<compile_context>
chip_gen: v6e
topology: v6e:2x2x1
jax: 0.10.0
libtpu: 0.0.40
codegen_flags: <defaults>
</compile_context>

<pallas_src>
import math

import jax
import jax.numpy as jnp
from jax.experimental import pallas as pl
from jax.experimental.pallas import tpu as pltpu

EPS = 1e-5
LANES = 128

_VMEM_LIMIT = None


def _round_up(x, m):
    return (x + m - 1) // m * m


def _vmem_limit_bytes():
    """Generation-aware VMEM cap: ~2/3 of physical, <= 96 MiB."""
    global _VMEM_LIMIT
    if _VMEM_LIMIT is None:
        try:
            cap = int(pltpu.get_tpu_info().vmem_capacity_bytes)
        except Exception:                       # fallback: assume 128 MiB part
            cap = 128 * 1024 * 1024
        _VMEM_LIMIT = min(cap * 2 // 3, 96 * 1024 * 1024)
    return _VMEM_LIMIT


def _compiler_params():
    return pltpu.CompilerParams(
        dimension_semantics=("parallel",),      # batch grid; 2 TCs on v7x
        vmem_limit_bytes=_vmem_limit_bytes())


# ----------------------------------------------------------------------------
# Implicit-GEMM conv layer (the single Pallas workhorse)
# ----------------------------------------------------------------------------
def _im2col_cols(x, kh, kw, ho, wo, oy, ox):
    """x: (H, W, C) value already in VMEM.  Valid-conv im2col columns with a
    static (oy, ox) window offset: (ho, wo, kh*kw*C), tap-major / ch-minor."""
    cols = [x[oy + i:oy + i + ho, ox + j:ox + j + wo, :]
            for i in range(kh) for j in range(kw)]
    return jnp.concatenate(cols, axis=-1)


def conv_layer(inputs, w_mat, *, kh, kw, out_hw=None, offsets=None,
               affine=None, bias=None, compute_stats=True,
               out_dtype=jnp.bfloat16):
    """Implicit-GEMM valid conv over NHWC inputs (grid over batch).

    inputs : list of (N, H_i, W_i, C_i) arrays (same N).  Channels are padded
             to a multiple of 128 (lane-dense); w_mat's K axis must be built
             with the matching per-input cin padding, in list order,
             tap-major / channel-minor.
    out_hw : (Ho, Wo); defaults to the valid conv of inputs[0].
    offsets: per-input static (oy, ox) window offsets (fused center-crop).
    affine : (scale, shift) length-C_pad vectors fused onto inputs[0] as
             relu(x*scale + shift) right after load (= previous layer's BN+ReLU).
    bias   : length-C_out bias added to the matmul accumulator.
    Returns (N, Ho*Wo, C_out) and, if compute_stats, per-image (N, 2, C_out)
    [sum, sum-of-squares] partials from the f32 accumulator (for training-mode
    BatchNorm of THIS conv's output).
    """
    n_in = len(inputs)
    offsets = offsets or [(0, 0)] * n_in
    n = inputs[0].shape[0]
    if out_hw is None:
        out_hw = (inputs[0].shape[1] - kh + 1, inputs[0].shape[2] - kw + 1)
    ho, wo = out_hw
    m = ho * wo
    K, C = w_mat.shape

    xs = []
    for x in inputs:
        c = x.shape[-1]
        cp = _round_up(c, LANES)
        if cp != c:
            # lane-pad so all in-kernel concats stay 128-aligned (only hits
            # the 64-channel skip at depth_level 0; tiny extra copy).
            x = jnp.pad(x, ((0, 0), (0, 0), (0, 0), (0, cp - c)))
        xs.append(x.astype(jnp.bfloat16))
    k_expect = kh * kw * sum(x.shape[-1] for x in xs)
    assert k_expect == K, (k_expect, K)

    operands = list(xs)
    in_specs = [pl.BlockSpec((1,) + x.shape[1:], lambda i: (i, 0, 0, 0))
                for x in xs]
    if affine is not None:
        c0 = xs[0].shape[-1]
        scale, shift = affine
        operands += [scale.reshape(1, 1, c0).astype(jnp.float32),
                     shift.reshape(1, 1, c0).astype(jnp.float32)]
        in_specs += [pl.BlockSpec((1, 1, c0), lambda i: (0, 0, 0))] * 2
    operands.append(w_mat.astype(jnp.bfloat16))
    in_specs.append(pl.BlockSpec((K, C), lambda i: (0, 0)))
    if bias is not None:
        operands.append(bias.reshape(1, C).astype(jnp.float32))
        in_specs.append(pl.BlockSpec((1, C), lambda i: (0, 0)))

    out_shape = [jax.ShapeDtypeStruct((n, m, C), out_dtype)]
    out_specs = [pl.BlockSpec((1, m, C), lambda i: (i, 0, 0))]
    if compute_stats:
        out_shape.append(jax.ShapeDtypeStruct((n, 2, C), jnp.float32))
        out_specs.append(pl.BlockSpec((1, 2, C), lambda i: (i, 0, 0)))

    def kernel(*refs):
        idx = 0
        tiles = [refs[idx + t][0] for t in range(n_in)]
        idx += n_in
        if affine is not None:
            sc, sh = refs[idx][...], refs[idx + 1][...]
            idx += 2
            tiles[0] = jnp.maximum(
                tiles[0].astype(jnp.float32) * sc + sh, 0.0
            ).astype(jnp.bfloat16)
        w_ref = refs[idx]
        idx += 1
        b_ref = None
        if bias is not None:
            b_ref = refs[idx]
            idx += 1
        y_ref = refs[idx]
        idx += 1
        stats_ref = refs[idx] if compute_stats else None

        cols = [_im2col_cols(t, kh, kw, ho, wo, oy, ox)
                for t, (oy, ox) in zip(tiles, offsets)]
        a = cols[0] if n_in == 1 else jnp.concatenate(cols, axis=-1)
        a = a.reshape(m, K)                                   # stays in VMEM
        y = jnp.dot(a, w_ref[...], preferred_element_type=jnp.float32)
        if b_ref is not None:
            y = y + b_ref[...]
        y_ref[0] = y.astype(y_ref.dtype)
        if compute_stats:
            s = jnp.sum(y, axis=0, keepdims=True)
            ss = jnp.sum(y * y, axis=0, keepdims=True)
            stats_ref[0] = jnp.concatenate([s, ss], axis=0)

    bytes_acc = int(sum(x.size * 2 for x in xs) + K * C * 2
                    + n * m * C * jnp.dtype(out_dtype).itemsize
                    + (n * 2 * C * 4 if compute_stats else 0))
    cost = pl.CostEstimate(flops=2 * n * m * K * C + 4 * n * m * C,
                           transcendentals=0, bytes_accessed=bytes_acc)

    return pl.pallas_call(
        kernel,
        out_shape=tuple(out_shape) if compute_stats else out_shape[0],
        grid=(n,),
        in_specs=in_specs,
        out_specs=tuple(out_specs) if compute_stats else out_specs[0],
        compiler_params=_compiler_params(),
        cost_estimate=cost,
    )(*operands)


def affine_relu(y, scale, shift, out_dtype=jnp.float32):
    """Standalone BN-apply + ReLU (only needed after the last conv)."""
    n, m, c = y.shape

    def kernel(y_ref, sc_ref, sh_ref, o_ref):
        o = jnp.maximum(
            y_ref[0].astype(jnp.float32) * sc_ref[...] + sh_ref[...], 0.0)
        o_ref[0] = o.astype(o_ref.dtype)

    return pl.pallas_call(
        kernel,
        out_shape=jax.ShapeDtypeStruct((n, m, c), out_dtype),
        grid=(n,),
        in_specs=[pl.BlockSpec((1, m, c), lambda i: (i, 0, 0)),
                  pl.BlockSpec((1, c), lambda i: (0, 0)),
                  pl.BlockSpec((1, c), lambda i: (0, 0))],
        out_specs=pl.BlockSpec((1, m, c), lambda i: (i, 0, 0)),
        compiler_params=_compiler_params(),
    )(y, scale.reshape(1, c).astype(jnp.float32),
      shift.reshape(1, c).astype(jnp.float32))


# ----------------------------------------------------------------------------
# BatchNorm finalize + weight-layout helpers (tiny, XLA-level)
# ----------------------------------------------------------------------------
def bn_scale_shift(stats, count, gamma, beta, c_pad):
    """Training-mode BatchNorm (biased var, eps=1e-5) folded into per-channel
    scale/shift.  Pad channels get scale = shift = 0 and stay exactly zero."""
    s = jnp.sum(stats[:, 0, :], axis=0)
    ss = jnp.sum(stats[:, 1, :], axis=0)
    mean = s / count
    var = jnp.maximum(ss / count - mean * mean, 0.0)
    inv = jax.lax.rsqrt(var + EPS)
    g = jnp.pad(gamma.astype(jnp.float32), (0, c_pad - gamma.shape[0]))
    b = jnp.pad(beta.astype(jnp.float32), (0, c_pad - beta.shape[0]))
    scale = g * inv
    shift = b - mean * scale
    return scale, shift


def conv_weight_to_mat(w, cin_pad=None, cout_pad=None):
    """PyTorch Conv2d weight (Cout, Cin, kh, kw) -> (kh*kw*Cin_pad, Cout_pad),
    tap-major / channel-minor, zero rows/cols for the padding."""
    cout, cin, kh, kw = w.shape
    if cin_pad is not None and cin_pad != cin:
        w = jnp.pad(w, ((0, 0), (0, cin_pad - cin), (0, 0), (0, 0)))
        cin = cin_pad
    mat = jnp.transpose(w, (2, 3, 1, 0)).reshape(kh * kw * cin, cout)
    if cout_pad is not None and cout_pad != cout:
        mat = jnp.pad(mat, ((0, 0), (0, cout_pad - cout)))
    return mat


def _phase_weight(w_t):
    """ConvTranspose2d(k=3, s=2, padding=0, output_padding=0) weight
    (Cin, Cout, 3, 3) -> combined (4*Cin, 4*Cout) matrix.  Rows: 2x2 taps over
    the 1-padded input (tap-major, channel-minor); columns: output parities
    (ee, eo, oe, oo) x Cout.  Only valid for this exact configuration."""
    assert w_t.shape[2:] == (3, 3)
    c_in, c_out = w_t.shape[0], w_t.shape[1]
    w = jnp.zeros((4 * c_in, 4 * c_out), jnp.float32)
    taps = {  # phase -> [((dy, dx) tap on padded input, (ky, kx) of W_t)]
        0: [((0, 0), (2, 2)), ((0, 1), (2, 0)), ((1, 0), (0, 2)), ((1, 1), (0, 0))],
        1: [((0, 1), (2, 1)), ((1, 1), (0, 1))],
        2: [((1, 0), (1, 2)), ((1, 1), (1, 0))],
        3: [((1, 1), (1, 1))],
    }
    for phase, lst in taps.items():
        for (dy, dx), (ky, kx) in lst:
            r = (dy * 2 + dx) * c_in
            c = phase * c_out
            w = w.at[r:r + c_in, c:c + c_out].set(w_t[:, :, ky, kx])
    return w


def to_nhwc(x):
    return jnp.transpose(x, (0, 2, 3, 1))


def to_nchw(x):
    return jnp.transpose(x, (0, 3, 1, 2))


def conv_transpose_upsample(x, w_t, bias):
    """Stride-2, k=3 ConvTranspose2d via sub-pixel phase decomposition: one
    implicit-GEMM 2x2 conv over the 1-padded input yields all four output
    parities; one reshape/transpose interleaves them.  The result is returned
    WITHOUT slicing off the garbage last row/col (shape 2H+2 x 2W+2); the
    valid output is [:, :2H+1, :2W+1, :] and downstream kernels never read
    the last row/col, so the slice copy is skipped."""
    n, h, w, c = x.shape
    xp = jnp.pad(x, ((0, 0), (1, 1), (1, 1), (0, 0)))
    y = conv_layer([xp], _phase_weight(w_t), kh=2, kw=2,
                   bias=jnp.tile(bias, 4), compute_stats=False)
    y = y.reshape(n, h + 1, w + 1, 2, 2, c)
    up = jnp.transpose(y, (0, 1, 3, 2, 4, 5)).reshape(
        n, 2 * h + 2, 2 * w + 2, c)
    return up


# ----------------------------------------------------------------------------
# Module forward
# ----------------------------------------------------------------------------
def unet_expanding_block_forward(params, x_previous_layer, x_coppied,
                                 depth_level):
    c_mid = int(64 * math.pow(2, depth_level))
    c_pad = _round_up(c_mid, LANES)

    xp = to_nhwc(x_previous_layer).astype(jnp.bfloat16)
    n, h, w = xp.shape[0], xp.shape[1], xp.shape[2]

    # --- upsample: ConvTranspose2d(c_in, c_in, 3, stride=2) ----------------
    up = conv_transpose_upsample(xp, params["w_up"], params["b_up"])
    hu, wu = 2 * h + 1, 2 * w + 1           # valid upsampled size

    # --- conv1 (k=2, no bias); BN1 partial stats fused into the same pass --
    ho1, wo1 = hu - 1, wu - 1
    y1, st1 = conv_layer(
        [up], conv_weight_to_mat(params["w1"], cout_pad=c_pad),
        kh=2, kw=2, out_hw=(ho1, wo1))
    sc1, sh1 = bn_scale_shift(st1, n * ho1 * wo1,
                              params["g1"], params["be1"], c_pad)
    x1 = y1.reshape(n, ho1, wo1, c_pad)     # raw conv1 output (BN1 applied later)

    # --- conv2 (k=3, no bias, Cin split {decoder, skip}) --------------------
    # BN1+ReLU are fused onto the decoder input inside the conv2 kernel; the
    # center crop of the skip is a static window offset (never materialized),
    # and the channel concat is a K-split of the weight matrix.
    xc = to_nhwc(x_coppied).astype(jnp.bfloat16)
    ho2, wo2 = ho1 - 2, wo1 - 2
    mh = (xc.shape[1] - ho1) // 2
    mw = (xc.shape[2] - wo1) // 2
    w2 = jnp.concatenate(
        [conv_weight_to_mat(params["w2"][:, :c_mid],
                            cin_pad=c_pad, cout_pad=c_pad),
         conv_weight_to_mat(params["w2"][:, c_mid:],
                            cin_pad=c_pad, cout_pad=c_pad)], axis=0)
    y2, st2 = conv_layer([x1, xc], w2, kh=3, kw=3, out_hw=(ho2, wo2),
                         offsets=[(0, 0), (mh, mw)], affine=(sc1, sh1))
    sc2, sh2 = bn_scale_shift(st2, n * ho2 * wo2,
                              params["g2"], params["be2"], c_pad)
    x2 = y2.reshape(n, ho2, wo2, c_pad)

    # --- conv3 (k=3, no bias); BN2+ReLU fused onto its input ---------------
    ho3, wo3 = ho2 - 2, wo2 - 2
    y3, st3 = conv_layer(
        [x2], conv_weight_to_mat(params["w3"], cin_pad=c_pad, cout_pad=c_pad),
        kh=3, kw=3, affine=(sc2, sh2))
    sc3, sh3 = bn_scale_shift(st3, n * ho3 * wo3,
                              params["g3"], params["be3"], c_pad)

    # --- final BN3 + ReLU ---------------------------------------------------
    out = affine_relu(y3, sc3, sh3, out_dtype=jnp.float32)
    out = out.reshape(n, ho3, wo3, c_pad)[:, :, :, :c_mid]
    return to_nchw(out)                     # NCHW, like PyTorch


# ----------------------------------------------------------------------------
# Deterministic parameter init (shapes follow the PyTorch __init__)
# ----------------------------------------------------------------------------
def init_params(key, depth_level):
    c_in = int(64 * math.pow(2, depth_level + 1))
    c_mid = int(64 * math.pow(2, depth_level))
    ks = jax.random.split(key, 5)

    def uniform_fan(k, shape, fan_in):
        bound = 1.0 / math.sqrt(fan_in)
        return jax.random.uniform(k, shape, jnp.float32, -bound, bound)

    return {
        # ConvTranspose2d(c_in, c_in, 3, 2): weight (c_in, c_in, 3, 3) + bias
        "w_up": uniform_fan(ks[0], (c_in, c_in, 3, 3), c_in * 9),
        "b_up": uniform_fan(ks[1], (c_in,), c_in * 9),
        # Conv2d(c_in, c_mid, 2, bias=False)
        "w1": uniform_fan(ks[2], (c_mid, c_in, 2, 2), c_in * 4),
        # Conv2d(c_in, c_mid, 3, bias=False)
        "w2": uniform_fan(ks[3], (c_mid, c_in, 3, 3), c_in * 9),
        # Conv2d(c_mid, c_mid, 3, bias=False)
        "w3": uniform_fan(ks[4], (c_mid, c_mid, 3, 3), c_mid * 9),
        # BatchNorm affine params (PyTorch default init: gamma=1, beta=0)
        "g1": jnp.ones((c_mid,), jnp.float32),
        "be1": jnp.zeros((c_mid,), jnp.float32),
        "g2": jnp.ones((c_mid,), jnp.float32),
        "be2": jnp.zeros((c_mid,), jnp.float32),
        "g3": jnp.ones((c_mid,), jnp.float32),
        "be3": jnp.zeros((c_mid,), jnp.float32),
    }


if __name__ == "__main__":
    depth_level = 0          # -> input_channels=128, mid/output_channels=64
    c_in = int(64 * math.pow(2, depth_level + 1))
    c_mid = int(64 * math.pow(2, depth_level))

    key = jax.random.PRNGKey(0)
    k_params, k_prev, k_copy = jax.random.split(key, 3)

    params = init_params(k_params, depth_level)

    # x_prev 5x5 -> upsample 11x11 -> conv1 10x10 -> conv2 8x8 -> conv3 6x6
    x_previous_layer = jax.random.normal(k_prev, (2, c_in, 5, 5), jnp.float32)
    x_coppied = jax.random.normal(k_copy, (2, c_mid, 14, 14), jnp.float32)

    fwd = jax.jit(unet_expanding_block_forward, static_argnums=(3,))
    out = fwd(params, x_previous_layer, x_coppied, depth_level)
    out = jax.block_until_ready(out)

    assert out.shape == (2, c_mid, 6, 6), out.shape
    assert bool(jnp.all(jnp.isfinite(out)))
    assert bool(jnp.all(out >= 0.0))     # final ReLU
    print("KERNEL_OK")
</pallas_src>

<mosaic_0001>
module attributes {stable_mosaic.version = 11 : i64} {
  func.func @kernel(%arg0: i32, %arg1: memref<1x7x7x128xbf16, #tpu.memory_space<vmem>>, %arg2: memref<512x512xbf16, #tpu.memory_space<vmem>>, %arg3: memref<1x512xf32, #tpu.memory_space<vmem>>, %arg4: memref<1x36x512xbf16, #tpu.memory_space<vmem>>) attributes {dimension_semantics = [#tpu.dimension_semantics<parallel>], iteration_bounds = array<i64: 2>, scalar_prefetch = 0 : i64, scratch_operands = 0 : i64, tpu.core_type = #tpu.core_type<tc>, window_params = [{transform_indices = @transform_0, window_bounds = array<i64: 1, 7, 7, 128>}, {pipeline_mode = #tpu.pipeline_mode<synchronous>, transform_indices = @transform_1, window_bounds = array<i64: 512, 512>}, {pipeline_mode = #tpu.pipeline_mode<synchronous>, transform_indices = @transform_2, window_bounds = array<i64: 1, 512>}, {transform_indices = @transform_3, window_bounds = array<i64: 1, 36, 512>}]} {
    %c0 = arith.constant 0 : index
    %c0_0 = arith.constant 0 : index
    %c0_1 = arith.constant 0 : index
    %c0_2 = arith.constant 0 : index
    %0 = vector.load %arg1[%c0, %c0_0, %c0_1, %c0_2] : memref<1x7x7x128xbf16, #tpu.memory_space<vmem>>, vector<1x7x7x128xbf16>
    %1 = vector.shape_cast %0 : vector<1x7x7x128xbf16> to vector<7x7x128xbf16>
    %2 = vector.extract_strided_slice %1 {offsets = [0, 0, 0], sizes = [6, 6, 128], strides = [1, 1, 1]} : vector<7x7x128xbf16> to vector<6x6x128xbf16>
    %3 = vector.extract_strided_slice %1 {offsets = [0, 1, 0], sizes = [6, 6, 128], strides = [1, 1, 1]} : vector<7x7x128xbf16> to vector<6x6x128xbf16>
    %4 = vector.extract_strided_slice %1 {offsets = [1, 0, 0], sizes = [6, 6, 128], strides = [1, 1, 1]} : vector<7x7x128xbf16> to vector<6x6x128xbf16>
    %5 = vector.extract_strided_slice %1 {offsets = [1, 1, 0], sizes = [6, 6, 128], strides = [1, 1, 1]} : vector<7x7x128xbf16> to vector<6x6x128xbf16>
    %6 = tpu.concatenate %2, %3, %4, %5 in 2 : vector<6x6x128xbf16>, vector<6x6x128xbf16>, vector<6x6x128xbf16>, vector<6x6x128xbf16> -> vector<6x6x512xbf16>
    %7 = vector.shape_cast %6 : vector<6x6x512xbf16> to vector<36x512xbf16>
    %c0_3 = arith.constant 0 : index
    %c0_4 = arith.constant 0 : index
    %8 = vector.load %arg2[%c0_3, %c0_4] : memref<512x512xbf16, #tpu.memory_space<vmem>>, vector<512x512xbf16>
    %cst = arith.constant dense<0.000000e+00> : vector<36x512xf32>
    %9 = tpu.matmul %7, %8, %cst {dimension_numbers = #tpu.dot_dimension_numbers<[1], [0], [0], [1], [0, 0, 1, 1], [], []>} : vector<36x512xbf16>, vector<512x512xbf16>, vector<36x512xf32> -> vector<36x512xf32>
    %c0_5 = arith.constant 0 : index
    %c0_6 = arith.constant 0 : index
    %10 = vector.load %arg3[%c0_5, %c0_6] : memref<1x512xf32, #tpu.memory_space<vmem>>, vector<1x512xf32>
    %11 = vector.broadcast %10 : vector<1x512xf32> to vector<36x512xf32>
    %12 = arith.addf %9, %11 : vector<36x512xf32>
    %13 = arith.truncf %12 : vector<36x512xf32> to vector<36x512xbf16>
    %c0_7 = arith.constant 0 : index
    %c0_8 = arith.constant 0 : index
    %c0_9 = arith.constant 0 : index
    %14 = vector.load %arg4[%c0_7, %c0_8, %c0_9] : memref<1x36x512xbf16, #tpu.memory_space<vmem>>, vector<1x36x512xbf16>
    %15 = vector.shape_cast %14 : vector<1x36x512xbf16> to vector<36x512xbf16>
    %16 = vector.shape_cast %13 : vector<36x512xbf16> to vector<1x36x512xbf16>
    tpu.vector_store %arg4[%c0_7, %c0_8, %c0_9], %16 {strides = array<i32>} : memref<1x36x512xbf16, #tpu.memory_space<vmem>>, vector<1x36x512xbf16>,
    return
  }
  func.func @transform_0(%arg0: i32) -> (i32, i32, i32, i32) {
    %c0_i32 = arith.constant 0 : i32
    %c0_i32_0 = arith.constant 0 : i32
    %c0_i32_1 = arith.constant 0 : i32
    %c0_i32_2 = arith.constant 0 : i32
    return %arg0, %c0_i32, %c0_i32_0, %c0_i32_1 : i32, i32, i32, i32
  }
  func.func @transform_1(%arg0: i32) -> (i32, i32) {
    %c0_i32 = arith.constant 0 : i32
    %c0_i32_0 = arith.constant 0 : i32
    %c0_i32_1 = arith.constant 0 : i32
    return %c0_i32, %c0_i32_0 : i32, i32
  }
  func.func @transform_2(%arg0: i32) -> (i32, i32) {
    %c0_i32 = arith.constant 0 : i32
    %c0_i32_0 = arith.constant 0 : i32
    %c0_i32_1 = arith.constant 0 : i32
    return %c0_i32, %c0_i32_0 : i32, i32
  }
  func.func @transform_3(%arg0: i32) -> (i32, i32, i32) {
    %c0_i32 = arith.constant 0 : i32
    %c0_i32_0 = arith.constant 0 : i32
    %c0_i32_1 = arith.constant 0 : i32
    return %arg0, %c0_i32, %c0_i32_0 : i32, i32, i32
  }
}

module attributes {stable_mosaic.version = 11 : i64} {
  func.func @kernel(%arg0: i32, %arg1: memref<1x12x12x128xbf16, #tpu.memory_space<vmem>>, %arg2: memref<512x128xbf16, #tpu.memory_space<vmem>>, %arg3: memref<1x100x128xbf16, #tpu.memory_space<vmem>>, %arg4: memref<1x2x128xf32, #tpu.memory_space<vmem>>) attributes {dimension_semantics = [#tpu.dimension_semantics<parallel>], iteration_bounds = array<i64: 2>, scalar_prefetch = 0 : i64, scratch_operands = 0 : i64, tpu.core_type = #tpu.core_type<tc>, window_params = [{transform_indices = @transform_0, window_bounds = array<i64: 1, 12, 12, 128>}, {pipeline_mode = #tpu.pipeline_mode<synchronous>, transform_indices = @transform_1, window_bounds = array<i64: 512, 128>}, {transform_indices = @transform_2, window_bounds = array<i64: 1, 100, 128>}, {transform_indices = @transform_3, window_bounds = array<i64: 1, 2, 128>}]} {
    %c0 = arith.constant 0 : index
    %c0_0 = arith.constant 0 : index
    %c0_1 = arith.constant 0 : index
    %c0_2 = arith.constant 0 : index
    %0 = vector.load %arg1[%c0, %c0_0, %c0_1, %c0_2] : memref<1x12x12x128xbf16, #tpu.memory_space<vmem>>, vector<1x12x12x128xbf16>
    %1 = vector.shape_cast %0 : vector<1x12x12x128xbf16> to vector<12x12x128xbf16>
    %2 = vector.extract_strided_slice %1 {offsets = [0, 0, 0], sizes = [10, 10, 128], strides = [1, 1, 1]} : vector<12x12x128xbf16> to vector<10x10x128xbf16>
    %3 = vector.extract_strided_slice %1 {offsets = [0, 1, 0], sizes = [10, 10, 128], strides = [1, 1, 1]} : vector<12x12x128xbf16> to vector<10x10x128xbf16>
    %4 = vector.extract_strided_slice %1 {offsets = [1, 0, 0], sizes = [10, 10, 128], strides = [1, 1, 1]} : vector<12x12x128xbf16> to vector<10x10x128xbf16>
    %5 = vector.extract_strided_slice %1 {offsets = [1, 1, 0], sizes = [10, 10, 128], strides = [1, 1, 1]} : vector<12x12x128xbf16> to vector<10x10x128xbf16>
    %6 = tpu.concatenate %2, %3, %4, %5 in 2 : vector<10x10x128xbf16>, vector<10x10x128xbf16>, vector<10x10x128xbf16>, vector<10x10x128xbf16> -> vector<10x10x512xbf16>
    %7 = vector.shape_cast %6 : vector<10x10x512xbf16> to vector<100x512xbf16>
    %c0_3 = arith.constant 0 : index
    %c0_4 = arith.constant 0 : index
    %8 = vector.load %arg2[%c0_3, %c0_4] : memref<512x128xbf16, #tpu.memory_space<vmem>>, vector<512x128xbf16>
    %cst = arith.constant dense<0.000000e+00> : vector<100x128xf32>
    %9 = tpu.matmul %7, %8, %cst {dimension_numbers = #tpu.dot_dimension_numbers<[1], [0], [0], [1], [0, 0, 1, 1], [], []>} : vector<100x512xbf16>, vector<512x128xbf16>, vector<100x128xf32> -> vector<100x128xf32>
    %10 = arith.truncf %9 : vector<100x128xf32> to vector<100x128xbf16>
    %c0_5 = arith.constant 0 : index
    %c0_6 = arith.constant 0 : index
    %c0_7 = arith.constant 0 : index
    %11 = vector.load %arg3[%c0_5, %c0_6, %c0_7] : memref<1x100x128xbf16, #tpu.memory_space<vmem>>, vector<1x100x128xbf16>
    %12 = vector.shape_cast %11 : vector<1x100x128xbf16> to vector<100x128xbf16>
    %13 = vector.shape_cast %10 : vector<100x128xbf16> to vector<1x100x128xbf16>
    tpu.vector_store %arg3[%c0_5, %c0_6, %c0_7], %13 {strides = array<i32>} : memref<1x100x128xbf16, #tpu.memory_space<vmem>>, vector<1x100x128xbf16>,
    %cst_8 = arith.constant dense<0.000000e+00> : vector<128xf32>
    %14 = vector.multi_reduction <add>, %9, %cst_8 [0] : vector<100x128xf32> to vector<128xf32>
    %15 = vector.shape_cast %14 : vector<128xf32> to vector<1x128xf32>
    %16 = arith.mulf %9, %9 : vector<100x128xf32>
    %cst_9 = arith.constant dense<0.000000e+00> : vector<128xf32>
    %17 = vector.multi_reduction <add>, %16, %cst_9 [0] : vector<100x128xf32> to vector<128xf32>
    %18 = vector.shape_cast %17 : vector<128xf32> to vector<1x128xf32>
    %19 = tpu.concatenate %15, %18 in 0 : vector<1x128xf32>, vector<1x128xf32> -> vector<2x128xf32>
    %c0_10 = arith.constant 0 : index
    %c0_11 = arith.constant 0 : index
    %c0_12 = arith.constant 0 : index
    %20 = vector.load %arg4[%c0_10, %c0_11, %c0_12] : memref<1x2x128xf32, #tpu.memory_space<vmem>>, vector<1x2x128xf32>
    %21 = vector.shape_cast %20 : vector<1x2x128xf32> to vector<2x128xf32>
    %22 = vector.shape_cast %19 : vector<2x128xf32> to vector<1x2x128xf32>
    tpu.vector_store %arg4[%c0_10, %c0_11, %c0_12], %22 {strides = array<i32>} : memref<1x2x128xf32, #tpu.memory_space<vmem>>, vector<1x2x128xf32>,
    return
  }
  func.func @transform_0(%arg0: i32) -> (i32, i32, i32, i32) {
    %c0_i32 = arith.constant 0 : i32
    %c0_i32_0 = arith.constant 0 : i32
    %c0_i32_1 = arith.constant 0 : i32
    %c0_i32_2 = arith.constant 0 : i32
    return %arg0, %c0_i32, %c0_i32_0, %c0_i32_1 : i32, i32, i32, i32
  }
  func.func @transform_1(%arg0: i32) -> (i32, i32) {
    %c0_i32 = arith.constant 0 : i32
    %c0_i32_0 = arith.constant 0 : i32
    %c0_i32_1 = arith.constant 0 : i32
    return %c0_i32, %c0_i32_0 : i32, i32
  }
  func.func @transform_2(%arg0: i32) -> (i32, i32, i32) {
    %c0_i32 = arith.constant 0 : i32
    %c0_i32_0 = arith.constant 0 : i32
    %c0_i32_1 = arith.constant 0 : i32
    return %arg0, %c0_i32, %c0_i32_0 : i32, i32, i32
  }
  func.func @transform_3(%arg0: i32) -> (i32, i32, i32) {
    %c0_i32 = arith.constant 0 : i32
    %c0_i32_0 = arith.constant 0 : i32
    %c0_i32_1 = arith.constant 0 : i32
    return %arg0, %c0_i32, %c0_i32_0 : i32, i32, i32
  }
}

module attributes {stable_mosaic.version = 11 : i64} {
  func.func @kernel(%arg0: i32, %arg1: memref<1x10x10x128xbf16, #tpu.memory_space<vmem>>, %arg2: memref<1x14x14x128xbf16, #tpu.memory_space<vmem>>, %arg3: memref<1x1x128xf32, #tpu.memory_space<vmem>>, %arg4: memref<1x1x128xf32, #tpu.memory_space<vmem>>, %arg5: memref<2304x128xbf16, #tpu.memory_space<vmem>>, %arg6: memref<1x64x128xbf16, #tpu.memory_space<vmem>>, %arg7: memref<1x2x128xf32, #tpu.memory_space<vmem>>) attributes {dimension_semantics = [#tpu.dimension_semantics<parallel>], iteration_bounds = array<i64: 2>, scalar_prefetch = 0 : i64, scratch_operands = 0 : i64, tpu.core_type = #tpu.core_type<tc>, window_params = [{transform_indices = @transform_0, window_bounds = array<i64: 1, 10, 10, 128>}, {transform_indices = @transform_1, window_bounds = array<i64: 1, 14, 14, 128>}, {pipeline_mode = #tpu.pipeline_mode<synchronous>, transform_indices = @transform_2, window_bounds = array<i64: 1, 1, 128>}, {pipeline_mode = #tpu.pipeline_mode<synchronous>, transform_indices = @transform_3, window_bounds = array<i64: 1, 1, 128>}, {pipeline_mode = #tpu.pipeline_mode<synchronous>, transform_indices = @transform_4, window_bounds = array<i64: 2304, 128>}, {transform_indices = @transform_5, window_bounds = array<i64: 1, 64, 128>}, {transform_indices = @transform_6, window_bounds = array<i64: 1, 2, 128>}]} {
    %c0 = arith.constant 0 : index
    %c0_0 = arith.constant 0 : index
    %c0_1 = arith.constant 0 : index
    %c0_2 = arith.constant 0 : index
    %0 = vector.load %arg1[%c0, %c0_0, %c0_1, %c0_2] : memref<1x10x10x128xbf16, #tpu.memory_space<vmem>>, vector<1x10x10x128xbf16>
    %1 = vector.shape_cast %0 : vector<1x10x10x128xbf16> to vector<10x10x128xbf16>
    %c0_3 = arith.constant 0 : index
    %c0_4 = arith.constant 0 : index
    %c0_5 = arith.constant 0 : index
    %c0_6 = arith.constant 0 : index
    %2 = vector.load %arg2[%c0_3, %c0_4, %c0_5, %c0_6] : memref<1x14x14x128xbf16, #tpu.memory_space<vmem>>, vector<1x14x14x128xbf16>
    %3 = vector.shape_cast %2 : vector<1x14x14x128xbf16> to vector<14x14x128xbf16>
    %c0_7 = arith.constant 0 : index
    %c0_8 = arith.constant 0 : index
    %c0_9 = arith.constant 0 : index
    %4 = vector.load %arg3[%c0_7, %c0_8, %c0_9] : memref<1x1x128xf32, #tpu.memory_space<vmem>>, vector<1x1x128xf32>
    %c0_10 = arith.constant 0 : index
    %c0_11 = arith.constant 0 : index
    %c0_12 = arith.constant 0 : index
    %5 = vector.load %arg4[%c0_10, %c0_11, %c0_12] : memref<1x1x128xf32, #tpu.memory_space<vmem>>, vector<1x1x128xf32>
    %6 = arith.extf %1 : vector<10x10x128xbf16> to vector<10x10x128xf32>
    %7 = vector.broadcast %4 : vector<1x1x128xf32> to vector<10x10x128xf32>
    %8 = arith.mulf %6, %7 : vector<10x10x128xf32>
    %9 = vector.broadcast %5 : vector<1x1x128xf32> to vector<10x10x128xf32>
    %10 = arith.addf %8, %9 : vector<10x10x128xf32>
    %cst = arith.constant 0.000000e+00 : f32
    %11 = vector.broadcast %cst : f32 to vector<10x10x128xf32>
    %12 = arith.maximumf %10, %11 : vector<10x10x128xf32>
    %13 = arith.truncf %12 : vector<10x10x128xf32> to vector<10x10x128xbf16>
    %14 = vector.extract_strided_slice %13 {offsets = [0, 0, 0], sizes = [8, 8, 128], strides = [1, 1, 1]} : vector<10x10x128xbf16> to vector<8x8x128xbf16>
    %15 = vector.extract_strided_slice %13 {offsets = [0, 1, 0], sizes = [8, 8, 128], strides = [1, 1, 1]} : vector<10x10x128xbf16> to vector<8x8x128xbf16>
    %16 = vector.extract_strided_slice %13 {offsets = [0, 2, 0], sizes = [8, 8, 128], strides = [1, 1, 1]} : vector<10x10x128xbf16> to vector<8x8x128xbf16>
    %17 = vector.extract_strided_slice %13 {offsets = [1, 0, 0], sizes = [8, 8, 128], strides = [1, 1, 1]} : vector<10x10x128xbf16> to vector<8x8x128xbf16>
    %18 = vector.extract_strided_slice %13 {offsets = [1, 1, 0], sizes = [8, 8, 128], strides = [1, 1, 1]} : vector<10x10x128xbf16> to vector<8x8x128xbf16>
    %19 = vector.extract_strided_slice %13 {offsets = [1, 2, 0], sizes = [8, 8, 128], strides = [1, 1, 1]} : vector<10x10x128xbf16> to vector<8x8x128xbf16>
    %20 = vector.extract_strided_slice %13 {offsets = [2, 0, 0], sizes = [8, 8, 128], strides = [1, 1, 1]} : vector<10x10x128xbf16> to vector<8x8x128xbf16>
    %21 = vector.extract_strided_slice %13 {offsets = [2, 1, 0], sizes = [8, 8, 128], strides = [1, 1, 1]} : vector<10x10x128xbf16> to vector<8x8x128xbf16>
    %22 = vector.extract_strided_slice %13 {offsets = [2, 2, 0], sizes = [8, 8, 128], strides = [1, 1, 1]} : vector<10x10x128xbf16> to vector<8x8x128xbf16>
    %23 = tpu.concatenate %14, %15, %16, %17, %18, %19, %20, %21, %22 in 2 : vector<8x8x128xbf16>, vector<8x8x128xbf16>, vector<8x8x128xbf16>, vector<8x8x128xbf16>, vector<8x8x128xbf16>, vector<8x8x128xbf16>, vector<8x8x128xbf16>, vector<8x8x128xbf16>, vector<8x8x128xbf16> -> vector<8x8x1152xbf16>
    %24 = vector.extract_strided_slice %3 {offsets = [2, 2, 0], sizes = [8, 8, 128], strides = [1, 1, 1]} : vector<14x14x128xbf16> to vector<8x8x128xbf16>
    %25 = vector.extract_strided_slice %3 {offsets = [2, 3, 0], sizes = [8, 8, 128], strides = [1, 1, 1]} : vector<14x14x128xbf16> to vector<8x8x128xbf16>
    %26 = vector.extract_strided_slice %3 {offsets = [2, 4, 0], sizes = [8, 8, 128], strides = [1, 1, 1]} : vector<14x14x128xbf16> to vector<8x8x128xbf16>
    %27 = vector.extract_strided_slice %3 {offsets = [3, 2, 0], sizes = [8, 8, 128], strides = [1, 1, 1]} : vector<14x14x128xbf16> to vector<8x8x128xbf16>
    %28 = vector.extract_strided_slice %3 {offsets = [3, 3, 0], sizes = [8, 8, 128], strides = [1, 1, 1]} : vector<14x14x128xbf16> to vector<8x8x128xbf16>
    %29 = vector.extract_strided_slice %3 {offsets = [3, 4, 0], sizes = [8, 8, 128], strides = [1, 1, 1]} : vector<14x14x128xbf16> to vector<8x8x128xbf16>
    %30 = vector.extract_strided_slice %3 {offsets = [4, 2, 0], sizes = [8, 8, 128], strides = [1, 1, 1]} : vector<14x14x128xbf16> to vector<8x8x128xbf16>
    %31 = vector.extract_strided_slice %3 {offsets = [4, 3, 0], sizes = [8, 8, 128], strides = [1, 1, 1]} : vector<14x14x128xbf16> to vector<8x8x128xbf16>
    %32 = vector.extract_strided_slice %3 {offsets = [4, 4, 0], sizes = [8, 8, 128], strides = [1, 1, 1]} : vector<14x14x128xbf16> to vector<8x8x128xbf16>
    %33 = tpu.concatenate %24, %25, %26, %27, %28, %29, %30, %31, %32 in 2 : vector<8x8x128xbf16>, vector<8x8x128xbf16>, vector<8x8x128xbf16>, vector<8x8x128xbf16>, vector<8x8x128xbf16>, vector<8x8x128xbf16>, vector<8x8x128xbf16>, vector<8x8x128xbf16>, vector<8x8x128xbf16> -> vector<8x8x1152xbf16>
    %34 = tpu.concatenate %23, %33 in 2 : vector<8x8x1152xbf16>, vector<8x8x1152xbf16> -> vector<8x8x2304xbf16>
    %35 = vector.shape_cast %34 : vector<8x8x2304xbf16> to vector<64x2304xbf16>
    %c0_13 = arith.constant 0 : index
    %c0_14 = arith.constant 0 : index
    %36 = vector.load %arg5[%c0_13, %c0_14] : memref<2304x128xbf16, #tpu.memory_space<vmem>>, vector<2304x128xbf16>
    %cst_15 = arith.constant dense<0.000000e+00> : vector<64x128xf32>
    %37 = tpu.matmul %35, %36, %cst_15 {dimension_numbers = #tpu.dot_dimension_numbers<[1], [0], [0], [1], [0, 0, 1, 1], [], []>} : vector<64x2304xbf16>, vector<2304x128xbf16>, vector<64x128xf32> -> vector<64x128xf32>
    %38 = arith.truncf %37 : vector<64x128xf32> to vector<64x128xbf16>
    %c0_16 = arith.constant 0 : index
    %c0_17 = arith.constant 0 : index
    %c0_18 = arith.constant 0 : index
    %39 = vector.load %arg6[%c0_16, %c0_17, %c0_18] : memref<1x64x128xbf16, #tpu.memory_space<vmem>>, vector<1x64x128xbf16>
    %40 = vector.shape_cast %39 : vector<1x64x128xbf16> to vector<64x128xbf16>
    %41 = vector.shape_cast %38 : vector<64x128xbf16> to vector<1x64x128xbf16>
    tpu.vector_store %arg6[%c0_16, %c0_17, %c0_18], %41 {strides = array<i32>} : memref<1x64x128xbf16, #tpu.memory_space<vmem>>, vector<1x64x128xbf16>,
    %cst_19 = arith.constant dense<0.000000e+00> : vector<128xf32>
    %42 = vector.multi_reduction <add>, %37, %cst_19 [0] : vector<64x128xf32> to vector<128xf32>
    %43 = vector.shape_cast %42 : vector<128xf32> to vector<1x128xf32>
    %44 = arith.mulf %37, %37 : vector<64x128xf32>
    %cst_20 = arith.constant dense<0.000000e+00> : vector<128xf32>
    %45 = vector.multi_reduction <add>, %44, %cst_20 [0] : vector<64x128xf32> to vector<128xf32>
    %46 = vector.shape_cast %45 : vector<128xf32> to vector<1x128xf32>
    %47 = tpu.concatenate %43, %46 in 0 : vector<1x128xf32>, vector<1x128xf32> -> vector<2x128xf32>
    %c0_21 = arith.constant 0 : index
    %c0_22 = arith.constant 0 : index
    %c0_23 = arith.constant 0 : index
    %48 = vector.load %arg7[%c0_21, %c0_22, %c0_23] : memref<1x2x128xf32, #tpu.memory_space<vmem>>, vector<1x2x128xf32>
    %49 = vector.shape_cast %48 : vector<1x2x128xf32> to vector<2x128xf32>
    %50 = vector.shape_cast %47 : vector<2x128xf32> to vector<1x2x128xf32>
    tpu.vector_store %arg7[%c0_21, %c0_22, %c0_23], %50 {strides = array<i32>} : memref<1x2x128xf32, #tpu.memory_space<vmem>>, vector<1x2x128xf32>,
    return
  }
  func.func @transform_0(%arg0: i32) -> (i32, i32, i32, i32) {
    %c0_i32 = arith.constant 0 : i32
    %c0_i32_0 = arith.constant 0 : i32
    %c0_i32_1 = arith.constant 0 : i32
    %c0_i32_2 = arith.constant 0 : i32
    return %arg0, %c0_i32, %c0_i32_0, %c0_i32_1 : i32, i32, i32, i32
  }
  func.func @transform_1(%arg0: i32) -> (i32, i32, i32, i32) {
    %c0_i32 = arith.constant 0 : i32
    %c0_i32_0 = arith.constant 0 : i32
    %c0_i32_1 = arith.constant 0 : i32
    %c0_i32_2 = arith.constant 0 : i32
    return %arg0, %c0_i32, %c0_i32_0, %c0_i32_1 : i32, i32, i32, i32
  }
  func.func @transform_2(%arg0: i32) -> (i32, i32, i32) {
    %c0_i32 = arith.constant 0 : i32
    %c0_i32_0 = arith.constant 0 : i32
    %c0_i32_1 = arith.constant 0 : i32
    %c0_i32_2 = arith.constant 0 : i32
    return %c0_i32, %c0_i32_0, %c0_i32_1 : i32, i32, i32
  }
  func.func @transform_3(%arg0: i32) -> (i32, i32, i32) {
    %c0_i32 = arith.constant 0 : i32
    %c0_i32_0 = arith.constant 0 : i32
    %c0_i32_1 = arith.constant 0 : i32
    %c0_i32_2 = arith.constant 0 : i32
    return %c0_i32, %c0_i32_0, %c0_i32_1 : i32, i32, i32
  }
  func.func @transform_4(%arg0: i32) -> (i32, i32) {
    %c0_i32 = arith.constant 0 : i32
    %c0_i32_0 = arith.constant 0 : i32
    %c0_i32_1 = arith.constant 0 : i32
    return %c0_i32, %c0_i32_0 : i32, i32
  }
  func.func @transform_5(%arg0: i32) -> (i32, i32, i32) {
    %c0_i32 = arith.constant 0 : i32
    %c0_i32_0 = arith.constant 0 : i32
    %c0_i32_1 = arith.constant 0 : i32
    return %arg0, %c0_i32, %c0_i32_0 : i32, i32, i32
  }
  func.func @transform_6(%arg0: i32) -> (i32, i32, i32) {
    %c0_i32 = arith.constant 0 : i32
    %c0_i32_0 = arith.constant 0 : i32
    %c0_i32_1 = arith.constant 0 : i32
    return %arg0, %c0_i32, %c0_i32_0 : i32, i32, i32
  }
}

module attributes {stable_mosaic.version = 11 : i64} {
  func.func @kernel(%arg0: i32, %arg1: memref<1x8x8x128xbf16, #tpu.memory_space<vmem>>, %arg2: memref<1x1x128xf32, #tpu.memory_space<vmem>>, %arg3: memref<1x1x128xf32, #tpu.memory_space<vmem>>, %arg4: memref<1152x128xbf16, #tpu.memory_space<vmem>>, %arg5: memref<1x36x128xbf16, #tpu.memory_space<vmem>>, %arg6: memref<1x2x128xf32, #tpu.memory_space<vmem>>) attributes {dimension_semantics = [#tpu.dimension_semantics<parallel>], iteration_bounds = array<i64: 2>, scalar_prefetch = 0 : i64, scratch_operands = 0 : i64, tpu.core_type = #tpu.core_type<tc>, window_params = [{transform_indices = @transform_0, window_bounds = array<i64: 1, 8, 8, 128>}, {pipeline_mode = #tpu.pipeline_mode<synchronous>, transform_indices = @transform_1, window_bounds = array<i64: 1, 1, 128>}, {pipeline_mode = #tpu.pipeline_mode<synchronous>, transform_indices = @transform_2, window_bounds = array<i64: 1, 1, 128>}, {pipeline_mode = #tpu.pipeline_mode<synchronous>, transform_indices = @transform_3, window_bounds = array<i64: 1152, 128>}, {transform_indices = @transform_4, window_bounds = array<i64: 1, 36, 128>}, {transform_indices = @transform_5, window_bounds = array<i64: 1, 2, 128>}]} {
    %c0 = arith.constant 0 : index
    %c0_0 = arith.constant 0 : index
    %c0_1 = arith.constant 0 : index
    %c0_2 = arith.constant 0 : index
    %0 = vector.load %arg1[%c0, %c0_0, %c0_1, %c0_2] : memref<1x8x8x128xbf16, #tpu.memory_space<vmem>>, vector<1x8x8x128xbf16>
    %1 = vector.shape_cast %0 : vector<1x8x8x128xbf16> to vector<8x8x128xbf16>
    %c0_3 = arith.constant 0 : index
    %c0_4 = arith.constant 0 : index
    %c0_5 = arith.constant 0 : index
    %2 = vector.load %arg2[%c0_3, %c0_4, %c0_5] : memref<1x1x128xf32, #tpu.memory_space<vmem>>, vector<1x1x128xf32>
    %c0_6 = arith.constant 0 : index
    %c0_7 = arith.constant 0 : index
    %c0_8 = arith.constant 0 : index
    %3 = vector.load %arg3[%c0_6, %c0_7, %c0_8] : memref<1x1x128xf32, #tpu.memory_space<vmem>>, vector<1x1x128xf32>
    %4 = arith.extf %1 : vector<8x8x128xbf16> to vector<8x8x128xf32>
    %5 = vector.broadcast %2 : vector<1x1x128xf32> to vector<8x8x128xf32>
    %6 = arith.mulf %4, %5 : vector<8x8x128xf32>
    %7 = vector.broadcast %3 : vector<1x1x128xf32> to vector<8x8x128xf32>
    %8 = arith.addf %6, %7 : vector<8x8x128xf32>
    %cst = arith.constant 0.000000e+00 : f32
    %9 = vector.broadcast %cst : f32 to vector<8x8x128xf32>
    %10 = arith.maximumf %8, %9 : vector<8x8x128xf32>
    %11 = arith.truncf %10 : vector<8x8x128xf32> to vector<8x8x128xbf16>
    %12 = vector.extract_strided_slice %11 {offsets = [0, 0, 0], sizes = [6, 6, 128], strides = [1, 1, 1]} : vector<8x8x128xbf16> to vector<6x6x128xbf16>
    %13 = vector.extract_strided_slice %11 {offsets = [0, 1, 0], sizes = [6, 6, 128], strides = [1, 1, 1]} : vector<8x8x128xbf16> to vector<6x6x128xbf16>
    %14 = vector.extract_strided_slice %11 {offsets = [0, 2, 0], sizes = [6, 6, 128], strides = [1, 1, 1]} : vector<8x8x128xbf16> to vector<6x6x128xbf16>
    %15 = vector.extract_strided_slice %11 {offsets = [1, 0, 0], sizes = [6, 6, 128], strides = [1, 1, 1]} : vector<8x8x128xbf16> to vector<6x6x128xbf16>
    %16 = vector.extract_strided_slice %11 {offsets = [1, 1, 0], sizes = [6, 6, 128], strides = [1, 1, 1]} : vector<8x8x128xbf16> to vector<6x6x128xbf16>
    %17 = vector.extract_strided_slice %11 {offsets = [1, 2, 0], sizes = [6, 6, 128], strides = [1, 1, 1]} : vector<8x8x128xbf16> to vector<6x6x128xbf16>
    %18 = vector.extract_strided_slice %11 {offsets = [2, 0, 0], sizes = [6, 6, 128], strides = [1, 1, 1]} : vector<8x8x128xbf16> to vector<6x6x128xbf16>
    %19 = vector.extract_strided_slice %11 {offsets = [2, 1, 0], sizes = [6, 6, 128], strides = [1, 1, 1]} : vector<8x8x128xbf16> to vector<6x6x128xbf16>
    %20 = vector.extract_strided_slice %11 {offsets = [2, 2, 0], sizes = [6, 6, 128], strides = [1, 1, 1]} : vector<8x8x128xbf16> to vector<6x6x128xbf16>
    %21 = tpu.concatenate %12, %13, %14, %15, %16, %17, %18, %19, %20 in 2 : vector<6x6x128xbf16>, vector<6x6x128xbf16>, vector<6x6x128xbf16>, vector<6x6x128xbf16>, vector<6x6x128xbf16>, vector<6x6x128xbf16>, vector<6x6x128xbf16>, vector<6x6x128xbf16>, vector<6x6x128xbf16> -> vector<6x6x1152xbf16>
    %22 = vector.shape_cast %21 : vector<6x6x1152xbf16> to vector<36x1152xbf16>
    %c0_9 = arith.constant 0 : index
    %c0_10 = arith.constant 0 : index
    %23 = vector.load %arg4[%c0_9, %c0_10] : memref<1152x128xbf16, #tpu.memory_space<vmem>>, vector<1152x128xbf16>
    %cst_11 = arith.constant dense<0.000000e+00> : vector<36x128xf32>
    %24 = tpu.matmul %22, %23, %cst_11 {dimension_numbers = #tpu.dot_dimension_numbers<[1], [0], [0], [1], [0, 0, 1, 1], [], []>} : vector<36x1152xbf16>, vector<1152x128xbf16>, vector<36x128xf32> -> vector<36x128xf32>
    %25 = arith.truncf %24 : vector<36x128xf32> to vector<36x128xbf16>
    %c0_12 = arith.constant 0 : index
    %c0_13 = arith.constant 0 : index
    %c0_14 = arith.constant 0 : index
    %26 = vector.load %arg5[%c0_12, %c0_13, %c0_14] : memref<1x36x128xbf16, #tpu.memory_space<vmem>>, vector<1x36x128xbf16>
    %27 = vector.shape_cast %26 : vector<1x36x128xbf16> to vector<36x128xbf16>
    %28 = vector.shape_cast %25 : vector<36x128xbf16> to vector<1x36x128xbf16>
    tpu.vector_store %arg5[%c0_12, %c0_13, %c0_14], %28 {strides = array<i32>} : memref<1x36x128xbf16, #tpu.memory_space<vmem>>, vector<1x36x128xbf16>,
    %cst_15 = arith.constant dense<0.000000e+00> : vector<128xf32>
    %29 = vector.multi_reduction <add>, %24, %cst_15 [0] : vector<36x128xf32> to vector<128xf32>
    %30 = vector.shape_cast %29 : vector<128xf32> to vector<1x128xf32>
    %31 = arith.mulf %24, %24 : vector<36x128xf32>
    %cst_16 = arith.constant dense<0.000000e+00> : vector<128xf32>
    %32 = vector.multi_reduction <add>, %31, %cst_16 [0] : vector<36x128xf32> to vector<128xf32>
    %33 = vector.shape_cast %32 : vector<128xf32> to vector<1x128xf32>
    %34 = tpu.concatenate %30, %33 in 0 : vector<1x128xf32>, vector<1x128xf32> -> vector<2x128xf32>
    %c0_17 = arith.constant 0 : index
    %c0_18 = arith.constant 0 : index
    %c0_19 = arith.constant 0 : index
    %35 = vector.load %arg6[%c0_17, %c0_18, %c0_19] : memref<1x2x128xf32, #tpu.memory_space<vmem>>, vector<1x2x128xf32>
    %36 = vector.shape_cast %35 : vector<1x2x128xf32> to vector<2x128xf32>
    %37 = vector.shape_cast %34 : vector<2x128xf32> to vector<1x2x128xf32>
    tpu.vector_store %arg6[%c0_17, %c0_18, %c0_19], %37 {strides = array<i32>} : memref<1x2x128xf32, #tpu.memory_space<vmem>>, vector<1x2x128xf32>,
    return
  }
  func.func @transform_0(%arg0: i32) -> (i32, i32, i32, i32) {
    %c0_i32 = arith.constant 0 : i32
    %c0_i32_0 = arith.constant 0 : i32
    %c0_i32_1 = arith.constant 0 : i32
    %c0_i32_2 = arith.constant 0 : i32
    return %arg0, %c0_i32, %c0_i32_0, %c0_i32_1 : i32, i32, i32, i32
  }
  func.func @transform_1(%arg0: i32) -> (i32, i32, i32) {
    %c0_i32 = arith.constant 0 : i32
    %c0_i32_0 = arith.constant 0 : i32
    %c0_i32_1 = arith.constant 0 : i32
    %c0_i32_2 = arith.constant 0 : i32
    return %c0_i32, %c0_i32_0, %c0_i32_1 : i32, i32, i32
  }
  func.func @transform_2(%arg0: i32) -> (i32, i32, i32) {
    %c0_i32 = arith.constant 0 : i32
    %c0_i32_0 = arith.constant 0 : i32
    %c0_i32_1 = arith.constant 0 : i32
    %c0_i32_2 = arith.constant 0 : i32
    return %c0_i32, %c0_i32_0, %c0_i32_1 : i32, i32, i32
  }
  func.func @transform_3(%arg0: i32) -> (i32, i32) {
    %c0_i32 = arith.constant 0 : i32
    %c0_i32_0 = arith.constant 0 : i32
    %c0_i32_1 = arith.constant 0 : i32
    return %c0_i32, %c0_i32_0 : i32, i32
  }
  func.func @transform_4(%arg0: i32) -> (i32, i32, i32) {
    %c0_i32 = arith.constant 0 : i32
    %c0_i32_0 = arith.constant 0 : i32
    %c0_i32_1 = arith.constant 0 : i32
    return %arg0, %c0_i32, %c0_i32_0 : i32, i32, i32
  }
  func.func @transform_5(%arg0: i32) -> (i32, i32, i32) {
    %c0_i32 = arith.constant 0 : i32
    %c0_i32_0 = arith.constant 0 : i32
    %c0_i32_1 = arith.constant 0 : i32
    return %arg0, %c0_i32, %c0_i32_0 : i32, i32, i32
  }
}

module attributes {stable_mosaic.version = 11 : i64} {
  func.func @kernel(%arg0: i32, %arg1: memref<1x36x128xbf16, #tpu.memory_space<vmem>>, %arg2: memref<1x128xf32, #tpu.memory_space<vmem>>, %arg3: memref<1x128xf32, #tpu.memory_space<vmem>>, %arg4: memref<1x36x128xf32, #tpu.memory_space<vmem>>) attributes {dimension_semantics = [#tpu.dimension_semantics<parallel>], iteration_bounds = array<i64: 2>, scalar_prefetch = 0 : i64, scratch_operands = 0 : i64, tpu.core_type = #tpu.core_type<tc>, window_params = [{transform_indices = @transform_0, window_bounds = array<i64: 1, 36, 128>}, {pipeline_mode = #tpu.pipeline_mode<synchronous>, transform_indices = @transform_1, window_bounds = array<i64: 1, 128>}, {pipeline_mode = #tpu.pipeline_mode<synchronous>, transform_indices = @transform_2, window_bounds = array<i64: 1, 128>}, {transform_indices = @transform_3, window_bounds = array<i64: 1, 36, 128>}]} {
    %c0 = arith.constant 0 : index
    %c0_0 = arith.constant 0 : index
    %c0_1 = arith.constant 0 : index
    %0 = vector.load %arg1[%c0, %c0_0, %c0_1] : memref<1x36x128xbf16, #tpu.memory_space<vmem>>, vector<1x36x128xbf16>
    %1 = vector.shape_cast %0 : vector<1x36x128xbf16> to vector<36x128xbf16>
    %2 = arith.extf %1 : vector<36x128xbf16> to vector<36x128xf32>
    %c0_2 = arith.constant 0 : index
    %c0_3 = arith.constant 0 : index
    %3 = vector.load %arg2[%c0_2, %c0_3] : memref<1x128xf32, #tpu.memory_space<vmem>>, vector<1x128xf32>
    %4 = vector.broadcast %3 : vector<1x128xf32> to vector<36x128xf32>
    %5 = arith.mulf %2, %4 : vector<36x128xf32>
    %c0_4 = arith.constant 0 : index
    %c0_5 = arith.constant 0 : index
    %6 = vector.load %arg3[%c0_4, %c0_5] : memref<1x128xf32, #tpu.memory_space<vmem>>, vector<1x128xf32>
    %7 = vector.broadcast %6 : vector<1x128xf32> to vector<36x128xf32>
    %8 = arith.addf %5, %7 : vector<36x128xf32>
    %cst = arith.constant 0.000000e+00 : f32
    %9 = vector.broadcast %cst : f32 to vector<36x128xf32>
    %10 = arith.maximumf %8, %9 : vector<36x128xf32>
    %c0_6 = arith.constant 0 : index
    %c0_7 = arith.constant 0 : index
    %c0_8 = arith.constant 0 : index
    %11 = vector.load %arg4[%c0_6, %c0_7, %c0_8] : memref<1x36x128xf32, #tpu.memory_space<vmem>>, vector<1x36x128xf32>
    %12 = vector.shape_cast %11 : vector<1x36x128xf32> to vector<36x128xf32>
    %13 = vector.shape_cast %10 : vector<36x128xf32> to vector<1x36x128xf32>
    tpu.vector_store %arg4[%c0_6, %c0_7, %c0_8], %13 {strides = array<i32>} : memref<1x36x128xf32, #tpu.memory_space<vmem>>, vector<1x36x128xf32>,
    return
  }
  func.func @transform_0(%arg0: i32) -> (i32, i32, i32) {
    %c0_i32 = arith.constant 0 : i32
    %c0_i32_0 = arith.constant 0 : i32
    %c0_i32_1 = arith.constant 0 : i32
    return %arg0, %c0_i32, %c0_i32_0 : i32, i32, i32
  }
  func.func @transform_1(%arg0: i32) -> (i32, i32) {
    %c0_i32 = arith.constant 0 : i32
    %c0_i32_0 = arith.constant 0 : i32
    %c0_i32_1 = arith.constant 0 : i32
    return %c0_i32, %c0_i32_0 : i32, i32
  }
  func.func @transform_2(%arg0: i32) -> (i32, i32) {
    %c0_i32 = arith.constant 0 : i32
    %c0_i32_0 = arith.constant 0 : i32
    %c0_i32_1 = arith.constant 0 : i32
    return %c0_i32, %c0_i32_0 : i32, i32
  }
  func.func @transform_3(%arg0: i32) -> (i32, i32, i32) {
    %c0_i32 = arith.constant 0 : i32
    %c0_i32_0 = arith.constant 0 : i32
    %c0_i32_1 = arith.constant 0 : i32
    return %arg0, %c0_i32, %c0_i32_0 : i32, i32, i32
  }
}

</mosaic_0001>

<llo_original>
// kernel: tile.8
$region0: #{tile.8}
  #allocation0 [shape = 's32[1]{0}', space=sflag, size = 0x4, scoped, tag = 'scoped memory for tile.8']
  %s0 = inlined_call_operand.vmem [shape: f32[128], index: 0, kind: input, shape index: {}]
  %s1 = inlined_call_operand.vmem [shape: f32[4,128], index: 1, kind: output, shape index: {}]
  // Predicated region
  $region2: #{tile.8} parent=0 // pred_check
    _
  $region3: #{tile.8} parent=0 // pred_check_branch
    %3 = sbr.rel (0) target = $region5
  $region4: #{tile.8} parent=0 // pred_region
    _
  $region5: #{tile.8} parent=0 // pred_fallthru
    _
  %v4 = vld [vmem:[%s0] ss:$0 sm:$0xff]
  %5 = vst [vmem:[%s1] sm:$0xf] %v4

// kernel: unet_expanding_block_forward.5
$region0: #{unet_expanding_block_forward.5}
  #allocation0 [shape = 'u32[]', space=smem, size = 0x4, offset = 0x4, fixed_abs, tag = 'smem constant byte address 0x4 - core index']
  #allocation1 [shape = 'u32[144,128]{1,0:T(1,128)}', space=vmem, size = 0x12000, scoped, tag = 'internal scratch']
  %s0 = inlined_call_operand.vmem [shape: bf16[2,7,7,128], index: 0, kind: input, shape index: {}]
  %s1 = inlined_call_operand.vmem [shape: bf16[512,512], index: 1, kind: input, shape index: {}]
  %s2 = inlined_call_operand.vmem [shape: f32[1,512], index: 2, kind: input, shape index: {}]
  %s3 = inlined_call_operand.vmem [shape: bf16[2,36,512], index: 3, kind: output, shape index: {}]
  %s4 = sld [smem:[#allocation0]]
  $region45: #{unet_expanding_block_forward.5} parent=0
    _
  %s6 = ssub.s32 1, %s4
  %s7 = scalar_select 0, %s6, %s4
  loop: start=0, step=1, limit=4
  $region2: #{unet_expanding_block_forward.5} parent=0 // loop_pre_header
    _
  $region3: #{unet_expanding_block_forward.5} parent=0 // loop_header
    %s9 = sphi 0, %s13
    %p10 = scmp.ge.s32.totalorder %s9, 4
    %s19 = sphi 0, %s21
    %s22 = sphi 0, %s19
    %s23 = sphi 0, %s22
    %s39 = sphi 0, %s23
    %s43 = sphi 0, %s43
    %s45 = sphi 0, %s43
    %s46 = sphi 0, %s45
    %s60 = sphi 0, %s46
    %s64 = sphi 0, %s64
    %s66 = sphi 0, %s64
    %s67 = sphi 0, %s66
    %s81 = sphi 0, %s67
    %s87 = sphi 0, %s89
    %s90 = sphi 0, %s87
    %s91 = sphi 0, %s90
    %s107 = sphi 0, %s91
  $region4: #{unet_expanding_block_forward.5} parent=0 // loop_header_branch
    %12 = sbr.rel (%p10) target = $region8
  $region5: #{unet_expanding_block_forward.5} parent=0 // loop_body
    %s14 = ssub.s32 %s9, 1
    %s15 = ssub.s32 %s9, 2
    %s16 = sadd.s32 %s9, 1
    %s17 = ssub.s32 %s9, %s16
    %p18 = scmp.eq.s32.totalorder %s17, 0
    %s20 = sadd.s32 %s19, 1
    %s21 = scalar_select %p18, %s19, %s20
    %p24 = pneg %p18
    %p25 = scmp.eq.s32.totalorder %s9, 1
    %p26 = por %p24, %p25
    %p27 = scmp.ne.s32.totalorder %s19, %s22
    %p28 = scmp.eq.s32.totalorder %s9, 0
    %p29 = por %p27, %p28
    %p30 = scmp.ne.s32.totalorder %s19, %s22
    %p31 = scmp.eq.s32.totalorder %s14, 1
    %p32 = por %p30, %p31
    %p33 = scmp.ne.s32.totalorder %s22, %s23
    %p34 = scmp.eq.s32.totalorder %s14, 0
    %p35 = por %p33, %p34
    %p36 = scmp.ne.s32.totalorder %s22, %s23
    %p37 = scmp.eq.s32.totalorder %s15, 1
    %p38 = por %p36, %p37
    %p40 = scmp.ne.s32.totalorder %s23, %s39
    %p41 = scmp.eq.s32.totalorder %s15, 0
    %p42 = por %p40, %p41
    %s44 = sadd.s32 %s43, 1
    %p47 = scmp.eq.s32.totalorder %s9, 1
    %p48 = scmp.ne.s32.totalorder %s43, %s45
    %p49 = scmp.eq.s32.totalorder %s9, 0
    %p50 = por %p48, %p49
    %p51 = scmp.ne.s32.totalorder %s43, %s45
    %p52 = scmp.eq.s32.totalorder %s14, 1
    %p53 = por %p51, %p52
    %p54 = scmp.ne.s32.totalorder %s45, %s46
    %p55 = scmp.eq.s32.totalorder %s14, 0
    %p56 = por %p54, %p55
    %p57 = scmp.ne.s32.totalorder %s45, %s46
    %p58 = scmp.eq.s32.totalorder %s15, 1
    %p59 = por %p57, %p58
    %p61 = scmp.ne.s32.totalorder %s46, %s60
    %p62 = scmp.eq.s32.totalorder %s15, 0
    %p63 = por %p61, %p62
    %s65 = sadd.s32 %s64, 1
    %p68 = scmp.eq.s32.totalorder %s9, 1
    %p69 = scmp.ne.s32.totalorder %s64, %s66
    %p70 = scmp.eq.s32.totalorder %s9, 0
    %p71 = por %p69, %p70
    %p72 = scmp.ne.s32.totalorder %s64, %s66
    %p73 = scmp.eq.s32.totalorder %s14, 1
    %p74 = por %p72, %p73
    %p75 = scmp.ne.s32.totalorder %s66, %s67
    %p76 = scmp.eq.s32.totalorder %s14, 0
    %p77 = por %p75, %p76
    %p78 = scmp.ne.s32.totalorder %s66, %s67
    %p79 = scmp.eq.s32.totalorder %s15, 1
    %p80 = por %p78, %p79
    %p82 = scmp.ne.s32.totalorder %s67, %s81
    %p83 = scmp.eq.s32.totalorder %s15, 0
    %p84 = por %p82, %p83
    %s85 = ssub.s32 %s9, %s16
    %p86 = scmp.eq.s32.totalorder %s85, 0
    %s88 = sadd.s32 %s87, 1
    %s89 = scalar_select %p86, %s87, %s88
    %p92 = pneg %p86
    %p93 = scmp.eq.s32.totalorder %s9, 1
    %p94 = por %p92, %p93
    %p95 = scmp.ne.s32.totalorder %s87, %s90
    %p96 = scmp.eq.s32.totalorder %s9, 0
    %p97 = por %p95, %p96
    %p98 = scmp.ne.s32.totalorder %s87, %s90
    %p99 = scmp.eq.s32.totalorder %s14, 1
    %p100 = por %p98, %p99
    %p101 = scmp.ne.s32.totalorder %s90, %s91
    %p102 = scmp.eq.s32.totalorder %s14, 0
    %p103 = por %p101, %p102
    %p104 = scmp.ne.s32.totalorder %s90, %s91
    %p105 = scmp.eq.s32.totalorder %s15, 1
    %p106 = por %p104, %p105
    %p108 = scmp.ne.s32.totalorder %s91, %s107
    %p109 = scmp.eq.s32.totalorder %s15, 0
    %p110 = por %p108, %p109
    %p111 = scmp.le.s32.totalorder 1, %s9
    %p112 = scmp.lt.s32.totalorder %s9, 3
    %p113 = pnand %p111, %p112
    %p114 = pneg %p113
    // Predicated region
    $region9: #{unet_expanding_block_forward.5} parent=5 // pred_check
      _
    $region10: #{unet_expanding_block_forward.5} parent=5 // pred_check_branch
      %116 = sbr.rel (%p113) target = $region12
    $region11: #{unet_expanding_block_forward.5} parent=5 // pred_region
      %s117 = ssub.s32 %s9, 1
      // Predicated region
      $region13: #{unet_expanding_block_forward.5} parent=11 // pred_check
        %p118 = pneg %p56
      $region14: #{unet_expanding_block_forward.5} parent=11 // pred_check_branch
        %120 = sbr.rel (%p118) target = $region16
      $region15: #{unet_expanding_block_forward.5} parent=11 // pred_region
        _
      $region16: #{unet_expanding_block_forward.5} parent=11 // pred_fallthru
        _
      // Predicated region
      $region17: #{unet_expanding_block_forward.5} parent=11 // pred_check
        %p121 = pneg %p77
      $region18: #{unet_expanding_block_forward.5} parent=11 // pred_check_branch
        %123 = sbr.rel (%p121) target = $region20
      $region19: #{unet_expanding_block_forward.5} parent=11 // pred_region
        _
      $region20: #{unet_expanding_block_forward.5} parent=11 // pred_fallthru
        _
    $region12: #{unet_expanding_block_forward.5} parent=5 // pred_fallthru
      _
    %p124 = scmp.lt.s32.totalorder %s9, 2
    // Predicated region
    $region21: #{unet_expanding_block_forward.5} parent=5 // pred_check
      %p125 = pneg %p124
    $region22: #{unet_expanding_block_forward.5} parent=5 // pred_check_branch
      %127 = sbr.rel (%p125) target = $region24
    $region23: #{unet_expanding_block_forward.5} parent=5 // pred_region
      // Predicated region
      $region25: #{unet_expanding_block_forward.5} parent=23 // pred_check
        %p128 = pneg %p29
      $region26: #{unet_expanding_block_forward.5} parent=23 // pred_check_branch
        %130 = sbr.rel (%p128) target = $region28
      $region27: #{unet_expanding_block_forward.5} parent=23 // pred_region
        %p131 = scmp.lt.s32.totalorder %s9, 1
        %s132 = scalar_select %p131, %s9, 1
        %s133 = smul.addr %s132, 7
        %s134 = smul.addr %s133, 4
        %s135 = scalar_lea.vmem %s0, %s134
      $region28: #{unet_expanding_block_forward.5} parent=23 // pred_fallthru
        _
    $region24: #{unet_expanding_block_forward.5} parent=5 // pred_fallthru
      _
    %p136 = scmp.le.s32.totalorder 1, %s9
    %p137 = scmp.lt.s32.totalorder %s9, 3
    %p138 = pnand %p136, %p137
    %p139 = pneg %p138
    // Predicated region
    $region29: #{unet_expanding_block_forward.5} parent=5 // pred_check
      _
    $region30: #{unet_expanding_block_forward.5} parent=5 // pred_check_branch
      %141 = sbr.rel (%p138) target = $region32
    $region31: #{unet_expanding_block_forward.5} parent=5 // pred_region
      %s142 = ssub.s32 %s9, 1
      %p143 = scmp.lt.s32.totalorder %s14, 1
      %s144 = scalar_select %p143, %s14, 1
      %s145 = smul.addr %s144, 7
      %s146 = smul.addr %s145, 4
      %s147 = scalar_lea.vmem %s0, %s146
      %p148 = pneg %p35
      %p149 = pneg %p32
      %p150 = pneg %p56
      %p151 = pneg %p53
      %p152 = pneg %p77
      %p153 = pneg %p74
      %p154 = pneg %p103
      %p155 = pneg %p100
      %p156 = scmp.lt.s32.totalorder %s14, 1
      %s157 = scalar_select %p156, %s14, 1
      %s158 = smul.addr %s157, 20
      %s159 = smul.addr %s158, 4
      %s160 = scalar_lea.vmem %s3, %s159
      %p161 = scmp.lt.s32.totalorder %s14, 1
      %s162 = scalar_select %p161, %s14, 1
      %s163 = smul.addr %s162, 7
      %s164 = smul.addr %s163, 4
      %s165 = scalar_lea.vmem %s0, %s164
      %p166 = scmp.lt.s32.totalorder %s14, 1
      %s167 = scalar_select %p166, %s14, 1
      %s168 = smul.addr %s167, 20
      %s169 = smul.addr %s168, 4
      %s170 = scalar_lea.vmem %s3, %s169
      %v171 = vld [vmem:[%s165] sm:$0xf]
      %v172 = vld [vmem:[%s165 + $0x4] sm:$0xf]
      %v173 = vld [vmem:[%s165 + $0x8] sm:$0xf]
      %v174 = vld [vmem:[%s165 + $0xc] sm:$0xf]
      %v175 = vld [vmem:[%s165 + $0x10] sm:$0xf]
      %v176 = vld [vmem:[%s165 + $0x14] sm:$0xf]
      %v177 = vld [vmem:[%s165 + $0x18] sm:$0xf]
      %v184 = vunpack.c.l.b16 %v171
      %v185 = vunpack.c.l.b16 %v172
      %v186 = vunpack.c.l.b16 %v173
      %v187 = vunpack.c.l.b16 %v174
      %v188 = vunpack.c.l.b16 %v175
      %v189 = vunpack.c.l.b16 %v176
      %v190 = vpack.c.b16 %v184, %v184
      %v191 = vpack.c.b16 %v185, %v185
      %v192 = vpack.c.b16 %v186, %v186
      %v193 = vpack.c.b16 %v187, %v187
      %v194 = vpack.c.b16 %v188, %v188
      %v195 = vpack.c.b16 %v189, %v189
      %v197 = vshrl.u32 %v190, 16
      %v199 = vshll.u32 %v190, 16
      %v201 = vrot.slane %v199, 1
      %v202 = vor.u32 %v197, %v201
      %v204 = vshrl.u32 %v191, 16
      %v206 = vshll.u32 %v191, 16
      %v208 = vrot.slane %v206, 1
      %v209 = vor.u32 %v204, %v208
      %v211 = vshrl.u32 %v192, 16
      %v213 = vshll.u32 %v192, 16
      %v215 = vrot.slane %v213, 1
      %v216 = vor.u32 %v211, %v215
      %v218 = vshrl.u32 %v193, 16
      %v220 = vshll.u32 %v193, 16
      %v222 = vrot.slane %v220, 1
      %v223 = vor.u32 %v218, %v222
      %v225 = vshrl.u32 %v194, 16
      %v227 = vshll.u32 %v194, 16
      %v229 = vrot.slane %v227, 1
      %v230 = vor.u32 %v225, %v229
      %v232 = vshrl.u32 %v195, 16
      %v234 = vshll.u32 %v195, 16
      %v236 = vrot.slane %v234, 1
      %v237 = vor.u32 %v232, %v236
      %v239 = vunpack.c.l.b16 %v177
      %v240 = vpack.c.b16 %v239, %v239
      %v242 = vshrl.u32 %v240, 16
      %v244 = vshll.u32 %v240, 16
      %v246 = vrot.slane %v244, 1
      %v247 = vor.u32 %v242, %v246
      %v248 = vcombine.low %v171, %v202
      %v249 = vcombine.low %v172, %v209
      %v251 = vunpack.c.l.s4 1966171168
      %v252 = vunpack.c.0.s8 %v251
      %v253 = vlaneseq
      %v254 = vshrl.u32 %v253, 7
      %v255 = vsub.s32 %v252, %v254
      %v256 = vrot.slane %v248, %v255
      %v258 = vunpack.c.l.s4 1966171168
      %v259 = vunpack.c.0.s8 %v258
      %v260 = vlaneseq
      %v261 = vshrl.u32 %v260, 7
      %v262 = vsub.s32 %v259, %v261
      %v263 = vrot.slane %v249, %v262
      %v264 = vcombine.low %v256, %v263
      %v265 = vcombine.high %v256, %v263
      %v267 = vunpack.c.l.s4 1966171168
      %v268 = vunpack.c.0.s8 %v267
      %v269 = vlaneseq
      %v270 = vshrl.u32 %v269, 7
      %v271 = vsub.s32 %v268, %v270
      %v272 = vrot.slane %v264, %v271
      %v274 = vunpack.c.l.s4 1966171168
      %v275 = vunpack.c.0.s8 %v274
      %v276 = vlaneseq
      %v277 = vshrl.u32 %v276, 7
      %v278 = vsub.s32 %v275, %v277
      %v279 = vrot.slane %v265, %v278
      %v280 = vcombine.high %v272, %v272
      %v281 = vcombine.low %v173, %v216
      %v283 = vunpack.c.l.s4 1966171168
      %v284 = vunpack.c.0.s8 %v283
      %v285 = vlaneseq
      %v286 = vshrl.u32 %v285, 7
      %v287 = vsub.s32 %v284, %v286
      %v288 = vrot.slane %v281, %v287
      %v289 = vcombine.low %v263, %v288
      %v290 = vcombine.high %v263, %v288
      %v292 = vunpack.c.l.s4 1966171168
      %v293 = vunpack.c.0.s8 %v292
      %v294 = vlaneseq
      %v295 = vshrl.u32 %v294, 7
      %v296 = vsub.s32 %v293, %v295
      %v297 = vrot.slane %v289, %v296
      %v299 = vunpack.c.l.s4 1966171168
      %v300 = vunpack.c.0.s8 %v299
      %v301 = vlaneseq
      %v302 = vshrl.u32 %v301, 7
      %v303 = vsub.s32 %v300, %v302
      %v304 = vrot.slane %v290, %v303
      %v305 = vcombine.high %v297, %v297
      %v306 = vcombine.low %v174, %v223
      %v308 = vunpack.c.l.s4 1966171168
      %v309 = vunpack.c.0.s8 %v308
      %v310 = vlaneseq
      %v311 = vshrl.u32 %v310, 7
      %v312 = vsub.s32 %v309, %v311
      %v313 = vrot.slane %v306, %v312
      %v314 = vcombine.low %v288, %v313
      %v315 = vcombine.high %v288, %v313
      %v317 = vunpack.c.l.s4 1966171168
      %v318 = vunpack.c.0.s8 %v317
      %v319 = vlaneseq
      %v320 = vshrl.u32 %v319, 7
      %v321 = vsub.s32 %v318, %v320
      %v322 = vrot.slane %v314, %v321
      %v324 = vunpack.c.l.s4 1966171168
      %v325 = vunpack.c.0.s8 %v324
      %v326 = vlaneseq
      %v327 = vshrl.u32 %v326, 7
      %v328 = vsub.s32 %v325, %v327
      %v329 = vrot.slane %v315, %v328
      %v330 = vcombine.high %v322, %v322
      %v331 = vcombine.low %v175, %v230
      %v333 = vunpack.c.l.s4 1966171168
      %v334 = vunpack.c.0.s8 %v333
      %v335 = vlaneseq
      %v336 = vshrl.u32 %v335, 7
      %v337 = vsub.s32 %v334, %v336
      %v338 = vrot.slane %v331, %v337
      %v339 = vcombine.low %v313, %v338
      %v340 = vcombine.high %v313, %v338
      %v342 = vunpack.c.l.s4 1966171168
      %v343 = vunpack.c.0.s8 %v342
      %v344 = vlaneseq
      %v345 = vshrl.u32 %v344, 7
      %v346 = vsub.s32 %v343, %v345
      %v347 = vrot.slane %v339, %v346
      %v349 = vunpack.c.l.s4 1966171168
      %v350 = vunpack.c.0.s8 %v349
      %v351 = vlaneseq
      %v352 = vshrl.u32 %v351, 7
      %v353 = vsub.s32 %v350, %v352
      %v354 = vrot.slane %v340, %v353
      %v355 = vcombine.high %v347, %v347
      %v356 = vcombine.low %v176, %v237
      %v358 = vunpack.c.l.s4 1966171168
      %v359 = vunpack.c.0.s8 %v358
      %v360 = vlaneseq
      %v361 = vshrl.u32 %v360, 7
      %v362 = vsub.s32 %v359, %v361
      %v363 = vrot.slane %v356, %v362
      %v364 = vcombine.low %v338, %v363
      %v365 = vcombine.high %v338, %v363
      %v367 = vunpack.c.l.s4 1966171168
      %v368 = vunpack.c.0.s8 %v367
      %v369 = vlaneseq
      %v370 = vshrl.u32 %v369, 7
      %v371 = vsub.s32 %v368, %v370
      %v372 = vrot.slane %v364, %v371
      %v374 = vunpack.c.l.s4 1966171168
      %v375 = vunpack.c.0.s8 %v374
      %v376 = vlaneseq
      %v377 = vshrl.u32 %v376, 7
      %v378 = vsub.s32 %v375, %v377
      %v379 = vrot.slane %v365, %v378
      %v380 = vcombine.high %v372, %v372
      %v381 = vcombine.low %v177, %v247
      %v383 = vunpack.c.l.s4 1966171168
      %v384 = vunpack.c.0.s8 %v383
      %v385 = vlaneseq
      %v386 = vshrl.u32 %v385, 7
      %v387 = vsub.s32 %v384, %v386
      %v388 = vrot.slane %v381, %v387
      %v389 = vcombine.low %v363, %v388
      %v390 = vcombine.high %v363, %v388
      %v392 = vunpack.c.l.s4 1966171168
      %v393 = vunpack.c.0.s8 %v392
      %v394 = vlaneseq
      %v395 = vshrl.u32 %v394, 7
      %v396 = vsub.s32 %v393, %v395
      %v397 = vrot.slane %v389, %v396
      %v399 = vunpack.c.l.s4 1966171168
      %v400 = vunpack.c.0.s8 %v399
      %v401 = vlaneseq
      %v402 = vshrl.u32 %v401, 7
      %v403 = vsub.s32 %v400, %v402
      %v404 = vrot.slane %v390, %v403
      %v405 = vcombine.high %v397, %v397
      %v406 = vld [vmem:[%s1] sm:$0xff]
      %v407 = vld [vmem:[%s1 + $0x8] sm:$0xff]
      %v408 = vld [vmem:[%s1 + $0x10] sm:$0xff]
      %v409 = vld [vmem:[%s1 + $0x18] sm:$0xff]
      %v410 = vld [vmem:[%s1 + $0x20] sm:$0xff]
      %v411 = vld [vmem:[%s1 + $0x28] sm:$0xff]
      %v412 = vld [vmem:[%s1 + $0x30] sm:$0xff]
      %v413 = vld [vmem:[%s1 + $0x38] sm:$0xff]
      %v414 = vld [vmem:[%s1 + $0x40] sm:$0xff]
      %v415 = vld [vmem:[%s1 + $0x48] sm:$0xff]
      %v416 = vld [vmem:[%s1 + $0x50] sm:$0xff]
      %v417 = vld [vmem:[%s1 + $0x58] sm:$0xff]
      %v418 = vld [vmem:[%s1 + $0x60] sm:$0xff]
      %v419 = vld [vmem:[%s1 + $0x68] sm:$0xff]
      %v420 = vld [vmem:[%s1 + $0x70] sm:$0xff]
      %v421 = vld [vmem:[%s1 + $0x78] sm:$0xff]
      %v422 = vld [vmem:[%s1 + $0x80] sm:$0xff]
      %v423 = vld [vmem:[%s1 + $0x88] sm:$0xff]
      %v424 = vld [vmem:[%s1 + $0x90] sm:$0xff]
      %v425 = vld [vmem:[%s1 + $0x98] sm:$0xff]
      %v426 = vld [vmem:[%s1 + $0xa0] sm:$0xff]
      %v427 = vld [vmem:[%s1 + $0xa8] sm:$0xff]
      %v428 = vld [vmem:[%s1 + $0xb0] sm:$0xff]
      %v429 = vld [vmem:[%s1 + $0xb8] sm:$0xff]
      %v430 = vld [vmem:[%s1 + $0xc0] sm:$0xff]
      %v431 = vld [vmem:[%s1 + $0xc8] sm:$0xff]
      %v432 = vld [vmem:[%s1 + $0xd0] sm:$0xff]
      %v433 = vld [vmem:[%s1 + $0xd8] sm:$0xff]
      %v434 = vld [vmem:[%s1 + $0xe0] sm:$0xff]
      %v435 = vld [vmem:[%s1 + $0xe8] sm:$0xff]
      %v436 = vld [vmem:[%s1 + $0xf0] sm:$0xff]
      %v437 = vld [vmem:[%s1 + $0xf8] sm:$0xff]
      %v438 = vld [vmem:[%s1 + $0x100] sm:$0xff]
      %v439 = vld [vmem:[%s1 + $0x108] sm:$0xff]
      %v440 = vld [vmem:[%s1 + $0x110] sm:$0xff]
      %v441 = vld [vmem:[%s1 + $0x118] sm:$0xff]
      %v442 = vld [vmem:[%s1 + $0x120] sm:$0xff]
      %v443 = vld [vmem:[%s1 + $0x128] sm:$0xff]
      %v444 = vld [vmem:[%s1 + $0x130] sm:$0xff]
      %v445 = vld [vmem:[%s1 + $0x138] sm:$0xff]
      %v446 = vld [vmem:[%s1 + $0x140] sm:$0xff]
      %v447 = vld [vmem:[%s1 + $0x148] sm:$0xff]
      %v448 = vld [vmem:[%s1 + $0x150] sm:$0xff]
      %v449 = vld [vmem:[%s1 + $0x158] sm:$0xff]
      %v450 = vld [vmem:[%s1 + $0x160] sm:$0xff]
      %v451 = vld [vmem:[%s1 + $0x168] sm:$0xff]
      %v452 = vld [vmem:[%s1 + $0x170] sm:$0xff]
      %v453 = vld [vmem:[%s1 + $0x178] sm:$0xff]
      %v454 = vld [vmem:[%s1 + $0x180] sm:$0xff]
      %v455 = vld [vmem:[%s1 + $0x188] sm:$0xff]
      %v456 = vld [vmem:[%s1 + $0x190] sm:$0xff]
      %v457 = vld [vmem:[%s1 + $0x198] sm:$0xff]
      %v458 = vld [vmem:[%s1 + $0x1a0] sm:$0xff]
      %v459 = vld [vmem:[%s1 + $0x1a8] sm:$0xff]
      %v460 = vld [vmem:[%s1 + $0x1b0] sm:$0xff]
      %v461 = vld [vmem:[%s1 + $0x1b8] sm:$0xff]
      %v462 = vld [vmem:[%s1 + $0x1c0] sm:$0xff]
      %v463 = vld [vmem:[%s1 + $0x1c8] sm:$0xff]
      %v464 = vld [vmem:[%s1 + $0x1d0] sm:$0xff]
      %v465 = vld [vmem:[%s1 + $0x1d8] sm:$0xff]
      %v466 = vld [vmem:[%s1 + $0x1e0] sm:$0xff]
      %v467 = vld [vmem:[%s1 + $0x1e8] sm:$0xff]
      %v468 = vld [vmem:[%s1 + $0x1f0] sm:$0xff]
      %v469 = vld [vmem:[%s1 + $0x1f8] sm:$0xff]
      %v470 = vld [vmem:[%s1 + $0x200] sm:$0xff]
      %v471 = vld [vmem:[%s1 + $0x208] sm:$0xff]
      %v472 = vld [vmem:[%s1 + $0x210] sm:$0xff]
      %v473 = vld [vmem:[%s1 + $0x218] sm:$0xff]
      %v474 = vld [vmem:[%s1 + $0x220] sm:$0xff]
      %v475 = vld [vmem:[%s1 + $0x228] sm:$0xff]
      %v476 = vld [vmem:[%s1 + $0x230] sm:$0xff]
      %v477 = vld [vmem:[%s1 + $0x238] sm:$0xff]
      %v478 = vld [vmem:[%s1 + $0x240] sm:$0xff]
      %v479 = vld [vmem:[%s1 + $0x248] sm:$0xff]
      %v480 = vld [vmem:[%s1 + $0x250] sm:$0xff]
      %v481 = vld [vmem:[%s1 + $0x258] sm:$0xff]
      %v482 = vld [vmem:[%s1 + $0x260] sm:$0xff]
      %v483 = vld [vmem:[%s1 + $0x268] sm:$0xff]
      %v484 = vld [vmem:[%s1 + $0x270] sm:$0xff]
      %v485 = vld [vmem:[%s1 + $0x278] sm:$0xff]
      %v486 = vld [vmem:[%s1 + $0x280] sm:$0xff]
      %v487 = vld [vmem:[%s1 + $0x288] sm:$0xff]
      %v488 = vld [vmem:[%s1 + $0x290] sm:$0xff]
      %v489 = vld [vmem:[%s1 + $0x298] sm:$0xff]
      %v490 = vld [vmem:[%s1 + $0x2a0] sm:$0xff]
      %v491 = vld [vmem:[%s1 + $0x2a8] sm:$0xff]
      %v492 = vld [vmem:[%s1 + $0x2b0] sm:$0xff]
      %v493 = vld [vmem:[%s1 + $0x2b8] sm:$0xff]
      %v494 = vld [vmem:[%s1 + $0x2c0] sm:$0xff]
      %v495 = vld [vmem:[%s1 + $0x2c8] sm:$0xff]
      %v496 = vld [vmem:[%s1 + $0x2d0] sm:$0xff]
      %v497 = vld [vmem:[%s1 + $0x2d8] sm:$0xff]
      %v498 = vld [vmem:[%s1 + $0x2e0] sm:$0xff]
      %v499 = vld [vmem:[%s1 + $0x2e8] sm:$0xff]
      %v500 = vld [vmem:[%s1 + $0x2f0] sm:$0xff]
      %v501 = vld [vmem:[%s1 + $0x2f8] sm:$0xff]
      %v502 = vld [vmem:[%s1 + $0x300] sm:$0xff]
      %v503 = vld [vmem:[%s1 + $0x308] sm:$0xff]
      %v504 = vld [vmem:[%s1 + $0x310] sm:$0xff]
      %v505 = vld [vmem:[%s1 + $0x318] sm:$0xff]
      %v506 = vld [vmem:[%s1 + $0x320] sm:$0xff]
      %v507 = vld [vmem:[%s1 + $0x328] sm:$0xff]
      %v508 = vld [vmem:[%s1 + $0x330] sm:$0xff]
      %v509 = vld [vmem:[%s1 + $0x338] sm:$0xff]
      %v510 = vld [vmem:[%s1 + $0x340] sm:$0xff]
      %v511 = vld [vmem:[%s1 + $0x348] sm:$0xff]
      %v512 = vld [vmem:[%s1 + $0x350] sm:$0xff]
      %v513 = vld [vmem:[%s1 + $0x358] sm:$0xff]
      %v514 = vld [vmem:[%s1 + $0x360] sm:$0xff]
      %v515 = vld [vmem:[%s1 + $0x368] sm:$0xff]
      %v516 = vld [vmem:[%s1 + $0x370] sm:$0xff]
      %v517 = vld [vmem:[%s1 + $0x378] sm:$0xff]
      %v518 = vld [vmem:[%s1 + $0x380] sm:$0xff]
      %v519 = vld [vmem:[%s1 + $0x388] sm:$0xff]
      %v520 = vld [vmem:[%s1 + $0x390] sm:$0xff]
      %v521 = vld [vmem:[%s1 + $0x398] sm:$0xff]
      %v522 = vld [vmem:[%s1 + $0x3a0] sm:$0xff]
      %v523 = vld [vmem:[%s1 + $0x3a8] sm:$0xff]
      %v524 = vld [vmem:[%s1 + $0x3b0] sm:$0xff]
      %v525 = vld [vmem:[%s1 + $0x3b8] sm:$0xff]
      %v526 = vld [vmem:[%s1 + $0x3c0] sm:$0xff]
      %v527 = vld [vmem:[%s1 + $0x3c8] sm:$0xff]
      %v528 = vld [vmem:[%s1 + $0x3d0] sm:$0xff]
      %v529 = vld [vmem:[%s1 + $0x3d8] sm:$0xff]
      %v530 = vld [vmem:[%s1 + $0x3e0] sm:$0xff]
      %v531 = vld [vmem:[%s1 + $0x3e8] sm:$0xff]
      %v532 = vld [vmem:[%s1 + $0x3f0] sm:$0xff]
      %v533 = vld [vmem:[%s1 + $0x3f8] sm:$0xff]
      %v534 = vld [vmem:[%s2] sm:$0xf]
      %v536 = vlaneseq
      %v537 = vshrl.u32 %v536, 7
      %v538 = vsub.s32 0, %v537
      %v539 = vrot.slane %v534, %v538
      %v540 = vlaneseq
      %v541 = vshrl.u32 %v540, 7
      %v542 = vsub.s32 1, %v541
      %v543 = vrot.slane %v534, %v542
      %v544 = vlaneseq
      %v545 = vshrl.u32 %v544, 7
      %v546 = vsub.s32 2, %v545
      %v547 = vrot.slane %v534, %v546
      %v548 = vlaneseq
      %v549 = vshrl.u32 %v548, 7
      %v550 = vsub.s32 3, %v549
      %v551 = vrot.slane %v534, %v550
      %v556 = vcombine.low %v272, %v279
      %v557 = vcombine.low %v280, %v297
      %v558 = vcombine.low %v304, %v305
      %v559 = vcombine.low %v322, %v329
      %v561 = vunpack.c.l.s4 1966171168
      %v562 = vunpack.c.0.s8 %v561
      %v563 = vlaneseq
      %v564 = vshrl.u32 %v563, 7
      %v565 = vsub.s32 %v562, %v564
      %v566 = vrot.slane %v556, %v565
      %v568 = vunpack.c.l.s4 1966171168
      %v569 = vunpack.c.0.s8 %v568
      %v570 = vlaneseq
      %v571 = vshrl.u32 %v570, 7
      %v572 = vsub.s32 %v569, %v571
      %v573 = vrot.slane %v557, %v572
      %v575 = vunpack.c.l.s4 1966171168
      %v576 = vunpack.c.0.s8 %v575
      %v577 = vlaneseq
      %v578 = vshrl.u32 %v577, 7
      %v579 = vsub.s32 %v576, %v578
      %v580 = vrot.slane %v558, %v579
      %v582 = vunpack.c.l.s4 1966171168
      %v583 = vunpack.c.0.s8 %v582
      %v584 = vlaneseq
      %v585 = vshrl.u32 %v584, 7
      %v586 = vsub.s32 %v583, %v585
      %v587 = vrot.slane %v559, %v586
      %v588 = vcombine.low %v566, %v573
      %v589 = vcombine.high %v566, %v573
      %v590 = vcombine.low %v580, %v587
      %v591 = vcombine.high %v580, %v587
      %v593 = vunpack.c.l.s4 1966171168
      %v594 = vunpack.c.0.s8 %v593
      %v595 = vlaneseq
      %v596 = vshrl.u32 %v595, 7
      %v597 = vsub.s32 %v594, %v596
      %v598 = vrot.slane %v588, %v597
      %v600 = vunpack.c.l.s4 1966171168
      %v601 = vunpack.c.0.s8 %v600
      %v602 = vlaneseq
      %v603 = vshrl.u32 %v602, 7
      %v604 = vsub.s32 %v601, %v603
      %v605 = vrot.slane %v589, %v604
      %v607 = vunpack.c.l.s4 1966171168
      %v608 = vunpack.c.0.s8 %v607
      %v609 = vlaneseq
      %v610 = vshrl.u32 %v609, 7
      %v611 = vsub.s32 %v608, %v610
      %v612 = vrot.slane %v590, %v611
      %v614 = vunpack.c.l.s4 1966171168
      %v615 = vunpack.c.0.s8 %v614
      %v616 = vlaneseq
      %v617 = vshrl.u32 %v616, 7
      %v618 = vsub.s32 %v615, %v617
      %v619 = vrot.slane %v591, %v618
      %v620 = vcombine.low %v598, %v612
      %v621 = vcombine.high %v598, %v612
      %v622 = vcombine.low %v605, %v619
      %v623 = vcombine.high %v605, %v619
      %v624 = vcombine.low %v330, %v347
      %v625 = vcombine.low %v354, %v355
      %v626 = vcombine.low %v372, %v379
      %v627 = vcombine.low %v380, %v397
      %v629 = vunpack.c.l.s4 1966171168
      %v630 = vunpack.c.0.s8 %v629
      %v631 = vlaneseq
      %v632 = vshrl.u32 %v631, 7
      %v633 = vsub.s32 %v630, %v632
      %v634 = vrot.slane %v624, %v633
      %v636 = vunpack.c.l.s4 1966171168
      %v637 = vunpack.c.0.s8 %v636
      %v638 = vlaneseq
      %v639 = vshrl.u32 %v638, 7
      %v640 = vsub.s32 %v637, %v639
      %v641 = vrot.slane %v625, %v640
      %v643 = vunpack.c.l.s4 1966171168
      %v644 = vunpack.c.0.s8 %v643
      %v645 = vlaneseq
      %v646 = vshrl.u32 %v645, 7
      %v647 = vsub.s32 %v644, %v646
      %v648 = vrot.slane %v626, %v647
      %v650 = vunpack.c.l.s4 1966171168
      %v651 = vunpack.c.0.s8 %v650
      %v652 = vlaneseq
      %v653 = vshrl.u32 %v652, 7
      %v654 = vsub.s32 %v651, %v653
      %v655 = vrot.slane %v627, %v654
      %v656 = vcombine.low %v634, %v641
      %v657 = vcombine.high %v634, %v641
      %v658 = vcombine.low %v648, %v655
      %v659 = vcombine.high %v648, %v655
      %v661 = vunpack.c.l.s4 1966171168
      %v662 = vunpack.c.0.s8 %v661
      %v663 = vlaneseq
      %v664 = vshrl.u32 %v663, 7
      %v665 = vsub.s32 %v662, %v664
      %v666 = vrot.slane %v656, %v665
      %v668 = vunpack.c.l.s4 1966171168
      %v669 = vunpack.c.0.s8 %v668
      %v670 = vlaneseq
      %v671 = vshrl.u32 %v670, 7
      %v672 = vsub.s32 %v669, %v671
      %v673 = vrot.slane %v657, %v672
      %v675 = vunpack.c.l.s4 1966171168
      %v676 = vunpack.c.0.s8 %v675
      %v677 = vlaneseq
      %v678 = vshrl.u32 %v677, 7
      %v679 = vsub.s32 %v676, %v678
      %v680 = vrot.slane %v658, %v679
      %v682 = vunpack.c.l.s4 1966171168
      %v683 = vunpack.c.0.s8 %v682
      %v684 = vlaneseq
      %v685 = vshrl.u32 %v684, 7
      %v686 = vsub.s32 %v683, %v685
      %v687 = vrot.slane %v659, %v686
      %v688 = vcombine.low %v666, %v680
      %v689 = vcombine.high %v666, %v680
      %v690 = vcombine.low %v673, %v687
      %v691 = vcombine.high %v673, %v687
      %v692 = vcombine.low %v404, %v405
      %v694 = vunpack.c.l.s4 1966171168
      %v695 = vunpack.c.0.s8 %v694
      %v696 = vlaneseq
      %v697 = vshrl.u32 %v696, 7
      %v698 = vsub.s32 %v695, %v697
      %v699 = vrot.slane %v692, %v698
      %v700 = vcombine.high %v699, %v699
      %v702 = vunpack.c.l.s4 1966171168
      %v703 = vunpack.c.0.s8 %v702
      %v704 = vlaneseq
      %v705 = vshrl.u32 %v704, 7
      %v706 = vsub.s32 %v703, %v705
      %v707 = vrot.slane %v699, %v706
      %v709 = vunpack.c.l.s4 1966171168
      %v710 = vunpack.c.0.s8 %v709
      %v711 = vlaneseq
      %v712 = vshrl.u32 %v711, 7
      %v713 = vsub.s32 %v710, %v712
      %v714 = vrot.slane %v700, %v713
      %v715 = vcombine.high %v707, %v707
      %v716 = vcombine.high %v714, %v714
      %v857 = vunpack.c.l.b16 %v406
      %v858 = vunpack.c.h.b16 %v406
      %v859 = vunpack.c.l.b16 %v407
      %v860 = vunpack.c.h.b16 %v407
      %v861 = vunpack.c.l.b16 %v408
      %v862 = vunpack.c.h.b16 %v408
      %v863 = vunpack.c.l.b16 %v409
      %v864 = vunpack.c.h.b16 %v409
      %v865 = vunpack.c.l.b16 %v410
      %v866 = vunpack.c.h.b16 %v410
      %v867 = vunpack.c.l.b16 %v411
      %v868 = vunpack.c.h.b16 %v411
      %v869 = vunpack.c.l.b16 %v412
      %v870 = vunpack.c.h.b16 %v412
      %v871 = vunpack.c.l.b16 %v413
      %v872 = vunpack.c.h.b16 %v413
      %v873 = vunpack.c.l.b16 %v414
      %v874 = vunpack.c.h.b16 %v414
      %v875 = vunpack.c.l.b16 %v415
      %v876 = vunpack.c.h.b16 %v415
      %v877 = vunpack.c.l.b16 %v416
      %v878 = vunpack.c.h.b16 %v416
      %v879 = vunpack.c.l.b16 %v417
      %v880 = vunpack.c.h.b16 %v417
      %v881 = vunpack.c.l.b16 %v418
      %v882 = vunpack.c.h.b16 %v418
      %v883 = vunpack.c.l.b16 %v419
      %v884 = vunpack.c.h.b16 %v419
      %v885 = vunpack.c.l.b16 %v420
      %v886 = vunpack.c.h.b16 %v420
      %v887 = vunpack.c.l.b16 %v421
      %v888 = vunpack.c.h.b16 %v421
      %v889 = vunpack.c.l.b16 %v422
      %v890 = vunpack.c.h.b16 %v422
      %v891 = vunpack.c.l.b16 %v423
      %v892 = vunpack.c.h.b16 %v423
      %v893 = vunpack.c.l.b16 %v424
      %v894 = vunpack.c.h.b16 %v424
      %v895 = vunpack.c.l.b16 %v425
      %v896 = vunpack.c.h.b16 %v425
      %v897 = vunpack.c.l.b16 %v426
      %v898 = vunpack.c.h.b16 %v426
      %v899 = vunpack.c.l.b16 %v427
      %v900 = vunpack.c.h.b16 %v427
      %v901 = vunpack.c.l.b16 %v428
      %v902 = vunpack.c.h.b16 %v428
      %v903 = vunpack.c.l.b16 %v429
      %v904 = vunpack.c.h.b16 %v429
      %v905 = vunpack.c.l.b16 %v430
      %v906 = vunpack.c.h.b16 %v430
      %v907 = vunpack.c.l.b16 %v431
      %v908 = vunpack.c.h.b16 %v431
      %v909 = vunpack.c.l.b16 %v432
      %v910 = vunpack.c.h.b16 %v432
      %v911 = vunpack.c.l.b16 %v433
      %v912 = vunpack.c.h.b16 %v433
      %v913 = vunpack.c.l.b16 %v434
      %v914 = vunpack.c.h.b16 %v434
      %v915 = vunpack.c.l.b16 %v435
      %v916 = vunpack.c.h.b16 %v435
      %v917 = vunpack.c.l.b16 %v436
      %v918 = vunpack.c.h.b16 %v436
      %v919 = vunpack.c.l.b16 %v437
      %v920 = vunpack.c.h.b16 %v437
      %v921 = vunpack.c.l.b16 %v438
      %v922 = vunpack.c.h.b16 %v438
      %v923 = vunpack.c.l.b16 %v439
      %v924 = vunpack.c.h.b16 %v439
      %v925 = vunpack.c.l.b16 %v440
      %v926 = vunpack.c.h.b16 %v440
      %v927 = vunpack.c.l.b16 %v441
      %v928 = vunpack.c.h.b16 %v441
      %v929 = vunpack.c.l.b16 %v442
      %v930 = vunpack.c.h.b16 %v442
      %v931 = vunpack.c.l.b16 %v443
      %v932 = vunpack.c.h.b16 %v443
      %v933 = vunpack.c.l.b16 %v444
      %v934 = vunpack.c.h.b16 %v444
      %v935 = vunpack.c.l.b16 %v445
      %v936 = vunpack.c.h.b16 %v445
      %v937 = vunpack.c.l.b16 %v446
      %v938 = vunpack.c.h.b16 %v446
      %v939 = vunpack.c.l.b16 %v447
      %v940 = vunpack.c.h.b16 %v447
      %v941 = vunpack.c.l.b16 %v448
      %v942 = vunpack.c.h.b16 %v448
      %v943 = vunpack.c.l.b16 %v449
      %v944 = vunpack.c.h.b16 %v449
      %v945 = vunpack.c.l.b16 %v450
      %v946 = vunpack.c.h.b16 %v450
      %v947 = vunpack.c.l.b16 %v451
      %v948 = vunpack.c.h.b16 %v451
      %v949 = vunpack.c.l.b16 %v452
      %v950 = vunpack.c.h.b16 %v452
      %v951 = vunpack.c.l.b16 %v453
      %v952 = vunpack.c.h.b16 %v453
      %v953 = vunpack.c.l.b16 %v454
      %v954 = vunpack.c.h.b16 %v454
      %v955 = vunpack.c.l.b16 %v455
      %v956 = vunpack.c.h.b16 %v455
      %v957 = vunpack.c.l.b16 %v456
      %v958 = vunpack.c.h.b16 %v456
      %v959 = vunpack.c.l.b16 %v457
      %v960 = vunpack.c.h.b16 %v457
      %v961 = vunpack.c.l.b16 %v458
      %v962 = vunpack.c.h.b16 %v458
      %v963 = vunpack.c.l.b16 %v459
      %v964 = vunpack.c.h.b16 %v459
      %v965 = vunpack.c.l.b16 %v460
      %v966 = vunpack.c.h.b16 %v460
      %v967 = vunpack.c.l.b16 %v461
      %v968 = vunpack.c.h.b16 %v461
      %v969 = vunpack.c.l.b16 %v462
      %v970 = vunpack.c.h.b16 %v462
      %v971 = vunpack.c.l.b16 %v463
      %v972 = vunpack.c.h.b16 %v463
      %v973 = vunpack.c.l.b16 %v464
      %v974 = vunpack.c.h.b16 %v464
      %v975 = vunpack.c.l.b16 %v465
      %v976 = vunpack.c.h.b16 %v465
      %v977 = vunpack.c.l.b16 %v466
      %v978 = vunpack.c.h.b16 %v466
      %v979 = vunpack.c.l.b16 %v467
      %v980 = vunpack.c.h.b16 %v467
      %v981 = vunpack.c.l.b16 %v468
      %v982 = vunpack.c.h.b16 %v468
      %v983 = vunpack.c.l.b16 %v469
      %v984 = vunpack.c.h.b16 %v469
      %v985 = vunpack.c.l.b16 %v470
      %v986 = vunpack.c.h.b16 %v470
      %v987 = vunpack.c.l.b16 %v471
      %v988 = vunpack.c.h.b16 %v471
      %v989 = vunpack.c.l.b16 %v472
      %v990 = vunpack.c.h.b16 %v472
      %v991 = vunpack.c.l.b16 %v473
      %v992 = vunpack.c.h.b16 %v473
      %v993 = vunpack.c.l.b16 %v474
      %v994 = vunpack.c.h.b16 %v474
      %v995 = vunpack.c.l.b16 %v475
      %v996 = vunpack.c.h.b16 %v475
      %v997 = vunpack.c.l.b16 %v476
      %v998 = vunpack.c.h.b16 %v476
      %v999 = vunpack.c.l.b16 %v477
      %v1000 = vunpack.c.h.b16 %v477
      %v1001 = vunpack.c.l.b16 %v478
      %v1002 = vunpack.c.h.b16 %v478
      %v1003 = vunpack.c.l.b16 %v479
      %v1004 = vunpack.c.h.b16 %v479
      %v1005 = vunpack.c.l.b16 %v480
      %v1006 = vunpack.c.h.b16 %v480
      %v1007 = vunpack.c.l.b16 %v481
      %v1008 = vunpack.c.h.b16 %v481
      %v1009 = vunpack.c.l.b16 %v482
      %v1010 = vunpack.c.h.b16 %v482
      %v1011 = vunpack.c.l.b16 %v483
      %v1012 = vunpack.c.h.b16 %v483
      %v1013 = vunpack.c.l.b16 %v484
      %v1014 = vunpack.c.h.b16 %v484
      %v1015 = vunpack.c.l.b16 %v485
      %v1016 = vunpack.c.h.b16 %v485
      %v1017 = vunpack.c.l.b16 %v486
      %v1018 = vunpack.c.h.b16 %v486
      %v1019 = vunpack.c.l.b16 %v487
      %v1020 = vunpack.c.h.b16 %v487
      %v1021 = vunpack.c.l.b16 %v488
      %v1022 = vunpack.c.h.b16 %v488
      %v1023 = vunpack.c.l.b16 %v489
      %v1024 = vunpack.c.h.b16 %v489
      %v1025 = vunpack.c.l.b16 %v490
      %v1026 = vunpack.c.h.b16 %v490
      %v1027 = vunpack.c.l.b16 %v491
      %v1028 = vunpack.c.h.b16 %v491
      %v1029 = vunpack.c.l.b16 %v492
      %v1030 = vunpack.c.h.b16 %v492
      %v1031 = vunpack.c.l.b16 %v493
      %v1032 = vunpack.c.h.b16 %v493
      %v1033 = vunpack.c.l.b16 %v494
      %v1034 = vunpack.c.h.b16 %v494
      %v1035 = vunpack.c.l.b16 %v495
      %v1036 = vunpack.c.h.b16 %v495
      %v1037 = vunpack.c.l.b16 %v496
      %v1038 = vunpack.c.h.b16 %v496
      %v1039 = vunpack.c.l.b16 %v497
      %v1040 = vunpack.c.h.b16 %v497
      %v1041 = vunpack.c.l.b16 %v498
      %v1042 = vunpack.c.h.b16 %v498
      %v1043 = vunpack.c.l.b16 %v499
      %v1044 = vunpack.c.h.b16 %v499
      %v1045 = vunpack.c.l.b16 %v500
      %v1046 = vunpack.c.h.b16 %v500
      %v1047 = vunpack.c.l.b16 %v501
      %v1048 = vunpack.c.h.b16 %v501
      %v1049 = vunpack.c.l.b16 %v502
      %v1050 = vunpack.c.h.b16 %v502
      %v1051 = vunpack.c.l.b16 %v503
      %v1052 = vunpack.c.h.b16 %v503
      %v1053 = vunpack.c.l.b16 %v504
      %v1054 = vunpack.c.h.b16 %v504
      %v1055 = vunpack.c.l.b16 %v505
      %v1056 = vunpack.c.h.b16 %v505
      %v1057 = vunpack.c.l.b16 %v506
      %v1058 = vunpack.c.h.b16 %v506
      %v1059 = vunpack.c.l.b16 %v507
      %v1060 = vunpack.c.h.b16 %v507
      %v1061 = vunpack.c.l.b16 %v508
      %v1062 = vunpack.c.h.b16 %v508
      %v1063 = vunpack.c.l.b16 %v509
      %v1064 = vunpack.c.h.b16 %v509
      %v1065 = vunpack.c.l.b16 %v510
      %v1066 = vunpack.c.h.b16 %v510
      %v1067 = vunpack.c.l.b16 %v511
      %v1068 = vunpack.c.h.b16 %v511
      %v1069 = vunpack.c.l.b16 %v512
      %v1070 = vunpack.c.h.b16 %v512
      %v1071 = vunpack.c.l.b16 %v513
      %v1072 = vunpack.c.h.b16 %v513
      %v1073 = vunpack.c.l.b16 %v514
      %v1074 = vunpack.c.h.b16 %v514
      %v1075 = vunpack.c.l.b16 %v515
      %v1076 = vunpack.c.h.b16 %v515
      %v1077 = vunpack.c.l.b16 %v516
      %v1078 = vunpack.c.h.b16 %v516
      %v1079 = vunpack.c.l.b16 %v517
      %v1080 = vunpack.c.h.b16 %v517
      %v1081 = vunpack.c.l.b16 %v518
      %v1082 = vunpack.c.h.b16 %v518
      %v1083 = vunpack.c.l.b16 %v519
      %v1084 = vunpack.c.h.b16 %v519
      %v1085 = vunpack.c.l.b16 %v520
      %v1086 = vunpack.c.h.b16 %v520
      %v1087 = vunpack.c.l.b16 %v521
      %v1088 = vunpack.c.h.b16 %v521
      %v1089 = vunpack.c.l.b16 %v522
      %v1090 = vunpack.c.h.b16 %v522
      %v1091 = vunpack.c.l.b16 %v523
      %v1092 = vunpack.c.h.b16 %v523
      %v1093 = vunpack.c.l.b16 %v524
      %v1094 = vunpack.c.h.b16 %v524
      %v1095 = vunpack.c.l.b16 %v525
      %v1096 = vunpack.c.h.b16 %v525
      %v1097 = vunpack.c.l.b16 %v526
      %v1098 = vunpack.c.h.b16 %v526
      %v1099 = vunpack.c.l.b16 %v527
      %v1100 = vunpack.c.h.b16 %v527
      %v1101 = vunpack.c.l.b16 %v528
      %v1102 = vunpack.c.h.b16 %v528
      %v1103 = vunpack.c.l.b16 %v529
      %v1104 = vunpack.c.h.b16 %v529
      %v1105 = vunpack.c.l.b16 %v530
      %v1106 = vunpack.c.h.b16 %v530
      %v1107 = vunpack.c.l.b16 %v531
      %v1108 = vunpack.c.h.b16 %v531
      %v1109 = vunpack.c.l.b16 %v532
      %v1110 = vunpack.c.h.b16 %v532
      %v1111 = vunpack.c.l.b16 %v533
      %v1112 = vunpack.c.h.b16 %v533
      %v1113 = vpack.c.b16 %v861, %v857
      %v1114 = vpack.c.b16 %v862, %v858
      %v1115 = vpack.c.b16 %v863, %v859
      %v1116 = vpack.c.b16 %v864, %v860
      %v1117 = vpack.c.b16 %v869, %v865
      %v1118 = vpack.c.b16 %v870, %v866
      %v1119 = vpack.c.b16 %v871, %v867
      %v1120 = vpack.c.b16 %v872, %v868
      %v1121 = vpack.c.b16 %v877, %v873
      %v1122 = vpack.c.b16 %v878, %v874
      %v1123 = vpack.c.b16 %v879, %v875
      %v1124 = vpack.c.b16 %v880, %v876
      %v1125 = vpack.c.b16 %v885, %v881
      %v1126 = vpack.c.b16 %v886, %v882
      %v1127 = vpack.c.b16 %v887, %v883
      %v1128 = vpack.c.b16 %v888, %v884
      %v1129 = vpack.c.b16 %v893, %v889
      %v1130 = vpack.c.b16 %v894, %v890
      %v1131 = vpack.c.b16 %v895, %v891
      %v1132 = vpack.c.b16 %v896, %v892
      %v1133 = vpack.c.b16 %v901, %v897
      %v1134 = vpack.c.b16 %v902, %v898
      %v1135 = vpack.c.b16 %v903, %v899
      %v1136 = vpack.c.b16 %v904, %v900
      %v1137 = vpack.c.b16 %v909, %v905
      %v1138 = vpack.c.b16 %v910, %v906
      %v1139 = vpack.c.b16 %v911, %v907
      %v1140 = vpack.c.b16 %v912, %v908
      %v1141 = vpack.c.b16 %v917, %v913
      %v1142 = vpack.c.b16 %v918, %v914
      %v1143 = vpack.c.b16 %v919, %v915
      %v1144 = vpack.c.b16 %v920, %v916
      %v1145 = vpack.c.b16 %v925, %v921
      %v1146 = vpack.c.b16 %v926, %v922
      %v1147 = vpack.c.b16 %v927, %v923
      %v1148 = vpack.c.b16 %v928, %v924
      %v1149 = vpack.c.b16 %v933, %v929
      %v1150 = vpack.c.b16 %v934, %v930
      %v1151 = vpack.c.b16 %v935, %v931
      %v1152 = vpack.c.b16 %v936, %v932
      %v1153 = vpack.c.b16 %v941, %v937
      %v1154 = vpack.c.b16 %v942, %v938
      %v1155 = vpack.c.b16 %v943, %v939
      %v1156 = vpack.c.b16 %v944, %v940
      %v1157 = vpack.c.b16 %v949, %v945
      %v1158 = vpack.c.b16 %v950, %v946
      %v1159 = vpack.c.b16 %v951, %v947
      %v1160 = vpack.c.b16 %v952, %v948
      %v1161 = vpack.c.b16 %v957, %v953
      %v1162 = vpack.c.b16 %v958, %v954
      %v1163 = vpack.c.b16 %v959, %v955
      %v1164 = vpack.c.b16 %v960, %v956
      %v1165 = vpack.c.b16 %v965, %v961
      %v1166 = vpack.c.b16 %v966, %v962
      %v1167 = vpack.c.b16 %v967, %v963
      %v1168 = vpack.c.b16 %v968, %v964
      %v1169 = vpack.c.b16 %v973, %v969
      %v1170 = vpack.c.b16 %v974, %v970
      %v1171 = vpack.c.b16 %v975, %v971
      %v1172 = vpack.c.b16 %v976, %v972
      %v1173 = vpack.c.b16 %v981, %v977
      %v1174 = vpack.c.b16 %v982, %v978
      %v1175 = vpack.c.b16 %v983, %v979
      %v1176 = vpack.c.b16 %v984, %v980
      %v1177 = vpack.c.b16 %v989, %v985
      %v1178 = vpack.c.b16 %v990, %v986
      %v1179 = vpack.c.b16 %v991, %v987
      %v1180 = vpack.c.b16 %v992, %v988
      %v1181 = vpack.c.b16 %v997, %v993
      %v1182 = vpack.c.b16 %v998, %v994
      %v1183 = vpack.c.b16 %v999, %v995
      %v1184 = vpack.c.b16 %v1000, %v996
      %v1185 = vpack.c.b16 %v1005, %v1001
      %v1186 = vpack.c.b16 %v1006, %v1002
      %v1187 = vpack.c.b16 %v1007, %v1003
      %v1188 = vpack.c.b16 %v1008, %v1004
      %v1189 = vpack.c.b16 %v1013, %v1009
      %v1190 = vpack.c.b16 %v1014, %v1010
      %v1191 = vpack.c.b16 %v1015, %v1011
      %v1192 = vpack.c.b16 %v1016, %v1012
      %v1193 = vpack.c.b16 %v1021, %v1017
      %v1194 = vpack.c.b16 %v1022, %v1018
      %v1195 = vpack.c.b16 %v1023, %v1019
      %v1196 = vpack.c.b16 %v1024, %v1020
      %v1197 = vpack.c.b16 %v1029, %v1025
      %v1198 = vpack.c.b16 %v1030, %v1026
      %v1199 = vpack.c.b16 %v1031, %v1027
      %v1200 = vpack.c.b16 %v1032, %v1028
      %v1201 = vpack.c.b16 %v1037, %v1033
      %v1202 = vpack.c.b16 %v1038, %v1034
      %v1203 = vpack.c.b16 %v1039, %v1035
      %v1204 = vpack.c.b16 %v1040, %v1036
      %v1205 = vpack.c.b16 %v1045, %v1041
      %v1206 = vpack.c.b16 %v1046, %v1042
      %v1207 = vpack.c.b16 %v1047, %v1043
      %v1208 = vpack.c.b16 %v1048, %v1044
      %v1209 = vpack.c.b16 %v1053, %v1049
      %v1210 = vpack.c.b16 %v1054, %v1050
      %v1211 = vpack.c.b16 %v1055, %v1051
      %v1212 = vpack.c.b16 %v1056, %v1052
      %v1213 = vpack.c.b16 %v1061, %v1057
      %v1214 = vpack.c.b16 %v1062, %v1058
      %v1215 = vpack.c.b16 %v1063, %v1059
      %v1216 = vpack.c.b16 %v1064, %v1060
      %v1217 = vpack.c.b16 %v1069, %v1065
      %v1218 = vpack.c.b16 %v1070, %v1066
      %v1219 = vpack.c.b16 %v1071, %v1067
      %v1220 = vpack.c.b16 %v1072, %v1068
      %v1221 = vpack.c.b16 %v1077, %v1073
      %v1222 = vpack.c.b16 %v1078, %v1074
      %v1223 = vpack.c.b16 %v1079, %v1075
      %v1224 = vpack.c.b16 %v1080, %v1076
      %v1225 = vpack.c.b16 %v1085, %v1081
      %v1226 = vpack.c.b16 %v1086, %v1082
      %v1227 = vpack.c.b16 %v1087, %v1083
      %v1228 = vpack.c.b16 %v1088, %v1084
      %v1229 = vpack.c.b16 %v1093, %v1089
      %v1230 = vpack.c.b16 %v1094, %v1090
      %v1231 = vpack.c.b16 %v1095, %v1091
      %v1232 = vpack.c.b16 %v1096, %v1092
      %v1233 = vpack.c.b16 %v1101, %v1097
      %v1234 = vpack.c.b16 %v1102, %v1098
      %v1235 = vpack.c.b16 %v1103, %v1099
      %v1236 = vpack.c.b16 %v1104, %v1100
      %v1237 = vpack.c.b16 %v1109, %v1105
      %v1238 = vpack.c.b16 %v1110, %v1106
      %v1239 = vpack.c.b16 %v1111, %v1107
      %v1240 = vpack.c.b16 %v1112, %v1108
      %1369 = vmatprep.subr.bf16.mxu0 %v1142
      %1370 = vmatpush1.bf16.msra.mxu0 %v1141
      %1371 = vmatprep.subr.bf16.mxu0 %v1138
      %1372 = vmatpush1.bf16.msra.mxu0 %v1137
      %1373 = vmatprep.subr.bf16.mxu0 %v1134
      %1374 = vmatpush1.bf16.msra.mxu0 %v1133
      %1375 = vmatprep.subr.bf16.mxu0 %v1130
      %1376 = vmatpush1.bf16.msra.mxu0 %v1129
      %1377 = vmatprep.subr.bf16.mxu0 %v1126
      %1378 = vmatpush1.bf16.msra.mxu0 %v1125
      %1379 = vmatprep.subr.bf16.mxu0 %v1122
      %1380 = vmatpush1.bf16.msra.mxu0 %v1121
      %1381 = vmatprep.subr.bf16.mxu0 %v1118
      %1382 = vmatpush1.bf16.msra.mxu0 %v1117
      %1383 = vmatprep.subr.bf16.mxu0 %v1114
      %1384 = vmatpush1.bf16.msra.mxu0 %v1113
      %1385 = vmatprep.subr.bf16.mxu0 %v1174
      %1386 = vmatpush2.bf16.msra.mxu0 %v1173
      %1387 = vmatprep.subr.bf16.mxu0 %v1170
      %1388 = vmatpush2.bf16.msra.mxu0 %v1169
      %1389 = vmatprep.subr.bf16.mxu0 %v1166
      %1390 = vmatpush2.bf16.msra.mxu0 %v1165
      %1391 = vmatprep.subr.bf16.mxu0 %v1162
      %1392 = vmatpush2.bf16.msra.mxu0 %v1161
      %1393 = vmatprep.subr.bf16.mxu0 %v1158
      %1394 = vmatpush2.bf16.msra.mxu0 %v1157
      %1395 = vmatprep.subr.bf16.mxu0 %v1154
      %1396 = vmatpush2.bf16.msra.mxu0 %v1153
      %1397 = vmatprep.subr.bf16.mxu0 %v1150
      %1398 = vmatpush2.bf16.msra.mxu0 %v1149
      %1399 = vmatprep.subr.bf16.mxu0 %v1146
      %1400 = vmatpush2.bf16.msra.mxu0 %v1145
      %1401 = vmatprep.mubr.bf16.mxu0 %v622
      %1402 = vmatmul.mubr.bf16.gmra.mxu0 %v620
      %v1403 = vpop.f32.mrf.mxu0
      %v1404 = vadd.f32 %v539, %v1403
      %v1405 = vpop.f32.mrf.mxu0
      %v1406 = vadd.f32 %v543, %v1405
      %v1407 = vpop.f32.mrf.mxu0
      %v1408 = vadd.f32 %v539, %v1407
      %v1409 = vpop.f32.mrf.mxu0
      %v1410 = vadd.f32 %v543, %v1409
      %1411 = vmatprep.mubr.bf16.mxu0 %v690
      %1412 = vmatmul.mubr.bf16.gmra.mxu0 %v688
      %v1413 = vpop.f32.mrf.mxu0
      %v1414 = vadd.f32 %v539, %v1413
      %v1415 = vpop.f32.mrf.mxu0
      %v1416 = vadd.f32 %v543, %v1415
      %v1417 = vpop.f32.mrf.mxu0
      %v1418 = vadd.f32 %v539, %v1417
      %v1419 = vpop.f32.mrf.mxu0
      %v1420 = vadd.f32 %v543, %v1419
      %1421 = vmatprep.mubr.bf16.mxu0 %v714
      %1422 = vmatmul.mubr.bf16.gmra.mxu0 %v707
      %v1423 = vpop.f32.mrf.mxu0
      %v1424 = vadd.f32 %v539, %v1423
      %v1425 = vpop.f32.mrf.mxu0
      %v1426 = vadd.f32 %v543, %v1425
      %v1427 = vpop.f32.mrf.mxu0
      %v1428 = vpop.f32.mrf.mxu0
      %1429 = vdwg.mxu0
      %1430 = vmatprep.subr.bf16.mxu0 %v1206
      %1431 = vmatpush1.bf16.msra.mxu0 %v1205
      %1432 = vmatprep.subr.bf16.mxu0 %v1202
      %1433 = vmatpush1.bf16.msra.mxu0 %v1201
      %1434 = vmatprep.subr.bf16.mxu0 %v1198
      %1435 = vmatpush1.bf16.msra.mxu0 %v1197
      %1436 = vmatprep.subr.bf16.mxu0 %v1194
      %1437 = vmatpush1.bf16.msra.mxu0 %v1193
      %1438 = vmatprep.subr.bf16.mxu0 %v1190
      %1439 = vmatpush1.bf16.msra.mxu0 %v1189
      %1440 = vmatprep.subr.bf16.mxu0 %v1186
      %1441 = vmatpush1.bf16.msra.mxu0 %v1185
      %1442 = vmatprep.subr.bf16.mxu0 %v1182
      %1443 = vmatpush1.bf16.msra.mxu0 %v1181
      %1444 = vmatprep.subr.bf16.mxu0 %v1178
      %1445 = vmatpush1.bf16.msra.mxu0 %v1177
      %1446 = vmatprep.subr.bf16.mxu0 %v1238
      %1447 = vmatpush2.bf16.msra.mxu0 %v1237
      %1448 = vmatprep.subr.bf16.mxu0 %v1234
      %1449 = vmatpush2.bf16.msra.mxu0 %v1233
      %1450 = vmatprep.subr.bf16.mxu0 %v1230
      %1451 = vmatpush2.bf16.msra.mxu0 %v1229
      %1452 = vmatprep.subr.bf16.mxu0 %v1226
      %1453 = vmatpush2.bf16.msra.mxu0 %v1225
      %1454 = vmatprep.subr.bf16.mxu0 %v1222
      %1455 = vmatpush2.bf16.msra.mxu0 %v1221
      %1456 = vmatprep.subr.bf16.mxu0 %v1218
      %1457 = vmatpush2.bf16.msra.mxu0 %v1217
      %1458 = vmatprep.subr.bf16.mxu0 %v1214
      %1459 = vmatpush2.bf16.msra.mxu0 %v1213
      %1460 = vmatprep.subr.bf16.mxu0 %v1210
      %1461 = vmatpush2.bf16.msra.mxu0 %v1209
      %1462 = vmatprep.mubr.bf16.mxu0 %v623
      %1463 = vmatmul.mubr.bf16.gmra.mxu0 %v621
      %v1464 = vpop.f32.mrf.mxu0
      %v1465 = vadd.f32 %v1404, %v1464
      %v1466 = vpop.f32.mrf.mxu0
      %v1467 = vadd.f32 %v1406, %v1466
      %v1468 = vpop.f32.mrf.mxu0
      %v1469 = vadd.f32 %v1408, %v1468
      %v1470 = vpop.f32.mrf.mxu0
      %v1471 = vadd.f32 %v1410, %v1470
      %1472 = vmatprep.mubr.bf16.mxu0 %v691
      %1473 = vmatmul.mubr.bf16.gmra.mxu0 %v689
      %v1474 = vpop.f32.mrf.mxu0
      %v1475 = vadd.f32 %v1414, %v1474
      %v1476 = vpop.f32.mrf.mxu0
      %v1477 = vadd.f32 %v1416, %v1476
      %v1478 = vpop.f32.mrf.mxu0
      %v1479 = vadd.f32 %v1418, %v1478
      %v1480 = vpop.f32.mrf.mxu0
      %v1481 = vadd.f32 %v1420, %v1480
      %1482 = vmatprep.mubr.bf16.mxu0 %v716
      %1483 = vmatmul.mubr.bf16.gmra.mxu0 %v715
      %v1484 = vpop.f32.mrf.mxu0
      %v1485 = vadd.f32 %v1424, %v1484
      %v1486 = vpop.f32.mrf.mxu0
      %v1487 = vadd.f32 %v1426, %v1486
      %v1488 = vpop.f32.mrf.mxu0
      %v1489 = vpop.f32.mrf.mxu0
      %1490 = vdwg.mxu0
      %1491 = vmatprep.subr.bf16.mxu0 %v1144
      %1492 = vmatpush1.bf16.msra.mxu0 %v1143
      %1493 = vmatprep.subr.bf16.mxu0 %v1140
      %1494 = vmatpush1.bf16.msra.mxu0 %v1139
      %1495 = vmatprep.subr.bf16.mxu0 %v1136
      %1496 = vmatpush1.bf16.msra.mxu0 %v1135
      %1497 = vmatprep.subr.bf16.mxu0 %v1132
      %1498 = vmatpush1.bf16.msra.mxu0 %v1131
      %1499 = vmatprep.subr.bf16.mxu0 %v1128
      %1500 = vmatpush1.bf16.msra.mxu0 %v1127
      %1501 = vmatprep.subr.bf16.mxu0 %v1124
      %1502 = vmatpush1.bf16.msra.mxu0 %v1123
      %1503 = vmatprep.subr.bf16.mxu0 %v1120
      %1504 = vmatpush1.bf16.msra.mxu0 %v1119
      %1505 = vmatprep.subr.bf16.mxu0 %v1116
      %1506 = vmatpush1.bf16.msra.mxu0 %v1115
      %1507 = vmatprep.subr.bf16.mxu0 %v1176
      %1508 = vmatpush2.bf16.msra.mxu0 %v1175
      %1509 = vmatprep.subr.bf16.mxu0 %v1172
      %1510 = vmatpush2.bf16.msra.mxu0 %v1171
      %1511 = vmatprep.subr.bf16.mxu0 %v1168
      %1512 = vmatpush2.bf16.msra.mxu0 %v1167
      %1513 = vmatprep.subr.bf16.mxu0 %v1164
      %1514 = vmatpush2.bf16.msra.mxu0 %v1163
      %1515 = vmatprep.subr.bf16.mxu0 %v1160
      %1516 = vmatpush2.bf16.msra.mxu0 %v1159
      %1517 = vmatprep.subr.bf16.mxu0 %v1156
      %1518 = vmatpush2.bf16.msra.mxu0 %v1155
      %1519 = vmatprep.subr.bf16.mxu0 %v1152
      %1520 = vmatpush2.bf16.msra.mxu0 %v1151
      %1521 = vmatprep.subr.bf16.mxu0 %v1148
      %1522 = vmatpush2.bf16.msra.mxu0 %v1147
      %1523 = vmatprep.mubr.bf16.mxu0 %v622
      %1524 = vmatmul.mubr.bf16.gmra.mxu0 %v620
      %v1525 = vpop.f32.mrf.mxu0
      %v1526 = vadd.f32 %v547, %v1525
      %v1527 = vpop.f32.mrf.mxu0
      %v1528 = vadd.f32 %v551, %v1527
      %v1529 = vpop.f32.mrf.mxu0
      %v1530 = vadd.f32 %v547, %v1529
      %v1531 = vpop.f32.mrf.mxu0
      %v1532 = vadd.f32 %v551, %v1531
      %1533 = vmatprep.mubr.bf16.mxu0 %v690
      %1534 = vmatmul.mubr.bf16.gmra.mxu0 %v688
      %v1535 = vpop.f32.mrf.mxu0
      %v1536 = vadd.f32 %v547, %v1535
      %v1537 = vpop.f32.mrf.mxu0
      %v1538 = vadd.f32 %v551, %v1537
      %v1539 = vpop.f32.mrf.mxu0
      %v1540 = vadd.f32 %v547, %v1539
      %v1541 = vpop.f32.mrf.mxu0
      %v1542 = vadd.f32 %v551, %v1541
      %1543 = vmatprep.mubr.bf16.mxu0 %v714
      %1544 = vmatmul.mubr.bf16.gmra.mxu0 %v707
      %v1545 = vpop.f32.mrf.mxu0
      %v1546 = vadd.f32 %v547, %v1545
      %v1547 = vpop.f32.mrf.mxu0
      %v1548 = vadd.f32 %v551, %v1547
      %v1549 = vpop.f32.mrf.mxu0
      %v1550 = vpop.f32.mrf.mxu0
      %1551 = vdwg.mxu0
      %1552 = vmatprep.subr.bf16.mxu0 %v1208
      %1553 = vmatpush1.bf16.msra.mxu0 %v1207
      %1554 = vmatprep.subr.bf16.mxu0 %v1204
      %1555 = vmatpush1.bf16.msra.mxu0 %v1203
      %1556 = vmatprep.subr.bf16.mxu0 %v1200
      %1557 = vmatpush1.bf16.msra.mxu0 %v1199
      %1558 = vmatprep.subr.bf16.mxu0 %v1196
      %1559 = vmatpush1.bf16.msra.mxu0 %v1195
      %1560 = vmatprep.subr.bf16.mxu0 %v1192
      %1561 = vmatpush1.bf16.msra.mxu0 %v1191
      %1562 = vmatprep.subr.bf16.mxu0 %v1188
      %1563 = vmatpush1.bf16.msra.mxu0 %v1187
      %1564 = vmatprep.subr.bf16.mxu0 %v1184
      %1565 = vmatpush1.bf16.msra.mxu0 %v1183
      %1566 = vmatprep.subr.bf16.mxu0 %v1180
      %1567 = vmatpush1.bf16.msra.mxu0 %v1179
      %1568 = vmatprep.subr.bf16.mxu0 %v1240
      %1569 = vmatpush2.bf16.msra.mxu0 %v1239
      %1570 = vmatprep.subr.bf16.mxu0 %v1236
      %1571 = vmatpush2.bf16.msra.mxu0 %v1235
      %1572 = vmatprep.subr.bf16.mxu0 %v1232
      %1573 = vmatpush2.bf16.msra.mxu0 %v1231
      %1574 = vmatprep.subr.bf16.mxu0 %v1228
      %1575 = vmatpush2.bf16.msra.mxu0 %v1227
      %1576 = vmatprep.subr.bf16.mxu0 %v1224
      %1577 = vmatpush2.bf16.msra.mxu0 %v1223
      %1578 = vmatprep.subr.bf16.mxu0 %v1220
      %1579 = vmatpush2.bf16.msra.mxu0 %v1219
      %1580 = vmatprep.subr.bf16.mxu0 %v1216
      %1581 = vmatpush2.bf16.msra.mxu0 %v1215
      %1582 = vmatprep.subr.bf16.mxu0 %v1212
      %1583 = vmatpush2.bf16.msra.mxu0 %v1211
      %1584 = vmatprep.mubr.bf16.mxu0 %v623
      %1585 = vmatmul.mubr.bf16.gmra.mxu0 %v621
      %v1586 = vpop.f32.mrf.mxu0
      %v1587 = vadd.f32 %v1526, %v1586
      %v1588 = vpop.f32.mrf.mxu0
      %v1589 = vadd.f32 %v1528, %v1588
      %v1590 = vpop.f32.mrf.mxu0
      %v1591 = vadd.f32 %v1530, %v1590
      %v1592 = vpop.f32.mrf.mxu0
      %v1593 = vadd.f32 %v1532, %v1592
      %1594 = vmatprep.mubr.bf16.mxu0 %v691
      %1595 = vmatmul.mubr.bf16.gmra.mxu0 %v689
      %v1596 = vpop.f32.mrf.mxu0
      %v1597 = vadd.f32 %v1536, %v1596
      %v1598 = vpop.f32.mrf.mxu0
      %v1599 = vadd.f32 %v1538, %v1598
      %v1600 = vpop.f32.mrf.mxu0
      %v1601 = vadd.f32 %v1540, %v1600
      %v1602 = vpop.f32.mrf.mxu0
      %v1603 = vadd.f32 %v1542, %v1602
      %1604 = vmatprep.mubr.bf16.mxu0 %v716
      %1605 = vmatmul.mubr.bf16.gmra.mxu0 %v715
      %v1606 = vpop.f32.mrf.mxu0
      %v1607 = vadd.f32 %v1546, %v1606
      %v1608 = vpop.f32.mrf.mxu0
      %v1609 = vadd.f32 %v1548, %v1608
      %v1610 = vpop.f32.mrf.mxu0
      %v1611 = vpop.f32.mrf.mxu0
      %1612 = vdwg.mxu0
      %v1613 = vpack.c.bf16 %v1469, %v1465
      %v1614 = vpack.c.bf16 %v1471, %v1467
      %v1615 = vpack.c.bf16 %v1591, %v1587
      %v1616 = vpack.c.bf16 %v1593, %v1589
      %v1617 = vpack.c.bf16 %v1479, %v1475
      %v1618 = vpack.c.bf16 %v1481, %v1477
      %v1619 = vpack.c.bf16 %v1601, %v1597
      %v1620 = vpack.c.bf16 %v1603, %v1599
      %v1621 = vpack.c.bf16 %v1485, %v1485
      %v1622 = vpack.c.bf16 %v1487, %v1487
      %v1623 = vpack.c.bf16 %v1607, %v1607
      %v1624 = vpack.c.bf16 %v1609, %v1609
      %v1637 = vunpack.c.l.b16 %v1613
      %v1638 = vunpack.c.l.b16 %v1614
      %v1639 = vunpack.c.l.b16 %v1615
      %v1640 = vunpack.c.l.b16 %v1616
      %v1641 = vunpack.c.h.b16 %v1613
      %v1642 = vunpack.c.h.b16 %v1614
      %v1643 = vunpack.c.h.b16 %v1615
      %v1644 = vunpack.c.h.b16 %v1616
      %v1645 = vunpack.c.l.b16 %v1617
      %v1646 = vunpack.c.l.b16 %v1618
      %v1647 = vunpack.c.l.b16 %v1619
      %v1648 = vunpack.c.l.b16 %v1620
      %v1649 = vunpack.c.h.b16 %v1617
      %v1650 = vunpack.c.h.b16 %v1618
      %v1651 = vunpack.c.h.b16 %v1619
      %v1652 = vunpack.c.h.b16 %v1620
      %v1653 = vunpack.c.l.b16 %v1621
      %v1654 = vunpack.c.l.b16 %v1622
      %v1655 = vunpack.c.l.b16 %v1623
      %v1656 = vunpack.c.l.b16 %v1624
      %v1657 = vpack.c.b16 %v1638, %v1637
      %v1658 = vpack.c.b16 %v1640, %v1639
      %v1659 = vpack.c.b16 %v1642, %v1641
      %v1660 = vpack.c.b16 %v1644, %v1643
      %v1661 = vpack.c.b16 %v1646, %v1645
      %v1662 = vpack.c.b16 %v1648, %v1647
      %v1663 = vpack.c.b16 %v1650, %v1649
      %v1664 = vpack.c.b16 %v1652, %v1651
      %v1665 = vpack.c.b16 %v1654, %v1653
      %v1666 = vpack.c.b16 %v1656, %v1655
      %1677 = vst [vmem:[%s170] sm:$0xff] %v1657
      %1678 = vst [vmem:[%s170 + $0x8] sm:$0xff] %v1658
      %1679 = vst [vmem:[%s170 + $0x10] sm:$0xff] %v1659
      %1680 = vst [vmem:[%s170 + $0x18] sm:$0xff] %v1660
      %1681 = vst [vmem:[%s170 + $0x20] sm:$0xff] %v1661
      %1682 = vst [vmem:[%s170 + $0x28] sm:$0xff] %v1662
      %1683 = vst [vmem:[%s170 + $0x30] sm:$0xff] %v1663
      %1684 = vst [vmem:[%s170 + $0x38] sm:$0xff] %v1664
      %1685 = vst [vmem:[%s170 + $0x40] sm:$0x33] %v1665
      %1686 = vst [vmem:[%s170 + $0x48] sm:$0x33] %v1666
      %p1687 = scmp.lt.s32.totalorder %s14, 1
      %s1688 = scalar_select %p1687, %s14, 1
      %s1689 = smul.addr %s1688, 20
      %s1690 = smul.addr %s1689, 4
      %s1691 = scalar_lea.vmem %s3, %s1690
      // Predicated region
      $region33: #{unet_expanding_block_forward.5} parent=31 // pred_check
        %p1692 = pneg %p100
      $region34: #{unet_expanding_block_forward.5} parent=31 // pred_check_branch
        %1694 = sbr.rel (%p1692) target = $region36
      $region35: #{unet_expanding_block_forward.5} parent=31 // pred_region
        _
      $region36: #{unet_expanding_block_forward.5} parent=31 // pred_fallthru
        _
    $region32: #{unet_expanding_block_forward.5} parent=5 // pred_fallthru
      _
    %p1695 = scmp.le.s32.totalorder 2, %s9
    // Predicated region
    $region37: #{unet_expanding_block_forward.5} parent=5 // pred_check
      %p1696 = pneg %p1695
    $region38: #{unet_expanding_block_forward.5} parent=5 // pred_check_branch
      %1698 = sbr.rel (%p1696) target = $region40
    $region39: #{unet_expanding_block_forward.5} parent=5 // pred_region
      %s1699 = ssub.s32 %s9, 2
      // Predicated region
      $region41: #{unet_expanding_block_forward.5} parent=39 // pred_check
        %p1700 = pneg %p106
      $region42: #{unet_expanding_block_forward.5} parent=39 // pred_check_branch
        %1702 = sbr.rel (%p1700) target = $region44
      $region43: #{unet_expanding_block_forward.5} parent=39 // pred_region
        %p1703 = scmp.lt.s32.totalorder %s15, 1
        %s1704 = scalar_select %p1703, %s15, 1
        %s1705 = smul.addr %s1704, 20
        %s1706 = smul.addr %s1705, 4
        %s1707 = scalar_lea.vmem %s3, %s1706
      $region44: #{unet_expanding_block_forward.5} parent=39 // pred_fallthru
        _
    $region40: #{unet_expanding_block_forward.5} parent=5 // pred_fallthru
      _
  $region6: #{unet_expanding_block_forward.5} parent=0 // loop_footer
    %s13 = sadd.s32 1, %s9
  $region7: #{unet_expanding_block_forward.5} parent=0 // loop_footer_branch
    %8 = sbr.rel target = $region3
  $region8: #{unet_expanding_block_forward.5} parent=0 // loop_exit
    _

// kernel: unet_expanding_block_forward.6
$region0: #{unet_expanding_block_forward.6}
  #allocation0 [shape = 'u32[]', space=smem, size = 0x4, offset = 0x4, fixed_abs, tag = 'smem constant byte address 0x4 - core index']
  #allocation1 [shape = 'u32[144,128]{1,0:T(1,128)}', space=vmem, size = 0x12000, scoped, tag = 'internal scratch']
  %s0 = inlined_call_operand.vmem [shape: bf16[2,12,12,128], index: 0, kind: input, shape index: {}]
  %s1 = inlined_call_operand.vmem [shape: bf16[512,128], index: 1, kind: input, shape index: {}]
  %s2 = inlined_call_operand.vmem [shape: bf16[2,100,128], index: 2, kind: output, shape index: {0}]
  %s3 = inlined_call_operand.vmem [shape: f32[2,2,128], index: 3, kind: output, shape index: {1}]
  %4 = xla_tuple %s2, %s3
  %s5 = sld [smem:[#allocation0]]
  $region49: #{unet_expanding_block_forward.6} parent=0
    _
  %s7 = ssub.s32 1, %s5
  %s8 = scalar_select 0, %s7, %s5
  loop: start=0, step=1, limit=4
  $region2: #{unet_expanding_block_forward.6} parent=0 // loop_pre_header
    _
  $region3: #{unet_expanding_block_forward.6} parent=0 // loop_header
    %s10 = sphi 0, %s14
    %p11 = scmp.ge.s32.totalorder %s10, 4
    %s20 = sphi 0, %s22
    %s23 = sphi 0, %s20
    %s24 = sphi 0, %s23
    %s40 = sphi 0, %s24
    %s44 = sphi 0, %s44
    %s46 = sphi 0, %s44
    %s47 = sphi 0, %s46
    %s61 = sphi 0, %s47
    %s67 = sphi 0, %s69
    %s70 = sphi 0, %s67
    %s71 = sphi 0, %s70
    %s87 = sphi 0, %s71
    %s93 = sphi 0, %s95
    %s96 = sphi 0, %s93
    %s97 = sphi 0, %s96
    %s113 = sphi 0, %s97
  $region4: #{unet_expanding_block_forward.6} parent=0 // loop_header_branch
    %13 = sbr.rel (%p11) target = $region8
  $region5: #{unet_expanding_block_forward.6} parent=0 // loop_body
    %s15 = ssub.s32 %s10, 1
    %s16 = ssub.s32 %s10, 2
    %s17 = sadd.s32 %s10, 1
    %s18 = ssub.s32 %s10, %s17
    %p19 = scmp.eq.s32.totalorder %s18, 0
    %s21 = sadd.s32 %s20, 1
    %s22 = scalar_select %p19, %s20, %s21
    %p25 = pneg %p19
    %p26 = scmp.eq.s32.totalorder %s10, 1
    %p27 = por %p25, %p26
    %p28 = scmp.ne.s32.totalorder %s20, %s23
    %p29 = scmp.eq.s32.totalorder %s10, 0
    %p30 = por %p28, %p29
    %p31 = scmp.ne.s32.totalorder %s20, %s23
    %p32 = scmp.eq.s32.totalorder %s15, 1
    %p33 = por %p31, %p32
    %p34 = scmp.ne.s32.totalorder %s23, %s24
    %p35 = scmp.eq.s32.totalorder %s15, 0
    %p36 = por %p34, %p35
    %p37 = scmp.ne.s32.totalorder %s23, %s24
    %p38 = scmp.eq.s32.totalorder %s16, 1
    %p39 = por %p37, %p38
    %p41 = scmp.ne.s32.totalorder %s24, %s40
    %p42 = scmp.eq.s32.totalorder %s16, 0
    %p43 = por %p41, %p42
    %s45 = sadd.s32 %s44, 1
    %p48 = scmp.eq.s32.totalorder %s10, 1
    %p49 = scmp.ne.s32.totalorder %s44, %s46
    %p50 = scmp.eq.s32.totalorder %s10, 0
    %p51 = por %p49, %p50
    %p52 = scmp.ne.s32.totalorder %s44, %s46
    %p53 = scmp.eq.s32.totalorder %s15, 1
    %p54 = por %p52, %p53
    %p55 = scmp.ne.s32.totalorder %s46, %s47
    %p56 = scmp.eq.s32.totalorder %s15, 0
    %p57 = por %p55, %p56
    %p58 = scmp.ne.s32.totalorder %s46, %s47
    %p59 = scmp.eq.s32.totalorder %s16, 1
    %p60 = por %p58, %p59
    %p62 = scmp.ne.s32.totalorder %s47, %s61
    %p63 = scmp.eq.s32.totalorder %s16, 0
    %p64 = por %p62, %p63
    %s65 = ssub.s32 %s10, %s17
    %p66 = scmp.eq.s32.totalorder %s65, 0
    %s68 = sadd.s32 %s67, 1
    %s69 = scalar_select %p66, %s67, %s68
    %p72 = pneg %p66
    %p73 = scmp.eq.s32.totalorder %s10, 1
    %p74 = por %p72, %p73
    %p75 = scmp.ne.s32.totalorder %s67, %s70
    %p76 = scmp.eq.s32.totalorder %s10, 0
    %p77 = por %p75, %p76
    %p78 = scmp.ne.s32.totalorder %s67, %s70
    %p79 = scmp.eq.s32.totalorder %s15, 1
    %p80 = por %p78, %p79
    %p81 = scmp.ne.s32.totalorder %s70, %s71
    %p82 = scmp.eq.s32.totalorder %s15, 0
    %p83 = por %p81, %p82
    %p84 = scmp.ne.s32.totalorder %s70, %s71
    %p85 = scmp.eq.s32.totalorder %s16, 1
    %p86 = por %p84, %p85
    %p88 = scmp.ne.s32.totalorder %s71, %s87
    %p89 = scmp.eq.s32.totalorder %s16, 0
    %p90 = por %p88, %p89
    %s91 = ssub.s32 %s10, %s17
    %p92 = scmp.eq.s32.totalorder %s91, 0
    %s94 = sadd.s32 %s93, 1
    %s95 = scalar_select %p92, %s93, %s94
    %p98 = pneg %p92
    %p99 = scmp.eq.s32.totalorder %s10, 1
    %p100 = por %p98, %p99
    %p101 = scmp.ne.s32.totalorder %s93, %s96
    %p102 = scmp.eq.s32.totalorder %s10, 0
    %p103 = por %p101, %p102
    %p104 = scmp.ne.s32.totalorder %s93, %s96
    %p105 = scmp.eq.s32.totalorder %s15, 1
    %p106 = por %p104, %p105
    %p107 = scmp.ne.s32.totalorder %s96, %s97
    %p108 = scmp.eq.s32.totalorder %s15, 0
    %p109 = por %p107, %p108
    %p110 = scmp.ne.s32.totalorder %s96, %s97
    %p111 = scmp.eq.s32.totalorder %s16, 1
    %p112 = por %p110, %p111
    %p114 = scmp.ne.s32.totalorder %s97, %s113
    %p115 = scmp.eq.s32.totalorder %s16, 0
    %p116 = por %p114, %p115
    %p117 = scmp.le.s32.totalorder 1, %s10
    %p118 = scmp.lt.s32.totalorder %s10, 3
    %p119 = pnand %p117, %p118
    %p120 = pneg %p119
    // Predicated region
    $region9: #{unet_expanding_block_forward.6} parent=5 // pred_check
      _
    $region10: #{unet_expanding_block_forward.6} parent=5 // pred_check_branch
      %122 = sbr.rel (%p119) target = $region12
    $region11: #{unet_expanding_block_forward.6} parent=5 // pred_region
      %s123 = ssub.s32 %s10, 1
      // Predicated region
      $region13: #{unet_expanding_block_forward.6} parent=11 // pred_check
        %p124 = pneg %p57
      $region14: #{unet_expanding_block_forward.6} parent=11 // pred_check_branch
        %126 = sbr.rel (%p124) target = $region16
      $region15: #{unet_expanding_block_forward.6} parent=11 // pred_region
        _
      $region16: #{unet_expanding_block_forward.6} parent=11 // pred_fallthru
        _
    $region12: #{unet_expanding_block_forward.6} parent=5 // pred_fallthru
      _
    %p127 = scmp.lt.s32.totalorder %s10, 2
    // Predicated region
    $region17: #{unet_expanding_block_forward.6} parent=5 // pred_check
      %p128 = pneg %p127
    $region18: #{unet_expanding_block_forward.6} parent=5 // pred_check_branch
      %130 = sbr.rel (%p128) target = $region20
    $region19: #{unet_expanding_block_forward.6} parent=5 // pred_region
      // Predicated region
      $region21: #{unet_expanding_block_forward.6} parent=19 // pred_check
        %p131 = pneg %p30
      $region22: #{unet_expanding_block_forward.6} parent=19 // pred_check_branch
        %133 = sbr.rel (%p131) target = $region24
      $region23: #{unet_expanding_block_forward.6} parent=19 // pred_region
        %p134 = scmp.lt.s32.totalorder %s10, 1
        %s135 = scalar_select %p134, %s10, 1
        %s136 = smul.addr %s135, 24
        %s137 = smul.addr %s136, 4
        %s138 = scalar_lea.vmem %s0, %s137
      $region24: #{unet_expanding_block_forward.6} parent=19 // pred_fallthru
        _
    $region20: #{unet_expanding_block_forward.6} parent=5 // pred_fallthru
      _
    %p139 = scmp.le.s32.totalorder 1, %s10
    %p140 = scmp.lt.s32.totalorder %s10, 3
    %p141 = pnand %p139, %p140
    %p142 = pneg %p141
    // Predicated region
    $region25: #{unet_expanding_block_forward.6} parent=5 // pred_check
      _
    $region26: #{unet_expanding_block_forward.6} parent=5 // pred_check_branch
      %144 = sbr.rel (%p141) target = $region28
    $region27: #{unet_expanding_block_forward.6} parent=5 // pred_region
      %s145 = ssub.s32 %s10, 1
      %p146 = scmp.lt.s32.totalorder %s15, 1
      %s147 = scalar_select %p146, %s15, 1
      %s148 = smul.addr %s147, 24
      %s149 = smul.addr %s148, 4
      %s150 = scalar_lea.vmem %s0, %s149
      %p151 = pneg %p36
      %p152 = pneg %p33
      %p153 = pneg %p57
      %p154 = pneg %p54
      %p155 = pneg %p83
      %p156 = pneg %p80
      %p157 = scmp.lt.s32.totalorder %s15, 1
      %s158 = scalar_select %p157, %s15, 1
      %s159 = smul.addr %s158, 13
      %s160 = smul.addr %s159, 4
      %s161 = scalar_lea.vmem %s2, %s160
      %p162 = pneg %p109
      %p163 = pneg %p106
      %p164 = scmp.lt.s32.totalorder %s15, 1
      %s165 = scalar_select %p164, %s15, 1
      %s166 = smul.addr %s165, 2
      %s167 = scalar_lea.vmem %s3, %s166
      %p168 = scmp.lt.s32.totalorder %s15, 1
      %s169 = scalar_select %p168, %s15, 1
      %s170 = smul.addr %s169, 24
      %s171 = smul.addr %s170, 4
      %s172 = scalar_lea.vmem %s0, %s171
      %p173 = scmp.lt.s32.totalorder %s15, 1
      %s174 = scalar_select %p173, %s15, 1
      %s175 = smul.addr %s174, 13
      %s176 = smul.addr %s175, 4
      %s177 = scalar_lea.vmem %s2, %s176
      %p178 = scmp.lt.s32.totalorder %s15, 1
      %s179 = scalar_select %p178, %s15, 1
      %s180 = smul.addr %s179, 2
      %s181 = scalar_lea.vmem %s3, %s180
      %v183 = vld [vmem:[%s172] sm:$0xf]
      %v184 = vld [vmem:[%s172 + $0x4] sm:$0x3]
      %v185 = vld [vmem:[%s172 + $0x8] sm:$0xf]
      %v186 = vld [vmem:[%s172 + $0xc] sm:$0x3]
      %v187 = vld [vmem:[%s172 + $0x10] sm:$0xf]
      %v188 = vld [vmem:[%s172 + $0x14] sm:$0x3]
      %v189 = vld [vmem:[%s172 + $0x18] sm:$0xf]
      %v190 = vld [vmem:[%s172 + $0x1c] sm:$0x3]
      %v191 = vld [vmem:[%s172 + $0x20] sm:$0xf]
      %v192 = vld [vmem:[%s172 + $0x24] sm:$0x3]
      %v193 = vld [vmem:[%s172 + $0x28] sm:$0xf]
      %v194 = vld [vmem:[%s172 + $0x2c] sm:$0x3]
      %v195 = vld [vmem:[%s172 + $0x30] sm:$0xf]
      %v196 = vld [vmem:[%s172 + $0x34] sm:$0x3]
      %v197 = vld [vmem:[%s172 + $0x38] sm:$0xf]
      %v198 = vld [vmem:[%s172 + $0x3c] sm:$0x3]
      %v199 = vld [vmem:[%s172 + $0x40] sm:$0xf]
      %v200 = vld [vmem:[%s172 + $0x44] sm:$0x3]
      %v201 = vld [vmem:[%s172 + $0x48] sm:$0xf]
      %v202 = vld [vmem:[%s172 + $0x4c] sm:$0x3]
      %v203 = vld [vmem:[%s172 + $0x50] sm:$0xf]
      %v204 = vld [vmem:[%s172 + $0x54] sm:$0x3]
      %v225 = vunpack.c.l.b16 %v183
      %v226 = vunpack.c.l.b16 %v184
      %v227 = vunpack.c.l.b16 %v185
      %v228 = vunpack.c.l.b16 %v186
      %v229 = vunpack.c.l.b16 %v187
      %v230 = vunpack.c.l.b16 %v188
      %v231 = vunpack.c.l.b16 %v189
      %v232 = vunpack.c.l.b16 %v190
      %v233 = vunpack.c.l.b16 %v191
      %v234 = vunpack.c.l.b16 %v192
      %v235 = vunpack.c.l.b16 %v193
      %v236 = vunpack.c.l.b16 %v194
      %v237 = vunpack.c.l.b16 %v195
      %v238 = vunpack.c.l.b16 %v196
      %v239 = vunpack.c.l.b16 %v197
      %v240 = vunpack.c.l.b16 %v198
      %v241 = vunpack.c.l.b16 %v199
      %v242 = vunpack.c.l.b16 %v200
      %v243 = vunpack.c.l.b16 %v201
      %v244 = vunpack.c.l.b16 %v202
      %v245 = vpack.c.b16 %v226, %v225
      %v246 = vpack.c.b16 %v228, %v227
      %v247 = vpack.c.b16 %v230, %v229
      %v248 = vpack.c.b16 %v232, %v231
      %v249 = vpack.c.b16 %v234, %v233
      %v250 = vpack.c.b16 %v236, %v235
      %v251 = vpack.c.b16 %v238, %v237
      %v252 = vpack.c.b16 %v240, %v239
      %v253 = vpack.c.b16 %v242, %v241
      %v254 = vpack.c.b16 %v244, %v243
      %v256 = vshrl.u32 %v245, 16
      %v258 = vshll.u32 %v245, 16
      %v260 = vrot.slane %v258, 1
      %v261 = vor.u32 %v256, %v260
      %v263 = vshrl.u32 %v246, 16
      %v265 = vshll.u32 %v246, 16
      %v267 = vrot.slane %v265, 1
      %v268 = vor.u32 %v263, %v267
      %v270 = vshrl.u32 %v247, 16
      %v272 = vshll.u32 %v247, 16
      %v274 = vrot.slane %v272, 1
      %v275 = vor.u32 %v270, %v274
      %v277 = vshrl.u32 %v248, 16
      %v279 = vshll.u32 %v248, 16
      %v281 = vrot.slane %v279, 1
      %v282 = vor.u32 %v277, %v281
      %v284 = vshrl.u32 %v249, 16
      %v286 = vshll.u32 %v249, 16
      %v288 = vrot.slane %v286, 1
      %v289 = vor.u32 %v284, %v288
      %v291 = vshrl.u32 %v250, 16
      %v293 = vshll.u32 %v250, 16
      %v295 = vrot.slane %v293, 1
      %v296 = vor.u32 %v291, %v295
      %v298 = vshrl.u32 %v251, 16
      %v300 = vshll.u32 %v251, 16
      %v302 = vrot.slane %v300, 1
      %v303 = vor.u32 %v298, %v302
      %v305 = vshrl.u32 %v252, 16
      %v307 = vshll.u32 %v252, 16
      %v309 = vrot.slane %v307, 1
      %v310 = vor.u32 %v305, %v309
      %v312 = vshrl.u32 %v253, 16
      %v314 = vshll.u32 %v253, 16
      %v316 = vrot.slane %v314, 1
      %v317 = vor.u32 %v312, %v316
      %v319 = vshrl.u32 %v254, 16
      %v321 = vshll.u32 %v254, 16
      %v323 = vrot.slane %v321, 1
      %v324 = vor.u32 %v319, %v323
      %v327 = vunpack.c.l.b16 %v203
      %v328 = vunpack.c.l.b16 %v204
      %v329 = vpack.c.b16 %v328, %v327
      %v331 = vshrl.u32 %v329, 16
      %v333 = vshll.u32 %v329, 16
      %v335 = vrot.slane %v333, 1
      %v336 = vor.u32 %v331, %v335
      %v337 = vcombine.low %v245, %v261
      %v338 = vcombine.high %v245, %v261
      %v339 = vcombine.low %v246, %v268
      %v340 = vcombine.high %v246, %v268
      %v342 = vunpack.c.l.s4 1966171168
      %v343 = vunpack.c.0.s8 %v342
      %v344 = vlaneseq
      %v345 = vshrl.u32 %v344, 7
      %v346 = vsub.s32 %v343, %v345
      %v347 = vrot.slane %v337, %v346
      %v349 = vunpack.c.l.s4 1966171168
      %v350 = vunpack.c.0.s8 %v349
      %v351 = vlaneseq
      %v352 = vshrl.u32 %v351, 7
      %v353 = vsub.s32 %v350, %v352
      %v354 = vrot.slane %v338, %v353
      %v356 = vunpack.c.l.s4 1966171168
      %v357 = vunpack.c.0.s8 %v356
      %v358 = vlaneseq
      %v359 = vshrl.u32 %v358, 7
      %v360 = vsub.s32 %v357, %v359
      %v361 = vrot.slane %v339, %v360
      %v363 = vunpack.c.l.s4 1966171168
      %v364 = vunpack.c.0.s8 %v363
      %v365 = vlaneseq
      %v366 = vshrl.u32 %v365, 7
      %v367 = vsub.s32 %v364, %v366
      %v368 = vrot.slane %v340, %v367
      %v369 = vcombine.low %v347, %v361
      %v370 = vcombine.high %v347, %v361
      %v371 = vcombine.low %v354, %v368
      %v373 = vunpack.c.l.s4 1966171168
      %v374 = vunpack.c.0.s8 %v373
      %v375 = vlaneseq
      %v376 = vshrl.u32 %v375, 7
      %v377 = vsub.s32 %v374, %v376
      %v378 = vrot.slane %v369, %v377
      %v380 = vunpack.c.l.s4 1966171168
      %v381 = vunpack.c.0.s8 %v380
      %v382 = vlaneseq
      %v383 = vshrl.u32 %v382, 7
      %v384 = vsub.s32 %v381, %v383
      %v385 = vrot.slane %v371, %v384
      %v387 = vunpack.c.l.s4 1966171168
      %v388 = vunpack.c.0.s8 %v387
      %v389 = vlaneseq
      %v390 = vshrl.u32 %v389, 7
      %v391 = vsub.s32 %v388, %v390
      %v392 = vrot.slane %v370, %v391
      %v393 = vcombine.high %v378, %v378
      %v394 = vcombine.high %v392, %v392
      %v395 = vcombine.low %v247, %v275
      %v396 = vcombine.high %v247, %v275
      %v398 = vunpack.c.l.s4 1966171168
      %v399 = vunpack.c.0.s8 %v398
      %v400 = vlaneseq
      %v401 = vshrl.u32 %v400, 7
      %v402 = vsub.s32 %v399, %v401
      %v403 = vrot.slane %v395, %v402
      %v405 = vunpack.c.l.s4 1966171168
      %v406 = vunpack.c.0.s8 %v405
      %v407 = vlaneseq
      %v408 = vshrl.u32 %v407, 7
      %v409 = vsub.s32 %v406, %v408
      %v410 = vrot.slane %v396, %v409
      %v411 = vcombine.low %v361, %v403
      %v412 = vcombine.high %v361, %v403
      %v413 = vcombine.low %v368, %v410
      %v415 = vunpack.c.l.s4 1966171168
      %v416 = vunpack.c.0.s8 %v415
      %v417 = vlaneseq
      %v418 = vshrl.u32 %v417, 7
      %v419 = vsub.s32 %v416, %v418
      %v420 = vrot.slane %v411, %v419
      %v422 = vunpack.c.l.s4 1966171168
      %v423 = vunpack.c.0.s8 %v422
      %v424 = vlaneseq
      %v425 = vshrl.u32 %v424, 7
      %v426 = vsub.s32 %v423, %v425
      %v427 = vrot.slane %v413, %v426
      %v429 = vunpack.c.l.s4 1966171168
      %v430 = vunpack.c.0.s8 %v429
      %v431 = vlaneseq
      %v432 = vshrl.u32 %v431, 7
      %v433 = vsub.s32 %v430, %v432
      %v434 = vrot.slane %v412, %v433
      %v435 = vcombine.high %v420, %v420
      %v436 = vcombine.high %v434, %v434
      %v437 = vcombine.low %v248, %v282
      %v438 = vcombine.high %v248, %v282
      %v440 = vunpack.c.l.s4 1966171168
      %v441 = vunpack.c.0.s8 %v440
      %v442 = vlaneseq
      %v443 = vshrl.u32 %v442, 7
      %v444 = vsub.s32 %v441, %v443
      %v445 = vrot.slane %v437, %v444
      %v447 = vunpack.c.l.s4 1966171168
      %v448 = vunpack.c.0.s8 %v447
      %v449 = vlaneseq
      %v450 = vshrl.u32 %v449, 7
      %v451 = vsub.s32 %v448, %v450
      %v452 = vrot.slane %v438, %v451
      %v453 = vcombine.low %v403, %v445
      %v454 = vcombine.high %v403, %v445
      %v455 = vcombine.low %v410, %v452
      %v457 = vunpack.c.l.s4 1966171168
      %v458 = vunpack.c.0.s8 %v457
      %v459 = vlaneseq
      %v460 = vshrl.u32 %v459, 7
      %v461 = vsub.s32 %v458, %v460
      %v462 = vrot.slane %v453, %v461
      %v464 = vunpack.c.l.s4 1966171168
      %v465 = vunpack.c.0.s8 %v464
      %v466 = vlaneseq
      %v467 = vshrl.u32 %v466, 7
      %v468 = vsub.s32 %v465, %v467
      %v469 = vrot.slane %v455, %v468
      %v471 = vunpack.c.l.s4 1966171168
      %v472 = vunpack.c.0.s8 %v471
      %v473 = vlaneseq
      %v474 = vshrl.u32 %v473, 7
      %v475 = vsub.s32 %v472, %v474
      %v476 = vrot.slane %v454, %v475
      %v477 = vcombine.high %v462, %v462
      %v478 = vcombine.high %v476, %v476
      %v479 = vcombine.low %v249, %v289
      %v480 = vcombine.high %v249, %v289
      %v482 = vunpack.c.l.s4 1966171168
      %v483 = vunpack.c.0.s8 %v482
      %v484 = vlaneseq
      %v485 = vshrl.u32 %v484, 7
      %v486 = vsub.s32 %v483, %v485
      %v487 = vrot.slane %v479, %v486
      %v489 = vunpack.c.l.s4 1966171168
      %v490 = vunpack.c.0.s8 %v489
      %v491 = vlaneseq
      %v492 = vshrl.u32 %v491, 7
      %v493 = vsub.s32 %v490, %v492
      %v494 = vrot.slane %v480, %v493
      %v495 = vcombine.low %v445, %v487
      %v496 = vcombine.high %v445, %v487
      %v497 = vcombine.low %v452, %v494
      %v499 = vunpack.c.l.s4 1966171168
      %v500 = vunpack.c.0.s8 %v499
      %v501 = vlaneseq
      %v502 = vshrl.u32 %v501, 7
      %v503 = vsub.s32 %v500, %v502
      %v504 = vrot.slane %v495, %v503
      %v506 = vunpack.c.l.s4 1966171168
      %v507 = vunpack.c.0.s8 %v506
      %v508 = vlaneseq
      %v509 = vshrl.u32 %v508, 7
      %v510 = vsub.s32 %v507, %v509
      %v511 = vrot.slane %v497, %v510
      %v513 = vunpack.c.l.s4 1966171168
      %v514 = vunpack.c.0.s8 %v513
      %v515 = vlaneseq
      %v516 = vshrl.u32 %v515, 7
      %v517 = vsub.s32 %v514, %v516
      %v518 = vrot.slane %v496, %v517
      %v519 = vcombine.high %v504, %v504
      %v520 = vcombine.high %v518, %v518
      %v521 = vcombine.low %v250, %v296
      %v522 = vcombine.high %v250, %v296
      %v524 = vunpack.c.l.s4 1966171168
      %v525 = vunpack.c.0.s8 %v524
      %v526 = vlaneseq
      %v527 = vshrl.u32 %v526, 7
      %v528 = vsub.s32 %v525, %v527
      %v529 = vrot.slane %v521, %v528
      %v531 = vunpack.c.l.s4 1966171168
      %v532 = vunpack.c.0.s8 %v531
      %v533 = vlaneseq
      %v534 = vshrl.u32 %v533, 7
      %v535 = vsub.s32 %v532, %v534
      %v536 = vrot.slane %v522, %v535
      %v537 = vcombine.low %v487, %v529
      %v538 = vcombine.high %v487, %v529
      %v539 = vcombine.low %v494, %v536
      %v541 = vunpack.c.l.s4 1966171168
      %v542 = vunpack.c.0.s8 %v541
      %v543 = vlaneseq
      %v544 = vshrl.u32 %v543, 7
      %v545 = vsub.s32 %v542, %v544
      %v546 = vrot.slane %v537, %v545
      %v548 = vunpack.c.l.s4 1966171168
      %v549 = vunpack.c.0.s8 %v548
      %v550 = vlaneseq
      %v551 = vshrl.u32 %v550, 7
      %v552 = vsub.s32 %v549, %v551
      %v553 = vrot.slane %v539, %v552
      %v555 = vunpack.c.l.s4 1966171168
      %v556 = vunpack.c.0.s8 %v555
      %v557 = vlaneseq
      %v558 = vshrl.u32 %v557, 7
      %v559 = vsub.s32 %v556, %v558
      %v560 = vrot.slane %v538, %v559
      %v561 = vcombine.high %v546, %v546
      %v562 = vcombine.high %v560, %v560
      %v563 = vcombine.low %v251, %v303
      %v564 = vcombine.high %v251, %v303
      %v566 = vunpack.c.l.s4 1966171168
      %v567 = vunpack.c.0.s8 %v566
      %v568 = vlaneseq
      %v569 = vshrl.u32 %v568, 7
      %v570 = vsub.s32 %v567, %v569
      %v571 = vrot.slane %v563, %v570
      %v573 = vunpack.c.l.s4 1966171168
      %v574 = vunpack.c.0.s8 %v573
      %v575 = vlaneseq
      %v576 = vshrl.u32 %v575, 7
      %v577 = vsub.s32 %v574, %v576
      %v578 = vrot.slane %v564, %v577
      %v579 = vcombine.low %v529, %v571
      %v580 = vcombine.high %v529, %v571
      %v581 = vcombine.low %v536, %v578
      %v583 = vunpack.c.l.s4 1966171168
      %v584 = vunpack.c.0.s8 %v583
      %v585 = vlaneseq
      %v586 = vshrl.u32 %v585, 7
      %v587 = vsub.s32 %v584, %v586
      %v588 = vrot.slane %v579, %v587
      %v590 = vunpack.c.l.s4 1966171168
      %v591 = vunpack.c.0.s8 %v590
      %v592 = vlaneseq
      %v593 = vshrl.u32 %v592, 7
      %v594 = vsub.s32 %v591, %v593
      %v595 = vrot.slane %v581, %v594
      %v597 = vunpack.c.l.s4 1966171168
      %v598 = vunpack.c.0.s8 %v597
      %v599 = vlaneseq
      %v600 = vshrl.u32 %v599, 7
      %v601 = vsub.s32 %v598, %v600
      %v602 = vrot.slane %v580, %v601
      %v603 = vcombine.high %v588, %v588
      %v604 = vcombine.high %v602, %v602
      %v605 = vcombine.low %v252, %v310
      %v606 = vcombine.high %v252, %v310
      %v608 = vunpack.c.l.s4 1966171168
      %v609 = vunpack.c.0.s8 %v608
      %v610 = vlaneseq
      %v611 = vshrl.u32 %v610, 7
      %v612 = vsub.s32 %v609, %v611
      %v613 = vrot.slane %v605, %v612
      %v615 = vunpack.c.l.s4 1966171168
      %v616 = vunpack.c.0.s8 %v615
      %v617 = vlaneseq
      %v618 = vshrl.u32 %v617, 7
      %v619 = vsub.s32 %v616, %v618
      %v620 = vrot.slane %v606, %v619
      %v621 = vcombine.low %v571, %v613
      %v622 = vcombine.high %v571, %v613
      %v623 = vcombine.low %v578, %v620
      %v625 = vunpack.c.l.s4 1966171168
      %v626 = vunpack.c.0.s8 %v625
      %v627 = vlaneseq
      %v628 = vshrl.u32 %v627, 7
      %v629 = vsub.s32 %v626, %v628
      %v630 = vrot.slane %v621, %v629
      %v632 = vunpack.c.l.s4 1966171168
      %v633 = vunpack.c.0.s8 %v632
      %v634 = vlaneseq
      %v635 = vshrl.u32 %v634, 7
      %v636 = vsub.s32 %v633, %v635
      %v637 = vrot.slane %v623, %v636
      %v639 = vunpack.c.l.s4 1966171168
      %v640 = vunpack.c.0.s8 %v639
      %v641 = vlaneseq
      %v642 = vshrl.u32 %v641, 7
      %v643 = vsub.s32 %v640, %v642
      %v644 = vrot.slane %v622, %v643
      %v645 = vcombine.high %v630, %v630
      %v646 = vcombine.high %v644, %v644
      %v647 = vcombine.low %v253, %v317
      %v648 = vcombine.high %v253, %v317
      %v650 = vunpack.c.l.s4 1966171168
      %v651 = vunpack.c.0.s8 %v650
      %v652 = vlaneseq
      %v653 = vshrl.u32 %v652, 7
      %v654 = vsub.s32 %v651, %v653
      %v655 = vrot.slane %v647, %v654
      %v657 = vunpack.c.l.s4 1966171168
      %v658 = vunpack.c.0.s8 %v657
      %v659 = vlaneseq
      %v660 = vshrl.u32 %v659, 7
      %v661 = vsub.s32 %v658, %v660
      %v662 = vrot.slane %v648, %v661
      %v663 = vcombine.low %v613, %v655
      %v664 = vcombine.high %v613, %v655
      %v665 = vcombine.low %v620, %v662
      %v667 = vunpack.c.l.s4 1966171168
      %v668 = vunpack.c.0.s8 %v667
      %v669 = vlaneseq
      %v670 = vshrl.u32 %v669, 7
      %v671 = vsub.s32 %v668, %v670
      %v672 = vrot.slane %v663, %v671
      %v674 = vunpack.c.l.s4 1966171168
      %v675 = vunpack.c.0.s8 %v674
      %v676 = vlaneseq
      %v677 = vshrl.u32 %v676, 7
      %v678 = vsub.s32 %v675, %v677
      %v679 = vrot.slane %v665, %v678
      %v681 = vunpack.c.l.s4 1966171168
      %v682 = vunpack.c.0.s8 %v681
      %v683 = vlaneseq
      %v684 = vshrl.u32 %v683, 7
      %v685 = vsub.s32 %v682, %v684
      %v686 = vrot.slane %v664, %v685
      %v687 = vcombine.high %v672, %v672
      %v688 = vcombine.high %v686, %v686
      %v689 = vcombine.low %v254, %v324
      %v690 = vcombine.high %v254, %v324
      %v692 = vunpack.c.l.s4 1966171168
      %v693 = vunpack.c.0.s8 %v692
      %v694 = vlaneseq
      %v695 = vshrl.u32 %v694, 7
      %v696 = vsub.s32 %v693, %v695
      %v697 = vrot.slane %v689, %v696
      %v699 = vunpack.c.l.s4 1966171168
      %v700 = vunpack.c.0.s8 %v699
      %v701 = vlaneseq
      %v702 = vshrl.u32 %v701, 7
      %v703 = vsub.s32 %v700, %v702
      %v704 = vrot.slane %v690, %v703
      %v705 = vcombine.low %v655, %v697
      %v706 = vcombine.high %v655, %v697
      %v707 = vcombine.low %v662, %v704
      %v709 = vunpack.c.l.s4 1966171168
      %v710 = vunpack.c.0.s8 %v709
      %v711 = vlaneseq
      %v712 = vshrl.u32 %v711, 7
      %v713 = vsub.s32 %v710, %v712
      %v714 = vrot.slane %v705, %v713
      %v716 = vunpack.c.l.s4 1966171168
      %v717 = vunpack.c.0.s8 %v716
      %v718 = vlaneseq
      %v719 = vshrl.u32 %v718, 7
      %v720 = vsub.s32 %v717, %v719
      %v721 = vrot.slane %v707, %v720
      %v723 = vunpack.c.l.s4 1966171168
      %v724 = vunpack.c.0.s8 %v723
      %v725 = vlaneseq
      %v726 = vshrl.u32 %v725, 7
      %v727 = vsub.s32 %v724, %v726
      %v728 = vrot.slane %v706, %v727
      %v729 = vcombine.high %v714, %v714
      %v730 = vcombine.high %v728, %v728
      %v731 = vcombine.low %v329, %v336
      %v732 = vcombine.high %v329, %v336
      %v734 = vunpack.c.l.s4 1966171168
      %v735 = vunpack.c.0.s8 %v734
      %v736 = vlaneseq
      %v737 = vshrl.u32 %v736, 7
      %v738 = vsub.s32 %v735, %v737
      %v739 = vrot.slane %v731, %v738
      %v741 = vunpack.c.l.s4 1966171168
      %v742 = vunpack.c.0.s8 %v741
      %v743 = vlaneseq
      %v744 = vshrl.u32 %v743, 7
      %v745 = vsub.s32 %v742, %v744
      %v746 = vrot.slane %v732, %v745
      %v747 = vcombine.low %v697, %v739
      %v748 = vcombine.high %v697, %v739
      %v749 = vcombine.low %v704, %v746
      %v751 = vunpack.c.l.s4 1966171168
      %v752 = vunpack.c.0.s8 %v751
      %v753 = vlaneseq
      %v754 = vshrl.u32 %v753, 7
      %v755 = vsub.s32 %v752, %v754
      %v756 = vrot.slane %v747, %v755
      %v758 = vunpack.c.l.s4 1966171168
      %v759 = vunpack.c.0.s8 %v758
      %v760 = vlaneseq
      %v761 = vshrl.u32 %v760, 7
      %v762 = vsub.s32 %v759, %v761
      %v763 = vrot.slane %v749, %v762
      %v765 = vunpack.c.l.s4 1966171168
      %v766 = vunpack.c.0.s8 %v765
      %v767 = vlaneseq
      %v768 = vshrl.u32 %v767, 7
      %v769 = vsub.s32 %v766, %v768
      %v770 = vrot.slane %v748, %v769
      %v771 = vcombine.high %v756, %v756
      %v772 = vcombine.high %v770, %v770
      %v773 = vld [vmem:[%s1] sm:$0xf]
      %v774 = vld [vmem:[%s1 + $0x4] sm:$0xf]
      %v775 = vld [vmem:[%s1 + $0x8] sm:$0xf]
      %v776 = vld [vmem:[%s1 + $0xc] sm:$0xf]
      %v777 = vld [vmem:[%s1 + $0x10] sm:$0xf]
      %v778 = vld [vmem:[%s1 + $0x14] sm:$0xf]
      %v779 = vld [vmem:[%s1 + $0x18] sm:$0xf]
      %v780 = vld [vmem:[%s1 + $0x1c] sm:$0xf]
      %v781 = vld [vmem:[%s1 + $0x20] sm:$0xf]
      %v782 = vld [vmem:[%s1 + $0x24] sm:$0xf]
      %v783 = vld [vmem:[%s1 + $0x28] sm:$0xf]
      %v784 = vld [vmem:[%s1 + $0x2c] sm:$0xf]
      %v785 = vld [vmem:[%s1 + $0x30] sm:$0xf]
      %v786 = vld [vmem:[%s1 + $0x34] sm:$0xf]
      %v787 = vld [vmem:[%s1 + $0x38] sm:$0xf]
      %v788 = vld [vmem:[%s1 + $0x3c] sm:$0xf]
      %v789 = vld [vmem:[%s1 + $0x40] sm:$0xf]
      %v790 = vld [vmem:[%s1 + $0x44] sm:$0xf]
      %v791 = vld [vmem:[%s1 + $0x48] sm:$0xf]
      %v792 = vld [vmem:[%s1 + $0x4c] sm:$0xf]
      %v793 = vld [vmem:[%s1 + $0x50] sm:$0xf]
      %v794 = vld [vmem:[%s1 + $0x54] sm:$0xf]
      %v795 = vld [vmem:[%s1 + $0x58] sm:$0xf]
      %v796 = vld [vmem:[%s1 + $0x5c] sm:$0xf]
      %v797 = vld [vmem:[%s1 + $0x60] sm:$0xf]
      %v798 = vld [vmem:[%s1 + $0x64] sm:$0xf]
      %v799 = vld [vmem:[%s1 + $0x68] sm:$0xf]
      %v800 = vld [vmem:[%s1 + $0x6c] sm:$0xf]
      %v801 = vld [vmem:[%s1 + $0x70] sm:$0xf]
      %v802 = vld [vmem:[%s1 + $0x74] sm:$0xf]
      %v803 = vld [vmem:[%s1 + $0x78] sm:$0xf]
      %v804 = vld [vmem:[%s1 + $0x7c] sm:$0xf]
      %v805 = vld [vmem:[%s1 + $0x80] sm:$0xf]
      %v806 = vld [vmem:[%s1 + $0x84] sm:$0xf]
      %v807 = vld [vmem:[%s1 + $0x88] sm:$0xf]
      %v808 = vld [vmem:[%s1 + $0x8c] sm:$0xf]
      %v809 = vld [vmem:[%s1 + $0x90] sm:$0xf]
      %v810 = vld [vmem:[%s1 + $0x94] sm:$0xf]
      %v811 = vld [vmem:[%s1 + $0x98] sm:$0xf]
      %v812 = vld [vmem:[%s1 + $0x9c] sm:$0xf]
      %v813 = vld [vmem:[%s1 + $0xa0] sm:$0xf]
      %v814 = vld [vmem:[%s1 + $0xa4] sm:$0xf]
      %v815 = vld [vmem:[%s1 + $0xa8] sm:$0xf]
      %v816 = vld [vmem:[%s1 + $0xac] sm:$0xf]
      %v817 = vld [vmem:[%s1 + $0xb0] sm:$0xf]
      %v818 = vld [vmem:[%s1 + $0xb4] sm:$0xf]
      %v819 = vld [vmem:[%s1 + $0xb8] sm:$0xf]
      %v820 = vld [vmem:[%s1 + $0xbc] sm:$0xf]
      %v821 = vld [vmem:[%s1 + $0xc0] sm:$0xf]
      %v822 = vld [vmem:[%s1 + $0xc4] sm:$0xf]
      %v823 = vld [vmem:[%s1 + $0xc8] sm:$0xf]
      %v824 = vld [vmem:[%s1 + $0xcc] sm:$0xf]
      %v825 = vld [vmem:[%s1 + $0xd0] sm:$0xf]
      %v826 = vld [vmem:[%s1 + $0xd4] sm:$0xf]
      %v827 = vld [vmem:[%s1 + $0xd8] sm:$0xf]
      %v828 = vld [vmem:[%s1 + $0xdc] sm:$0xf]
      %v829 = vld [vmem:[%s1 + $0xe0] sm:$0xf]
      %v830 = vld [vmem:[%s1 + $0xe4] sm:$0xf]
      %v831 = vld [vmem:[%s1 + $0xe8] sm:$0xf]
      %v832 = vld [vmem:[%s1 + $0xec] sm:$0xf]
      %v833 = vld [vmem:[%s1 + $0xf0] sm:$0xf]
      %v834 = vld [vmem:[%s1 + $0xf4] sm:$0xf]
      %v835 = vld [vmem:[%s1 + $0xf8] sm:$0xf]
      %v836 = vld [vmem:[%s1 + $0xfc] sm:$0xf]
      %v837 = vcombine.low %v378, %v392
      %v838 = vcombine.low %v393, %v394
      %v839 = vcombine.low %v385, %v420
      %v840 = vcombine.low %v434, %v435
      %v842 = vunpack.c.l.s4 1966171168
      %v843 = vunpack.c.0.s8 %v842
      %v844 = vlaneseq
      %v845 = vshrl.u32 %v844, 7
      %v846 = vsub.s32 %v843, %v845
      %v847 = vrot.slane %v837, %v846
      %v849 = vunpack.c.l.s4 1966171168
      %v850 = vunpack.c.0.s8 %v849
      %v851 = vlaneseq
      %v852 = vshrl.u32 %v851, 7
      %v853 = vsub.s32 %v850, %v852
      %v854 = vrot.slane %v838, %v853
      %v856 = vunpack.c.l.s4 1966171168
      %v857 = vunpack.c.0.s8 %v856
      %v858 = vlaneseq
      %v859 = vshrl.u32 %v858, 7
      %v860 = vsub.s32 %v857, %v859
      %v861 = vrot.slane %v839, %v860
      %v863 = vunpack.c.l.s4 1966171168
      %v864 = vunpack.c.0.s8 %v863
      %v865 = vlaneseq
      %v866 = vshrl.u32 %v865, 7
      %v867 = vsub.s32 %v864, %v866
      %v868 = vrot.slane %v840, %v867
      %v869 = vcombine.low %v847, %v854
      %v870 = vcombine.high %v847, %v854
      %v871 = vcombine.low %v861, %v868
      %v872 = vcombine.high %v861, %v868
      %v874 = vunpack.c.l.s4 1966171168
      %v875 = vunpack.c.0.s8 %v874
      %v876 = vlaneseq
      %v877 = vshrl.u32 %v876, 7
      %v878 = vsub.s32 %v875, %v877
      %v879 = vrot.slane %v869, %v878
      %v881 = vunpack.c.l.s4 1966171168
      %v882 = vunpack.c.0.s8 %v881
      %v883 = vlaneseq
      %v884 = vshrl.u32 %v883, 7
      %v885 = vsub.s32 %v882, %v884
      %v886 = vrot.slane %v870, %v885
      %v888 = vunpack.c.l.s4 1966171168
      %v889 = vunpack.c.0.s8 %v888
      %v890 = vlaneseq
      %v891 = vshrl.u32 %v890, 7
      %v892 = vsub.s32 %v889, %v891
      %v893 = vrot.slane %v871, %v892
      %v895 = vunpack.c.l.s4 1966171168
      %v896 = vunpack.c.0.s8 %v895
      %v897 = vlaneseq
      %v898 = vshrl.u32 %v897, 7
      %v899 = vsub.s32 %v896, %v898
      %v900 = vrot.slane %v872, %v899
      %v901 = vcombine.low %v879, %v893
      %v902 = vcombine.high %v879, %v893
      %v903 = vcombine.low %v886, %v900
      %v904 = vcombine.high %v886, %v900
      %v905 = vcombine.low %v436, %v427
      %v906 = vcombine.low %v462, %v476
      %v907 = vcombine.low %v477, %v478
      %v908 = vcombine.low %v469, %v504
      %v910 = vunpack.c.l.s4 1966171168
      %v911 = vunpack.c.0.s8 %v910
      %v912 = vlaneseq
      %v913 = vshrl.u32 %v912, 7
      %v914 = vsub.s32 %v911, %v913
      %v915 = vrot.slane %v905, %v914
      %v917 = vunpack.c.l.s4 1966171168
      %v918 = vunpack.c.0.s8 %v917
      %v919 = vlaneseq
      %v920 = vshrl.u32 %v919, 7
      %v921 = vsub.s32 %v918, %v920
      %v922 = vrot.slane %v906, %v921
      %v924 = vunpack.c.l.s4 1966171168
      %v925 = vunpack.c.0.s8 %v924
      %v926 = vlaneseq
      %v927 = vshrl.u32 %v926, 7
      %v928 = vsub.s32 %v925, %v927
      %v929 = vrot.slane %v907, %v928
      %v931 = vunpack.c.l.s4 1966171168
      %v932 = vunpack.c.0.s8 %v931
      %v933 = vlaneseq
      %v934 = vshrl.u32 %v933, 7
      %v935 = vsub.s32 %v932, %v934
      %v936 = vrot.slane %v908, %v935
      %v937 = vcombine.low %v915, %v922
      %v938 = vcombine.high %v915, %v922
      %v939 = vcombine.low %v929, %v936
      %v940 = vcombine.high %v929, %v936
      %v942 = vunpack.c.l.s4 1966171168
      %v943 = vunpack.c.0.s8 %v942
      %v944 = vlaneseq
      %v945 = vshrl.u32 %v944, 7
      %v946 = vsub.s32 %v943, %v945
      %v947 = vrot.slane %v937, %v946
      %v949 = vunpack.c.l.s4 1966171168
      %v950 = vunpack.c.0.s8 %v949
      %v951 = vlaneseq
      %v952 = vshrl.u32 %v951, 7
      %v953 = vsub.s32 %v950, %v952
      %v954 = vrot.slane %v938, %v953
      %v956 = vunpack.c.l.s4 1966171168
      %v957 = vunpack.c.0.s8 %v956
      %v958 = vlaneseq
      %v959 = vshrl.u32 %v958, 7
      %v960 = vsub.s32 %v957, %v959
      %v961 = vrot.slane %v939, %v960
      %v963 = vunpack.c.l.s4 1966171168
      %v964 = vunpack.c.0.s8 %v963
      %v965 = vlaneseq
      %v966 = vshrl.u32 %v965, 7
      %v967 = vsub.s32 %v964, %v966
      %v968 = vrot.slane %v940, %v967
      %v969 = vcombine.low %v947, %v961
      %v970 = vcombine.high %v947, %v961
      %v971 = vcombine.low %v954, %v968
      %v972 = vcombine.high %v954, %v968
      %v973 = vcombine.low %v518, %v519
      %v974 = vcombine.low %v520, %v511
      %v975 = vcombine.low %v546, %v560
      %v976 = vcombine.low %v561, %v562
      %v978 = vunpack.c.l.s4 1966171168
      %v979 = vunpack.c.0.s8 %v978
      %v980 = vlaneseq
      %v981 = vshrl.u32 %v980, 7
      %v982 = vsub.s32 %v979, %v981
      %v983 = vrot.slane %v973, %v982
      %v985 = vunpack.c.l.s4 1966171168
      %v986 = vunpack.c.0.s8 %v985
      %v987 = vlaneseq
      %v988 = vshrl.u32 %v987, 7
      %v989 = vsub.s32 %v986, %v988
      %v990 = vrot.slane %v974, %v989
      %v992 = vunpack.c.l.s4 1966171168
      %v993 = vunpack.c.0.s8 %v992
      %v994 = vlaneseq
      %v995 = vshrl.u32 %v994, 7
      %v996 = vsub.s32 %v993, %v995
      %v997 = vrot.slane %v975, %v996
      %v999 = vunpack.c.l.s4 1966171168
      %v1000 = vunpack.c.0.s8 %v999
      %v1001 = vlaneseq
      %v1002 = vshrl.u32 %v1001, 7
      %v1003 = vsub.s32 %v1000, %v1002
      %v1004 = vrot.slane %v976, %v1003
      %v1005 = vcombine.low %v983, %v990
      %v1006 = vcombine.high %v983, %v990
      %v1007 = vcombine.low %v997, %v1004
      %v1008 = vcombine.high %v997, %v1004
      %v1010 = vunpack.c.l.s4 1966171168
      %v1011 = vunpack.c.0.s8 %v1010
      %v1012 = vlaneseq
      %v1013 = vshrl.u32 %v1012, 7
      %v1014 = vsub.s32 %v1011, %v1013
      %v1015 = vrot.slane %v1005, %v1014
      %v1017 = vunpack.c.l.s4 1966171168
      %v1018 = vunpack.c.0.s8 %v1017
      %v1019 = vlaneseq
      %v1020 = vshrl.u32 %v1019, 7
      %v1021 = vsub.s32 %v1018, %v1020
      %v1022 = vrot.slane %v1006, %v1021
      %v1024 = vunpack.c.l.s4 1966171168
      %v1025 = vunpack.c.0.s8 %v1024
      %v1026 = vlaneseq
      %v1027 = vshrl.u32 %v1026, 7
      %v1028 = vsub.s32 %v1025, %v1027
      %v1029 = vrot.slane %v1007, %v1028
      %v1031 = vunpack.c.l.s4 1966171168
      %v1032 = vunpack.c.0.s8 %v1031
      %v1033 = vlaneseq
      %v1034 = vshrl.u32 %v1033, 7
      %v1035 = vsub.s32 %v1032, %v1034
      %v1036 = vrot.slane %v1008, %v1035
      %v1037 = vcombine.low %v1015, %v1029
      %v1038 = vcombine.high %v1015, %v1029
      %v1039 = vcombine.low %v1022, %v1036
      %v1040 = vcombine.high %v1022, %v1036
      %v1041 = vcombine.low %v553, %v588
      %v1042 = vcombine.low %v602, %v603
      %v1043 = vcombine.low %v604, %v595
      %v1044 = vcombine.low %v630, %v644
      %v1046 = vunpack.c.l.s4 1966171168
      %v1047 = vunpack.c.0.s8 %v1046
      %v1048 = vlaneseq
      %v1049 = vshrl.u32 %v1048, 7
      %v1050 = vsub.s32 %v1047, %v1049
      %v1051 = vrot.slane %v1041, %v1050
      %v1053 = vunpack.c.l.s4 1966171168
      %v1054 = vunpack.c.0.s8 %v1053
      %v1055 = vlaneseq
      %v1056 = vshrl.u32 %v1055, 7
      %v1057 = vsub.s32 %v1054, %v1056
      %v1058 = vrot.slane %v1042, %v1057
      %v1060 = vunpack.c.l.s4 1966171168
      %v1061 = vunpack.c.0.s8 %v1060
      %v1062 = vlaneseq
      %v1063 = vshrl.u32 %v1062, 7
      %v1064 = vsub.s32 %v1061, %v1063
      %v1065 = vrot.slane %v1043, %v1064
      %v1067 = vunpack.c.l.s4 1966171168
      %v1068 = vunpack.c.0.s8 %v1067
      %v1069 = vlaneseq
      %v1070 = vshrl.u32 %v1069, 7
      %v1071 = vsub.s32 %v1068, %v1070
      %v1072 = vrot.slane %v1044, %v1071
      %v1073 = vcombine.low %v1051, %v1058
      %v1074 = vcombine.high %v1051, %v1058
      %v1075 = vcombine.low %v1065, %v1072
      %v1076 = vcombine.high %v1065, %v1072
      %v1078 = vunpack.c.l.s4 1966171168
      %v1079 = vunpack.c.0.s8 %v1078
      %v1080 = vlaneseq
      %v1081 = vshrl.u32 %v1080, 7
      %v1082 = vsub.s32 %v1079, %v1081
      %v1083 = vrot.slane %v1073, %v1082
      %v1085 = vunpack.c.l.s4 1966171168
      %v1086 = vunpack.c.0.s8 %v1085
      %v1087 = vlaneseq
      %v1088 = vshrl.u32 %v1087, 7
      %v1089 = vsub.s32 %v1086, %v1088
      %v1090 = vrot.slane %v1074, %v1089
      %v1092 = vunpack.c.l.s4 1966171168
      %v1093 = vunpack.c.0.s8 %v1092
      %v1094 = vlaneseq
      %v1095 = vshrl.u32 %v1094, 7
      %v1096 = vsub.s32 %v1093, %v1095
      %v1097 = vrot.slane %v1075, %v1096
      %v1099 = vunpack.c.l.s4 1966171168
      %v1100 = vunpack.c.0.s8 %v1099
      %v1101 = vlaneseq
      %v1102 = vshrl.u32 %v1101, 7
      %v1103 = vsub.s32 %v1100, %v1102
      %v1104 = vrot.slane %v1076, %v1103
      %v1105 = vcombine.low %v1083, %v1097
      %v1106 = vcombine.high %v1083, %v1097
      %v1107 = vcombine.low %v1090, %v1104
      %v1108 = vcombine.high %v1090, %v1104
      %v1109 = vcombine.low %v645, %v646
      %v1110 = vcombine.low %v637, %v672
      %v1111 = vcombine.low %v686, %v687
      %v1112 = vcombine.low %v688, %v679
      %v1114 = vunpack.c.l.s4 1966171168
      %v1115 = vunpack.c.0.s8 %v1114
      %v1116 = vlaneseq
      %v1117 = vshrl.u32 %v1116, 7
      %v1118 = vsub.s32 %v1115, %v1117
      %v1119 = vrot.slane %v1109, %v1118
      %v1121 = vunpack.c.l.s4 1966171168
      %v1122 = vunpack.c.0.s8 %v1121
      %v1123 = vlaneseq
      %v1124 = vshrl.u32 %v1123, 7
      %v1125 = vsub.s32 %v1122, %v1124
      %v1126 = vrot.slane %v1110, %v1125
      %v1128 = vunpack.c.l.s4 1966171168
      %v1129 = vunpack.c.0.s8 %v1128
      %v1130 = vlaneseq
      %v1131 = vshrl.u32 %v1130, 7
      %v1132 = vsub.s32 %v1129, %v1131
      %v1133 = vrot.slane %v1111, %v1132
      %v1135 = vunpack.c.l.s4 1966171168
      %v1136 = vunpack.c.0.s8 %v1135
      %v1137 = vlaneseq
      %v1138 = vshrl.u32 %v1137, 7
      %v1139 = vsub.s32 %v1136, %v1138
      %v1140 = vrot.slane %v1112, %v1139
      %v1141 = vcombine.low %v1119, %v1126
      %v1142 = vcombine.high %v1119, %v1126
      %v1143 = vcombine.low %v1133, %v1140
      %v1144 = vcombine.high %v1133, %v1140
      %v1146 = vunpack.c.l.s4 1966171168
      %v1147 = vunpack.c.0.s8 %v1146
      %v1148 = vlaneseq
      %v1149 = vshrl.u32 %v1148, 7
      %v1150 = vsub.s32 %v1147, %v1149
      %v1151 = vrot.slane %v1141, %v1150
      %v1153 = vunpack.c.l.s4 1966171168
      %v1154 = vunpack.c.0.s8 %v1153
      %v1155 = vlaneseq
      %v1156 = vshrl.u32 %v1155, 7
      %v1157 = vsub.s32 %v1154, %v1156
      %v1158 = vrot.slane %v1142, %v1157
      %v1160 = vunpack.c.l.s4 1966171168
      %v1161 = vunpack.c.0.s8 %v1160
      %v1162 = vlaneseq
      %v1163 = vshrl.u32 %v1162, 7
      %v1164 = vsub.s32 %v1161, %v1163
      %v1165 = vrot.slane %v1143, %v1164
      %v1167 = vunpack.c.l.s4 1966171168
      %v1168 = vunpack.c.0.s8 %v1167
      %v1169 = vlaneseq
      %v1170 = vshrl.u32 %v1169, 7
      %v1171 = vsub.s32 %v1168, %v1170
      %v1172 = vrot.slane %v1144, %v1171
      %v1173 = vcombine.low %v1151, %v1165
      %v1174 = vcombine.high %v1151, %v1165
      %v1175 = vcombine.low %v1158, %v1172
      %v1176 = vcombine.high %v1158, %v1172
      %v1177 = vcombine.low %v714, %v728
      %v1178 = vcombine.low %v729, %v730
      %v1179 = vcombine.low %v721, %v756
      %v1180 = vcombine.low %v770, %v771
      %v1182 = vunpack.c.l.s4 1966171168
      %v1183 = vunpack.c.0.s8 %v1182
      %v1184 = vlaneseq
      %v1185 = vshrl.u32 %v1184, 7
      %v1186 = vsub.s32 %v1183, %v1185
      %v1187 = vrot.slane %v1177, %v1186
      %v1189 = vunpack.c.l.s4 1966171168
      %v1190 = vunpack.c.0.s8 %v1189
      %v1191 = vlaneseq
      %v1192 = vshrl.u32 %v1191, 7
      %v1193 = vsub.s32 %v1190, %v1192
      %v1194 = vrot.slane %v1178, %v1193
      %v1196 = vunpack.c.l.s4 1966171168
      %v1197 = vunpack.c.0.s8 %v1196
      %v1198 = vlaneseq
      %v1199 = vshrl.u32 %v1198, 7
      %v1200 = vsub.s32 %v1197, %v1199
      %v1201 = vrot.slane %v1179, %v1200
      %v1203 = vunpack.c.l.s4 1966171168
      %v1204 = vunpack.c.0.s8 %v1203
      %v1205 = vlaneseq
      %v1206 = vshrl.u32 %v1205, 7
      %v1207 = vsub.s32 %v1204, %v1206
      %v1208 = vrot.slane %v1180, %v1207
      %v1209 = vcombine.low %v1187, %v1194
      %v1210 = vcombine.high %v1187, %v1194
      %v1211 = vcombine.low %v1201, %v1208
      %v1212 = vcombine.high %v1201, %v1208
      %v1214 = vunpack.c.l.s4 1966171168
      %v1215 = vunpack.c.0.s8 %v1214
      %v1216 = vlaneseq
      %v1217 = vshrl.u32 %v1216, 7
      %v1218 = vsub.s32 %v1215, %v1217
      %v1219 = vrot.slane %v1209, %v1218
      %v1221 = vunpack.c.l.s4 1966171168
      %v1222 = vunpack.c.0.s8 %v1221
      %v1223 = vlaneseq
      %v1224 = vshrl.u32 %v1223, 7
      %v1225 = vsub.s32 %v1222, %v1224
      %v1226 = vrot.slane %v1210, %v1225
      %v1228 = vunpack.c.l.s4 1966171168
      %v1229 = vunpack.c.0.s8 %v1228
      %v1230 = vlaneseq
      %v1231 = vshrl.u32 %v1230, 7
      %v1232 = vsub.s32 %v1229, %v1231
      %v1233 = vrot.slane %v1211, %v1232
      %v1235 = vunpack.c.l.s4 1966171168
      %v1236 = vunpack.c.0.s8 %v1235
      %v1237 = vlaneseq
      %v1238 = vshrl.u32 %v1237, 7
      %v1239 = vsub.s32 %v1236, %v1238
      %v1240 = vrot.slane %v1212, %v1239
      %v1241 = vcombine.low %v1219, %v1233
      %v1242 = vcombine.high %v1219, %v1233
      %v1243 = vcombine.low %v1226, %v1240
      %v1244 = vcombine.high %v1226, %v1240
      %v1245 = vcombine.low %v772, %v763
      %v1247 = vunpack.c.l.s4 1966171168
      %v1248 = vunpack.c.0.s8 %v1247
      %v1249 = vlaneseq
      %v1250 = vshrl.u32 %v1249, 7
      %v1251 = vsub.s32 %v1248, %v1250
      %v1252 = vrot.slane %v1245, %v1251
      %v1253 = vcombine.high %v1252, %v1252
      %v1255 = vunpack.c.l.s4 1966171168
      %v1256 = vunpack.c.0.s8 %v1255
      %v1257 = vlaneseq
      %v1258 = vshrl.u32 %v1257, 7
      %v1259 = vsub.s32 %v1256, %v1258
      %v1260 = vrot.slane %v1252, %v1259
      %v1262 = vunpack.c.l.s4 1966171168
      %v1263 = vunpack.c.0.s8 %v1262
      %v1264 = vlaneseq
      %v1265 = vshrl.u32 %v1264, 7
      %v1266 = vsub.s32 %v1263, %v1265
      %v1267 = vrot.slane %v1253, %v1266
      %v1268 = vcombine.high %v1260, %v1260
      %v1269 = vcombine.high %v1267, %v1267
      %v1362 = vunpack.c.l.b16 %v773
      %v1363 = vunpack.c.l.b16 %v774
      %v1364 = vunpack.c.l.b16 %v775
      %v1365 = vunpack.c.l.b16 %v776
      %v1366 = vunpack.c.l.b16 %v777
      %v1367 = vunpack.c.l.b16 %v778
      %v1368 = vunpack.c.l.b16 %v779
      %v1369 = vunpack.c.l.b16 %v780
      %v1370 = vunpack.c.l.b16 %v781
      %v1371 = vunpack.c.l.b16 %v782
      %v1372 = vunpack.c.l.b16 %v783
      %v1373 = vunpack.c.l.b16 %v784
      %v1374 = vunpack.c.l.b16 %v785
      %v1375 = vunpack.c.l.b16 %v786
      %v1376 = vunpack.c.l.b16 %v787
      %v1377 = vunpack.c.l.b16 %v788
      %v1378 = vunpack.c.l.b16 %v789
      %v1379 = vunpack.c.l.b16 %v790
      %v1380 = vunpack.c.l.b16 %v791
      %v1381 = vunpack.c.l.b16 %v792
      %v1382 = vunpack.c.l.b16 %v793
      %v1383 = vunpack.c.l.b16 %v794
      %v1384 = vunpack.c.l.b16 %v795
      %v1385 = vunpack.c.l.b16 %v796
      %v1386 = vunpack.c.l.b16 %v797
      %v1387 = vunpack.c.l.b16 %v798
      %v1388 = vunpack.c.l.b16 %v799
      %v1389 = vunpack.c.l.b16 %v800
      %v1390 = vunpack.c.l.b16 %v801
      %v1391 = vunpack.c.l.b16 %v802
      %v1392 = vunpack.c.l.b16 %v803
      %v1393 = vunpack.c.l.b16 %v804
      %v1394 = vunpack.c.l.b16 %v805
      %v1395 = vunpack.c.l.b16 %v806
      %v1396 = vunpack.c.l.b16 %v807
      %v1397 = vunpack.c.l.b16 %v808
      %v1398 = vunpack.c.l.b16 %v809
      %v1399 = vunpack.c.l.b16 %v810
      %v1400 = vunpack.c.l.b16 %v811
      %v1401 = vunpack.c.l.b16 %v812
      %v1402 = vunpack.c.l.b16 %v813
      %v1403 = vunpack.c.l.b16 %v814
      %v1404 = vunpack.c.l.b16 %v815
      %v1405 = vunpack.c.l.b16 %v816
      %v1406 = vunpack.c.l.b16 %v817
      %v1407 = vunpack.c.l.b16 %v818
      %v1408 = vunpack.c.l.b16 %v819
      %v1409 = vunpack.c.l.b16 %v820
      %v1410 = vunpack.c.l.b16 %v821
      %v1411 = vunpack.c.l.b16 %v822
      %v1412 = vunpack.c.l.b16 %v823
      %v1413 = vunpack.c.l.b16 %v824
      %v1414 = vunpack.c.l.b16 %v825
      %v1415 = vunpack.c.l.b16 %v826
      %v1416 = vunpack.c.l.b16 %v827
      %v1417 = vunpack.c.l.b16 %v828
      %v1418 = vunpack.c.l.b16 %v829
      %v1419 = vunpack.c.l.b16 %v830
      %v1420 = vunpack.c.l.b16 %v831
      %v1421 = vunpack.c.l.b16 %v832
      %v1422 = vunpack.c.l.b16 %v833
      %v1423 = vunpack.c.l.b16 %v834
      %v1424 = vunpack.c.l.b16 %v835
      %v1425 = vunpack.c.l.b16 %v836
      %v1426 = vpack.c.b16 %v1363, %v1362
      %v1427 = vpack.c.b16 %v1365, %v1364
      %v1428 = vpack.c.b16 %v1367, %v1366
      %v1429 = vpack.c.b16 %v1369, %v1368
      %v1430 = vpack.c.b16 %v1371, %v1370
      %v1431 = vpack.c.b16 %v1373, %v1372
      %v1432 = vpack.c.b16 %v1375, %v1374
      %v1433 = vpack.c.b16 %v1377, %v1376
      %v1434 = vpack.c.b16 %v1379, %v1378
      %v1435 = vpack.c.b16 %v1381, %v1380
      %v1436 = vpack.c.b16 %v1383, %v1382
      %v1437 = vpack.c.b16 %v1385, %v1384
      %v1438 = vpack.c.b16 %v1387, %v1386
      %v1439 = vpack.c.b16 %v1389, %v1388
      %v1440 = vpack.c.b16 %v1391, %v1390
      %v1441 = vpack.c.b16 %v1393, %v1392
      %v1442 = vpack.c.b16 %v1395, %v1394
      %v1443 = vpack.c.b16 %v1397, %v1396
      %v1444 = vpack.c.b16 %v1399, %v1398
      %v1445 = vpack.c.b16 %v1401, %v1400
      %v1446 = vpack.c.b16 %v1403, %v1402
      %v1447 = vpack.c.b16 %v1405, %v1404
      %v1448 = vpack.c.b16 %v1407, %v1406
      %v1449 = vpack.c.b16 %v1409, %v1408
      %v1450 = vpack.c.b16 %v1411, %v1410
      %v1451 = vpack.c.b16 %v1413, %v1412
      %v1452 = vpack.c.b16 %v1415, %v1414
      %v1453 = vpack.c.b16 %v1417, %v1416
      %v1454 = vpack.c.b16 %v1419, %v1418
      %v1455 = vpack.c.b16 %v1421, %v1420
      %v1456 = vpack.c.b16 %v1423, %v1422
      %v1457 = vpack.c.b16 %v1425, %v1424
      %1490 = vmatprep.subr.bf16.mxu0 0
      %1491 = vmatpush1.bf16.msra.mxu0 %v1433
      %1492 = vmatprep.subr.bf16.mxu0 0
      %1493 = vmatpush1.bf16.msra.mxu0 %v1432
      %1494 = vmatprep.subr.bf16.mxu0 0
      %1495 = vmatpush1.bf16.msra.mxu0 %v1431
      %1496 = vmatprep.subr.bf16.mxu0 0
      %1497 = vmatpush1.bf16.msra.mxu0 %v1430
      %1498 = vmatprep.subr.bf16.mxu0 0
      %1499 = vmatpush1.bf16.msra.mxu0 %v1429
      %1500 = vmatprep.subr.bf16.mxu0 0
      %1501 = vmatpush1.bf16.msra.mxu0 %v1428
      %1502 = vmatprep.subr.bf16.mxu0 0
      %1503 = vmatpush1.bf16.msra.mxu0 %v1427
      %1504 = vmatprep.subr.bf16.mxu0 0
      %1505 = vmatpush1.bf16.msra.mxu0 %v1426
      %1506 = vmatprep.subr.bf16.mxu0 0
      %1507 = vmatpush2.bf16.msra.mxu0 %v1441
      %1508 = vmatprep.subr.bf16.mxu0 0
      %1509 = vmatpush2.bf16.msra.mxu0 %v1440
      %1510 = vmatprep.subr.bf16.mxu0 0
      %1511 = vmatpush2.bf16.msra.mxu0 %v1439
      %1512 = vmatprep.subr.bf16.mxu0 0
      %1513 = vmatpush2.bf16.msra.mxu0 %v1438
      %1514 = vmatprep.subr.bf16.mxu0 0
      %1515 = vmatpush2.bf16.msra.mxu0 %v1437
      %1516 = vmatprep.subr.bf16.mxu0 0
      %1517 = vmatpush2.bf16.msra.mxu0 %v1436
      %1518 = vmatprep.subr.bf16.mxu0 0
      %1519 = vmatpush2.bf16.msra.mxu0 %v1435
      %1520 = vmatprep.subr.bf16.mxu0 0
      %1521 = vmatpush2.bf16.msra.mxu0 %v1434
      %1522 = vmatprep.mubr.bf16.mxu0 %v903
      %1523 = vmatmul.mubr.bf16.gmra.mxu0 %v901
      %v1524 = vpop.f32.mrf.mxu0
      %v1525 = vadd.f32 0.0, %v1524
      %v1526 = vpop.f32.mrf.mxu0
      %v1527 = vpop.f32.mrf.mxu0
      %v1528 = vadd.f32 0.0, %v1527
      %v1529 = vpop.f32.mrf.mxu0
      %1530 = vmatprep.mubr.bf16.mxu0 %v971
      %1531 = vmatmul.mubr.bf16.gmra.mxu0 %v969
      %v1532 = vpop.f32.mrf.mxu0
      %v1533 = vadd.f32 0.0, %v1532
      %v1534 = vpop.f32.mrf.mxu0
      %v1535 = vpop.f32.mrf.mxu0
      %v1536 = vadd.f32 0.0, %v1535
      %v1537 = vpop.f32.mrf.mxu0
      %1538 = vmatprep.mubr.bf16.mxu0 %v1039
      %1539 = vmatmul.mubr.bf16.gmra.mxu0 %v1037
      %v1540 = vpop.f32.mrf.mxu0
      %v1541 = vadd.f32 0.0, %v1540
      %v1542 = vpop.f32.mrf.mxu0
      %v1543 = vpop.f32.mrf.mxu0
      %v1544 = vadd.f32 0.0, %v1543
      %v1545 = vpop.f32.mrf.mxu0
      %1546 = vmatprep.mubr.bf16.mxu0 %v1107
      %1547 = vmatmul.mubr.bf16.gmra.mxu0 %v1105
      %v1548 = vpop.f32.mrf.mxu0
      %v1549 = vadd.f32 0.0, %v1548
      %v1550 = vpop.f32.mrf.mxu0
      %v1551 = vpop.f32.mrf.mxu0
      %v1552 = vadd.f32 0.0, %v1551
      %v1553 = vpop.f32.mrf.mxu0
      %1554 = vmatprep.mubr.bf16.mxu0 %v1175
      %1555 = vmatmul.mubr.bf16.gmra.mxu0 %v1173
      %v1556 = vpop.f32.mrf.mxu0
      %v1557 = vadd.f32 0.0, %v1556
      %v1558 = vpop.f32.mrf.mxu0
      %v1559 = vpop.f32.mrf.mxu0
      %v1560 = vadd.f32 0.0, %v1559
      %v1561 = vpop.f32.mrf.mxu0
      %1562 = vmatprep.mubr.bf16.mxu0 %v1243
      %1563 = vmatmul.mubr.bf16.gmra.mxu0 %v1241
      %v1564 = vpop.f32.mrf.mxu0
      %v1565 = vadd.f32 0.0, %v1564
      %v1566 = vpop.f32.mrf.mxu0
      %v1567 = vpop.f32.mrf.mxu0
      %v1568 = vadd.f32 0.0, %v1567
      %v1569 = vpop.f32.mrf.mxu0
      %1570 = vmatprep.mubr.bf16.mxu0 %v1267
      %1571 = vmatmul.mubr.bf16.gmra.mxu0 %v1260
      %v1572 = vpop.f32.mrf.mxu0
      %v1573 = vadd.f32 0.0, %v1572
      %v1574 = vpop.f32.mrf.mxu0
      %v1575 = vpop.f32.mrf.mxu0
      %v1576 = vpop.f32.mrf.mxu0
      %1577 = vdwg.mxu0
      %1578 = vmatprep.subr.bf16.mxu0 0
      %1579 = vmatpush1.bf16.msra.mxu0 %v1449
      %1580 = vmatprep.subr.bf16.mxu0 0
      %1581 = vmatpush1.bf16.msra.mxu0 %v1448
      %1582 = vmatprep.subr.bf16.mxu0 0
      %1583 = vmatpush1.bf16.msra.mxu0 %v1447
      %1584 = vmatprep.subr.bf16.mxu0 0
      %1585 = vmatpush1.bf16.msra.mxu0 %v1446
      %1586 = vmatprep.subr.bf16.mxu0 0
      %1587 = vmatpush1.bf16.msra.mxu0 %v1445
      %1588 = vmatprep.subr.bf16.mxu0 0
      %1589 = vmatpush1.bf16.msra.mxu0 %v1444
      %1590 = vmatprep.subr.bf16.mxu0 0
      %1591 = vmatpush1.bf16.msra.mxu0 %v1443
      %1592 = vmatprep.subr.bf16.mxu0 0
      %1593 = vmatpush1.bf16.msra.mxu0 %v1442
      %1594 = vmatprep.subr.bf16.mxu0 0
      %1595 = vmatpush2.bf16.msra.mxu0 %v1457
      %1596 = vmatprep.subr.bf16.mxu0 0
      %1597 = vmatpush2.bf16.msra.mxu0 %v1456
      %1598 = vmatprep.subr.bf16.mxu0 0
      %1599 = vmatpush2.bf16.msra.mxu0 %v1455
      %1600 = vmatprep.subr.bf16.mxu0 0
      %1601 = vmatpush2.bf16.msra.mxu0 %v1454
      %1602 = vmatprep.subr.bf16.mxu0 0
      %1603 = vmatpush2.bf16.msra.mxu0 %v1453
      %1604 = vmatprep.subr.bf16.mxu0 0
      %1605 = vmatpush2.bf16.msra.mxu0 %v1452
      %1606 = vmatprep.subr.bf16.mxu0 0
      %1607 = vmatpush2.bf16.msra.mxu0 %v1451
      %1608 = vmatprep.subr.bf16.mxu0 0
      %1609 = vmatpush2.bf16.msra.mxu0 %v1450
      %1610 = vmatprep.mubr.bf16.mxu0 %v904
      %1611 = vmatmul.mubr.bf16.gmra.mxu0 %v902
      %v1612 = vpop.f32.mrf.mxu0
      %v1613 = vadd.f32 %v1525, %v1612
      %v1614 = vpop.f32.mrf.mxu0
      %v1615 = vpop.f32.mrf.mxu0
      %v1616 = vadd.f32 %v1528, %v1615
      %v1617 = vpop.f32.mrf.mxu0
      %1618 = vmatprep.mubr.bf16.mxu0 %v972
      %1619 = vmatmul.mubr.bf16.gmra.mxu0 %v970
      %v1620 = vpop.f32.mrf.mxu0
      %v1621 = vadd.f32 %v1533, %v1620
      %v1622 = vpop.f32.mrf.mxu0
      %v1623 = vpop.f32.mrf.mxu0
      %v1624 = vadd.f32 %v1536, %v1623
      %v1625 = vpop.f32.mrf.mxu0
      %1626 = vmatprep.mubr.bf16.mxu0 %v1040
      %1627 = vmatmul.mubr.bf16.gmra.mxu0 %v1038
      %v1628 = vpop.f32.mrf.mxu0
      %v1629 = vadd.f32 %v1541, %v1628
      %v1630 = vpop.f32.mrf.mxu0
      %v1631 = vpop.f32.mrf.mxu0
      %v1632 = vadd.f32 %v1544, %v1631
      %v1633 = vpop.f32.mrf.mxu0
      %1634 = vmatprep.mubr.bf16.mxu0 %v1108
      %1635 = vmatmul.mubr.bf16.gmra.mxu0 %v1106
      %v1636 = vpop.f32.mrf.mxu0
      %v1637 = vadd.f32 %v1549, %v1636
      %v1638 = vpop.f32.mrf.mxu0
      %v1639 = vpop.f32.mrf.mxu0
      %v1640 = vadd.f32 %v1552, %v1639
      %v1641 = vpop.f32.mrf.mxu0
      %1642 = vmatprep.mubr.bf16.mxu0 %v1176
      %1643 = vmatmul.mubr.bf16.gmra.mxu0 %v1174
      %v1644 = vpop.f32.mrf.mxu0
      %v1645 = vadd.f32 %v1557, %v1644
      %v1646 = vpop.f32.mrf.mxu0
      %v1647 = vpop.f32.mrf.mxu0
      %v1648 = vadd.f32 %v1560, %v1647
      %v1649 = vpop.f32.mrf.mxu0
      %1650 = vmatprep.mubr.bf16.mxu0 %v1244
      %1651 = vmatmul.mubr.bf16.gmra.mxu0 %v1242
      %v1652 = vpop.f32.mrf.mxu0
      %v1653 = vadd.f32 %v1565, %v1652
      %v1654 = vpop.f32.mrf.mxu0
      %v1655 = vpop.f32.mrf.mxu0
      %v1656 = vadd.f32 %v1568, %v1655
      %v1657 = vpop.f32.mrf.mxu0
      %1658 = vmatprep.mubr.bf16.mxu0 %v1269
      %1659 = vmatmul.mubr.bf16.gmra.mxu0 %v1268
      %v1660 = vpop.f32.mrf.mxu0
      %v1661 = vadd.f32 %v1573, %v1660
      %v1662 = vpop.f32.mrf.mxu0
      %v1663 = vpop.f32.mrf.mxu0
      %v1664 = vpop.f32.mrf.mxu0
      %1665 = vdwg.mxu0
      %v1666 = vpack.c.bf16 %v1616, %v1613
      %v1667 = vpack.c.bf16 %v1624, %v1621
      %v1668 = vpack.c.bf16 %v1632, %v1629
      %v1669 = vpack.c.bf16 %v1640, %v1637
      %v1670 = vpack.c.bf16 %v1648, %v1645
      %v1671 = vpack.c.bf16 %v1656, %v1653
      %v1672 = vpack.c.bf16 %v1661, %v1661
      %v1680 = vunpack.c.l.b16 %v1666
      %v1681 = vunpack.c.h.b16 %v1666
      %v1682 = vunpack.c.l.b16 %v1667
      %v1683 = vunpack.c.h.b16 %v1667
      %v1684 = vunpack.c.l.b16 %v1668
      %v1685 = vunpack.c.h.b16 %v1668
      %v1686 = vunpack.c.l.b16 %v1669
      %v1687 = vunpack.c.h.b16 %v1669
      %v1688 = vunpack.c.l.b16 %v1670
      %v1689 = vunpack.c.h.b16 %v1670
      %v1690 = vunpack.c.l.b16 %v1671
      %v1691 = vunpack.c.h.b16 %v1671
      %v1692 = vunpack.c.l.b16 %v1672
      %v1693 = vpack.c.b16 %v1680, %v1680
      %v1694 = vpack.c.b16 %v1681, %v1681
      %v1695 = vpack.c.b16 %v1682, %v1682
      %v1696 = vpack.c.b16 %v1683, %v1683
      %v1697 = vpack.c.b16 %v1684, %v1684
      %v1698 = vpack.c.b16 %v1685, %v1685
      %v1699 = vpack.c.b16 %v1686, %v1686
      %v1700 = vpack.c.b16 %v1687, %v1687
      %v1701 = vpack.c.b16 %v1688, %v1688
      %v1702 = vpack.c.b16 %v1689, %v1689
      %v1703 = vpack.c.b16 %v1690, %v1690
      %v1704 = vpack.c.b16 %v1691, %v1691
      %v1705 = vpack.c.b16 %v1692, %v1692
      %1719 = vst [vmem:[%s177] sm:$0xf] %v1693
      %1720 = vst [vmem:[%s177 + $0x4] sm:$0xf] %v1694
      %1721 = vst [vmem:[%s177 + $0x8] sm:$0xf] %v1695
      %1722 = vst [vmem:[%s177 + $0xc] sm:$0xf] %v1696
      %1723 = vst [vmem:[%s177 + $0x10] sm:$0xf] %v1697
      %1724 = vst [vmem:[%s177 + $0x14] sm:$0xf] %v1698
      %1725 = vst [vmem:[%s177 + $0x18] sm:$0xf] %v1699
      %1726 = vst [vmem:[%s177 + $0x1c] sm:$0xf] %v1700
      %1727 = vst [vmem:[%s177 + $0x20] sm:$0xf] %v1701
      %1728 = vst [vmem:[%s177 + $0x24] sm:$0xf] %v1702
      %1729 = vst [vmem:[%s177 + $0x28] sm:$0xf] %v1703
      %1730 = vst [vmem:[%s177 + $0x2c] sm:$0xf] %v1704
      %1731 = vst [vmem:[%s177 + $0x30] sm:$0x3] %v1705
      %v1732 = vadd.f32 %v1613, %v1616
      %v1733 = vadd.f32 %v1732, %v1621
      %v1734 = vadd.f32 %v1733, %v1624
      %v1735 = vadd.f32 %v1734, %v1629
      %v1736 = vadd.f32 %v1735, %v1632
      %v1737 = vadd.f32 %v1736, %v1637
      %v1738 = vadd.f32 %v1737, %v1640
      %v1739 = vadd.f32 %v1738, %v1645
      %v1740 = vadd.f32 %v1739, %v1648
      %v1741 = vadd.f32 %v1740, %v1653
      %v1742 = vadd.f32 %v1741, %v1656
      %vm1743 = vcmask 1043456
      %v1744 = vsel %vm1743, %v1661, 0.0
      %v1745 = vadd.f32 %v1742, %v1744
      %v1746 = vrot.slane %v1745, 4
      %v1747 = vadd.f32 %v1745, %v1746
      %v1748 = vrot.slane %v1747, 2
      %v1749 = vadd.f32 %v1747, %v1748
      %v1750 = vrot.slane %v1749, 1
      %v1751 = vadd.f32 %v1749, %v1750
      %v1752 = vmul.f32 %v1613, %v1613
      %v1753 = vmul.f32 %v1616, %v1616
      %v1754 = vmul.f32 %v1621, %v1621
      %v1755 = vmul.f32 %v1624, %v1624
      %v1756 = vmul.f32 %v1629, %v1629
      %v1757 = vmul.f32 %v1632, %v1632
      %v1758 = vmul.f32 %v1637, %v1637
      %v1759 = vmul.f32 %v1640, %v1640
      %v1760 = vmul.f32 %v1645, %v1645
      %v1761 = vmul.f32 %v1648, %v1648
      %v1762 = vmul.f32 %v1653, %v1653
      %v1763 = vmul.f32 %v1656, %v1656
      %v1764 = vmul.f32 %v1661, %v1661
      %v1765 = vadd.f32 %v1752, %v1753
      %v1766 = vadd.f32 %v1765, %v1754
      %v1767 = vadd.f32 %v1766, %v1755
      %v1768 = vadd.f32 %v1767, %v1756
      %v1769 = vadd.f32 %v1768, %v1757
      %v1770 = vadd.f32 %v1769, %v1758
      %v1771 = vadd.f32 %v1770, %v1759
      %v1772 = vadd.f32 %v1771, %v1760
      %v1773 = vadd.f32 %v1772, %v1761
      %v1774 = vadd.f32 %v1773, %v1762
      %v1775 = vadd.f32 %v1774, %v1763
      %v1776 = vsel %vm1743, %v1764, 0.0
      %v1777 = vadd.f32 %v1775, %v1776
      %v1778 = vrot.slane %v1777, 4
      %v1779 = vadd.f32 %v1777, %v1778
      %v1780 = vrot.slane %v1779, 2
      %v1781 = vadd.f32 %v1779, %v1780
      %v1782 = vrot.slane %v1781, 1
      %v1783 = vadd.f32 %v1781, %v1782
      %vm1784 = vcmask 1040384
      %v1785 = vsel %vm1784, %v1751, %v1783
      %1786 = vst [vmem:[%s181] sm:$0x3] %v1785
      %p1787 = scmp.lt.s32.totalorder %s15, 1
      %s1788 = scalar_select %p1787, %s15, 1
      %s1789 = smul.addr %s1788, 13
      %s1790 = smul.addr %s1789, 4
      %s1791 = scalar_lea.vmem %s2, %s1790
      %p1792 = scmp.lt.s32.totalorder %s15, 1
      %s1793 = scalar_select %p1792, %s15, 1
      %s1794 = smul.addr %s1793, 2
      %s1795 = scalar_lea.vmem %s3, %s1794
      // Predicated region
      $region29: #{unet_expanding_block_forward.6} parent=27 // pred_check
        %p1796 = pneg %p80
      $region30: #{unet_expanding_block_forward.6} parent=27 // pred_check_branch
        %1798 = sbr.rel (%p1796) target = $region32
      $region31: #{unet_expanding_block_forward.6} parent=27 // pred_region
        _
      $region32: #{unet_expanding_block_forward.6} parent=27 // pred_fallthru
        _
      // Predicated region
      $region33: #{unet_expanding_block_forward.6} parent=27 // pred_check
        %p1799 = pneg %p106
      $region34: #{unet_expanding_block_forward.6} parent=27 // pred_check_branch
        %1801 = sbr.rel (%p1799) target = $region36
      $region35: #{unet_expanding_block_forward.6} parent=27 // pred_region
        _
      $region36: #{unet_expanding_block_forward.6} parent=27 // pred_fallthru
        _
    $region28: #{unet_expanding_block_forward.6} parent=5 // pred_fallthru
      _
    %p1802 = scmp.le.s32.totalorder 2, %s10
    // Predicated region
    $region37: #{unet_expanding_block_forward.6} parent=5 // pred_check
      %p1803 = pneg %p1802
    $region38: #{unet_expanding_block_forward.6} parent=5 // pred_check_branch
      %1805 = sbr.rel (%p1803) target = $region40
    $region39: #{unet_expanding_block_forward.6} parent=5 // pred_region
      %s1806 = ssub.s32 %s10, 2
      // Predicated region
      $region41: #{unet_expanding_block_forward.6} parent=39 // pred_check
        %p1807 = pneg %p86
      $region42: #{unet_expanding_block_forward.6} parent=39 // pred_check_branch
        %1809 = sbr.rel (%p1807) target = $region44
      $region43: #{unet_expanding_block_forward.6} parent=39 // pred_region
        %p1810 = scmp.lt.s32.totalorder %s16, 1
        %s1811 = scalar_select %p1810, %s16, 1
        %s1812 = smul.addr %s1811, 13
        %s1813 = smul.addr %s1812, 4
        %s1814 = scalar_lea.vmem %s2, %s1813
      $region44: #{unet_expanding_block_forward.6} parent=39 // pred_fallthru
        _
      // Predicated region
      $region45: #{unet_expanding_block_forward.6} parent=39 // pred_check
        %p1815 = pneg %p112
      $region46: #{unet_expanding_block_forward.6} parent=39 // pred_check_branch
        %1817 = sbr.rel (%p1815) target = $region48
      $region47: #{unet_expanding_block_forward.6} parent=39 // pred_region
        %p1818 = scmp.lt.s32.totalorder %s16, 1
        %s1819 = scalar_select %p1818, %s16, 1
        %s1820 = smul.addr %s1819, 2
        %s1821 = scalar_lea.vmem %s3, %s1820
      $region48: #{unet_expanding_block_forward.6} parent=39 // pred_fallthru
        _
    $region40: #{unet_expanding_block_forward.6} parent=5 // pred_fallthru
      _
  $region6: #{unet_expanding_block_forward.6} parent=0 // loop_footer
    %s14 = sadd.s32 1, %s10
  $region7: #{unet_expanding_block_forward.6} parent=0 // loop_footer_branch
    %9 = sbr.rel target = $region3
  $region8: #{unet_expanding_block_forward.6} parent=0 // loop_exit
    _

// kernel: unet_expanding_block_forward.9
$region0: #{unet_expanding_block_forward.9}
  #allocation0 [shape = 'u32[]', space=smem, size = 0x4, offset = 0x4, fixed_abs, tag = 'smem constant byte address 0x4 - core index']
  #allocation1 [shape = 'u32[144,128]{1,0:T(1,128)}', space=vmem, size = 0x12000, scoped, tag = 'internal scratch']
  %s0 = inlined_call_operand.vmem [shape: bf16[2,36,128], index: 0, kind: input, shape index: {}]
  %s1 = inlined_call_operand.vmem [shape: f32[1,128], index: 1, kind: input, shape index: {}]
  %s2 = inlined_call_operand.vmem [shape: f32[1,128], index: 2, kind: input, shape index: {}]
  %s3 = inlined_call_operand.vmem [shape: f32[2,36,128], index: 3, kind: output, shape index: {}]
  %s4 = sld [smem:[#allocation0]]
  $region45: #{unet_expanding_block_forward.9} parent=0
    _
  %s6 = ssub.s32 1, %s4
  %s7 = scalar_select 0, %s6, %s4
  loop: start=0, step=1, limit=4
  $region2: #{unet_expanding_block_forward.9} parent=0 // loop_pre_header
    _
  $region3: #{unet_expanding_block_forward.9} parent=0 // loop_header
    %s9 = sphi 0, %s13
    %p10 = scmp.ge.s32.totalorder %s9, 4
    %s19 = sphi 0, %s21
    %s22 = sphi 0, %s19
    %s23 = sphi 0, %s22
    %s39 = sphi 0, %s23
    %s43 = sphi 0, %s43
    %s45 = sphi 0, %s43
    %s46 = sphi 0, %s45
    %s60 = sphi 0, %s46
    %s64 = sphi 0, %s64
    %s66 = sphi 0, %s64
    %s67 = sphi 0, %s66
    %s81 = sphi 0, %s67
    %s87 = sphi 0, %s89
    %s90 = sphi 0, %s87
    %s91 = sphi 0, %s90
    %s107 = sphi 0, %s91
  $region4: #{unet_expanding_block_forward.9} parent=0 // loop_header_branch
    %12 = sbr.rel (%p10) target = $region8
  $region5: #{unet_expanding_block_forward.9} parent=0 // loop_body
    %s14 = ssub.s32 %s9, 1
    %s15 = ssub.s32 %s9, 2
    %s16 = sadd.s32 %s9, 1
    %s17 = ssub.s32 %s9, %s16
    %p18 = scmp.eq.s32.totalorder %s17, 0
    %s20 = sadd.s32 %s19, 1
    %s21 = scalar_select %p18, %s19, %s20
    %p24 = pneg %p18
    %p25 = scmp.eq.s32.totalorder %s9, 1
    %p26 = por %p24, %p25
    %p27 = scmp.ne.s32.totalorder %s19, %s22
    %p28 = scmp.eq.s32.totalorder %s9, 0
    %p29 = por %p27, %p28
    %p30 = scmp.ne.s32.totalorder %s19, %s22
    %p31 = scmp.eq.s32.totalorder %s14, 1
    %p32 = por %p30, %p31
    %p33 = scmp.ne.s32.totalorder %s22, %s23
    %p34 = scmp.eq.s32.totalorder %s14, 0
    %p35 = por %p33, %p34
    %p36 = scmp.ne.s32.totalorder %s22, %s23
    %p37 = scmp.eq.s32.totalorder %s15, 1
    %p38 = por %p36, %p37
    %p40 = scmp.ne.s32.totalorder %s23, %s39
    %p41 = scmp.eq.s32.totalorder %s15, 0
    %p42 = por %p40, %p41
    %s44 = sadd.s32 %s43, 1
    %p47 = scmp.eq.s32.totalorder %s9, 1
    %p48 = scmp.ne.s32.totalorder %s43, %s45
    %p49 = scmp.eq.s32.totalorder %s9, 0
    %p50 = por %p48, %p49
    %p51 = scmp.ne.s32.totalorder %s43, %s45
    %p52 = scmp.eq.s32.totalorder %s14, 1
    %p53 = por %p51, %p52
    %p54 = scmp.ne.s32.totalorder %s45, %s46
    %p55 = scmp.eq.s32.totalorder %s14, 0
    %p56 = por %p54, %p55
    %p57 = scmp.ne.s32.totalorder %s45, %s46
    %p58 = scmp.eq.s32.totalorder %s15, 1
    %p59 = por %p57, %p58
    %p61 = scmp.ne.s32.totalorder %s46, %s60
    %p62 = scmp.eq.s32.totalorder %s15, 0
    %p63 = por %p61, %p62
    %s65 = sadd.s32 %s64, 1
    %p68 = scmp.eq.s32.totalorder %s9, 1
    %p69 = scmp.ne.s32.totalorder %s64, %s66
    %p70 = scmp.eq.s32.totalorder %s9, 0
    %p71 = por %p69, %p70
    %p72 = scmp.ne.s32.totalorder %s64, %s66
    %p73 = scmp.eq.s32.totalorder %s14, 1
    %p74 = por %p72, %p73
    %p75 = scmp.ne.s32.totalorder %s66, %s67
    %p76 = scmp.eq.s32.totalorder %s14, 0
    %p77 = por %p75, %p76
    %p78 = scmp.ne.s32.totalorder %s66, %s67
    %p79 = scmp.eq.s32.totalorder %s15, 1
    %p80 = por %p78, %p79
    %p82 = scmp.ne.s32.totalorder %s67, %s81
    %p83 = scmp.eq.s32.totalorder %s15, 0
    %p84 = por %p82, %p83
    %s85 = ssub.s32 %s9, %s16
    %p86 = scmp.eq.s32.totalorder %s85, 0
    %s88 = sadd.s32 %s87, 1
    %s89 = scalar_select %p86, %s87, %s88
    %p92 = pneg %p86
    %p93 = scmp.eq.s32.totalorder %s9, 1
    %p94 = por %p92, %p93
    %p95 = scmp.ne.s32.totalorder %s87, %s90
    %p96 = scmp.eq.s32.totalorder %s9, 0
    %p97 = por %p95, %p96
    %p98 = scmp.ne.s32.totalorder %s87, %s90
    %p99 = scmp.eq.s32.totalorder %s14, 1
    %p100 = por %p98, %p99
    %p101 = scmp.ne.s32.totalorder %s90, %s91
    %p102 = scmp.eq.s32.totalorder %s14, 0
    %p103 = por %p101, %p102
    %p104 = scmp.ne.s32.totalorder %s90, %s91
    %p105 = scmp.eq.s32.totalorder %s15, 1
    %p106 = por %p104, %p105
    %p108 = scmp.ne.s32.totalorder %s91, %s107
    %p109 = scmp.eq.s32.totalorder %s15, 0
    %p110 = por %p108, %p109
    %p111 = scmp.le.s32.totalorder 1, %s9
    %p112 = scmp.lt.s32.totalorder %s9, 3
    %p113 = pnand %p111, %p112
    %p114 = pneg %p113
    // Predicated region
    $region9: #{unet_expanding_block_forward.9} parent=5 // pred_check
      _
    $region10: #{unet_expanding_block_forward.9} parent=5 // pred_check_branch
      %116 = sbr.rel (%p113) target = $region12
    $region11: #{unet_expanding_block_forward.9} parent=5 // pred_region
      %s117 = ssub.s32 %s9, 1
      // Predicated region
      $region13: #{unet_expanding_block_forward.9} parent=11 // pred_check
        %p118 = pneg %p56
      $region14: #{unet_expanding_block_forward.9} parent=11 // pred_check_branch
        %120 = sbr.rel (%p118) target = $region16
      $region15: #{unet_expanding_block_forward.9} parent=11 // pred_region
        _
      $region16: #{unet_expanding_block_forward.9} parent=11 // pred_fallthru
        _
      // Predicated region
      $region17: #{unet_expanding_block_forward.9} parent=11 // pred_check
        %p121 = pneg %p77
      $region18: #{unet_expanding_block_forward.9} parent=11 // pred_check_branch
        %123 = sbr.rel (%p121) target = $region20
      $region19: #{unet_expanding_block_forward.9} parent=11 // pred_region
        _
      $region20: #{unet_expanding_block_forward.9} parent=11 // pred_fallthru
        _
    $region12: #{unet_expanding_block_forward.9} parent=5 // pred_fallthru
      _
    %p124 = scmp.lt.s32.totalorder %s9, 2
    // Predicated region
    $region21: #{unet_expanding_block_forward.9} parent=5 // pred_check
      %p125 = pneg %p124
    $region22: #{unet_expanding_block_forward.9} parent=5 // pred_check_branch
      %127 = sbr.rel (%p125) target = $region24
    $region23: #{unet_expanding_block_forward.9} parent=5 // pred_region
      // Predicated region
      $region25: #{unet_expanding_block_forward.9} parent=23 // pred_check
        %p128 = pneg %p29
      $region26: #{unet_expanding_block_forward.9} parent=23 // pred_check_branch
        %130 = sbr.rel (%p128) target = $region28
      $region27: #{unet_expanding_block_forward.9} parent=23 // pred_region
        %p131 = scmp.lt.s32.totalorder %s9, 1
        %s132 = scalar_select %p131, %s9, 1
        %s133 = smul.addr %s132, 5
        %s134 = smul.addr %s133, 4
        %s135 = scalar_lea.vmem %s0, %s134
      $region28: #{unet_expanding_block_forward.9} parent=23 // pred_fallthru
        _
    $region24: #{unet_expanding_block_forward.9} parent=5 // pred_fallthru
      _
    %p136 = scmp.le.s32.totalorder 1, %s9
    %p137 = scmp.lt.s32.totalorder %s9, 3
    %p138 = pnand %p136, %p137
    %p139 = pneg %p138
    // Predicated region
    $region29: #{unet_expanding_block_forward.9} parent=5 // pred_check
      _
    $region30: #{unet_expanding_block_forward.9} parent=5 // pred_check_branch
      %141 = sbr.rel (%p138) target = $region32
    $region31: #{unet_expanding_block_forward.9} parent=5 // pred_region
      %s142 = ssub.s32 %s9, 1
      %p143 = scmp.lt.s32.totalorder %s14, 1
      %s144 = scalar_select %p143, %s14, 1
      %s145 = smul.addr %s144, 5
      %s146 = smul.addr %s145, 4
      %s147 = scalar_lea.vmem %s0, %s146
      %p148 = pneg %p35
      %p149 = pneg %p32
      %p150 = pneg %p56
      %p151 = pneg %p53
      %p152 = pneg %p77
      %p153 = pneg %p74
      %p154 = pneg %p103
      %p155 = pneg %p100
      %p156 = scmp.lt.s32.totalorder %s14, 1
      %s157 = scalar_select %p156, %s14, 1
      %s158 = smul.addr %s157, 5
      %s159 = smul.addr %s158, 8
      %s160 = scalar_lea.vmem %s3, %s159
      %p161 = scmp.lt.s32.totalorder %s14, 1
      %s162 = scalar_select %p161, %s14, 1
      %s163 = smul.addr %s162, 5
      %s164 = smul.addr %s163, 4
      %s165 = scalar_lea.vmem %s0, %s164
      %p166 = scmp.lt.s32.totalorder %s14, 1
      %s167 = scalar_select %p166, %s14, 1
      %s168 = smul.addr %s167, 5
      %s169 = smul.addr %s168, 8
      %s170 = scalar_lea.vmem %s3, %s169
      %v171 = vld [vmem:[%s165] sm:$0xf]
      %v172 = vld [vmem:[%s165 + $0x4] sm:$0xf]
      %v173 = vld [vmem:[%s165 + $0x8] sm:$0xf]
      %v174 = vld [vmem:[%s165 + $0xc] sm:$0xf]
      %v175 = vld [vmem:[%s165 + $0x10] sm:$0x3]
      %v176 = vunpack.c.l.bf16 %v171
      %v177 = vunpack.c.l.bf16 %v172
      %v178 = vunpack.c.l.bf16 %v173
      %v179 = vunpack.c.l.bf16 %v174
      %v180 = vunpack.c.l.bf16 %v175
      %v181 = vld [vmem:[%s1] sm:$0x1]
      %v183 = vlaneseq
      %v184 = vshrl.u32 %v183, 7
      %v185 = vsub.s32 0, %v184
      %v186 = vrot.slane %v181, %v185
      %v188 = vmul.f32 %v176, %v186
      %v189 = vmul.f32 %v177, %v186
      %v190 = vmul.f32 %v178, %v186
      %v191 = vmul.f32 %v179, %v186
      %v192 = vmul.f32 %v180, %v186
      %v193 = vld [vmem:[%s2] sm:$0x1]
      %v195 = vlaneseq
      %v196 = vshrl.u32 %v195, 7
      %v197 = vsub.s32 0, %v196
      %v198 = vrot.slane %v193, %v197
      %v200 = vadd.f32 %v188, %v198
      %v201 = vadd.f32 %v189, %v198
      %v202 = vadd.f32 %v190, %v198
      %v203 = vadd.f32 %v191, %v198
      %v204 = vadd.f32 %v192, %v198
      %v205 = vmax.f32 %v200, 0.0
      %v206 = vmax.f32 %v201, 0.0
      %v207 = vmax.f32 %v202, 0.0
      %v208 = vmax.f32 %v203, 0.0
      %v209 = vmax.f32 %v204, 0.0
      %210 = vst [vmem:[%s170] sm:$0xff] %v205
      %211 = vst [vmem:[%s170 + $0x8] sm:$0xff] %v206
      %212 = vst [vmem:[%s170 + $0x10] sm:$0xff] %v207
      %213 = vst [vmem:[%s170 + $0x18] sm:$0xff] %v208
      %214 = vst [vmem:[%s170 + $0x20] sm:$0xf] %v209
      %p215 = scmp.lt.s32.totalorder %s14, 1
      %s216 = scalar_select %p215, %s14, 1
      %s217 = smul.addr %s216, 5
      %s218 = smul.addr %s217, 8
      %s219 = scalar_lea.vmem %s3, %s218
      // Predicated region
      $region33: #{unet_expanding_block_forward.9} parent=31 // pred_check
        %p220 = pneg %p100
      $region34: #{unet_expanding_block_forward.9} parent=31 // pred_check_branch
        %222 = sbr.rel (%p220) target = $region36
      $region35: #{unet_expanding_block_forward.9} parent=31 // pred_region
        _
      $region36: #{unet_expanding_block_forward.9} parent=31 // pred_fallthru
        _
    $region32: #{unet_expanding_block_forward.9} parent=5 // pred_fallthru
      _
    %p223 = scmp.le.s32.totalorder 2, %s9
    // Predicated region
    $region37: #{unet_expanding_block_forward.9} parent=5 // pred_check
      %p224 = pneg %p223
    $region38: #{unet_expanding_block_forward.9} parent=5 // pred_check_branch
      %226 = sbr.rel (%p224) target = $region40
    $region39: #{unet_expanding_block_forward.9} parent=5 // pred_region
      %s227 = ssub.s32 %s9, 2
      // Predicated region
      $region41: #{unet_expanding_block_forward.9} parent=39 // pred_check
        %p228 = pneg %p106
      $region42: #{unet_expanding_block_forward.9} parent=39 // pred_check_branch
        %230 = sbr.rel (%p228) target = $region44
      $region43: #{unet_expanding_block_forward.9} parent=39 // pred_region
        %p231 = scmp.lt.s32.totalorder %s15, 1
        %s232 = scalar_select %p231, %s15, 1
        %s233 = smul.addr %s232, 5
        %s234 = smul.addr %s233, 8
        %s235 = scalar_lea.vmem %s3, %s234
      $region44: #{unet_expanding_block_forward.9} parent=39 // pred_fallthru
        _
    $region40: #{unet_expanding_block_forward.9} parent=5 // pred_fallthru
      _
  $region6: #{unet_expanding_block_forward.9} parent=0 // loop_footer
    %s13 = sadd.s32 1, %s9
  $region7: #{unet_expanding_block_forward.9} parent=0 // loop_footer_branch
    %8 = sbr.rel target = $region3
  $region8: #{unet_expanding_block_forward.9} parent=0 // loop_exit
    _

// kernel: unet_expanding_block_forward.8
$region0: #{unet_expanding_block_forward.8}
  #allocation0 [shape = 'u32[]', space=smem, size = 0x4, offset = 0x4, fixed_abs, tag = 'smem constant byte address 0x4 - core index']
  #allocation1 [shape = 'u32[144,128]{1,0:T(1,128)}', space=vmem, size = 0x12000, scoped, tag = 'internal scratch']
  %s0 = inlined_call_operand.vmem [shape: bf16[2,8,8,128], index: 0, kind: input, shape index: {}]
  %s1 = inlined_call_operand.vmem [shape: f32[1,1,128], index: 1, kind: input, shape index: {}]
  %s2 = inlined_call_operand.vmem [shape: f32[1,1,128], index: 2, kind: input, shape index: {}]
  %s3 = inlined_call_operand.vmem [shape: bf16[1152,128], index: 3, kind: input, shape index: {}]
  %s4 = inlined_call_operand.vmem [shape: bf16[2,36,128], index: 4, kind: output, shape index: {0}]
  %s5 = inlined_call_operand.vmem [shape: f32[2,2,128], index: 5, kind: output, shape index: {1}]
  %6 = xla_tuple %s4, %s5
  %s7 = sld [smem:[#allocation0]]
  $region57: #{unet_expanding_block_forward.8} parent=0
    _
  %s9 = ssub.s32 1, %s7
  %s10 = scalar_select 0, %s9, %s7
  loop: start=0, step=1, limit=4
  $region2: #{unet_expanding_block_forward.8} parent=0 // loop_pre_header
    _
  $region3: #{unet_expanding_block_forward.8} parent=0 // loop_header
    %s12 = sphi 0, %s16
    %p13 = scmp.ge.s32.totalorder %s12, 4
    %s22 = sphi 0, %s24
    %s25 = sphi 0, %s22
    %s26 = sphi 0, %s25
    %s42 = sphi 0, %s26
    %s46 = sphi 0, %s46
    %s48 = sphi 0, %s46
    %s49 = sphi 0, %s48
    %s63 = sphi 0, %s49
    %s67 = sphi 0, %s67
    %s69 = sphi 0, %s67
    %s70 = sphi 0, %s69
    %s84 = sphi 0, %s70
    %s88 = sphi 0, %s88
    %s90 = sphi 0, %s88
    %s91 = sphi 0, %s90
    %s105 = sphi 0, %s91
    %s111 = sphi 0, %s113
    %s114 = sphi 0, %s111
    %s115 = sphi 0, %s114
    %s131 = sphi 0, %s115
    %s137 = sphi 0, %s139
    %s140 = sphi 0, %s137
    %s141 = sphi 0, %s140
    %s157 = sphi 0, %s141
  $region4: #{unet_expanding_block_forward.8} parent=0 // loop_header_branch
    %15 = sbr.rel (%p13) target = $region8
  $region5: #{unet_expanding_block_forward.8} parent=0 // loop_body
    %s17 = ssub.s32 %s12, 1
    %s18 = ssub.s32 %s12, 2
    %s19 = sadd.s32 %s12, 1
    %s20 = ssub.s32 %s12, %s19
    %p21 = scmp.eq.s32.totalorder %s20, 0
    %s23 = sadd.s32 %s22, 1
    %s24 = scalar_select %p21, %s22, %s23
    %p27 = pneg %p21
    %p28 = scmp.eq.s32.totalorder %s12, 1
    %p29 = por %p27, %p28
    %p30 = scmp.ne.s32.totalorder %s22, %s25
    %p31 = scmp.eq.s32.totalorder %s12, 0
    %p32 = por %p30, %p31
    %p33 = scmp.ne.s32.totalorder %s22, %s25
    %p34 = scmp.eq.s32.totalorder %s17, 1
    %p35 = por %p33, %p34
    %p36 = scmp.ne.s32.totalorder %s25, %s26
    %p37 = scmp.eq.s32.totalorder %s17, 0
    %p38 = por %p36, %p37
    %p39 = scmp.ne.s32.totalorder %s25, %s26
    %p40 = scmp.eq.s32.totalorder %s18, 1
    %p41 = por %p39, %p40
    %p43 = scmp.ne.s32.totalorder %s26, %s42
    %p44 = scmp.eq.s32.totalorder %s18, 0
    %p45 = por %p43, %p44
    %s47 = sadd.s32 %s46, 1
    %p50 = scmp.eq.s32.totalorder %s12, 1
    %p51 = scmp.ne.s32.totalorder %s46, %s48
    %p52 = scmp.eq.s32.totalorder %s12, 0
    %p53 = por %p51, %p52
    %p54 = scmp.ne.s32.totalorder %s46, %s48
    %p55 = scmp.eq.s32.totalorder %s17, 1
    %p56 = por %p54, %p55
    %p57 = scmp.ne.s32.totalorder %s48, %s49
    %p58 = scmp.eq.s32.totalorder %s17, 0
    %p59 = por %p57, %p58
    %p60 = scmp.ne.s32.totalorder %s48, %s49
    %p61 = scmp.eq.s32.totalorder %s18, 1
    %p62 = por %p60, %p61
    %p64 = scmp.ne.s32.totalorder %s49, %s63
    %p65 = scmp.eq.s32.totalorder %s18, 0
    %p66 = por %p64, %p65
    %s68 = sadd.s32 %s67, 1
    %p71 = scmp.eq.s32.totalorder %s12, 1
    %p72 = scmp.ne.s32.totalorder %s67, %s69
    %p73 = scmp.eq.s32.totalorder %s12, 0
    %p74 = por %p72, %p73
    %p75 = scmp.ne.s32.totalorder %s67, %s69
    %p76 = scmp.eq.s32.totalorder %s17, 1
    %p77 = por %p75, %p76
    %p78 = scmp.ne.s32.totalorder %s69, %s70
    %p79 = scmp.eq.s32.totalorder %s17, 0
    %p80 = por %p78, %p79
    %p81 = scmp.ne.s32.totalorder %s69, %s70
    %p82 = scmp.eq.s32.totalorder %s18, 1
    %p83 = por %p81, %p82
    %p85 = scmp.ne.s32.totalorder %s70, %s84
    %p86 = scmp.eq.s32.totalorder %s18, 0
    %p87 = por %p85, %p86
    %s89 = sadd.s32 %s88, 1
    %p92 = scmp.eq.s32.totalorder %s12, 1
    %p93 = scmp.ne.s32.totalorder %s88, %s90
    %p94 = scmp.eq.s32.totalorder %s12, 0
    %p95 = por %p93, %p94
    %p96 = scmp.ne.s32.totalorder %s88, %s90
    %p97 = scmp.eq.s32.totalorder %s17, 1
    %p98 = por %p96, %p97
    %p99 = scmp.ne.s32.totalorder %s90, %s91
    %p100 = scmp.eq.s32.totalorder %s17, 0
    %p101 = por %p99, %p100
    %p102 = scmp.ne.s32.totalorder %s90, %s91
    %p103 = scmp.eq.s32.totalorder %s18, 1
    %p104 = por %p102, %p103
    %p106 = scmp.ne.s32.totalorder %s91, %s105
    %p107 = scmp.eq.s32.totalorder %s18, 0
    %p108 = por %p106, %p107
    %s109 = ssub.s32 %s12, %s19
    %p110 = scmp.eq.s32.totalorder %s109, 0
    %s112 = sadd.s32 %s111, 1
    %s113 = scalar_select %p110, %s111, %s112
    %p116 = pneg %p110
    %p117 = scmp.eq.s32.totalorder %s12, 1
    %p118 = por %p116, %p117
    %p119 = scmp.ne.s32.totalorder %s111, %s114
    %p120 = scmp.eq.s32.totalorder %s12, 0
    %p121 = por %p119, %p120
    %p122 = scmp.ne.s32.totalorder %s111, %s114
    %p123 = scmp.eq.s32.totalorder %s17, 1
    %p124 = por %p122, %p123
    %p125 = scmp.ne.s32.totalorder %s114, %s115
    %p126 = scmp.eq.s32.totalorder %s17, 0
    %p127 = por %p125, %p126
    %p128 = scmp.ne.s32.totalorder %s114, %s115
    %p129 = scmp.eq.s32.totalorder %s18, 1
    %p130 = por %p128, %p129
    %p132 = scmp.ne.s32.totalorder %s115, %s131
    %p133 = scmp.eq.s32.totalorder %s18, 0
    %p134 = por %p132, %p133
    %s135 = ssub.s32 %s12, %s19
    %p136 = scmp.eq.s32.totalorder %s135, 0
    %s138 = sadd.s32 %s137, 1
    %s139 = scalar_select %p136, %s137, %s138
    %p142 = pneg %p136
    %p143 = scmp.eq.s32.totalorder %s12, 1
    %p144 = por %p142, %p143
    %p145 = scmp.ne.s32.totalorder %s137, %s140
    %p146 = scmp.eq.s32.totalorder %s12, 0
    %p147 = por %p145, %p146
    %p148 = scmp.ne.s32.totalorder %s137, %s140
    %p149 = scmp.eq.s32.totalorder %s17, 1
    %p150 = por %p148, %p149
    %p151 = scmp.ne.s32.totalorder %s140, %s141
    %p152 = scmp.eq.s32.totalorder %s17, 0
    %p153 = por %p151, %p152
    %p154 = scmp.ne.s32.totalorder %s140, %s141
    %p155 = scmp.eq.s32.totalorder %s18, 1
    %p156 = por %p154, %p155
    %p158 = scmp.ne.s32.totalorder %s141, %s157
    %p159 = scmp.eq.s32.totalorder %s18, 0
    %p160 = por %p158, %p159
    %p161 = scmp.le.s32.totalorder 1, %s12
    %p162 = scmp.lt.s32.totalorder %s12, 3
    %p163 = pnand %p161, %p162
    %p164 = pneg %p163
    // Predicated region
    $region9: #{unet_expanding_block_forward.8} parent=5 // pred_check
      _
    $region10: #{unet_expanding_block_forward.8} parent=5 // pred_check_branch
      %166 = sbr.rel (%p163) target = $region12
    $region11: #{unet_expanding_block_forward.8} parent=5 // pred_region
      %s167 = ssub.s32 %s12, 1
      // Predicated region
      $region13: #{unet_expanding_block_forward.8} parent=11 // pred_check
        %p168 = pneg %p59
      $region14: #{unet_expanding_block_forward.8} parent=11 // pred_check_branch
        %170 = sbr.rel (%p168) target = $region16
      $region15: #{unet_expanding_block_forward.8} parent=11 // pred_region
        _
      $region16: #{unet_expanding_block_forward.8} parent=11 // pred_fallthru
        _
      // Predicated region
      $region17: #{unet_expanding_block_forward.8} parent=11 // pred_check
        %p171 = pneg %p80
      $region18: #{unet_expanding_block_forward.8} parent=11 // pred_check_branch
        %173 = sbr.rel (%p171) target = $region20
      $region19: #{unet_expanding_block_forward.8} parent=11 // pred_region
        _
      $region20: #{unet_expanding_block_forward.8} parent=11 // pred_fallthru
        _
      // Predicated region
      $region21: #{unet_expanding_block_forward.8} parent=11 // pred_check
        %p174 = pneg %p101
      $region22: #{unet_expanding_block_forward.8} parent=11 // pred_check_branch
        %176 = sbr.rel (%p174) target = $region24
      $region23: #{unet_expanding_block_forward.8} parent=11 // pred_region
        _
      $region24: #{unet_expanding_block_forward.8} parent=11 // pred_fallthru
        _
    $region12: #{unet_expanding_block_forward.8} parent=5 // pred_fallthru
      _
    %p177 = scmp.lt.s32.totalorder %s12, 2
    // Predicated region
    $region25: #{unet_expanding_block_forward.8} parent=5 // pred_check
      %p178 = pneg %p177
    $region26: #{unet_expanding_block_forward.8} parent=5 // pred_check_branch
      %180 = sbr.rel (%p178) target = $region28
    $region27: #{unet_expanding_block_forward.8} parent=5 // pred_region
      // Predicated region
      $region29: #{unet_expanding_block_forward.8} parent=27 // pred_check
        %p181 = pneg %p32
      $region30: #{unet_expanding_block_forward.8} parent=27 // pred_check_branch
        %183 = sbr.rel (%p181) target = $region32
      $region31: #{unet_expanding_block_forward.8} parent=27 // pred_region
        %p184 = scmp.lt.s32.totalorder %s12, 1
        %s185 = scalar_select %p184, %s12, 1
        %s186 = smul.addr %s185, 8
        %s187 = smul.addr %s186, 4
        %s188 = scalar_lea.vmem %s0, %s187
      $region32: #{unet_expanding_block_forward.8} parent=27 // pred_fallthru
        _
    $region28: #{unet_expanding_block_forward.8} parent=5 // pred_fallthru
      _
    %p189 = scmp.le.s32.totalorder 1, %s12
    %p190 = scmp.lt.s32.totalorder %s12, 3
    %p191 = pnand %p189, %p190
    %p192 = pneg %p191
    // Predicated region
    $region33: #{unet_expanding_block_forward.8} parent=5 // pred_check
      _
    $region34: #{unet_expanding_block_forward.8} parent=5 // pred_check_branch
      %194 = sbr.rel (%p191) target = $region36
    $region35: #{unet_expanding_block_forward.8} parent=5 // pred_region
      %s195 = ssub.s32 %s12, 1
      %p196 = scmp.lt.s32.totalorder %s17, 1
      %s197 = scalar_select %p196, %s17, 1
      %s198 = smul.addr %s197, 8
      %s199 = smul.addr %s198, 4
      %s200 = scalar_lea.vmem %s0, %s199
      %p201 = pneg %p38
      %p202 = pneg %p35
      %p203 = pneg %p59
      %p204 = pneg %p56
      %p205 = pneg %p80
      %p206 = pneg %p77
      %p207 = pneg %p101
      %p208 = pneg %p98
      %p209 = pneg %p127
      %p210 = pneg %p124
      %p211 = scmp.lt.s32.totalorder %s17, 1
      %s212 = scalar_select %p211, %s17, 1
      %s213 = smul.addr %s212, 5
      %s214 = smul.addr %s213, 4
      %s215 = scalar_lea.vmem %s4, %s214
      %p216 = pneg %p153
      %p217 = pneg %p150
      %p218 = scmp.lt.s32.totalorder %s17, 1
      %s219 = scalar_select %p218, %s17, 1
      %s220 = smul.addr %s219, 2
      %s221 = scalar_lea.vmem %s5, %s220
      %p222 = scmp.lt.s32.totalorder %s17, 1
      %s223 = scalar_select %p222, %s17, 1
      %s224 = smul.addr %s223, 8
      %s225 = smul.addr %s224, 4
      %s226 = scalar_lea.vmem %s0, %s225
      %p227 = scmp.lt.s32.totalorder %s17, 1
      %s228 = scalar_select %p227, %s17, 1
      %s229 = smul.addr %s228, 5
      %s230 = smul.addr %s229, 4
      %s231 = scalar_lea.vmem %s4, %s230
      %p232 = scmp.lt.s32.totalorder %s17, 1
      %s233 = scalar_select %p232, %s17, 1
      %s234 = smul.addr %s233, 2
      %s235 = scalar_lea.vmem %s5, %s234
      %v237 = vld [vmem:[%s226] sm:$0xf]
      %v238 = vld [vmem:[%s226 + $0x4] sm:$0xf]
      %v239 = vld [vmem:[%s226 + $0x8] sm:$0xf]
      %v240 = vld [vmem:[%s226 + $0xc] sm:$0xf]
      %v241 = vld [vmem:[%s226 + $0x10] sm:$0xf]
      %v242 = vld [vmem:[%s226 + $0x14] sm:$0xf]
      %v243 = vld [vmem:[%s226 + $0x18] sm:$0xf]
      %v244 = vld [vmem:[%s226 + $0x1c] sm:$0xf]
      %v245 = vld [vmem:[%s1] sm:$0x1]
      %v246 = vld [vmem:[%s2] sm:$0x1]
      %v247 = vunpack.c.l.bf16 %v237
      %v248 = vunpack.c.l.bf16 %v238
      %v249 = vunpack.c.l.bf16 %v239
      %v250 = vunpack.c.l.bf16 %v240
      %v251 = vunpack.c.l.bf16 %v241
      %v252 = vunpack.c.l.bf16 %v242
      %v253 = vunpack.c.l.bf16 %v243
      %v254 = vunpack.c.l.bf16 %v244
      %v256 = vlaneseq
      %v257 = vshrl.u32 %v256, 7
      %v258 = vsub.s32 0, %v257
      %v259 = vrot.slane %v245, %v258
      %v261 = vmul.f32 %v247, %v259
      %v262 = vmul.f32 %v248, %v259
      %v263 = vmul.f32 %v249, %v259
      %v264 = vmul.f32 %v250, %v259
      %v265 = vmul.f32 %v251, %v259
      %v266 = vmul.f32 %v252, %v259
      %v267 = vmul.f32 %v253, %v259
      %v268 = vmul.f32 %v254, %v259
      %v270 = vlaneseq
      %v271 = vshrl.u32 %v270, 7
      %v272 = vsub.s32 0, %v271
      %v273 = vrot.slane %v246, %v272
      %v275 = vadd.f32 %v261, %v273
      %v276 = vadd.f32 %v262, %v273
      %v277 = vadd.f32 %v263, %v273
      %v278 = vadd.f32 %v264, %v273
      %v279 = vadd.f32 %v265, %v273
      %v280 = vadd.f32 %v266, %v273
      %v281 = vadd.f32 %v267, %v273
      %v282 = vadd.f32 %v268, %v273
      %v283 = vmax.f32 %v275, 0.0
      %v284 = vmax.f32 %v276, 0.0
      %v285 = vmax.f32 %v277, 0.0
      %v286 = vmax.f32 %v278, 0.0
      %v287 = vmax.f32 %v279, 0.0
      %v288 = vmax.f32 %v280, 0.0
      %v289 = vmax.f32 %v281, 0.0
      %v290 = vmax.f32 %v282, 0.0
      %v291 = vpack.c.bf16 %v283, %v283
      %v292 = vpack.c.bf16 %v284, %v284
      %v293 = vpack.c.bf16 %v285, %v285
      %v294 = vpack.c.bf16 %v286, %v286
      %v295 = vpack.c.bf16 %v287, %v287
      %v296 = vpack.c.bf16 %v288, %v288
      %v297 = vpack.c.bf16 %v289, %v289
      %v298 = vpack.c.bf16 %v290, %v290
      %v300 = vshrl.u32 %v291, 16
      %v302 = vshll.u32 %v291, 16
      %v304 = vrot.slane %v302, 1
      %v305 = vor.u32 %v300, %v304
      %v307 = vshrl.u32 %v292, 16
      %v309 = vshll.u32 %v292, 16
      %v311 = vrot.slane %v309, 1
      %v312 = vor.u32 %v307, %v311
      %v314 = vshrl.u32 %v293, 16
      %v316 = vshll.u32 %v293, 16
      %v318 = vrot.slane %v316, 1
      %v319 = vor.u32 %v314, %v318
      %v321 = vshrl.u32 %v294, 16
      %v323 = vshll.u32 %v294, 16
      %v325 = vrot.slane %v323, 1
      %v326 = vor.u32 %v321, %v325
      %v328 = vshrl.u32 %v295, 16
      %v330 = vshll.u32 %v295, 16
      %v332 = vrot.slane %v330, 1
      %v333 = vor.u32 %v328, %v332
      %v335 = vshrl.u32 %v296, 16
      %v337 = vshll.u32 %v296, 16
      %v339 = vrot.slane %v337, 1
      %v340 = vor.u32 %v335, %v339
      %v347 = vrot.slane %v291, 1
      %v348 = vrot.slane %v292, 1
      %v349 = vrot.slane %v293, 1
      %v350 = vrot.slane %v294, 1
      %v351 = vrot.slane %v295, 1
      %v352 = vrot.slane %v296, 1
      %v354 = vshrl.u32 %v297, 16
      %v356 = vshll.u32 %v297, 16
      %v358 = vrot.slane %v356, 1
      %v359 = vor.u32 %v354, %v358
      %v361 = vrot.slane %v297, 1
      %v363 = vshrl.u32 %v298, 16
      %v365 = vshll.u32 %v298, 16
      %v367 = vrot.slane %v365, 1
      %v368 = vor.u32 %v363, %v367
      %v370 = vrot.slane %v298, 1
      %v371 = vcombine.low %v291, %v305
      %v372 = vcombine.low %v347, %v292
      %v373 = vcombine.low %v312, %v348
      %v374 = vcombine.low %v293, %v319
      %v376 = vunpack.c.l.s4 1966171168
      %v377 = vunpack.c.0.s8 %v376
      %v378 = vlaneseq
      %v379 = vshrl.u32 %v378, 7
      %v380 = vsub.s32 %v377, %v379
      %v381 = vrot.slane %v371, %v380
      %v383 = vunpack.c.l.s4 1966171168
      %v384 = vunpack.c.0.s8 %v383
      %v385 = vlaneseq
      %v386 = vshrl.u32 %v385, 7
      %v387 = vsub.s32 %v384, %v386
      %v388 = vrot.slane %v372, %v387
      %v390 = vunpack.c.l.s4 1966171168
      %v391 = vunpack.c.0.s8 %v390
      %v392 = vlaneseq
      %v393 = vshrl.u32 %v392, 7
      %v394 = vsub.s32 %v391, %v393
      %v395 = vrot.slane %v373, %v394
      %v397 = vunpack.c.l.s4 1966171168
      %v398 = vunpack.c.0.s8 %v397
      %v399 = vlaneseq
      %v400 = vshrl.u32 %v399, 7
      %v401 = vsub.s32 %v398, %v400
      %v402 = vrot.slane %v374, %v401
      %v403 = vcombine.low %v381, %v388
      %v404 = vcombine.high %v381, %v388
      %v405 = vcombine.low %v395, %v402
      %v406 = vcombine.high %v395, %v402
      %v408 = vunpack.c.l.s4 1966171168
      %v409 = vunpack.c.0.s8 %v408
      %v410 = vlaneseq
      %v411 = vshrl.u32 %v410, 7
      %v412 = vsub.s32 %v409, %v411
      %v413 = vrot.slane %v403, %v412
      %v415 = vunpack.c.l.s4 1966171168
      %v416 = vunpack.c.0.s8 %v415
      %v417 = vlaneseq
      %v418 = vshrl.u32 %v417, 7
      %v419 = vsub.s32 %v416, %v418
      %v420 = vrot.slane %v404, %v419
      %v422 = vunpack.c.l.s4 1966171168
      %v423 = vunpack.c.0.s8 %v422
      %v424 = vlaneseq
      %v425 = vshrl.u32 %v424, 7
      %v426 = vsub.s32 %v423, %v425
      %v427 = vrot.slane %v405, %v426
      %v429 = vunpack.c.l.s4 1966171168
      %v430 = vunpack.c.0.s8 %v429
      %v431 = vlaneseq
      %v432 = vshrl.u32 %v431, 7
      %v433 = vsub.s32 %v430, %v432
      %v434 = vrot.slane %v406, %v433
      %v435 = vcombine.low %v413, %v427
      %v436 = vcombine.high %v413, %v427
      %v437 = vcombine.low %v420, %v434
      %v439 = vunpack.c.l.s4 1966171168
      %v440 = vunpack.c.0.s8 %v439
      %v441 = vlaneseq
      %v442 = vshrl.u32 %v441, 7
      %v443 = vsub.s32 %v440, %v442
      %v444 = vrot.slane %v349, %v443
      %v445 = vcombine.high %v444, %v444
      %v447 = vunpack.c.l.s4 1966171168
      %v448 = vunpack.c.0.s8 %v447
      %v449 = vlaneseq
      %v450 = vshrl.u32 %v449, 7
      %v451 = vsub.s32 %v448, %v450
      %v452 = vrot.slane %v444, %v451
      %v454 = vunpack.c.l.s4 1966171168
      %v455 = vunpack.c.0.s8 %v454
      %v456 = vlaneseq
      %v457 = vshrl.u32 %v456, 7
      %v458 = vsub.s32 %v455, %v457
      %v459 = vrot.slane %v445, %v458
      %v460 = vcombine.high %v452, %v452
      %v461 = vcombine.low %v292, %v312
      %v462 = vcombine.low %v348, %v293
      %v463 = vcombine.low %v319, %v349
      %v464 = vcombine.low %v294, %v326
      %v466 = vunpack.c.l.s4 1966171168
      %v467 = vunpack.c.0.s8 %v466
      %v468 = vlaneseq
      %v469 = vshrl.u32 %v468, 7
      %v470 = vsub.s32 %v467, %v469
      %v471 = vrot.slane %v461, %v470
      %v473 = vunpack.c.l.s4 1966171168
      %v474 = vunpack.c.0.s8 %v473
      %v475 = vlaneseq
      %v476 = vshrl.u32 %v475, 7
      %v477 = vsub.s32 %v474, %v476
      %v478 = vrot.slane %v462, %v477
      %v480 = vunpack.c.l.s4 1966171168
      %v481 = vunpack.c.0.s8 %v480
      %v482 = vlaneseq
      %v483 = vshrl.u32 %v482, 7
      %v484 = vsub.s32 %v481, %v483
      %v485 = vrot.slane %v463, %v484
      %v487 = vunpack.c.l.s4 1966171168
      %v488 = vunpack.c.0.s8 %v487
      %v489 = vlaneseq
      %v490 = vshrl.u32 %v489, 7
      %v491 = vsub.s32 %v488, %v490
      %v492 = vrot.slane %v464, %v491
      %v493 = vcombine.low %v471, %v478
      %v494 = vcombine.high %v471, %v478
      %v495 = vcombine.low %v485, %v492
      %v496 = vcombine.high %v485, %v492
      %v498 = vunpack.c.l.s4 1966171168
      %v499 = vunpack.c.0.s8 %v498
      %v500 = vlaneseq
      %v501 = vshrl.u32 %v500, 7
      %v502 = vsub.s32 %v499, %v501
      %v503 = vrot.slane %v493, %v502
      %v505 = vunpack.c.l.s4 1966171168
      %v506 = vunpack.c.0.s8 %v505
      %v507 = vlaneseq
      %v508 = vshrl.u32 %v507, 7
      %v509 = vsub.s32 %v506, %v508
      %v510 = vrot.slane %v494, %v509
      %v512 = vunpack.c.l.s4 1966171168
      %v513 = vunpack.c.0.s8 %v512
      %v514 = vlaneseq
      %v515 = vshrl.u32 %v514, 7
      %v516 = vsub.s32 %v513, %v515
      %v517 = vrot.slane %v495, %v516
      %v519 = vunpack.c.l.s4 1966171168
      %v520 = vunpack.c.0.s8 %v519
      %v521 = vlaneseq
      %v522 = vshrl.u32 %v521, 7
      %v523 = vsub.s32 %v520, %v522
      %v524 = vrot.slane %v496, %v523
      %v525 = vcombine.low %v503, %v517
      %v526 = vcombine.high %v503, %v517
      %v527 = vcombine.low %v510, %v524
      %v529 = vunpack.c.l.s4 1966171168
      %v530 = vunpack.c.0.s8 %v529
      %v531 = vlaneseq
      %v532 = vshrl.u32 %v531, 7
      %v533 = vsub.s32 %v530, %v532
      %v534 = vrot.slane %v350, %v533
      %v535 = vcombine.high %v534, %v534
      %v537 = vunpack.c.l.s4 1966171168
      %v538 = vunpack.c.0.s8 %v537
      %v539 = vlaneseq
      %v540 = vshrl.u32 %v539, 7
      %v541 = vsub.s32 %v538, %v540
      %v542 = vrot.slane %v534, %v541
      %v544 = vunpack.c.l.s4 1966171168
      %v545 = vunpack.c.0.s8 %v544
      %v546 = vlaneseq
      %v547 = vshrl.u32 %v546, 7
      %v548 = vsub.s32 %v545, %v547
      %v549 = vrot.slane %v535, %v548
      %v550 = vcombine.high %v542, %v542
      %v551 = vcombine.low %v349, %v294
      %v552 = vcombine.low %v326, %v350
      %v553 = vcombine.low %v295, %v333
      %v555 = vunpack.c.l.s4 1966171168
      %v556 = vunpack.c.0.s8 %v555
      %v557 = vlaneseq
      %v558 = vshrl.u32 %v557, 7
      %v559 = vsub.s32 %v556, %v558
      %v560 = vrot.slane %v551, %v559
      %v562 = vunpack.c.l.s4 1966171168
      %v563 = vunpack.c.0.s8 %v562
      %v564 = vlaneseq
      %v565 = vshrl.u32 %v564, 7
      %v566 = vsub.s32 %v563, %v565
      %v567 = vrot.slane %v552, %v566
      %v569 = vunpack.c.l.s4 1966171168
      %v570 = vunpack.c.0.s8 %v569
      %v571 = vlaneseq
      %v572 = vshrl.u32 %v571, 7
      %v573 = vsub.s32 %v570, %v572
      %v574 = vrot.slane %v553, %v573
      %v575 = vcombine.low %v402, %v560
      %v576 = vcombine.high %v402, %v560
      %v577 = vcombine.low %v567, %v574
      %v578 = vcombine.high %v567, %v574
      %v580 = vunpack.c.l.s4 1966171168
      %v581 = vunpack.c.0.s8 %v580
      %v582 = vlaneseq
      %v583 = vshrl.u32 %v582, 7
      %v584 = vsub.s32 %v581, %v583
      %v585 = vrot.slane %v575, %v584
      %v587 = vunpack.c.l.s4 1966171168
      %v588 = vunpack.c.0.s8 %v587
      %v589 = vlaneseq
      %v590 = vshrl.u32 %v589, 7
      %v591 = vsub.s32 %v588, %v590
      %v592 = vrot.slane %v576, %v591
      %v594 = vunpack.c.l.s4 1966171168
      %v595 = vunpack.c.0.s8 %v594
      %v596 = vlaneseq
      %v597 = vshrl.u32 %v596, 7
      %v598 = vsub.s32 %v595, %v597
      %v599 = vrot.slane %v577, %v598
      %v601 = vunpack.c.l.s4 1966171168
      %v602 = vunpack.c.0.s8 %v601
      %v603 = vlaneseq
      %v604 = vshrl.u32 %v603, 7
      %v605 = vsub.s32 %v602, %v604
      %v606 = vrot.slane %v578, %v605
      %v607 = vcombine.low %v585, %v599
      %v608 = vcombine.high %v585, %v599
      %v609 = vcombine.low %v592, %v606
      %v611 = vunpack.c.l.s4 1966171168
      %v612 = vunpack.c.0.s8 %v611
      %v613 = vlaneseq
      %v614 = vshrl.u32 %v613, 7
      %v615 = vsub.s32 %v612, %v614
      %v616 = vrot.slane %v351, %v615
      %v617 = vcombine.high %v616, %v616
      %v619 = vunpack.c.l.s4 1966171168
      %v620 = vunpack.c.0.s8 %v619
      %v621 = vlaneseq
      %v622 = vshrl.u32 %v621, 7
      %v623 = vsub.s32 %v620, %v622
      %v624 = vrot.slane %v616, %v623
      %v626 = vunpack.c.l.s4 1966171168
      %v627 = vunpack.c.0.s8 %v626
      %v628 = vlaneseq
      %v629 = vshrl.u32 %v628, 7
      %v630 = vsub.s32 %v627, %v629
      %v631 = vrot.slane %v617, %v630
      %v632 = vcombine.high %v624, %v624
      %v633 = vcombine.low %v350, %v295
      %v634 = vcombine.low %v333, %v351
      %v635 = vcombine.low %v296, %v340
      %v637 = vunpack.c.l.s4 1966171168
      %v638 = vunpack.c.0.s8 %v637
      %v639 = vlaneseq
      %v640 = vshrl.u32 %v639, 7
      %v641 = vsub.s32 %v638, %v640
      %v642 = vrot.slane %v633, %v641
      %v644 = vunpack.c.l.s4 1966171168
      %v645 = vunpack.c.0.s8 %v644
      %v646 = vlaneseq
      %v647 = vshrl.u32 %v646, 7
      %v648 = vsub.s32 %v645, %v647
      %v649 = vrot.slane %v634, %v648
      %v651 = vunpack.c.l.s4 1966171168
      %v652 = vunpack.c.0.s8 %v651
      %v653 = vlaneseq
      %v654 = vshrl.u32 %v653, 7
      %v655 = vsub.s32 %v652, %v654
      %v656 = vrot.slane %v635, %v655
      %v657 = vcombine.low %v492, %v642
      %v658 = vcombine.high %v492, %v642
      %v659 = vcombine.low %v649, %v656
      %v660 = vcombine.high %v649, %v656
      %v662 = vunpack.c.l.s4 1966171168
      %v663 = vunpack.c.0.s8 %v662
      %v664 = vlaneseq
      %v665 = vshrl.u32 %v664, 7
      %v666 = vsub.s32 %v663, %v665
      %v667 = vrot.slane %v657, %v666
      %v669 = vunpack.c.l.s4 1966171168
      %v670 = vunpack.c.0.s8 %v669
      %v671 = vlaneseq
      %v672 = vshrl.u32 %v671, 7
      %v673 = vsub.s32 %v670, %v672
      %v674 = vrot.slane %v658, %v673
      %v676 = vunpack.c.l.s4 1966171168
      %v677 = vunpack.c.0.s8 %v676
      %v678 = vlaneseq
      %v679 = vshrl.u32 %v678, 7
      %v680 = vsub.s32 %v677, %v679
      %v681 = vrot.slane %v659, %v680
      %v683 = vunpack.c.l.s4 1966171168
      %v684 = vunpack.c.0.s8 %v683
      %v685 = vlaneseq
      %v686 = vshrl.u32 %v685, 7
      %v687 = vsub.s32 %v684, %v686
      %v688 = vrot.slane %v660, %v687
      %v689 = vcombine.low %v667, %v681
      %v690 = vcombine.high %v667, %v681
      %v691 = vcombine.low %v674, %v688
      %v693 = vunpack.c.l.s4 1966171168
      %v694 = vunpack.c.0.s8 %v693
      %v695 = vlaneseq
      %v696 = vshrl.u32 %v695, 7
      %v697 = vsub.s32 %v694, %v696
      %v698 = vrot.slane %v352, %v697
      %v699 = vcombine.high %v698, %v698
      %v701 = vunpack.c.l.s4 1966171168
      %v702 = vunpack.c.0.s8 %v701
      %v703 = vlaneseq
      %v704 = vshrl.u32 %v703, 7
      %v705 = vsub.s32 %v702, %v704
      %v706 = vrot.slane %v698, %v705
      %v708 = vunpack.c.l.s4 1966171168
      %v709 = vunpack.c.0.s8 %v708
      %v710 = vlaneseq
      %v711 = vshrl.u32 %v710, 7
      %v712 = vsub.s32 %v709, %v711
      %v713 = vrot.slane %v699, %v712
      %v714 = vcombine.high %v706, %v706
      %v715 = vcombine.low %v351, %v296
      %v716 = vcombine.low %v340, %v352
      %v717 = vcombine.low %v297, %v359
      %v719 = vunpack.c.l.s4 1966171168
      %v720 = vunpack.c.0.s8 %v719
      %v721 = vlaneseq
      %v722 = vshrl.u32 %v721, 7
      %v723 = vsub.s32 %v720, %v722
      %v724 = vrot.slane %v715, %v723
      %v726 = vunpack.c.l.s4 1966171168
      %v727 = vunpack.c.0.s8 %v726
      %v728 = vlaneseq
      %v729 = vshrl.u32 %v728, 7
      %v730 = vsub.s32 %v727, %v729
      %v731 = vrot.slane %v716, %v730
      %v733 = vunpack.c.l.s4 1966171168
      %v734 = vunpack.c.0.s8 %v733
      %v735 = vlaneseq
      %v736 = vshrl.u32 %v735, 7
      %v737 = vsub.s32 %v734, %v736
      %v738 = vrot.slane %v717, %v737
      %v739 = vcombine.low %v574, %v724
      %v740 = vcombine.high %v574, %v724
      %v741 = vcombine.low %v731, %v738
      %v742 = vcombine.high %v731, %v738
      %v744 = vunpack.c.l.s4 1966171168
      %v745 = vunpack.c.0.s8 %v744
      %v746 = vlaneseq
      %v747 = vshrl.u32 %v746, 7
      %v748 = vsub.s32 %v745, %v747
      %v749 = vrot.slane %v739, %v748
      %v751 = vunpack.c.l.s4 1966171168
      %v752 = vunpack.c.0.s8 %v751
      %v753 = vlaneseq
      %v754 = vshrl.u32 %v753, 7
      %v755 = vsub.s32 %v752, %v754
      %v756 = vrot.slane %v740, %v755
      %v758 = vunpack.c.l.s4 1966171168
      %v759 = vunpack.c.0.s8 %v758
      %v760 = vlaneseq
      %v761 = vshrl.u32 %v760, 7
      %v762 = vsub.s32 %v759, %v761
      %v763 = vrot.slane %v741, %v762
      %v765 = vunpack.c.l.s4 1966171168
      %v766 = vunpack.c.0.s8 %v765
      %v767 = vlaneseq
      %v768 = vshrl.u32 %v767, 7
      %v769 = vsub.s32 %v766, %v768
      %v770 = vrot.slane %v742, %v769
      %v771 = vcombine.low %v749, %v763
      %v772 = vcombine.high %v749, %v763
      %v773 = vcombine.low %v756, %v770
      %v775 = vunpack.c.l.s4 1966171168
      %v776 = vunpack.c.0.s8 %v775
      %v777 = vlaneseq
      %v778 = vshrl.u32 %v777, 7
      %v779 = vsub.s32 %v776, %v778
      %v780 = vrot.slane %v361, %v779
      %v781 = vcombine.high %v780, %v780
      %v783 = vunpack.c.l.s4 1966171168
      %v784 = vunpack.c.0.s8 %v783
      %v785 = vlaneseq
      %v786 = vshrl.u32 %v785, 7
      %v787 = vsub.s32 %v784, %v786
      %v788 = vrot.slane %v780, %v787
      %v790 = vunpack.c.l.s4 1966171168
      %v791 = vunpack.c.0.s8 %v790
      %v792 = vlaneseq
      %v793 = vshrl.u32 %v792, 7
      %v794 = vsub.s32 %v791, %v793
      %v795 = vrot.slane %v781, %v794
      %v796 = vcombine.high %v788, %v788
      %v797 = vcombine.low %v352, %v297
      %v798 = vcombine.low %v359, %v361
      %v799 = vcombine.low %v298, %v368
      %v801 = vunpack.c.l.s4 1966171168
      %v802 = vunpack.c.0.s8 %v801
      %v803 = vlaneseq
      %v804 = vshrl.u32 %v803, 7
      %v805 = vsub.s32 %v802, %v804
      %v806 = vrot.slane %v797, %v805
      %v808 = vunpack.c.l.s4 1966171168
      %v809 = vunpack.c.0.s8 %v808
      %v810 = vlaneseq
      %v811 = vshrl.u32 %v810, 7
      %v812 = vsub.s32 %v809, %v811
      %v813 = vrot.slane %v798, %v812
      %v815 = vunpack.c.l.s4 1966171168
      %v816 = vunpack.c.0.s8 %v815
      %v817 = vlaneseq
      %v818 = vshrl.u32 %v817, 7
      %v819 = vsub.s32 %v816, %v818
      %v820 = vrot.slane %v799, %v819
      %v821 = vcombine.low %v656, %v806
      %v822 = vcombine.high %v656, %v806
      %v823 = vcombine.low %v813, %v820
      %v824 = vcombine.high %v813, %v820
      %v826 = vunpack.c.l.s4 1966171168
      %v827 = vunpack.c.0.s8 %v826
      %v828 = vlaneseq
      %v829 = vshrl.u32 %v828, 7
      %v830 = vsub.s32 %v827, %v829
      %v831 = vrot.slane %v821, %v830
      %v833 = vunpack.c.l.s4 1966171168
      %v834 = vunpack.c.0.s8 %v833
      %v835 = vlaneseq
      %v836 = vshrl.u32 %v835, 7
      %v837 = vsub.s32 %v834, %v836
      %v838 = vrot.slane %v822, %v837
      %v840 = vunpack.c.l.s4 1966171168
      %v841 = vunpack.c.0.s8 %v840
      %v842 = vlaneseq
      %v843 = vshrl.u32 %v842, 7
      %v844 = vsub.s32 %v841, %v843
      %v845 = vrot.slane %v823, %v844
      %v847 = vunpack.c.l.s4 1966171168
      %v848 = vunpack.c.0.s8 %v847
      %v849 = vlaneseq
      %v850 = vshrl.u32 %v849, 7
      %v851 = vsub.s32 %v848, %v850
      %v852 = vrot.slane %v824, %v851
      %v853 = vcombine.low %v831, %v845
      %v854 = vcombine.high %v831, %v845
      %v855 = vcombine.low %v838, %v852
      %v857 = vunpack.c.l.s4 1966171168
      %v858 = vunpack.c.0.s8 %v857
      %v859 = vlaneseq
      %v860 = vshrl.u32 %v859, 7
      %v861 = vsub.s32 %v858, %v860
      %v862 = vrot.slane %v370, %v861
      %v863 = vcombine.high %v862, %v862
      %v865 = vunpack.c.l.s4 1966171168
      %v866 = vunpack.c.0.s8 %v865
      %v867 = vlaneseq
      %v868 = vshrl.u32 %v867, 7
      %v869 = vsub.s32 %v866, %v868
      %v870 = vrot.slane %v862, %v869
      %v872 = vunpack.c.l.s4 1966171168
      %v873 = vunpack.c.0.s8 %v872
      %v874 = vlaneseq
      %v875 = vshrl.u32 %v874, 7
      %v876 = vsub.s32 %v873, %v875
      %v877 = vrot.slane %v863, %v876
      %v878 = vcombine.high %v870, %v870
      %v879 = vld [vmem:[%s3] sm:$0xf]
      %v880 = vld [vmem:[%s3 + $0x4] sm:$0xf]
      %v881 = vld [vmem:[%s3 + $0x8] sm:$0xf]
      %v882 = vld [vmem:[%s3 + $0xc] sm:$0xf]
      %v883 = vld [vmem:[%s3 + $0x10] sm:$0xf]
      %v884 = vld [vmem:[%s3 + $0x14] sm:$0xf]
      %v885 = vld [vmem:[%s3 + $0x18] sm:$0xf]
      %v886 = vld [vmem:[%s3 + $0x1c] sm:$0xf]
      %v887 = vld [vmem:[%s3 + $0x20] sm:$0xf]
      %v888 = vld [vmem:[%s3 + $0x24] sm:$0xf]
      %v889 = vld [vmem:[%s3 + $0x28] sm:$0xf]
      %v890 = vld [vmem:[%s3 + $0x2c] sm:$0xf]
      %v891 = vld [vmem:[%s3 + $0x30] sm:$0xf]
      %v892 = vld [vmem:[%s3 + $0x34] sm:$0xf]
      %v893 = vld [vmem:[%s3 + $0x38] sm:$0xf]
      %v894 = vld [vmem:[%s3 + $0x3c] sm:$0xf]
      %v895 = vld [vmem:[%s3 + $0x40] sm:$0xf]
      %v896 = vld [vmem:[%s3 + $0x44] sm:$0xf]
      %v897 = vld [vmem:[%s3 + $0x48] sm:$0xf]
      %v898 = vld [vmem:[%s3 + $0x4c] sm:$0xf]
      %v899 = vld [vmem:[%s3 + $0x50] sm:$0xf]
      %v900 = vld [vmem:[%s3 + $0x54] sm:$0xf]
      %v901 = vld [vmem:[%s3 + $0x58] sm:$0xf]
      %v902 = vld [vmem:[%s3 + $0x5c] sm:$0xf]
      %v903 = vld [vmem:[%s3 + $0x60] sm:$0xf]
      %v904 = vld [vmem:[%s3 + $0x64] sm:$0xf]
      %v905 = vld [vmem:[%s3 + $0x68] sm:$0xf]
      %v906 = vld [vmem:[%s3 + $0x6c] sm:$0xf]
      %v907 = vld [vmem:[%s3 + $0x70] sm:$0xf]
      %v908 = vld [vmem:[%s3 + $0x74] sm:$0xf]
      %v909 = vld [vmem:[%s3 + $0x78] sm:$0xf]
      %v910 = vld [vmem:[%s3 + $0x7c] sm:$0xf]
      %v911 = vld [vmem:[%s3 + $0x80] sm:$0xf]
      %v912 = vld [vmem:[%s3 + $0x84] sm:$0xf]
      %v913 = vld [vmem:[%s3 + $0x88] sm:$0xf]
      %v914 = vld [vmem:[%s3 + $0x8c] sm:$0xf]
      %v915 = vld [vmem:[%s3 + $0x90] sm:$0xf]
      %v916 = vld [vmem:[%s3 + $0x94] sm:$0xf]
      %v917 = vld [vmem:[%s3 + $0x98] sm:$0xf]
      %v918 = vld [vmem:[%s3 + $0x9c] sm:$0xf]
      %v919 = vld [vmem:[%s3 + $0xa0] sm:$0xf]
      %v920 = vld [vmem:[%s3 + $0xa4] sm:$0xf]
      %v921 = vld [vmem:[%s3 + $0xa8] sm:$0xf]
      %v922 = vld [vmem:[%s3 + $0xac] sm:$0xf]
      %v923 = vld [vmem:[%s3 + $0xb0] sm:$0xf]
      %v924 = vld [vmem:[%s3 + $0xb4] sm:$0xf]
      %v925 = vld [vmem:[%s3 + $0xb8] sm:$0xf]
      %v926 = vld [vmem:[%s3 + $0xbc] sm:$0xf]
      %v927 = vld [vmem:[%s3 + $0xc0] sm:$0xf]
      %v928 = vld [vmem:[%s3 + $0xc4] sm:$0xf]
      %v929 = vld [vmem:[%s3 + $0xc8] sm:$0xf]
      %v930 = vld [vmem:[%s3 + $0xcc] sm:$0xf]
      %v931 = vld [vmem:[%s3 + $0xd0] sm:$0xf]
      %v932 = vld [vmem:[%s3 + $0xd4] sm:$0xf]
      %v933 = vld [vmem:[%s3 + $0xd8] sm:$0xf]
      %v934 = vld [vmem:[%s3 + $0xdc] sm:$0xf]
      %v935 = vld [vmem:[%s3 + $0xe0] sm:$0xf]
      %v936 = vld [vmem:[%s3 + $0xe4] sm:$0xf]
      %v937 = vld [vmem:[%s3 + $0xe8] sm:$0xf]
      %v938 = vld [vmem:[%s3 + $0xec] sm:$0xf]
      %v939 = vld [vmem:[%s3 + $0xf0] sm:$0xf]
      %v940 = vld [vmem:[%s3 + $0xf4] sm:$0xf]
      %v941 = vld [vmem:[%s3 + $0xf8] sm:$0xf]
      %v942 = vld [vmem:[%s3 + $0xfc] sm:$0xf]
      %v943 = vld [vmem:[%s3 + $0x100] sm:$0xf]
      %v944 = vld [vmem:[%s3 + $0x104] sm:$0xf]
      %v945 = vld [vmem:[%s3 + $0x108] sm:$0xf]
      %v946 = vld [vmem:[%s3 + $0x10c] sm:$0xf]
      %v947 = vld [vmem:[%s3 + $0x110] sm:$0xf]
      %v948 = vld [vmem:[%s3 + $0x114] sm:$0xf]
      %v949 = vld [vmem:[%s3 + $0x118] sm:$0xf]
      %v950 = vld [vmem:[%s3 + $0x11c] sm:$0xf]
      %v951 = vld [vmem:[%s3 + $0x120] sm:$0xf]
      %v952 = vld [vmem:[%s3 + $0x124] sm:$0xf]
      %v953 = vld [vmem:[%s3 + $0x128] sm:$0xf]
      %v954 = vld [vmem:[%s3 + $0x12c] sm:$0xf]
      %v955 = vld [vmem:[%s3 + $0x130] sm:$0xf]
      %v956 = vld [vmem:[%s3 + $0x134] sm:$0xf]
      %v957 = vld [vmem:[%s3 + $0x138] sm:$0xf]
      %v958 = vld [vmem:[%s3 + $0x13c] sm:$0xf]
      %v959 = vld [vmem:[%s3 + $0x140] sm:$0xf]
      %v960 = vld [vmem:[%s3 + $0x144] sm:$0xf]
      %v961 = vld [vmem:[%s3 + $0x148] sm:$0xf]
      %v962 = vld [vmem:[%s3 + $0x14c] sm:$0xf]
      %v963 = vld [vmem:[%s3 + $0x150] sm:$0xf]
      %v964 = vld [vmem:[%s3 + $0x154] sm:$0xf]
      %v965 = vld [vmem:[%s3 + $0x158] sm:$0xf]
      %v966 = vld [vmem:[%s3 + $0x15c] sm:$0xf]
      %v967 = vld [vmem:[%s3 + $0x160] sm:$0xf]
      %v968 = vld [vmem:[%s3 + $0x164] sm:$0xf]
      %v969 = vld [vmem:[%s3 + $0x168] sm:$0xf]
      %v970 = vld [vmem:[%s3 + $0x16c] sm:$0xf]
      %v971 = vld [vmem:[%s3 + $0x170] sm:$0xf]
      %v972 = vld [vmem:[%s3 + $0x174] sm:$0xf]
      %v973 = vld [vmem:[%s3 + $0x178] sm:$0xf]
      %v974 = vld [vmem:[%s3 + $0x17c] sm:$0xf]
      %v975 = vld [vmem:[%s3 + $0x180] sm:$0xf]
      %v976 = vld [vmem:[%s3 + $0x184] sm:$0xf]
      %v977 = vld [vmem:[%s3 + $0x188] sm:$0xf]
      %v978 = vld [vmem:[%s3 + $0x18c] sm:$0xf]
      %v979 = vld [vmem:[%s3 + $0x190] sm:$0xf]
      %v980 = vld [vmem:[%s3 + $0x194] sm:$0xf]
      %v981 = vld [vmem:[%s3 + $0x198] sm:$0xf]
      %v982 = vld [vmem:[%s3 + $0x19c] sm:$0xf]
      %v983 = vld [vmem:[%s3 + $0x1a0] sm:$0xf]
      %v984 = vld [vmem:[%s3 + $0x1a4] sm:$0xf]
      %v985 = vld [vmem:[%s3 + $0x1a8] sm:$0xf]
      %v986 = vld [vmem:[%s3 + $0x1ac] sm:$0xf]
      %v987 = vld [vmem:[%s3 + $0x1b0] sm:$0xf]
      %v988 = vld [vmem:[%s3 + $0x1b4] sm:$0xf]
      %v989 = vld [vmem:[%s3 + $0x1b8] sm:$0xf]
      %v990 = vld [vmem:[%s3 + $0x1bc] sm:$0xf]
      %v991 = vld [vmem:[%s3 + $0x1c0] sm:$0xf]
      %v992 = vld [vmem:[%s3 + $0x1c4] sm:$0xf]
      %v993 = vld [vmem:[%s3 + $0x1c8] sm:$0xf]
      %v994 = vld [vmem:[%s3 + $0x1cc] sm:$0xf]
      %v995 = vld [vmem:[%s3 + $0x1d0] sm:$0xf]
      %v996 = vld [vmem:[%s3 + $0x1d4] sm:$0xf]
      %v997 = vld [vmem:[%s3 + $0x1d8] sm:$0xf]
      %v998 = vld [vmem:[%s3 + $0x1dc] sm:$0xf]
      %v999 = vld [vmem:[%s3 + $0x1e0] sm:$0xf]
      %v1000 = vld [vmem:[%s3 + $0x1e4] sm:$0xf]
      %v1001 = vld [vmem:[%s3 + $0x1e8] sm:$0xf]
      %v1002 = vld [vmem:[%s3 + $0x1ec] sm:$0xf]
      %v1003 = vld [vmem:[%s3 + $0x1f0] sm:$0xf]
      %v1004 = vld [vmem:[%s3 + $0x1f4] sm:$0xf]
      %v1005 = vld [vmem:[%s3 + $0x1f8] sm:$0xf]
      %v1006 = vld [vmem:[%s3 + $0x1fc] sm:$0xf]
      %v1007 = vld [vmem:[%s3 + $0x200] sm:$0xf]
      %v1008 = vld [vmem:[%s3 + $0x204] sm:$0xf]
      %v1009 = vld [vmem:[%s3 + $0x208] sm:$0xf]
      %v1010 = vld [vmem:[%s3 + $0x20c] sm:$0xf]
      %v1011 = vld [vmem:[%s3 + $0x210] sm:$0xf]
      %v1012 = vld [vmem:[%s3 + $0x214] sm:$0xf]
      %v1013 = vld [vmem:[%s3 + $0x218] sm:$0xf]
      %v1014 = vld [vmem:[%s3 + $0x21c] sm:$0xf]
      %v1015 = vld [vmem:[%s3 + $0x220] sm:$0xf]
      %v1016 = vld [vmem:[%s3 + $0x224] sm:$0xf]
      %v1017 = vld [vmem:[%s3 + $0x228] sm:$0xf]
      %v1018 = vld [vmem:[%s3 + $0x22c] sm:$0xf]
      %v1019 = vld [vmem:[%s3 + $0x230] sm:$0xf]
      %v1020 = vld [vmem:[%s3 + $0x234] sm:$0xf]
      %v1021 = vld [vmem:[%s3 + $0x238] sm:$0xf]
      %v1022 = vld [vmem:[%s3 + $0x23c] sm:$0xf]
      %v1023 = vcombine.low %v435, %v437
      %v1024 = vcombine.high %v435, %v437
      %v1025 = vcombine.low %v436, %v525
      %v1026 = vcombine.high %v436, %v525
      %v1027 = vcombine.low %v527, %v526
      %v1028 = vcombine.high %v527, %v526
      %v1029 = vcombine.low %v607, %v609
      %v1030 = vcombine.high %v607, %v609
      %v1032 = vunpack.c.l.s4 1966171168
      %v1033 = vunpack.c.0.s8 %v1032
      %v1034 = vlaneseq
      %v1035 = vshrl.u32 %v1034, 7
      %v1036 = vsub.s32 %v1033, %v1035
      %v1037 = vrot.slane %v1023, %v1036
      %v1039 = vunpack.c.l.s4 1966171168
      %v1040 = vunpack.c.0.s8 %v1039
      %v1041 = vlaneseq
      %v1042 = vshrl.u32 %v1041, 7
      %v1043 = vsub.s32 %v1040, %v1042
      %v1044 = vrot.slane %v1024, %v1043
      %v1046 = vunpack.c.l.s4 1966171168
      %v1047 = vunpack.c.0.s8 %v1046
      %v1048 = vlaneseq
      %v1049 = vshrl.u32 %v1048, 7
      %v1050 = vsub.s32 %v1047, %v1049
      %v1051 = vrot.slane %v1025, %v1050
      %v1053 = vunpack.c.l.s4 1966171168
      %v1054 = vunpack.c.0.s8 %v1053
      %v1055 = vlaneseq
      %v1056 = vshrl.u32 %v1055, 7
      %v1057 = vsub.s32 %v1054, %v1056
      %v1058 = vrot.slane %v1026, %v1057
      %v1060 = vunpack.c.l.s4 1966171168
      %v1061 = vunpack.c.0.s8 %v1060
      %v1062 = vlaneseq
      %v1063 = vshrl.u32 %v1062, 7
      %v1064 = vsub.s32 %v1061, %v1063
      %v1065 = vrot.slane %v1027, %v1064
      %v1067 = vunpack.c.l.s4 1966171168
      %v1068 = vunpack.c.0.s8 %v1067
      %v1069 = vlaneseq
      %v1070 = vshrl.u32 %v1069, 7
      %v1071 = vsub.s32 %v1068, %v1070
      %v1072 = vrot.slane %v1028, %v1071
      %v1074 = vunpack.c.l.s4 1966171168
      %v1075 = vunpack.c.0.s8 %v1074
      %v1076 = vlaneseq
      %v1077 = vshrl.u32 %v1076, 7
      %v1078 = vsub.s32 %v1075, %v1077
      %v1079 = vrot.slane %v1029, %v1078
      %v1081 = vunpack.c.l.s4 1966171168
      %v1082 = vunpack.c.0.s8 %v1081
      %v1083 = vlaneseq
      %v1084 = vshrl.u32 %v1083, 7
      %v1085 = vsub.s32 %v1082, %v1084
      %v1086 = vrot.slane %v1030, %v1085
      %v1087 = vcombine.low %v1037, %v1051
      %v1088 = vcombine.high %v1037, %v1051
      %v1089 = vcombine.low %v1044, %v1058
      %v1090 = vcombine.high %v1044, %v1058
      %v1091 = vcombine.low %v1065, %v1079
      %v1092 = vcombine.high %v1065, %v1079
      %v1093 = vcombine.low %v1072, %v1086
      %v1094 = vcombine.high %v1072, %v1086
      %v1096 = vunpack.c.l.s4 1966171168
      %v1097 = vunpack.c.0.s8 %v1096
      %v1098 = vlaneseq
      %v1099 = vshrl.u32 %v1098, 7
      %v1100 = vsub.s32 %v1097, %v1099
      %v1101 = vrot.slane %v1087, %v1100
      %v1103 = vunpack.c.l.s4 1966171168
      %v1104 = vunpack.c.0.s8 %v1103
      %v1105 = vlaneseq
      %v1106 = vshrl.u32 %v1105, 7
      %v1107 = vsub.s32 %v1104, %v1106
      %v1108 = vrot.slane %v1089, %v1107
      %v1110 = vunpack.c.l.s4 1966171168
      %v1111 = vunpack.c.0.s8 %v1110
      %v1112 = vlaneseq
      %v1113 = vshrl.u32 %v1112, 7
      %v1114 = vsub.s32 %v1111, %v1113
      %v1115 = vrot.slane %v1088, %v1114
      %v1117 = vunpack.c.l.s4 1966171168
      %v1118 = vunpack.c.0.s8 %v1117
      %v1119 = vlaneseq
      %v1120 = vshrl.u32 %v1119, 7
      %v1121 = vsub.s32 %v1118, %v1120
      %v1122 = vrot.slane %v1090, %v1121
      %v1124 = vunpack.c.l.s4 1966171168
      %v1125 = vunpack.c.0.s8 %v1124
      %v1126 = vlaneseq
      %v1127 = vshrl.u32 %v1126, 7
      %v1128 = vsub.s32 %v1125, %v1127
      %v1129 = vrot.slane %v1091, %v1128
      %v1131 = vunpack.c.l.s4 1966171168
      %v1132 = vunpack.c.0.s8 %v1131
      %v1133 = vlaneseq
      %v1134 = vshrl.u32 %v1133, 7
      %v1135 = vsub.s32 %v1132, %v1134
      %v1136 = vrot.slane %v1093, %v1135
      %v1138 = vunpack.c.l.s4 1966171168
      %v1139 = vunpack.c.0.s8 %v1138
      %v1140 = vlaneseq
      %v1141 = vshrl.u32 %v1140, 7
      %v1142 = vsub.s32 %v1139, %v1141
      %v1143 = vrot.slane %v1092, %v1142
      %v1145 = vunpack.c.l.s4 1966171168
      %v1146 = vunpack.c.0.s8 %v1145
      %v1147 = vlaneseq
      %v1148 = vshrl.u32 %v1147, 7
      %v1149 = vsub.s32 %v1146, %v1148
      %v1150 = vrot.slane %v1094, %v1149
      %v1151 = vcombine.low %v1101, %v1129
      %v1152 = vcombine.high %v1101, %v1129
      %v1153 = vcombine.low %v1108, %v1136
      %v1154 = vcombine.high %v1108, %v1136
      %v1155 = vcombine.low %v1115, %v1143
      %v1156 = vcombine.high %v1115, %v1143
      %v1157 = vcombine.low %v1122, %v1150
      %v1158 = vcombine.high %v1122, %v1150
      %v1159 = vcombine.low %v452, %v459
      %v1160 = vcombine.low %v460, %v542
      %v1161 = vcombine.low %v549, %v550
      %v1162 = vcombine.low %v624, %v631
      %v1164 = vunpack.c.l.s4 1966171168
      %v1165 = vunpack.c.0.s8 %v1164
      %v1166 = vlaneseq
      %v1167 = vshrl.u32 %v1166, 7
      %v1168 = vsub.s32 %v1165, %v1167
      %v1169 = vrot.slane %v1159, %v1168
      %v1171 = vunpack.c.l.s4 1966171168
      %v1172 = vunpack.c.0.s8 %v1171
      %v1173 = vlaneseq
      %v1174 = vshrl.u32 %v1173, 7
      %v1175 = vsub.s32 %v1172, %v1174
      %v1176 = vrot.slane %v1160, %v1175
      %v1178 = vunpack.c.l.s4 1966171168
      %v1179 = vunpack.c.0.s8 %v1178
      %v1180 = vlaneseq
      %v1181 = vshrl.u32 %v1180, 7
      %v1182 = vsub.s32 %v1179, %v1181
      %v1183 = vrot.slane %v1161, %v1182
      %v1185 = vunpack.c.l.s4 1966171168
      %v1186 = vunpack.c.0.s8 %v1185
      %v1187 = vlaneseq
      %v1188 = vshrl.u32 %v1187, 7
      %v1189 = vsub.s32 %v1186, %v1188
      %v1190 = vrot.slane %v1162, %v1189
      %v1191 = vcombine.low %v1169, %v1176
      %v1192 = vcombine.low %v1183, %v1190
      %v1194 = vunpack.c.l.s4 1966171168
      %v1195 = vunpack.c.0.s8 %v1194
      %v1196 = vlaneseq
      %v1197 = vshrl.u32 %v1196, 7
      %v1198 = vsub.s32 %v1195, %v1197
      %v1199 = vrot.slane %v1191, %v1198
      %v1201 = vunpack.c.l.s4 1966171168
      %v1202 = vunpack.c.0.s8 %v1201
      %v1203 = vlaneseq
      %v1204 = vshrl.u32 %v1203, 7
      %v1205 = vsub.s32 %v1202, %v1204
      %v1206 = vrot.slane %v1192, %v1205
      %v1207 = vcombine.low %v1199, %v1206
      %v1208 = vcombine.low %v608, %v689
      %v1209 = vcombine.high %v608, %v689
      %v1210 = vcombine.low %v691, %v690
      %v1211 = vcombine.high %v691, %v690
      %v1212 = vcombine.low %v771, %v773
      %v1213 = vcombine.high %v771, %v773
      %v1214 = vcombine.low %v772, %v853
      %v1215 = vcombine.high %v772, %v853
      %v1217 = vunpack.c.l.s4 1966171168
      %v1218 = vunpack.c.0.s8 %v1217
      %v1219 = vlaneseq
      %v1220 = vshrl.u32 %v1219, 7
      %v1221 = vsub.s32 %v1218, %v1220
      %v1222 = vrot.slane %v1208, %v1221
      %v1224 = vunpack.c.l.s4 1966171168
      %v1225 = vunpack.c.0.s8 %v1224
      %v1226 = vlaneseq
      %v1227 = vshrl.u32 %v1226, 7
      %v1228 = vsub.s32 %v1225, %v1227
      %v1229 = vrot.slane %v1209, %v1228
      %v1231 = vunpack.c.l.s4 1966171168
      %v1232 = vunpack.c.0.s8 %v1231
      %v1233 = vlaneseq
      %v1234 = vshrl.u32 %v1233, 7
      %v1235 = vsub.s32 %v1232, %v1234
      %v1236 = vrot.slane %v1210, %v1235
      %v1238 = vunpack.c.l.s4 1966171168
      %v1239 = vunpack.c.0.s8 %v1238
      %v1240 = vlaneseq
      %v1241 = vshrl.u32 %v1240, 7
      %v1242 = vsub.s32 %v1239, %v1241
      %v1243 = vrot.slane %v1211, %v1242
      %v1245 = vunpack.c.l.s4 1966171168
      %v1246 = vunpack.c.0.s8 %v1245
      %v1247 = vlaneseq
      %v1248 = vshrl.u32 %v1247, 7
      %v1249 = vsub.s32 %v1246, %v1248
      %v1250 = vrot.slane %v1212, %v1249
      %v1252 = vunpack.c.l.s4 1966171168
      %v1253 = vunpack.c.0.s8 %v1252
      %v1254 = vlaneseq
      %v1255 = vshrl.u32 %v1254, 7
      %v1256 = vsub.s32 %v1253, %v1255
      %v1257 = vrot.slane %v1213, %v1256
      %v1259 = vunpack.c.l.s4 1966171168
      %v1260 = vunpack.c.0.s8 %v1259
      %v1261 = vlaneseq
      %v1262 = vshrl.u32 %v1261, 7
      %v1263 = vsub.s32 %v1260, %v1262
      %v1264 = vrot.slane %v1214, %v1263
      %v1266 = vunpack.c.l.s4 1966171168
      %v1267 = vunpack.c.0.s8 %v1266
      %v1268 = vlaneseq
      %v1269 = vshrl.u32 %v1268, 7
      %v1270 = vsub.s32 %v1267, %v1269
      %v1271 = vrot.slane %v1215, %v1270
      %v1272 = vcombine.low %v1222, %v1236
      %v1273 = vcombine.high %v1222, %v1236
      %v1274 = vcombine.low %v1229, %v1243
      %v1275 = vcombine.high %v1229, %v1243
      %v1276 = vcombine.low %v1250, %v1264
      %v1277 = vcombine.high %v1250, %v1264
      %v1278 = vcombine.low %v1257, %v1271
      %v1279 = vcombine.high %v1257, %v1271
      %v1281 = vunpack.c.l.s4 1966171168
      %v1282 = vunpack.c.0.s8 %v1281
      %v1283 = vlaneseq
      %v1284 = vshrl.u32 %v1283, 7
      %v1285 = vsub.s32 %v1282, %v1284
      %v1286 = vrot.slane %v1272, %v1285
      %v1288 = vunpack.c.l.s4 1966171168
      %v1289 = vunpack.c.0.s8 %v1288
      %v1290 = vlaneseq
      %v1291 = vshrl.u32 %v1290, 7
      %v1292 = vsub.s32 %v1289, %v1291
      %v1293 = vrot.slane %v1274, %v1292
      %v1295 = vunpack.c.l.s4 1966171168
      %v1296 = vunpack.c.0.s8 %v1295
      %v1297 = vlaneseq
      %v1298 = vshrl.u32 %v1297, 7
      %v1299 = vsub.s32 %v1296, %v1298
      %v1300 = vrot.slane %v1273, %v1299
      %v1302 = vunpack.c.l.s4 1966171168
      %v1303 = vunpack.c.0.s8 %v1302
      %v1304 = vlaneseq
      %v1305 = vshrl.u32 %v1304, 7
      %v1306 = vsub.s32 %v1303, %v1305
      %v1307 = vrot.slane %v1275, %v1306
      %v1309 = vunpack.c.l.s4 1966171168
      %v1310 = vunpack.c.0.s8 %v1309
      %v1311 = vlaneseq
      %v1312 = vshrl.u32 %v1311, 7
      %v1313 = vsub.s32 %v1310, %v1312
      %v1314 = vrot.slane %v1276, %v1313
      %v1316 = vunpack.c.l.s4 1966171168
      %v1317 = vunpack.c.0.s8 %v1316
      %v1318 = vlaneseq
      %v1319 = vshrl.u32 %v1318, 7
      %v1320 = vsub.s32 %v1317, %v1319
      %v1321 = vrot.slane %v1278, %v1320
      %v1323 = vunpack.c.l.s4 1966171168
      %v1324 = vunpack.c.0.s8 %v1323
      %v1325 = vlaneseq
      %v1326 = vshrl.u32 %v1325, 7
      %v1327 = vsub.s32 %v1324, %v1326
      %v1328 = vrot.slane %v1277, %v1327
      %v1330 = vunpack.c.l.s4 1966171168
      %v1331 = vunpack.c.0.s8 %v1330
      %v1332 = vlaneseq
      %v1333 = vshrl.u32 %v1332, 7
      %v1334 = vsub.s32 %v1331, %v1333
      %v1335 = vrot.slane %v1279, %v1334
      %v1336 = vcombine.low %v1286, %v1314
      %v1337 = vcombine.high %v1286, %v1314
      %v1338 = vcombine.low %v1293, %v1321
      %v1339 = vcombine.high %v1293, %v1321
      %v1340 = vcombine.low %v1300, %v1328
      %v1341 = vcombine.high %v1300, %v1328
      %v1342 = vcombine.low %v1307, %v1335
      %v1343 = vcombine.high %v1307, %v1335
      %v1344 = vcombine.low %v632, %v706
      %v1345 = vcombine.low %v713, %v714
      %v1346 = vcombine.low %v788, %v795
      %v1347 = vcombine.low %v796, %v870
      %v1349 = vunpack.c.l.s4 1966171168
      %v1350 = vunpack.c.0.s8 %v1349
      %v1351 = vlaneseq
      %v1352 = vshrl.u32 %v1351, 7
      %v1353 = vsub.s32 %v1350, %v1352
      %v1354 = vrot.slane %v1344, %v1353
      %v1356 = vunpack.c.l.s4 1966171168
      %v1357 = vunpack.c.0.s8 %v1356
      %v1358 = vlaneseq
      %v1359 = vshrl.u32 %v1358, 7
      %v1360 = vsub.s32 %v1357, %v1359
      %v1361 = vrot.slane %v1345, %v1360
      %v1363 = vunpack.c.l.s4 1966171168
      %v1364 = vunpack.c.0.s8 %v1363
      %v1365 = vlaneseq
      %v1366 = vshrl.u32 %v1365, 7
      %v1367 = vsub.s32 %v1364, %v1366
      %v1368 = vrot.slane %v1346, %v1367
      %v1370 = vunpack.c.l.s4 1966171168
      %v1371 = vunpack.c.0.s8 %v1370
      %v1372 = vlaneseq
      %v1373 = vshrl.u32 %v1372, 7
      %v1374 = vsub.s32 %v1371, %v1373
      %v1375 = vrot.slane %v1347, %v1374
      %v1376 = vcombine.low %v1354, %v1361
      %v1377 = vcombine.low %v1368, %v1375
      %v1379 = vunpack.c.l.s4 1966171168
      %v1380 = vunpack.c.0.s8 %v1379
      %v1381 = vlaneseq
      %v1382 = vshrl.u32 %v1381, 7
      %v1383 = vsub.s32 %v1380, %v1382
      %v1384 = vrot.slane %v1376, %v1383
      %v1386 = vunpack.c.l.s4 1966171168
      %v1387 = vunpack.c.0.s8 %v1386
      %v1388 = vlaneseq
      %v1389 = vshrl.u32 %v1388, 7
      %v1390 = vsub.s32 %v1387, %v1389
      %v1391 = vrot.slane %v1377, %v1390
      %v1392 = vcombine.low %v1384, %v1391
      %v1393 = vcombine.low %v855, %v854
      %v1394 = vcombine.high %v855, %v854
      %v1396 = vunpack.c.l.s4 1966171168
      %v1397 = vunpack.c.0.s8 %v1396
      %v1398 = vlaneseq
      %v1399 = vshrl.u32 %v1398, 7
      %v1400 = vsub.s32 %v1397, %v1399
      %v1401 = vrot.slane %v1393, %v1400
      %v1403 = vunpack.c.l.s4 1966171168
      %v1404 = vunpack.c.0.s8 %v1403
      %v1405 = vlaneseq
      %v1406 = vshrl.u32 %v1405, 7
      %v1407 = vsub.s32 %v1404, %v1406
      %v1408 = vrot.slane %v1394, %v1407
      %v1409 = vcombine.high %v1401, %v1401
      %v1410 = vcombine.high %v1408, %v1408
      %v1412 = vunpack.c.l.s4 1966171168
      %v1413 = vunpack.c.0.s8 %v1412
      %v1414 = vlaneseq
      %v1415 = vshrl.u32 %v1414, 7
      %v1416 = vsub.s32 %v1413, %v1415
      %v1417 = vrot.slane %v1401, %v1416
      %v1419 = vunpack.c.l.s4 1966171168
      %v1420 = vunpack.c.0.s8 %v1419
      %v1421 = vlaneseq
      %v1422 = vshrl.u32 %v1421, 7
      %v1423 = vsub.s32 %v1420, %v1422
      %v1424 = vrot.slane %v1408, %v1423
      %v1426 = vunpack.c.l.s4 1966171168
      %v1427 = vunpack.c.0.s8 %v1426
      %v1428 = vlaneseq
      %v1429 = vshrl.u32 %v1428, 7
      %v1430 = vsub.s32 %v1427, %v1429
      %v1431 = vrot.slane %v1409, %v1430
      %v1433 = vunpack.c.l.s4 1966171168
      %v1434 = vunpack.c.0.s8 %v1433
      %v1435 = vlaneseq
      %v1436 = vshrl.u32 %v1435, 7
      %v1437 = vsub.s32 %v1434, %v1436
      %v1438 = vrot.slane %v1410, %v1437
      %v1439 = vcombine.high %v1417, %v1417
      %v1440 = vcombine.high %v1424, %v1424
      %v1441 = vcombine.high %v1431, %v1431
      %v1442 = vcombine.high %v1438, %v1438
      %v1443 = vcombine.low %v877, %v878
      %v1445 = vunpack.c.l.s4 1966171168
      %v1446 = vunpack.c.0.s8 %v1445
      %v1447 = vlaneseq
      %v1448 = vshrl.u32 %v1447, 7
      %v1449 = vsub.s32 %v1446, %v1448
      %v1450 = vrot.slane %v1443, %v1449
      %v1452 = vunpack.c.l.s4 1966171168
      %v1453 = vunpack.c.0.s8 %v1452
      %v1454 = vlaneseq
      %v1455 = vshrl.u32 %v1454, 7
      %v1456 = vsub.s32 %v1453, %v1455
      %v1457 = vrot.slane %v1450, %v1456
      %v1629 = vunpack.c.l.b16 %v879
      %v1630 = vunpack.c.l.b16 %v880
      %v1631 = vunpack.c.l.b16 %v881
      %v1632 = vunpack.c.l.b16 %v882
      %v1633 = vunpack.c.l.b16 %v883
      %v1634 = vunpack.c.l.b16 %v884
      %v1635 = vunpack.c.l.b16 %v885
      %v1636 = vunpack.c.l.b16 %v886
      %v1637 = vunpack.c.l.b16 %v887
      %v1638 = vunpack.c.l.b16 %v888
      %v1639 = vunpack.c.l.b16 %v889
      %v1640 = vunpack.c.l.b16 %v890
      %v1641 = vunpack.c.l.b16 %v891
      %v1642 = vunpack.c.l.b16 %v892
      %v1643 = vunpack.c.l.b16 %v893
      %v1644 = vunpack.c.l.b16 %v894
      %v1645 = vunpack.c.l.b16 %v895
      %v1646 = vunpack.c.l.b16 %v896
      %v1647 = vunpack.c.l.b16 %v897
      %v1648 = vunpack.c.l.b16 %v898
      %v1649 = vunpack.c.l.b16 %v899
      %v1650 = vunpack.c.l.b16 %v900
      %v1651 = vunpack.c.l.b16 %v901
      %v1652 = vunpack.c.l.b16 %v902
      %v1653 = vunpack.c.l.b16 %v903
      %v1654 = vunpack.c.l.b16 %v904
      %v1655 = vunpack.c.l.b16 %v905
      %v1656 = vunpack.c.l.b16 %v906
      %v1657 = vunpack.c.l.b16 %v907
      %v1658 = vunpack.c.l.b16 %v908
      %v1659 = vunpack.c.l.b16 %v909
      %v1660 = vunpack.c.l.b16 %v910
      %v1661 = vunpack.c.l.b16 %v911
      %v1662 = vunpack.c.l.b16 %v912
      %v1663 = vunpack.c.l.b16 %v913
      %v1664 = vunpack.c.l.b16 %v914
      %v1665 = vunpack.c.l.b16 %v915
      %v1666 = vunpack.c.l.b16 %v916
      %v1667 = vunpack.c.l.b16 %v917
      %v1668 = vunpack.c.l.b16 %v918
      %v1669 = vunpack.c.l.b16 %v919
      %v1670 = vunpack.c.l.b16 %v920
      %v1671 = vunpack.c.l.b16 %v921
      %v1672 = vunpack.c.l.b16 %v922
      %v1673 = vunpack.c.l.b16 %v923
      %v1674 = vunpack.c.l.b16 %v924
      %v1675 = vunpack.c.l.b16 %v925
      %v1676 = vunpack.c.l.b16 %v926
      %v1677 = vunpack.c.l.b16 %v927
      %v1678 = vunpack.c.l.b16 %v928
      %v1679 = vunpack.c.l.b16 %v929
      %v1680 = vunpack.c.l.b16 %v930
      %v1681 = vunpack.c.l.b16 %v931
      %v1682 = vunpack.c.l.b16 %v932
      %v1683 = vunpack.c.l.b16 %v933
      %v1684 = vunpack.c.l.b16 %v934
      %v1685 = vunpack.c.l.b16 %v935
      %v1686 = vunpack.c.l.b16 %v936
      %v1687 = vunpack.c.l.b16 %v937
      %v1688 = vunpack.c.l.b16 %v938
      %v1689 = vunpack.c.l.b16 %v939
      %v1690 = vunpack.c.l.b16 %v940
      %v1691 = vunpack.c.l.b16 %v941
      %v1692 = vunpack.c.l.b16 %v942
      %v1693 = vunpack.c.l.b16 %v943
      %v1694 = vunpack.c.l.b16 %v944
      %v1695 = vunpack.c.l.b16 %v945
      %v1696 = vunpack.c.l.b16 %v946
      %v1697 = vunpack.c.l.b16 %v947
      %v1698 = vunpack.c.l.b16 %v948
      %v1699 = vunpack.c.l.b16 %v949
      %v1700 = vunpack.c.l.b16 %v950
      %v1701 = vunpack.c.l.b16 %v951
      %v1702 = vunpack.c.l.b16 %v952
      %v1703 = vunpack.c.l.b16 %v953
      %v1704 = vunpack.c.l.b16 %v954
      %v1705 = vunpack.c.l.b16 %v955
      %v1706 = vunpack.c.l.b16 %v956
      %v1707 = vunpack.c.l.b16 %v957
      %v1708 = vunpack.c.l.b16 %v958
      %v1709 = vunpack.c.l.b16 %v959
      %v1710 = vunpack.c.l.b16 %v960
      %v1711 = vunpack.c.l.b16 %v961
      %v1712 = vunpack.c.l.b16 %v962
      %v1713 = vunpack.c.l.b16 %v963
      %v1714 = vunpack.c.l.b16 %v964
      %v1715 = vunpack.c.l.b16 %v965
      %v1716 = vunpack.c.l.b16 %v966
      %v1717 = vunpack.c.l.b16 %v967
      %v1718 = vunpack.c.l.b16 %v968
      %v1719 = vunpack.c.l.b16 %v969
      %v1720 = vunpack.c.l.b16 %v970
      %v1721 = vunpack.c.l.b16 %v971
      %v1722 = vunpack.c.l.b16 %v972
      %v1723 = vunpack.c.l.b16 %v973
      %v1724 = vunpack.c.l.b16 %v974
      %v1725 = vunpack.c.l.b16 %v975
      %v1726 = vunpack.c.l.b16 %v976
      %v1727 = vunpack.c.l.b16 %v977
      %v1728 = vunpack.c.l.b16 %v978
      %v1729 = vunpack.c.l.b16 %v979
      %v1730 = vunpack.c.l.b16 %v980
      %v1731 = vunpack.c.l.b16 %v981
      %v1732 = vunpack.c.l.b16 %v982
      %v1733 = vunpack.c.l.b16 %v983
      %v1734 = vunpack.c.l.b16 %v984
      %v1735 = vunpack.c.l.b16 %v985
      %v1736 = vunpack.c.l.b16 %v986
      %v1737 = vunpack.c.l.b16 %v987
      %v1738 = vunpack.c.l.b16 %v988
      %v1739 = vunpack.c.l.b16 %v989
      %v1740 = vunpack.c.l.b16 %v990
      %v1741 = vunpack.c.l.b16 %v991
      %v1742 = vunpack.c.l.b16 %v992
      %v1743 = vunpack.c.l.b16 %v993
      %v1744 = vunpack.c.l.b16 %v994
      %v1745 = vunpack.c.l.b16 %v995
      %v1746 = vunpack.c.l.b16 %v996
      %v1747 = vunpack.c.l.b16 %v997
      %v1748 = vunpack.c.l.b16 %v998
      %v1749 = vunpack.c.l.b16 %v999
      %v1750 = vunpack.c.l.b16 %v1000
      %v1751 = vunpack.c.l.b16 %v1001
      %v1752 = vunpack.c.l.b16 %v1002
      %v1753 = vunpack.c.l.b16 %v1003
      %v1754 = vunpack.c.l.b16 %v1004
      %v1755 = vunpack.c.l.b16 %v1005
      %v1756 = vunpack.c.l.b16 %v1006
      %v1757 = vunpack.c.l.b16 %v1007
      %v1758 = vunpack.c.l.b16 %v1008
      %v1759 = vunpack.c.l.b16 %v1009
      %v1760 = vunpack.c.l.b16 %v1010
      %v1761 = vunpack.c.l.b16 %v1011
      %v1762 = vunpack.c.l.b16 %v1012
      %v1763 = vunpack.c.l.b16 %v1013
      %v1764 = vunpack.c.l.b16 %v1014
      %v1765 = vunpack.c.l.b16 %v1015
      %v1766 = vunpack.c.l.b16 %v1016
      %v1767 = vunpack.c.l.b16 %v1017
      %v1768 = vunpack.c.l.b16 %v1018
      %v1769 = vunpack.c.l.b16 %v1019
      %v1770 = vunpack.c.l.b16 %v1020
      %v1771 = vunpack.c.l.b16 %v1021
      %v1772 = vunpack.c.l.b16 %v1022
      %v1773 = vpack.c.b16 %v1630, %v1629
      %v1774 = vpack.c.b16 %v1632, %v1631
      %v1775 = vpack.c.b16 %v1634, %v1633
      %v1776 = vpack.c.b16 %v1636, %v1635
      %v1777 = vpack.c.b16 %v1638, %v1637
      %v1778 = vpack.c.b16 %v1640, %v1639
      %v1779 = vpack.c.b16 %v1642, %v1641
      %v1780 = vpack.c.b16 %v1644, %v1643
      %v1781 = vpack.c.b16 %v1646, %v1645
      %v1782 = vpack.c.b16 %v1648, %v1647
      %v1783 = vpack.c.b16 %v1650, %v1649
      %v1784 = vpack.c.b16 %v1652, %v1651
      %v1785 = vpack.c.b16 %v1654, %v1653
      %v1786 = vpack.c.b16 %v1656, %v1655
      %v1787 = vpack.c.b16 %v1658, %v1657
      %v1788 = vpack.c.b16 %v1660, %v1659
      %v1789 = vpack.c.b16 %v1662, %v1661
      %v1790 = vpack.c.b16 %v1664, %v1663
      %v1791 = vpack.c.b16 %v1666, %v1665
      %v1792 = vpack.c.b16 %v1668, %v1667
      %v1793 = vpack.c.b16 %v1670, %v1669
      %v1794 = vpack.c.b16 %v1672, %v1671
      %v1795 = vpack.c.b16 %v1674, %v1673
      %v1796 = vpack.c.b16 %v1676, %v1675
      %v1797 = vpack.c.b16 %v1678, %v1677
      %v1798 = vpack.c.b16 %v1680, %v1679
      %v1799 = vpack.c.b16 %v1682, %v1681
      %v1800 = vpack.c.b16 %v1684, %v1683
      %v1801 = vpack.c.b16 %v1686, %v1685
      %v1802 = vpack.c.b16 %v1688, %v1687
      %v1803 = vpack.c.b16 %v1690, %v1689
      %v1804 = vpack.c.b16 %v1692, %v1691
      %v1805 = vpack.c.b16 %v1694, %v1693
      %v1806 = vpack.c.b16 %v1696, %v1695
      %v1807 = vpack.c.b16 %v1698, %v1697
      %v1808 = vpack.c.b16 %v1700, %v1699
      %v1809 = vpack.c.b16 %v1702, %v1701
      %v1810 = vpack.c.b16 %v1704, %v1703
      %v1811 = vpack.c.b16 %v1706, %v1705
      %v1812 = vpack.c.b16 %v1708, %v1707
      %v1813 = vpack.c.b16 %v1710, %v1709
      %v1814 = vpack.c.b16 %v1712, %v1711
      %v1815 = vpack.c.b16 %v1714, %v1713
      %v1816 = vpack.c.b16 %v1716, %v1715
      %v1817 = vpack.c.b16 %v1718, %v1717
      %v1818 = vpack.c.b16 %v1720, %v1719
      %v1819 = vpack.c.b16 %v1722, %v1721
      %v1820 = vpack.c.b16 %v1724, %v1723
      %v1821 = vpack.c.b16 %v1726, %v1725
      %v1822 = vpack.c.b16 %v1728, %v1727
      %v1823 = vpack.c.b16 %v1730, %v1729
      %v1824 = vpack.c.b16 %v1732, %v1731
      %v1825 = vpack.c.b16 %v1734, %v1733
      %v1826 = vpack.c.b16 %v1736, %v1735
      %v1827 = vpack.c.b16 %v1738, %v1737
      %v1828 = vpack.c.b16 %v1740, %v1739
      %v1829 = vpack.c.b16 %v1742, %v1741
      %v1830 = vpack.c.b16 %v1744, %v1743
      %v1831 = vpack.c.b16 %v1746, %v1745
      %v1832 = vpack.c.b16 %v1748, %v1747
      %v1833 = vpack.c.b16 %v1750, %v1749
      %v1834 = vpack.c.b16 %v1752, %v1751
      %v1835 = vpack.c.b16 %v1754, %v1753
      %v1836 = vpack.c.b16 %v1756, %v1755
      %v1837 = vpack.c.b16 %v1758, %v1757
      %v1838 = vpack.c.b16 %v1760, %v1759
      %v1839 = vpack.c.b16 %v1762, %v1761
      %v1840 = vpack.c.b16 %v1764, %v1763
      %v1841 = vpack.c.b16 %v1766, %v1765
      %v1842 = vpack.c.b16 %v1768, %v1767
      %v1843 = vpack.c.b16 %v1770, %v1769
      %v1844 = vpack.c.b16 %v1772, %v1771
      %1917 = vmatprep.subr.bf16.mxu0 0
      %1918 = vmatpush1.bf16.msra.mxu0 %v1780
      %1919 = vmatprep.subr.bf16.mxu0 0
      %1920 = vmatpush1.bf16.msra.mxu0 %v1779
      %1921 = vmatprep.subr.bf16.mxu0 0
      %1922 = vmatpush1.bf16.msra.mxu0 %v1778
      %1923 = vmatprep.subr.bf16.mxu0 0
      %1924 = vmatpush1.bf16.msra.mxu0 %v1777
      %1925 = vmatprep.subr.bf16.mxu0 0
      %1926 = vmatpush1.bf16.msra.mxu0 %v1776
      %1927 = vmatprep.subr.bf16.mxu0 0
      %1928 = vmatpush1.bf16.msra.mxu0 %v1775
      %1929 = vmatprep.subr.bf16.mxu0 0
      %1930 = vmatpush1.bf16.msra.mxu0 %v1774
      %1931 = vmatprep.subr.bf16.mxu0 0
      %1932 = vmatpush1.bf16.msra.mxu0 %v1773
      %1933 = vmatprep.subr.bf16.mxu0 0
      %1934 = vmatpush2.bf16.msra.mxu0 %v1788
      %1935 = vmatprep.subr.bf16.mxu0 0
      %1936 = vmatpush2.bf16.msra.mxu0 %v1787
      %1937 = vmatprep.subr.bf16.mxu0 0
      %1938 = vmatpush2.bf16.msra.mxu0 %v1786
      %1939 = vmatprep.subr.bf16.mxu0 0
      %1940 = vmatpush2.bf16.msra.mxu0 %v1785
      %1941 = vmatprep.subr.bf16.mxu0 0
      %1942 = vmatpush2.bf16.msra.mxu0 %v1784
      %1943 = vmatprep.subr.bf16.mxu0 0
      %1944 = vmatpush2.bf16.msra.mxu0 %v1783
      %1945 = vmatprep.subr.bf16.mxu0 0
      %1946 = vmatpush2.bf16.msra.mxu0 %v1782
      %1947 = vmatprep.subr.bf16.mxu0 0
      %1948 = vmatpush2.bf16.msra.mxu0 %v1781
      %1949 = vmatprep.mubr.bf16.mxu0 %v1155
      %1950 = vmatmul.mubr.bf16.gmra.mxu0 %v1151
      %v1951 = vpop.f32.mrf.mxu0
      %v1952 = vadd.f32 0.0, %v1951
      %v1953 = vpop.f32.mrf.mxu0
      %v1954 = vpop.f32.mrf.mxu0
      %v1955 = vadd.f32 0.0, %v1954
      %v1956 = vpop.f32.mrf.mxu0
      %1957 = vmatprep.mubr.bf16.mxu0 %v1340
      %1958 = vmatmul.mubr.bf16.gmra.mxu0 %v1336
      %v1959 = vpop.f32.mrf.mxu0
      %v1960 = vadd.f32 0.0, %v1959
      %v1961 = vpop.f32.mrf.mxu0
      %v1962 = vpop.f32.mrf.mxu0
      %v1963 = vadd.f32 0.0, %v1962
      %v1964 = vpop.f32.mrf.mxu0
      %1965 = vmatprep.mubr.bf16.mxu0 %v1431
      %1966 = vmatmul.mubr.bf16.gmra.mxu0 %v1417
      %v1967 = vpop.f32.mrf.mxu0
      %v1968 = vadd.f32 0.0, %v1967
      %v1969 = vpop.f32.mrf.mxu0
      %v1970 = vpop.f32.mrf.mxu0
      %v1971 = vpop.f32.mrf.mxu0
      %1972 = vdwg.mxu0
      %1973 = vmatprep.subr.bf16.mxu0 0
      %1974 = vmatpush1.bf16.msra.mxu0 %v1796
      %1975 = vmatprep.subr.bf16.mxu0 0
      %1976 = vmatpush1.bf16.msra.mxu0 %v1795
      %1977 = vmatprep.subr.bf16.mxu0 0
      %1978 = vmatpush1.bf16.msra.mxu0 %v1794
      %1979 = vmatprep.subr.bf16.mxu0 0
      %1980 = vmatpush1.bf16.msra.mxu0 %v1793
      %1981 = vmatprep.subr.bf16.mxu0 0
      %1982 = vmatpush1.bf16.msra.mxu0 %v1792
      %1983 = vmatprep.subr.bf16.mxu0 0
      %1984 = vmatpush1.bf16.msra.mxu0 %v1791
      %1985 = vmatprep.subr.bf16.mxu0 0
      %1986 = vmatpush1.bf16.msra.mxu0 %v1790
      %1987 = vmatprep.subr.bf16.mxu0 0
      %1988 = vmatpush1.bf16.msra.mxu0 %v1789
      %1989 = vmatprep.subr.bf16.mxu0 0
      %1990 = vmatpush2.bf16.msra.mxu0 %v1804
      %1991 = vmatprep.subr.bf16.mxu0 0
      %1992 = vmatpush2.bf16.msra.mxu0 %v1803
      %1993 = vmatprep.subr.bf16.mxu0 0
      %1994 = vmatpush2.bf16.msra.mxu0 %v1802
      %1995 = vmatprep.subr.bf16.mxu0 0
      %1996 = vmatpush2.bf16.msra.mxu0 %v1801
      %1997 = vmatprep.subr.bf16.mxu0 0
      %1998 = vmatpush2.bf16.msra.mxu0 %v1800
      %1999 = vmatprep.subr.bf16.mxu0 0
      %2000 = vmatpush2.bf16.msra.mxu0 %v1799
      %2001 = vmatprep.subr.bf16.mxu0 0
      %2002 = vmatpush2.bf16.msra.mxu0 %v1798
      %2003 = vmatprep.subr.bf16.mxu0 0
      %2004 = vmatpush2.bf16.msra.mxu0 %v1797
      %2005 = vmatprep.mubr.bf16.mxu0 %v1156
      %2006 = vmatmul.mubr.bf16.gmra.mxu0 %v1152
      %v2007 = vpop.f32.mrf.mxu0
      %v2008 = vadd.f32 %v1952, %v2007
      %v2009 = vpop.f32.mrf.mxu0
      %v2010 = vpop.f32.mrf.mxu0
      %v2011 = vadd.f32 %v1955, %v2010
      %v2012 = vpop.f32.mrf.mxu0
      %2013 = vmatprep.mubr.bf16.mxu0 %v1341
      %2014 = vmatmul.mubr.bf16.gmra.mxu0 %v1337
      %v2015 = vpop.f32.mrf.mxu0
      %v2016 = vadd.f32 %v1960, %v2015
      %v2017 = vpop.f32.mrf.mxu0
      %v2018 = vpop.f32.mrf.mxu0
      %v2019 = vadd.f32 %v1963, %v2018
      %v2020 = vpop.f32.mrf.mxu0
      %2021 = vmatprep.mubr.bf16.mxu0 %v1441
      %2022 = vmatmul.mubr.bf16.gmra.mxu0 %v1439
      %v2023 = vpop.f32.mrf.mxu0
      %v2024 = vadd.f32 %v1968, %v2023
      %v2025 = vpop.f32.mrf.mxu0
      %v2026 = vpop.f32.mrf.mxu0
      %v2027 = vpop.f32.mrf.mxu0
      %2028 = vdwg.mxu0
      %2029 = vmatprep.subr.bf16.mxu0 0
      %2030 = vmatpush1.bf16.msra.mxu0 %v1812
      %2031 = vmatprep.subr.bf16.mxu0 0
      %2032 = vmatpush1.bf16.msra.mxu0 %v1811
      %2033 = vmatprep.subr.bf16.mxu0 0
      %2034 = vmatpush1.bf16.msra.mxu0 %v1810
      %2035 = vmatprep.subr.bf16.mxu0 0
      %2036 = vmatpush1.bf16.msra.mxu0 %v1809
      %2037 = vmatprep.subr.bf16.mxu0 0
      %2038 = vmatpush1.bf16.msra.mxu0 %v1808
      %2039 = vmatprep.subr.bf16.mxu0 0
      %2040 = vmatpush1.bf16.msra.mxu0 %v1807
      %2041 = vmatprep.subr.bf16.mxu0 0
      %2042 = vmatpush1.bf16.msra.mxu0 %v1806
      %2043 = vmatprep.subr.bf16.mxu0 0
      %2044 = vmatpush1.bf16.msra.mxu0 %v1805
      %2045 = vmatprep.subr.bf16.mxu0 0
      %2046 = vmatpush2.bf16.msra.mxu0 %v1820
      %2047 = vmatprep.subr.bf16.mxu0 0
      %2048 = vmatpush2.bf16.msra.mxu0 %v1819
      %2049 = vmatprep.subr.bf16.mxu0 0
      %2050 = vmatpush2.bf16.msra.mxu0 %v1818
      %2051 = vmatprep.subr.bf16.mxu0 0
      %2052 = vmatpush2.bf16.msra.mxu0 %v1817
      %2053 = vmatprep.subr.bf16.mxu0 0
      %2054 = vmatpush2.bf16.msra.mxu0 %v1816
      %2055 = vmatprep.subr.bf16.mxu0 0
      %2056 = vmatpush2.bf16.msra.mxu0 %v1815
      %2057 = vmatprep.subr.bf16.mxu0 0
      %2058 = vmatpush2.bf16.msra.mxu0 %v1814
      %2059 = vmatprep.subr.bf16.mxu0 0
      %2060 = vmatpush2.bf16.msra.mxu0 %v1813
      %2061 = vmatprep.mubr.bf16.mxu0 %v1157
      %2062 = vmatmul.mubr.bf16.gmra.mxu0 %v1153
      %v2063 = vpop.f32.mrf.mxu0
      %v2064 = vadd.f32 %v2008, %v2063
      %v2065 = vpop.f32.mrf.mxu0
      %v2066 = vpop.f32.mrf.mxu0
      %v2067 = vadd.f32 %v2011, %v2066
      %v2068 = vpop.f32.mrf.mxu0
      %2069 = vmatprep.mubr.bf16.mxu0 %v1342
      %2070 = vmatmul.mubr.bf16.gmra.mxu0 %v1338
      %v2071 = vpop.f32.mrf.mxu0
      %v2072 = vadd.f32 %v2016, %v2071
      %v2073 = vpop.f32.mrf.mxu0
      %v2074 = vpop.f32.mrf.mxu0
      %v2075 = vadd.f32 %v2019, %v2074
      %v2076 = vpop.f32.mrf.mxu0
      %2077 = vmatprep.mubr.bf16.mxu0 %v1438
      %2078 = vmatmul.mubr.bf16.gmra.mxu0 %v1424
      %v2079 = vpop.f32.mrf.mxu0
      %v2080 = vadd.f32 %v2024, %v2079
      %v2081 = vpop.f32.mrf.mxu0
      %v2082 = vpop.f32.mrf.mxu0
      %v2083 = vpop.f32.mrf.mxu0
      %2084 = vdwg.mxu0
      %2085 = vmatprep.subr.bf16.mxu0 0
      %2086 = vmatpush1.bf16.msra.mxu0 %v1828
      %2087 = vmatprep.subr.bf16.mxu0 0
      %2088 = vmatpush1.bf16.msra.mxu0 %v1827
      %2089 = vmatprep.subr.bf16.mxu0 0
      %2090 = vmatpush1.bf16.msra.mxu0 %v1826
      %2091 = vmatprep.subr.bf16.mxu0 0
      %2092 = vmatpush1.bf16.msra.mxu0 %v1825
      %2093 = vmatprep.subr.bf16.mxu0 0
      %2094 = vmatpush1.bf16.msra.mxu0 %v1824
      %2095 = vmatprep.subr.bf16.mxu0 0
      %2096 = vmatpush1.bf16.msra.mxu0 %v1823
      %2097 = vmatprep.subr.bf16.mxu0 0
      %2098 = vmatpush1.bf16.msra.mxu0 %v1822
      %2099 = vmatprep.subr.bf16.mxu0 0
      %2100 = vmatpush1.bf16.msra.mxu0 %v1821
      %2101 = vmatprep.subr.bf16.mxu0 0
      %2102 = vmatpush2.bf16.msra.mxu0 %v1836
      %2103 = vmatprep.subr.bf16.mxu0 0
      %2104 = vmatpush2.bf16.msra.mxu0 %v1835
      %2105 = vmatprep.subr.bf16.mxu0 0
      %2106 = vmatpush2.bf16.msra.mxu0 %v1834
      %2107 = vmatprep.subr.bf16.mxu0 0
      %2108 = vmatpush2.bf16.msra.mxu0 %v1833
      %2109 = vmatprep.subr.bf16.mxu0 0
      %2110 = vmatpush2.bf16.msra.mxu0 %v1832
      %2111 = vmatprep.subr.bf16.mxu0 0
      %2112 = vmatpush2.bf16.msra.mxu0 %v1831
      %2113 = vmatprep.subr.bf16.mxu0 0
      %2114 = vmatpush2.bf16.msra.mxu0 %v1830
      %2115 = vmatprep.subr.bf16.mxu0 0
      %2116 = vmatpush2.bf16.msra.mxu0 %v1829
      %2117 = vmatprep.mubr.bf16.mxu0 %v1158
      %2118 = vmatmul.mubr.bf16.gmra.mxu0 %v1154
      %v2119 = vpop.f32.mrf.mxu0
      %v2120 = vadd.f32 %v2064, %v2119
      %v2121 = vpop.f32.mrf.mxu0
      %v2122 = vpop.f32.mrf.mxu0
      %v2123 = vadd.f32 %v2067, %v2122
      %v2124 = vpop.f32.mrf.mxu0
      %2125 = vmatprep.mubr.bf16.mxu0 %v1343
      %2126 = vmatmul.mubr.bf16.gmra.mxu0 %v1339
      %v2127 = vpop.f32.mrf.mxu0
      %v2128 = vadd.f32 %v2072, %v2127
      %v2129 = vpop.f32.mrf.mxu0
      %v2130 = vpop.f32.mrf.mxu0
      %v2131 = vadd.f32 %v2075, %v2130
      %v2132 = vpop.f32.mrf.mxu0
      %2133 = vmatprep.mubr.bf16.mxu0 %v1442
      %2134 = vmatmul.mubr.bf16.gmra.mxu0 %v1440
      %v2135 = vpop.f32.mrf.mxu0
      %v2136 = vadd.f32 %v2080, %v2135
      %v2137 = vpop.f32.mrf.mxu0
      %v2138 = vpop.f32.mrf.mxu0
      %v2139 = vpop.f32.mrf.mxu0
      %2140 = vdwg.mxu0
      %2141 = vmatprep.subr.bf16.mxu0 0
      %2142 = vmatpush1.bf16.msra.mxu0 %v1844
      %2143 = vmatprep.subr.bf16.mxu0 0
      %2144 = vmatpush1.bf16.msra.mxu0 %v1843
      %2145 = vmatprep.subr.bf16.mxu0 0
      %2146 = vmatpush1.bf16.msra.mxu0 %v1842
      %2147 = vmatprep.subr.bf16.mxu0 0
      %2148 = vmatpush1.bf16.msra.mxu0 %v1841
      %2149 = vmatprep.subr.bf16.mxu0 0
      %2150 = vmatpush1.bf16.msra.mxu0 %v1840
      %2151 = vmatprep.subr.bf16.mxu0 0
      %2152 = vmatpush1.bf16.msra.mxu0 %v1839
      %2153 = vmatprep.subr.bf16.mxu0 0
      %2154 = vmatpush1.bf16.msra.mxu0 %v1838
      %2155 = vmatprep.subr.bf16.mxu0 0
      %2156 = vmatpush1.bf16.msra.mxu0 %v1837
      %2157 = vmatprep.subr.bf16.mxu0 0
      %2158 = vmatpush2.bf16.msra.mxu0 0
      %2159 = vmatprep.subr.bf16.mxu0 0
      %2160 = vmatpush2.bf16.msra.mxu0 0
      %2161 = vmatprep.subr.bf16.mxu0 0
      %2162 = vmatpush2.bf16.msra.mxu0 0
      %2163 = vmatprep.subr.bf16.mxu0 0
      %2164 = vmatpush2.bf16.msra.mxu0 0
      %2165 = vmatprep.subr.bf16.mxu0 0
      %2166 = vmatpush2.bf16.msra.mxu0 0
      %2167 = vmatprep.subr.bf16.mxu0 0
      %2168 = vmatpush2.bf16.msra.mxu0 0
      %2169 = vmatprep.subr.bf16.mxu0 0
      %2170 = vmatpush2.bf16.msra.mxu0 0
      %2171 = vmatprep.subr.bf16.mxu0 0
      %2172 = vmatpush2.bf16.msra.mxu0 0
      %2173 = vmatprep.mubr.bf16.mxu0 0
      %2174 = vmatmul.mubr.bf16.gmra.mxu0 %v1207
      %v2175 = vpop.f32.mrf.mxu0
      %v2176 = vadd.f32 %v2120, %v2175
      %v2177 = vpop.f32.mrf.mxu0
      %v2178 = vpop.f32.mrf.mxu0
      %v2179 = vadd.f32 %v2123, %v2178
      %v2180 = vpop.f32.mrf.mxu0
      %2181 = vmatprep.mubr.bf16.mxu0 0
      %2182 = vmatmul.mubr.bf16.gmra.mxu0 %v1392
      %v2183 = vpop.f32.mrf.mxu0
      %v2184 = vadd.f32 %v2128, %v2183
      %v2185 = vpop.f32.mrf.mxu0
      %v2186 = vpop.f32.mrf.mxu0
      %v2187 = vadd.f32 %v2131, %v2186
      %v2188 = vpop.f32.mrf.mxu0
      %2189 = vmatprep.mubr.bf16.mxu0 0
      %2190 = vmatmul.mubr.bf16.gmra.mxu0 %v1457
      %v2191 = vpop.f32.mrf.mxu0
      %v2192 = vadd.f32 %v2136, %v2191
      %v2193 = vpop.f32.mrf.mxu0
      %v2194 = vpop.f32.mrf.mxu0
      %v2195 = vpop.f32.mrf.mxu0
      %2196 = vdwg.mxu0
      %v2197 = vpack.c.bf16 %v2179, %v2176
      %v2198 = vpack.c.bf16 %v2187, %v2184
      %v2199 = vpack.c.bf16 %v2192, %v2192
      %v2203 = vunpack.c.l.b16 %v2197
      %v2204 = vunpack.c.h.b16 %v2197
      %v2205 = vunpack.c.l.b16 %v2198
      %v2206 = vunpack.c.h.b16 %v2198
      %v2207 = vunpack.c.l.b16 %v2199
      %v2208 = vpack.c.b16 %v2203, %v2203
      %v2209 = vpack.c.b16 %v2204, %v2204
      %v2210 = vpack.c.b16 %v2205, %v2205
      %v2211 = vpack.c.b16 %v2206, %v2206
      %v2212 = vpack.c.b16 %v2207, %v2207
      %2218 = vst [vmem:[%s231] sm:$0xf] %v2208
      %2219 = vst [vmem:[%s231 + $0x4] sm:$0xf] %v2209
      %2220 = vst [vmem:[%s231 + $0x8] sm:$0xf] %v2210
      %2221 = vst [vmem:[%s231 + $0xc] sm:$0xf] %v2211
      %2222 = vst [vmem:[%s231 + $0x10] sm:$0x3] %v2212
      %v2223 = vadd.f32 %v2176, %v2179
      %v2224 = vadd.f32 %v2223, %v2184
      %v2225 = vadd.f32 %v2224, %v2187
      %vm2226 = vcmask 1043456
      %v2227 = vsel %vm2226, %v2192, 0.0
      %v2228 = vadd.f32 %v2225, %v2227
      %v2229 = vrot.slane %v2228, 4
      %v2230 = vadd.f32 %v2228, %v2229
      %v2231 = vrot.slane %v2230, 2
      %v2232 = vadd.f32 %v2230, %v2231
      %v2233 = vrot.slane %v2232, 1
      %v2234 = vadd.f32 %v2232, %v2233
      %v2235 = vmul.f32 %v2176, %v2176
      %v2236 = vmul.f32 %v2179, %v2179
      %v2237 = vmul.f32 %v2184, %v2184
      %v2238 = vmul.f32 %v2187, %v2187
      %v2239 = vmul.f32 %v2192, %v2192
      %v2240 = vadd.f32 %v2235, %v2236
      %v2241 = vadd.f32 %v2240, %v2237
      %v2242 = vadd.f32 %v2241, %v2238
      %v2243 = vsel %vm2226, %v2239, 0.0
      %v2244 = vadd.f32 %v2242, %v2243
      %v2245 = vrot.slane %v2244, 4
      %v2246 = vadd.f32 %v2244, %v2245
      %v2247 = vrot.slane %v2246, 2
      %v2248 = vadd.f32 %v2246, %v2247
      %v2249 = vrot.slane %v2248, 1
      %v2250 = vadd.f32 %v2248, %v2249
      %vm2251 = vcmask 1040384
      %v2252 = vsel %vm2251, %v2234, %v2250
      %2253 = vst [vmem:[%s235] sm:$0x3] %v2252
      %p2254 = scmp.lt.s32.totalorder %s17, 1
      %s2255 = scalar_select %p2254, %s17, 1
      %s2256 = smul.addr %s2255, 5
      %s2257 = smul.addr %s2256, 4
      %s2258 = scalar_lea.vmem %s4, %s2257
      %p2259 = scmp.lt.s32.totalorder %s17, 1
      %s2260 = scalar_select %p2259, %s17, 1
      %s2261 = smul.addr %s2260, 2
      %s2262 = scalar_lea.vmem %s5, %s2261
      // Predicated region
      $region37: #{unet_expanding_block_forward.8} parent=35 // pred_check
        %p2263 = pneg %p124
      $region38: #{unet_expanding_block_forward.8} parent=35 // pred_check_branch
        %2265 = sbr.rel (%p2263) target = $region40
      $region39: #{unet_expanding_block_forward.8} parent=35 // pred_region
        _
      $region40: #{unet_expanding_block_forward.8} parent=35 // pred_fallthru
        _
      // Predicated region
      $region41: #{unet_expanding_block_forward.8} parent=35 // pred_check
        %p2266 = pneg %p150
      $region42: #{unet_expanding_block_forward.8} parent=35 // pred_check_branch
        %2268 = sbr.rel (%p2266) target = $region44
      $region43: #{unet_expanding_block_forward.8} parent=35 // pred_region
        _
      $region44: #{unet_expanding_block_forward.8} parent=35 // pred_fallthru
        _
    $region36: #{unet_expanding_block_forward.8} parent=5 // pred_fallthru
      _
    %p2269 = scmp.le.s32.totalorder 2, %s12
    // Predicated region
    $region45: #{unet_expanding_block_forward.8} parent=5 // pred_check
      %p2270 = pneg %p2269
    $region46: #{unet_expanding_block_forward.8} parent=5 // pred_check_branch
      %2272 = sbr.rel (%p2270) target = $region48
    $region47: #{unet_expanding_block_forward.8} parent=5 // pred_region
      %s2273 = ssub.s32 %s12, 2
      // Predicated region
      $region49: #{unet_expanding_block_forward.8} parent=47 // pred_check
        %p2274 = pneg %p130
      $region50: #{unet_expanding_block_forward.8} parent=47 // pred_check_branch
        %2276 = sbr.rel (%p2274) target = $region52
      $region51: #{unet_expanding_block_forward.8} parent=47 // pred_region
        %p2277 = scmp.lt.s32.totalorder %s18, 1
        %s2278 = scalar_select %p2277, %s18, 1
        %s2279 = smul.addr %s2278, 5
        %s2280 = smul.addr %s2279, 4
        %s2281 = scalar_lea.vmem %s4, %s2280
      $region52: #{unet_expanding_block_forward.8} parent=47 // pred_fallthru
        _
      // Predicated region
      $region53: #{unet_expanding_block_forward.8} parent=47 // pred_check
        %p2282 = pneg %p156
      $region54: #{unet_expanding_block_forward.8} parent=47 // pred_check_branch
        %2284 = sbr.rel (%p2282) target = $region56
      $region55: #{unet_expanding_block_forward.8} parent=47 // pred_region
        %p2285 = scmp.lt.s32.totalorder %s18, 1
        %s2286 = scalar_select %p2285, %s18, 1
        %s2287 = smul.addr %s2286, 2
        %s2288 = scalar_lea.vmem %s5, %s2287
      $region56: #{unet_expanding_block_forward.8} parent=47 // pred_fallthru
        _
    $region48: #{unet_expanding_block_forward.8} parent=5 // pred_fallthru
      _
  $region6: #{unet_expanding_block_forward.8} parent=0 // loop_footer
    %s16 = sadd.s32 1, %s12
  $region7: #{unet_expanding_block_forward.8} parent=0 // loop_footer_branch
    %11 = sbr.rel target = $region3
  $region8: #{unet_expanding_block_forward.8} parent=0 // loop_exit
    _

// kernel: unet_expanding_block_forward.7
$region0: #{unet_expanding_block_forward.7}
  #allocation0 [shape = 'u32[]', space=smem, size = 0x4, offset = 0x4, fixed_abs, tag = 'smem constant byte address 0x4 - core index']
  #allocation1 [shape = 'u32[144,128]{1,0:T(1,128)}', space=vmem, size = 0x12000, scoped, tag = 'internal scratch']
  %s0 = inlined_call_operand.vmem [shape: bf16[2,10,10,128], index: 0, kind: input, shape index: {}]
  %s1 = inlined_call_operand.vmem [shape: bf16[2,14,14,128], index: 1, kind: input, shape index: {}]
  %s2 = inlined_call_operand.vmem [shape: f32[1,1,128], index: 2, kind: input, shape index: {}]
  %s3 = inlined_call_operand.vmem [shape: f32[1,1,128], index: 3, kind: input, shape index: {}]
  %s4 = inlined_call_operand.vmem [shape: bf16[2304,128], index: 4, kind: input, shape index: {}]
  %s5 = inlined_call_operand.vmem [shape: bf16[2,64,128], index: 5, kind: output, shape index: {0}]
  %s6 = inlined_call_operand.vmem [shape: f32[2,2,128], index: 6, kind: output, shape index: {1}]
  %7 = xla_tuple %s5, %s6
  %s8 = sld [smem:[#allocation0]]
  $region61: #{unet_expanding_block_forward.7} parent=0
    _
  %s10 = ssub.s32 1, %s8
  %s11 = scalar_select 0, %s10, %s8
  loop: start=0, step=1, limit=4
  $region2: #{unet_expanding_block_forward.7} parent=0 // loop_pre_header
    _
  $region3: #{unet_expanding_block_forward.7} parent=0 // loop_header
    %s13 = sphi 0, %s17
    %p14 = scmp.ge.s32.totalorder %s13, 4
    %s23 = sphi 0, %s25
    %s26 = sphi 0, %s23
    %s27 = sphi 0, %s26
    %s43 = sphi 0, %s27
    %s49 = sphi 0, %s51
    %s52 = sphi 0, %s49
    %s53 = sphi 0, %s52
    %s69 = sphi 0, %s53
    %s73 = sphi 0, %s73
    %s75 = sphi 0, %s73
    %s76 = sphi 0, %s75
    %s90 = sphi 0, %s76
    %s94 = sphi 0, %s94
    %s96 = sphi 0, %s94
    %s97 = sphi 0, %s96
    %s111 = sphi 0, %s97
    %s115 = sphi 0, %s115
    %s117 = sphi 0, %s115
    %s118 = sphi 0, %s117
    %s132 = sphi 0, %s118
    %s138 = sphi 0, %s140
    %s141 = sphi 0, %s138
    %s142 = sphi 0, %s141
    %s158 = sphi 0, %s142
    %s164 = sphi 0, %s166
    %s167 = sphi 0, %s164
    %s168 = sphi 0, %s167
    %s184 = sphi 0, %s168
  $region4: #{unet_expanding_block_forward.7} parent=0 // loop_header_branch
    %16 = sbr.rel (%p14) target = $region8
  $region5: #{unet_expanding_block_forward.7} parent=0 // loop_body
    %s18 = ssub.s32 %s13, 1
    %s19 = ssub.s32 %s13, 2
    %s20 = sadd.s32 %s13, 1
    %s21 = ssub.s32 %s13, %s20
    %p22 = scmp.eq.s32.totalorder %s21, 0
    %s24 = sadd.s32 %s23, 1
    %s25 = scalar_select %p22, %s23, %s24
    %p28 = pneg %p22
    %p29 = scmp.eq.s32.totalorder %s13, 1
    %p30 = por %p28, %p29
    %p31 = scmp.ne.s32.totalorder %s23, %s26
    %p32 = scmp.eq.s32.totalorder %s13, 0
    %p33 = por %p31, %p32
    %p34 = scmp.ne.s32.totalorder %s23, %s26
    %p35 = scmp.eq.s32.totalorder %s18, 1
    %p36 = por %p34, %p35
    %p37 = scmp.ne.s32.totalorder %s26, %s27
    %p38 = scmp.eq.s32.totalorder %s18, 0
    %p39 = por %p37, %p38
    %p40 = scmp.ne.s32.totalorder %s26, %s27
    %p41 = scmp.eq.s32.totalorder %s19, 1
    %p42 = por %p40, %p41
    %p44 = scmp.ne.s32.totalorder %s27, %s43
    %p45 = scmp.eq.s32.totalorder %s19, 0
    %p46 = por %p44, %p45
    %s47 = ssub.s32 %s13, %s20
    %p48 = scmp.eq.s32.totalorder %s47, 0
    %s50 = sadd.s32 %s49, 1
    %s51 = scalar_select %p48, %s49, %s50
    %p54 = pneg %p48
    %p55 = scmp.eq.s32.totalorder %s13, 1
    %p56 = por %p54, %p55
    %p57 = scmp.ne.s32.totalorder %s49, %s52
    %p58 = scmp.eq.s32.totalorder %s13, 0
    %p59 = por %p57, %p58
    %p60 = scmp.ne.s32.totalorder %s49, %s52
    %p61 = scmp.eq.s32.totalorder %s18, 1
    %p62 = por %p60, %p61
    %p63 = scmp.ne.s32.totalorder %s52, %s53
    %p64 = scmp.eq.s32.totalorder %s18, 0
    %p65 = por %p63, %p64
    %p66 = scmp.ne.s32.totalorder %s52, %s53
    %p67 = scmp.eq.s32.totalorder %s19, 1
    %p68 = por %p66, %p67
    %p70 = scmp.ne.s32.totalorder %s53, %s69
    %p71 = scmp.eq.s32.totalorder %s19, 0
    %p72 = por %p70, %p71
    %s74 = sadd.s32 %s73, 1
    %p77 = scmp.eq.s32.totalorder %s13, 1
    %p78 = scmp.ne.s32.totalorder %s73, %s75
    %p79 = scmp.eq.s32.totalorder %s13, 0
    %p80 = por %p78, %p79
    %p81 = scmp.ne.s32.totalorder %s73, %s75
    %p82 = scmp.eq.s32.totalorder %s18, 1
    %p83 = por %p81, %p82
    %p84 = scmp.ne.s32.totalorder %s75, %s76
    %p85 = scmp.eq.s32.totalorder %s18, 0
    %p86 = por %p84, %p85
    %p87 = scmp.ne.s32.totalorder %s75, %s76
    %p88 = scmp.eq.s32.totalorder %s19, 1
    %p89 = por %p87, %p88
    %p91 = scmp.ne.s32.totalorder %s76, %s90
    %p92 = scmp.eq.s32.totalorder %s19, 0
    %p93 = por %p91, %p92
    %s95 = sadd.s32 %s94, 1
    %p98 = scmp.eq.s32.totalorder %s13, 1
    %p99 = scmp.ne.s32.totalorder %s94, %s96
    %p100 = scmp.eq.s32.totalorder %s13, 0
    %p101 = por %p99, %p100
    %p102 = scmp.ne.s32.totalorder %s94, %s96
    %p103 = scmp.eq.s32.totalorder %s18, 1
    %p104 = por %p102, %p103
    %p105 = scmp.ne.s32.totalorder %s96, %s97
    %p106 = scmp.eq.s32.totalorder %s18, 0
    %p107 = por %p105, %p106
    %p108 = scmp.ne.s32.totalorder %s96, %s97
    %p109 = scmp.eq.s32.totalorder %s19, 1
    %p110 = por %p108, %p109
    %p112 = scmp.ne.s32.totalorder %s97, %s111
    %p113 = scmp.eq.s32.totalorder %s19, 0
    %p114 = por %p112, %p113
    %s116 = sadd.s32 %s115, 1
    %p119 = scmp.eq.s32.totalorder %s13, 1
    %p120 = scmp.ne.s32.totalorder %s115, %s117
    %p121 = scmp.eq.s32.totalorder %s13, 0
    %p122 = por %p120, %p121
    %p123 = scmp.ne.s32.totalorder %s115, %s117
    %p124 = scmp.eq.s32.totalorder %s18, 1
    %p125 = por %p123, %p124
    %p126 = scmp.ne.s32.totalorder %s117, %s118
    %p127 = scmp.eq.s32.totalorder %s18, 0
    %p128 = por %p126, %p127
    %p129 = scmp.ne.s32.totalorder %s117, %s118
    %p130 = scmp.eq.s32.totalorder %s19, 1
    %p131 = por %p129, %p130
    %p133 = scmp.ne.s32.totalorder %s118, %s132
    %p134 = scmp.eq.s32.totalorder %s19, 0
    %p135 = por %p133, %p134
    %s136 = ssub.s32 %s13, %s20
    %p137 = scmp.eq.s32.totalorder %s136, 0
    %s139 = sadd.s32 %s138, 1
    %s140 = scalar_select %p137, %s138, %s139
    %p143 = pneg %p137
    %p144 = scmp.eq.s32.totalorder %s13, 1
    %p145 = por %p143, %p144
    %p146 = scmp.ne.s32.totalorder %s138, %s141
    %p147 = scmp.eq.s32.totalorder %s13, 0
    %p148 = por %p146, %p147
    %p149 = scmp.ne.s32.totalorder %s138, %s141
    %p150 = scmp.eq.s32.totalorder %s18, 1
    %p151 = por %p149, %p150
    %p152 = scmp.ne.s32.totalorder %s141, %s142
    %p153 = scmp.eq.s32.totalorder %s18, 0
    %p154 = por %p152, %p153
    %p155 = scmp.ne.s32.totalorder %s141, %s142
    %p156 = scmp.eq.s32.totalorder %s19, 1
    %p157 = por %p155, %p156
    %p159 = scmp.ne.s32.totalorder %s142, %s158
    %p160 = scmp.eq.s32.totalorder %s19, 0
    %p161 = por %p159, %p160
    %s162 = ssub.s32 %s13, %s20
    %p163 = scmp.eq.s32.totalorder %s162, 0
    %s165 = sadd.s32 %s164, 1
    %s166 = scalar_select %p163, %s164, %s165
    %p169 = pneg %p163
    %p170 = scmp.eq.s32.totalorder %s13, 1
    %p171 = por %p169, %p170
    %p172 = scmp.ne.s32.totalorder %s164, %s167
    %p173 = scmp.eq.s32.totalorder %s13, 0
    %p174 = por %p172, %p173
    %p175 = scmp.ne.s32.totalorder %s164, %s167
    %p176 = scmp.eq.s32.totalorder %s18, 1
    %p177 = por %p175, %p176
    %p178 = scmp.ne.s32.totalorder %s167, %s168
    %p179 = scmp.eq.s32.totalorder %s18, 0
    %p180 = por %p178, %p179
    %p181 = scmp.ne.s32.totalorder %s167, %s168
    %p182 = scmp.eq.s32.totalorder %s19, 1
    %p183 = por %p181, %p182
    %p185 = scmp.ne.s32.totalorder %s168, %s184
    %p186 = scmp.eq.s32.totalorder %s19, 0
    %p187 = por %p185, %p186
    %p188 = scmp.le.s32.totalorder 1, %s13
    %p189 = scmp.lt.s32.totalorder %s13, 3
    %p190 = pnand %p188, %p189
    %p191 = pneg %p190
    // Predicated region
    $region9: #{unet_expanding_block_forward.7} parent=5 // pred_check
      _
    $region10: #{unet_expanding_block_forward.7} parent=5 // pred_check_branch
      %193 = sbr.rel (%p190) target = $region12
    $region11: #{unet_expanding_block_forward.7} parent=5 // pred_region
      %s194 = ssub.s32 %s13, 1
      // Predicated region
      $region13: #{unet_expanding_block_forward.7} parent=11 // pred_check
        %p195 = pneg %p86
      $region14: #{unet_expanding_block_forward.7} parent=11 // pred_check_branch
        %197 = sbr.rel (%p195) target = $region16
      $region15: #{unet_expanding_block_forward.7} parent=11 // pred_region
        _
      $region16: #{unet_expanding_block_forward.7} parent=11 // pred_fallthru
        _
      // Predicated region
      $region17: #{unet_expanding_block_forward.7} parent=11 // pred_check
        %p198 = pneg %p107
      $region18: #{unet_expanding_block_forward.7} parent=11 // pred_check_branch
        %200 = sbr.rel (%p198) target = $region20
      $region19: #{unet_expanding_block_forward.7} parent=11 // pred_region
        _
      $region20: #{unet_expanding_block_forward.7} parent=11 // pred_fallthru
        _
      // Predicated region
      $region21: #{unet_expanding_block_forward.7} parent=11 // pred_check
        %p201 = pneg %p128
      $region22: #{unet_expanding_block_forward.7} parent=11 // pred_check_branch
        %203 = sbr.rel (%p201) target = $region24
      $region23: #{unet_expanding_block_forward.7} parent=11 // pred_region
        _
      $region24: #{unet_expanding_block_forward.7} parent=11 // pred_fallthru
        _
    $region12: #{unet_expanding_block_forward.7} parent=5 // pred_fallthru
      _
    %p204 = scmp.lt.s32.totalorder %s13, 2
    // Predicated region
    $region25: #{unet_expanding_block_forward.7} parent=5 // pred_check
      %p205 = pneg %p204
    $region26: #{unet_expanding_block_forward.7} parent=5 // pred_check_branch
      %207 = sbr.rel (%p205) target = $region28
    $region27: #{unet_expanding_block_forward.7} parent=5 // pred_region
      // Predicated region
      $region29: #{unet_expanding_block_forward.7} parent=27 // pred_check
        %p208 = pneg %p33
      $region30: #{unet_expanding_block_forward.7} parent=27 // pred_check_branch
        %210 = sbr.rel (%p208) target = $region32
      $region31: #{unet_expanding_block_forward.7} parent=27 // pred_region
        %p211 = scmp.lt.s32.totalorder %s13, 1
        %s212 = scalar_select %p211, %s13, 1
        %s213 = smul.addr %s212, 20
        %s214 = smul.addr %s213, 4
        %s215 = scalar_lea.vmem %s0, %s214
      $region32: #{unet_expanding_block_forward.7} parent=27 // pred_fallthru
        _
      // Predicated region
      $region33: #{unet_expanding_block_forward.7} parent=27 // pred_check
        %p216 = pneg %p59
      $region34: #{unet_expanding_block_forward.7} parent=27 // pred_check_branch
        %218 = sbr.rel (%p216) target = $region36
      $region35: #{unet_expanding_block_forward.7} parent=27 // pred_region
        %p219 = scmp.lt.s32.totalorder %s13, 1
        %s220 = scalar_select %p219, %s13, 1
        %s221 = smul.addr %s220, 28
        %s222 = smul.addr %s221, 4
        %s223 = scalar_lea.vmem %s1, %s222
      $region36: #{unet_expanding_block_forward.7} parent=27 // pred_fallthru
        _
    $region28: #{unet_expanding_block_forward.7} parent=5 // pred_fallthru
      _
    %p224 = scmp.le.s32.totalorder 1, %s13
    %p225 = scmp.lt.s32.totalorder %s13, 3
    %p226 = pnand %p224, %p225
    %p227 = pneg %p226
    // Predicated region
    $region37: #{unet_expanding_block_forward.7} parent=5 // pred_check
      _
    $region38: #{unet_expanding_block_forward.7} parent=5 // pred_check_branch
      %229 = sbr.rel (%p226) target = $region40
    $region39: #{unet_expanding_block_forward.7} parent=5 // pred_region
      %s230 = ssub.s32 %s13, 1
      %p231 = scmp.lt.s32.totalorder %s18, 1
      %s232 = scalar_select %p231, %s18, 1
      %s233 = smul.addr %s232, 20
      %s234 = smul.addr %s233, 4
      %s235 = scalar_lea.vmem %s0, %s234
      %p236 = pneg %p39
      %p237 = pneg %p36
      %p238 = scmp.lt.s32.totalorder %s18, 1
      %s239 = scalar_select %p238, %s18, 1
      %s240 = smul.addr %s239, 28
      %s241 = smul.addr %s240, 4
      %s242 = scalar_lea.vmem %s1, %s241
      %p243 = pneg %p65
      %p244 = pneg %p62
      %p245 = pneg %p86
      %p246 = pneg %p83
      %p247 = pneg %p107
      %p248 = pneg %p104
      %p249 = pneg %p128
      %p250 = pneg %p125
      %p251 = pneg %p154
      %p252 = pneg %p151
      %p253 = scmp.lt.s32.totalorder %s18, 1
      %s254 = scalar_select %p253, %s18, 1
      %s255 = smul.addr %s254, 8
      %s256 = smul.addr %s255, 4
      %s257 = scalar_lea.vmem %s5, %s256
      %p258 = pneg %p180
      %p259 = pneg %p177
      %p260 = scmp.lt.s32.totalorder %s18, 1
      %s261 = scalar_select %p260, %s18, 1
      %s262 = smul.addr %s261, 2
      %s263 = scalar_lea.vmem %s6, %s262
      %p264 = scmp.lt.s32.totalorder %s18, 1
      %s265 = scalar_select %p264, %s18, 1
      %s266 = smul.addr %s265, 20
      %s267 = smul.addr %s266, 4
      %s268 = scalar_lea.vmem %s0, %s267
      %p269 = scmp.lt.s32.totalorder %s18, 1
      %s270 = scalar_select %p269, %s18, 1
      %s271 = smul.addr %s270, 28
      %s272 = smul.addr %s271, 4
      %s273 = scalar_lea.vmem %s1, %s272
      %p274 = scmp.lt.s32.totalorder %s18, 1
      %s275 = scalar_select %p274, %s18, 1
      %s276 = smul.addr %s275, 8
      %s277 = smul.addr %s276, 4
      %s278 = scalar_lea.vmem %s5, %s277
      %p279 = scmp.lt.s32.totalorder %s18, 1
      %s280 = scalar_select %p279, %s18, 1
      %s281 = smul.addr %s280, 2
      %s282 = scalar_lea.vmem %s6, %s281
      %v284 = vld [vmem:[%s268] sm:$0xf]
      %v285 = vld [vmem:[%s268 + $0x4] sm:$0x1]
      %v286 = vld [vmem:[%s268 + $0x8] sm:$0xf]
      %v287 = vld [vmem:[%s268 + $0xc] sm:$0x1]
      %v288 = vld [vmem:[%s268 + $0x10] sm:$0xf]
      %v289 = vld [vmem:[%s268 + $0x14] sm:$0x1]
      %v290 = vld [vmem:[%s268 + $0x18] sm:$0xf]
      %v291 = vld [vmem:[%s268 + $0x1c] sm:$0x1]
      %v292 = vld [vmem:[%s268 + $0x20] sm:$0xf]
      %v293 = vld [vmem:[%s268 + $0x24] sm:$0x1]
      %v294 = vld [vmem:[%s268 + $0x28] sm:$0xf]
      %v295 = vld [vmem:[%s268 + $0x2c] sm:$0x1]
      %v296 = vld [vmem:[%s268 + $0x30] sm:$0xf]
      %v297 = vld [vmem:[%s268 + $0x34] sm:$0x1]
      %v298 = vld [vmem:[%s268 + $0x38] sm:$0xf]
      %v299 = vld [vmem:[%s268 + $0x3c] sm:$0x1]
      %v300 = vld [vmem:[%s268 + $0x40] sm:$0xf]
      %v301 = vld [vmem:[%s268 + $0x44] sm:$0x1]
      %v302 = vld [vmem:[%s268 + $0x48] sm:$0xf]
      %v303 = vld [vmem:[%s268 + $0x4c] sm:$0x1]
      %v304 = vld [vmem:[%s273 + $0x10] sm:$0xf]
      %v305 = vld [vmem:[%s273 + $0x14] sm:$0x7]
      %v306 = vld [vmem:[%s273 + $0x18] sm:$0xf]
      %v307 = vld [vmem:[%s273 + $0x1c] sm:$0x7]
      %v308 = vld [vmem:[%s273 + $0x20] sm:$0xf]
      %v309 = vld [vmem:[%s273 + $0x24] sm:$0x7]
      %v310 = vld [vmem:[%s273 + $0x28] sm:$0xf]
      %v311 = vld [vmem:[%s273 + $0x2c] sm:$0x7]
      %v312 = vld [vmem:[%s273 + $0x30] sm:$0xf]
      %v313 = vld [vmem:[%s273 + $0x34] sm:$0x7]
      %v314 = vld [vmem:[%s273 + $0x38] sm:$0xf]
      %v315 = vld [vmem:[%s273 + $0x3c] sm:$0x7]
      %v316 = vld [vmem:[%s273 + $0x40] sm:$0xf]
      %v317 = vld [vmem:[%s273 + $0x44] sm:$0x7]
      %v318 = vld [vmem:[%s273 + $0x48] sm:$0xf]
      %v319 = vld [vmem:[%s273 + $0x4c] sm:$0x7]
      %v320 = vld [vmem:[%s273 + $0x50] sm:$0xf]
      %v321 = vld [vmem:[%s273 + $0x54] sm:$0x7]
      %v322 = vld [vmem:[%s273 + $0x58] sm:$0xf]
      %v323 = vld [vmem:[%s273 + $0x5c] sm:$0x7]
      %v324 = vld [vmem:[%s2] sm:$0x1]
      %v325 = vld [vmem:[%s3] sm:$0x1]
      %v326 = vunpack.c.l.bf16 %v284
      %v327 = vunpack.c.l.bf16 %v285
      %v328 = vunpack.c.l.bf16 %v286
      %v329 = vunpack.c.l.bf16 %v287
      %v330 = vunpack.c.l.bf16 %v288
      %v331 = vunpack.c.l.bf16 %v289
      %v332 = vunpack.c.l.bf16 %v290
      %v333 = vunpack.c.l.bf16 %v291
      %v334 = vunpack.c.l.bf16 %v292
      %v335 = vunpack.c.l.bf16 %v293
      %v336 = vunpack.c.l.bf16 %v294
      %v337 = vunpack.c.l.bf16 %v295
      %v338 = vunpack.c.l.bf16 %v296
      %v339 = vunpack.c.l.bf16 %v297
      %v340 = vunpack.c.l.bf16 %v298
      %v341 = vunpack.c.l.bf16 %v299
      %v342 = vunpack.c.l.bf16 %v300
      %v343 = vunpack.c.l.bf16 %v301
      %v344 = vunpack.c.l.bf16 %v302
      %v345 = vunpack.c.l.bf16 %v303
      %v347 = vlaneseq
      %v348 = vshrl.u32 %v347, 7
      %v349 = vsub.s32 0, %v348
      %v350 = vrot.slane %v324, %v349
      %v352 = vmul.f32 %v326, %v350
      %v353 = vmul.f32 %v327, %v350
      %v354 = vmul.f32 %v328, %v350
      %v355 = vmul.f32 %v329, %v350
      %v356 = vmul.f32 %v330, %v350
      %v357 = vmul.f32 %v331, %v350
      %v358 = vmul.f32 %v332, %v350
      %v359 = vmul.f32 %v333, %v350
      %v360 = vmul.f32 %v334, %v350
      %v361 = vmul.f32 %v335, %v350
      %v362 = vmul.f32 %v336, %v350
      %v363 = vmul.f32 %v337, %v350
      %v364 = vmul.f32 %v338, %v350
      %v365 = vmul.f32 %v339, %v350
      %v366 = vmul.f32 %v340, %v350
      %v367 = vmul.f32 %v341, %v350
      %v368 = vmul.f32 %v342, %v350
      %v369 = vmul.f32 %v343, %v350
      %v370 = vmul.f32 %v344, %v350
      %v371 = vmul.f32 %v345, %v350
      %v373 = vlaneseq
      %v374 = vshrl.u32 %v373, 7
      %v375 = vsub.s32 0, %v374
      %v376 = vrot.slane %v325, %v375
      %v378 = vadd.f32 %v352, %v376
      %v379 = vadd.f32 %v353, %v376
      %v380 = vadd.f32 %v354, %v376
      %v381 = vadd.f32 %v355, %v376
      %v382 = vadd.f32 %v356, %v376
      %v383 = vadd.f32 %v357, %v376
      %v384 = vadd.f32 %v358, %v376
      %v385 = vadd.f32 %v359, %v376
      %v386 = vadd.f32 %v360, %v376
      %v387 = vadd.f32 %v361, %v376
      %v388 = vadd.f32 %v362, %v376
      %v389 = vadd.f32 %v363, %v376
      %v390 = vadd.f32 %v364, %v376
      %v391 = vadd.f32 %v365, %v376
      %v392 = vadd.f32 %v366, %v376
      %v393 = vadd.f32 %v367, %v376
      %v394 = vadd.f32 %v368, %v376
      %v395 = vadd.f32 %v369, %v376
      %v396 = vadd.f32 %v370, %v376
      %v397 = vadd.f32 %v371, %v376
      %v398 = vmax.f32 %v378, 0.0
      %v399 = vmax.f32 %v379, 0.0
      %v400 = vmax.f32 %v380, 0.0
      %v401 = vmax.f32 %v381, 0.0
      %v402 = vmax.f32 %v382, 0.0
      %v403 = vmax.f32 %v383, 0.0
      %v404 = vmax.f32 %v384, 0.0
      %v405 = vmax.f32 %v385, 0.0
      %v406 = vmax.f32 %v386, 0.0
      %v407 = vmax.f32 %v387, 0.0
      %v408 = vmax.f32 %v388, 0.0
      %v409 = vmax.f32 %v389, 0.0
      %v410 = vmax.f32 %v390, 0.0
      %v411 = vmax.f32 %v391, 0.0
      %v412 = vmax.f32 %v392, 0.0
      %v413 = vmax.f32 %v393, 0.0
      %v414 = vmax.f32 %v394, 0.0
      %v415 = vmax.f32 %v395, 0.0
      %v416 = vmax.f32 %v396, 0.0
      %v417 = vmax.f32 %v397, 0.0
      %v418 = vpack.c.bf16 %v399, %v398
      %v419 = vpack.c.bf16 %v401, %v400
      %v420 = vpack.c.bf16 %v403, %v402
      %v421 = vpack.c.bf16 %v405, %v404
      %v422 = vpack.c.bf16 %v407, %v406
      %v423 = vpack.c.bf16 %v409, %v408
      %v424 = vpack.c.bf16 %v411, %v410
      %v425 = vpack.c.bf16 %v413, %v412
      %v426 = vpack.c.bf16 %v415, %v414
      %v427 = vpack.c.bf16 %v417, %v416
      %v429 = vshrl.u32 %v418, 16
      %v431 = vshll.u32 %v418, 16
      %v433 = vrot.slane %v431, 1
      %v434 = vor.u32 %v429, %v433
      %v436 = vshrl.u32 %v419, 16
      %v438 = vshll.u32 %v419, 16
      %v440 = vrot.slane %v438, 1
      %v441 = vor.u32 %v436, %v440
      %v443 = vshrl.u32 %v420, 16
      %v445 = vshll.u32 %v420, 16
      %v447 = vrot.slane %v445, 1
      %v448 = vor.u32 %v443, %v447
      %v450 = vshrl.u32 %v421, 16
      %v452 = vshll.u32 %v421, 16
      %v454 = vrot.slane %v452, 1
      %v455 = vor.u32 %v450, %v454
      %v457 = vshrl.u32 %v422, 16
      %v459 = vshll.u32 %v422, 16
      %v461 = vrot.slane %v459, 1
      %v462 = vor.u32 %v457, %v461
      %v464 = vshrl.u32 %v423, 16
      %v466 = vshll.u32 %v423, 16
      %v468 = vrot.slane %v466, 1
      %v469 = vor.u32 %v464, %v468
      %v471 = vshrl.u32 %v424, 16
      %v473 = vshll.u32 %v424, 16
      %v475 = vrot.slane %v473, 1
      %v476 = vor.u32 %v471, %v475
      %v478 = vshrl.u32 %v425, 16
      %v480 = vshll.u32 %v425, 16
      %v482 = vrot.slane %v480, 1
      %v483 = vor.u32 %v478, %v482
      %v492 = vrot.slane %v418, 1
      %v493 = vrot.slane %v419, 1
      %v494 = vrot.slane %v420, 1
      %v495 = vrot.slane %v421, 1
      %v496 = vrot.slane %v422, 1
      %v497 = vrot.slane %v423, 1
      %v498 = vrot.slane %v424, 1
      %v499 = vrot.slane %v425, 1
      %v501 = vshrl.u32 %v426, 16
      %v503 = vshll.u32 %v426, 16
      %v505 = vrot.slane %v503, 1
      %v506 = vor.u32 %v501, %v505
      %v508 = vrot.slane %v426, 1
      %v510 = vshrl.u32 %v427, 16
      %v512 = vshll.u32 %v427, 16
      %v514 = vrot.slane %v512, 1
      %v515 = vor.u32 %v510, %v514
      %v517 = vrot.slane %v427, 1
      %v534 = vunpack.c.l.b16 %v304
      %v535 = vunpack.c.l.b16 %v305
      %v536 = vunpack.c.l.b16 %v306
      %v537 = vunpack.c.l.b16 %v307
      %v538 = vunpack.c.l.b16 %v308
      %v539 = vunpack.c.l.b16 %v309
      %v540 = vunpack.c.l.b16 %v310
      %v541 = vunpack.c.l.b16 %v311
      %v542 = vunpack.c.l.b16 %v312
      %v543 = vunpack.c.l.b16 %v313
      %v544 = vunpack.c.l.b16 %v314
      %v545 = vunpack.c.l.b16 %v315
      %v546 = vunpack.c.l.b16 %v316
      %v547 = vunpack.c.l.b16 %v317
      %v548 = vunpack.c.l.b16 %v318
      %v549 = vunpack.c.l.b16 %v319
      %v550 = vpack.c.b16 %v535, %v534
      %v551 = vpack.c.b16 %v537, %v536
      %v552 = vpack.c.b16 %v539, %v538
      %v553 = vpack.c.b16 %v541, %v540
      %v554 = vpack.c.b16 %v543, %v542
      %v555 = vpack.c.b16 %v545, %v544
      %v556 = vpack.c.b16 %v547, %v546
      %v557 = vpack.c.b16 %v549, %v548
      %v559 = vshrl.u32 %v550, 16
      %v561 = vshll.u32 %v550, 16
      %v563 = vrot.slane %v561, 1
      %v564 = vor.u32 %v559, %v563
      %v566 = vshrl.u32 %v551, 16
      %v568 = vshll.u32 %v551, 16
      %v570 = vrot.slane %v568, 1
      %v571 = vor.u32 %v566, %v570
      %v573 = vshrl.u32 %v552, 16
      %v575 = vshll.u32 %v552, 16
      %v577 = vrot.slane %v575, 1
      %v578 = vor.u32 %v573, %v577
      %v580 = vshrl.u32 %v553, 16
      %v582 = vshll.u32 %v553, 16
      %v584 = vrot.slane %v582, 1
      %v585 = vor.u32 %v580, %v584
      %v587 = vshrl.u32 %v554, 16
      %v589 = vshll.u32 %v554, 16
      %v591 = vrot.slane %v589, 1
      %v592 = vor.u32 %v587, %v591
      %v594 = vshrl.u32 %v555, 16
      %v596 = vshll.u32 %v555, 16
      %v598 = vrot.slane %v596, 1
      %v599 = vor.u32 %v594, %v598
      %v601 = vshrl.u32 %v556, 16
      %v603 = vshll.u32 %v556, 16
      %v605 = vrot.slane %v603, 1
      %v606 = vor.u32 %v601, %v605
      %v608 = vshrl.u32 %v557, 16
      %v610 = vshll.u32 %v557, 16
      %v612 = vrot.slane %v610, 1
      %v613 = vor.u32 %v608, %v612
      %v614 = vrot.slane %v550, 1
      %v615 = vrot.slane %v551, 1
      %v616 = vrot.slane %v552, 1
      %v617 = vrot.slane %v553, 1
      %v618 = vrot.slane %v554, 1
      %v619 = vrot.slane %v555, 1
      %v620 = vrot.slane %v556, 1
      %v621 = vrot.slane %v557, 1
      %v624 = vunpack.c.l.b16 %v320
      %v625 = vunpack.c.l.b16 %v321
      %v626 = vpack.c.b16 %v625, %v624
      %v628 = vshrl.u32 %v626, 16
      %v630 = vshll.u32 %v626, 16
      %v632 = vrot.slane %v630, 1
      %v633 = vor.u32 %v628, %v632
      %v634 = vrot.slane %v626, 1
      %v637 = vunpack.c.l.b16 %v322
      %v638 = vunpack.c.l.b16 %v323
      %v639 = vpack.c.b16 %v638, %v637
      %v641 = vshrl.u32 %v639, 16
      %v643 = vshll.u32 %v639, 16
      %v645 = vrot.slane %v643, 1
      %v646 = vor.u32 %v641, %v645
      %v647 = vrot.slane %v639, 1
      %v648 = vrot.slane %v564, 1
      %v649 = vrot.slane %v614, 1
      %v650 = vrot.slane %v571, 1
      %v651 = vrot.slane %v615, 1
      %v652 = vrot.slane %v578, 1
      %v653 = vrot.slane %v616, 1
      %v654 = vrot.slane %v585, 1
      %v655 = vrot.slane %v617, 1
      %v656 = vrot.slane %v592, 1
      %v657 = vrot.slane %v618, 1
      %v658 = vrot.slane %v599, 1
      %v659 = vrot.slane %v619, 1
      %v660 = vrot.slane %v606, 1
      %v661 = vrot.slane %v620, 1
      %v662 = vrot.slane %v613, 1
      %v663 = vrot.slane %v621, 1
      %v664 = vrot.slane %v633, 1
      %v665 = vrot.slane %v634, 1
      %v666 = vrot.slane %v646, 1
      %v667 = vrot.slane %v647, 1
      %v668 = vunpack.c.l.b16 %v418
      %v669 = vunpack.c.l.b16 %v434
      %v670 = vunpack.c.l.b16 %v492
      %v671 = vunpack.c.l.b16 %v419
      %v672 = vunpack.c.l.b16 %v441
      %v673 = vunpack.c.l.b16 %v493
      %v674 = vunpack.c.l.b16 %v420
      %v675 = vunpack.c.l.b16 %v448
      %v676 = vunpack.c.l.b16 %v494
      %v677 = vunpack.c.l.b16 %v614
      %v678 = vunpack.c.l.b16 %v648
      %v679 = vunpack.c.l.b16 %v649
      %v680 = vunpack.c.l.b16 %v615
      %v681 = vunpack.c.l.b16 %v650
      %v682 = vunpack.c.l.b16 %v651
      %v683 = vunpack.c.l.b16 %v616
      %v684 = vunpack.c.l.b16 %v652
      %v685 = vunpack.c.l.b16 %v653
      %v686 = vunpack.c.l.b16 %v421
      %v687 = vunpack.c.l.b16 %v455
      %v688 = vunpack.c.l.b16 %v495
      %v689 = vunpack.c.l.b16 %v617
      %v690 = vunpack.c.l.b16 %v654
      %v691 = vunpack.c.l.b16 %v655
      %v692 = vunpack.c.l.b16 %v422
      %v693 = vunpack.c.l.b16 %v462
      %v694 = vunpack.c.l.b16 %v496
      %v695 = vunpack.c.l.b16 %v618
      %v696 = vunpack.c.l.b16 %v656
      %v697 = vunpack.c.l.b16 %v657
      %v698 = vunpack.c.l.b16 %v423
      %v699 = vunpack.c.l.b16 %v469
      %v700 = vunpack.c.l.b16 %v497
      %v701 = vunpack.c.l.b16 %v619
      %v702 = vunpack.c.l.b16 %v658
      %v703 = vunpack.c.l.b16 %v659
      %v704 = vunpack.c.l.b16 %v424
      %v705 = vunpack.c.l.b16 %v476
      %v706 = vunpack.c.l.b16 %v498
      %v707 = vunpack.c.l.b16 %v620
      %v708 = vunpack.c.l.b16 %v660
      %v709 = vunpack.c.l.b16 %v661
      %v710 = vunpack.c.l.b16 %v425
      %v711 = vunpack.c.l.b16 %v483
      %v712 = vunpack.c.l.b16 %v499
      %v713 = vunpack.c.l.b16 %v621
      %v714 = vunpack.c.l.b16 %v662
      %v715 = vunpack.c.l.b16 %v663
      %v716 = vunpack.c.l.b16 %v426
      %v717 = vunpack.c.l.b16 %v506
      %v718 = vunpack.c.l.b16 %v508
      %v719 = vunpack.c.l.b16 %v634
      %v720 = vunpack.c.l.b16 %v664
      %v721 = vunpack.c.l.b16 %v665
      %v722 = vunpack.c.l.b16 %v427
      %v723 = vunpack.c.l.b16 %v515
      %v724 = vunpack.c.l.b16 %v517
      %v725 = vunpack.c.l.b16 %v647
      %v726 = vunpack.c.l.b16 %v666
      %v727 = vunpack.c.l.b16 %v667
      %v728 = vld [vmem:[%s4] sm:$0xf]
      %v729 = vld [vmem:[%s4 + $0x4] sm:$0xf]
      %v730 = vld [vmem:[%s4 + $0x8] sm:$0xf]
      %v731 = vld [vmem:[%s4 + $0xc] sm:$0xf]
      %v732 = vld [vmem:[%s4 + $0x10] sm:$0xf]
      %v733 = vld [vmem:[%s4 + $0x14] sm:$0xf]
      %v734 = vld [vmem:[%s4 + $0x18] sm:$0xf]
      %v735 = vld [vmem:[%s4 + $0x1c] sm:$0xf]
      %v736 = vld [vmem:[%s4 + $0x20] sm:$0xf]
      %v737 = vld [vmem:[%s4 + $0x24] sm:$0xf]
      %v738 = vld [vmem:[%s4 + $0x28] sm:$0xf]
      %v739 = vld [vmem:[%s4 + $0x2c] sm:$0xf]
      %v740 = vld [vmem:[%s4 + $0x30] sm:$0xf]
      %v741 = vld [vmem:[%s4 + $0x34] sm:$0xf]
      %v742 = vld [vmem:[%s4 + $0x38] sm:$0xf]
      %v743 = vld [vmem:[%s4 + $0x3c] sm:$0xf]
      %v744 = vld [vmem:[%s4 + $0x40] sm:$0xf]
      %v745 = vld [vmem:[%s4 + $0x44] sm:$0xf]
      %v746 = vld [vmem:[%s4 + $0x48] sm:$0xf]
      %v747 = vld [vmem:[%s4 + $0x4c] sm:$0xf]
      %v748 = vld [vmem:[%s4 + $0x50] sm:$0xf]
      %v749 = vld [vmem:[%s4 + $0x54] sm:$0xf]
      %v750 = vld [vmem:[%s4 + $0x58] sm:$0xf]
      %v751 = vld [vmem:[%s4 + $0x5c] sm:$0xf]
      %v752 = vld [vmem:[%s4 + $0x60] sm:$0xf]
      %v753 = vld [vmem:[%s4 + $0x64] sm:$0xf]
      %v754 = vld [vmem:[%s4 + $0x68] sm:$0xf]
      %v755 = vld [vmem:[%s4 + $0x6c] sm:$0xf]
      %v756 = vld [vmem:[%s4 + $0x70] sm:$0xf]
      %v757 = vld [vmem:[%s4 + $0x74] sm:$0xf]
      %v758 = vld [vmem:[%s4 + $0x78] sm:$0xf]
      %v759 = vld [vmem:[%s4 + $0x7c] sm:$0xf]
      %v760 = vld [vmem:[%s4 + $0x80] sm:$0xf]
      %v761 = vld [vmem:[%s4 + $0x84] sm:$0xf]
      %v762 = vld [vmem:[%s4 + $0x88] sm:$0xf]
      %v763 = vld [vmem:[%s4 + $0x8c] sm:$0xf]
      %v764 = vld [vmem:[%s4 + $0x90] sm:$0xf]
      %v765 = vld [vmem:[%s4 + $0x94] sm:$0xf]
      %v766 = vld [vmem:[%s4 + $0x98] sm:$0xf]
      %v767 = vld [vmem:[%s4 + $0x9c] sm:$0xf]
      %v768 = vld [vmem:[%s4 + $0xa0] sm:$0xf]
      %v769 = vld [vmem:[%s4 + $0xa4] sm:$0xf]
      %v770 = vld [vmem:[%s4 + $0xa8] sm:$0xf]
      %v771 = vld [vmem:[%s4 + $0xac] sm:$0xf]
      %v772 = vld [vmem:[%s4 + $0xb0] sm:$0xf]
      %v773 = vld [vmem:[%s4 + $0xb4] sm:$0xf]
      %v774 = vld [vmem:[%s4 + $0xb8] sm:$0xf]
      %v775 = vld [vmem:[%s4 + $0xbc] sm:$0xf]
      %v776 = vld [vmem:[%s4 + $0xc0] sm:$0xf]
      %v777 = vld [vmem:[%s4 + $0xc4] sm:$0xf]
      %v778 = vld [vmem:[%s4 + $0xc8] sm:$0xf]
      %v779 = vld [vmem:[%s4 + $0xcc] sm:$0xf]
      %v780 = vld [vmem:[%s4 + $0xd0] sm:$0xf]
      %v781 = vld [vmem:[%s4 + $0xd4] sm:$0xf]
      %v782 = vld [vmem:[%s4 + $0xd8] sm:$0xf]
      %v783 = vld [vmem:[%s4 + $0xdc] sm:$0xf]
      %v784 = vld [vmem:[%s4 + $0xe0] sm:$0xf]
      %v785 = vld [vmem:[%s4 + $0xe4] sm:$0xf]
      %v786 = vld [vmem:[%s4 + $0xe8] sm:$0xf]
      %v787 = vld [vmem:[%s4 + $0xec] sm:$0xf]
      %v788 = vld [vmem:[%s4 + $0xf0] sm:$0xf]
      %v789 = vld [vmem:[%s4 + $0xf4] sm:$0xf]
      %v790 = vld [vmem:[%s4 + $0xf8] sm:$0xf]
      %v791 = vld [vmem:[%s4 + $0xfc] sm:$0xf]
      %v792 = vld [vmem:[%s4 + $0x100] sm:$0xf]
      %v793 = vld [vmem:[%s4 + $0x104] sm:$0xf]
      %v794 = vld [vmem:[%s4 + $0x108] sm:$0xf]
      %v795 = vld [vmem:[%s4 + $0x10c] sm:$0xf]
      %v796 = vld [vmem:[%s4 + $0x110] sm:$0xf]
      %v797 = vld [vmem:[%s4 + $0x114] sm:$0xf]
      %v798 = vld [vmem:[%s4 + $0x118] sm:$0xf]
      %v799 = vld [vmem:[%s4 + $0x11c] sm:$0xf]
      %v800 = vld [vmem:[%s4 + $0x120] sm:$0xf]
      %v801 = vld [vmem:[%s4 + $0x124] sm:$0xf]
      %v802 = vld [vmem:[%s4 + $0x128] sm:$0xf]
      %v803 = vld [vmem:[%s4 + $0x12c] sm:$0xf]
      %v804 = vld [vmem:[%s4 + $0x130] sm:$0xf]
      %v805 = vld [vmem:[%s4 + $0x134] sm:$0xf]
      %v806 = vld [vmem:[%s4 + $0x138] sm:$0xf]
      %v807 = vld [vmem:[%s4 + $0x13c] sm:$0xf]
      %v808 = vld [vmem:[%s4 + $0x140] sm:$0xf]
      %v809 = vld [vmem:[%s4 + $0x144] sm:$0xf]
      %v810 = vld [vmem:[%s4 + $0x148] sm:$0xf]
      %v811 = vld [vmem:[%s4 + $0x14c] sm:$0xf]
      %v812 = vld [vmem:[%s4 + $0x150] sm:$0xf]
      %v813 = vld [vmem:[%s4 + $0x154] sm:$0xf]
      %v814 = vld [vmem:[%s4 + $0x158] sm:$0xf]
      %v815 = vld [vmem:[%s4 + $0x15c] sm:$0xf]
      %v816 = vld [vmem:[%s4 + $0x160] sm:$0xf]
      %v817 = vld [vmem:[%s4 + $0x164] sm:$0xf]
      %v818 = vld [vmem:[%s4 + $0x168] sm:$0xf]
      %v819 = vld [vmem:[%s4 + $0x16c] sm:$0xf]
      %v820 = vld [vmem:[%s4 + $0x170] sm:$0xf]
      %v821 = vld [vmem:[%s4 + $0x174] sm:$0xf]
      %v822 = vld [vmem:[%s4 + $0x178] sm:$0xf]
      %v823 = vld [vmem:[%s4 + $0x17c] sm:$0xf]
      %v824 = vld [vmem:[%s4 + $0x180] sm:$0xf]
      %v825 = vld [vmem:[%s4 + $0x184] sm:$0xf]
      %v826 = vld [vmem:[%s4 + $0x188] sm:$0xf]
      %v827 = vld [vmem:[%s4 + $0x18c] sm:$0xf]
      %v828 = vld [vmem:[%s4 + $0x190] sm:$0xf]
      %v829 = vld [vmem:[%s4 + $0x194] sm:$0xf]
      %v830 = vld [vmem:[%s4 + $0x198] sm:$0xf]
      %v831 = vld [vmem:[%s4 + $0x19c] sm:$0xf]
      %v832 = vld [vmem:[%s4 + $0x1a0] sm:$0xf]
      %v833 = vld [vmem:[%s4 + $0x1a4] sm:$0xf]
      %v834 = vld [vmem:[%s4 + $0x1a8] sm:$0xf]
      %v835 = vld [vmem:[%s4 + $0x1ac] sm:$0xf]
      %v836 = vld [vmem:[%s4 + $0x1b0] sm:$0xf]
      %v837 = vld [vmem:[%s4 + $0x1b4] sm:$0xf]
      %v838 = vld [vmem:[%s4 + $0x1b8] sm:$0xf]
      %v839 = vld [vmem:[%s4 + $0x1bc] sm:$0xf]
      %v840 = vld [vmem:[%s4 + $0x1c0] sm:$0xf]
      %v841 = vld [vmem:[%s4 + $0x1c4] sm:$0xf]
      %v842 = vld [vmem:[%s4 + $0x1c8] sm:$0xf]
      %v843 = vld [vmem:[%s4 + $0x1cc] sm:$0xf]
      %v844 = vld [vmem:[%s4 + $0x1d0] sm:$0xf]
      %v845 = vld [vmem:[%s4 + $0x1d4] sm:$0xf]
      %v846 = vld [vmem:[%s4 + $0x1d8] sm:$0xf]
      %v847 = vld [vmem:[%s4 + $0x1dc] sm:$0xf]
      %v848 = vld [vmem:[%s4 + $0x1e0] sm:$0xf]
      %v849 = vld [vmem:[%s4 + $0x1e4] sm:$0xf]
      %v850 = vld [vmem:[%s4 + $0x1e8] sm:$0xf]
      %v851 = vld [vmem:[%s4 + $0x1ec] sm:$0xf]
      %v852 = vld [vmem:[%s4 + $0x1f0] sm:$0xf]
      %v853 = vld [vmem:[%s4 + $0x1f4] sm:$0xf]
      %v854 = vld [vmem:[%s4 + $0x1f8] sm:$0xf]
      %v855 = vld [vmem:[%s4 + $0x1fc] sm:$0xf]
      %v856 = vld [vmem:[%s4 + $0x200] sm:$0xf]
      %v857 = vld [vmem:[%s4 + $0x204] sm:$0xf]
      %v858 = vld [vmem:[%s4 + $0x208] sm:$0xf]
      %v859 = vld [vmem:[%s4 + $0x20c] sm:$0xf]
      %v860 = vld [vmem:[%s4 + $0x210] sm:$0xf]
      %v861 = vld [vmem:[%s4 + $0x214] sm:$0xf]
      %v862 = vld [vmem:[%s4 + $0x218] sm:$0xf]
      %v863 = vld [vmem:[%s4 + $0x21c] sm:$0xf]
      %v864 = vld [vmem:[%s4 + $0x220] sm:$0xf]
      %v865 = vld [vmem:[%s4 + $0x224] sm:$0xf]
      %v866 = vld [vmem:[%s4 + $0x228] sm:$0xf]
      %v867 = vld [vmem:[%s4 + $0x22c] sm:$0xf]
      %v868 = vld [vmem:[%s4 + $0x230] sm:$0xf]
      %v869 = vld [vmem:[%s4 + $0x234] sm:$0xf]
      %v870 = vld [vmem:[%s4 + $0x238] sm:$0xf]
      %v871 = vld [vmem:[%s4 + $0x23c] sm:$0xf]
      %v872 = vld [vmem:[%s4 + $0x240] sm:$0xf]
      %v873 = vld [vmem:[%s4 + $0x244] sm:$0xf]
      %v874 = vld [vmem:[%s4 + $0x248] sm:$0xf]
      %v875 = vld [vmem:[%s4 + $0x24c] sm:$0xf]
      %v876 = vld [vmem:[%s4 + $0x250] sm:$0xf]
      %v877 = vld [vmem:[%s4 + $0x254] sm:$0xf]
      %v878 = vld [vmem:[%s4 + $0x258] sm:$0xf]
      %v879 = vld [vmem:[%s4 + $0x25c] sm:$0xf]
      %v880 = vld [vmem:[%s4 + $0x260] sm:$0xf]
      %v881 = vld [vmem:[%s4 + $0x264] sm:$0xf]
      %v882 = vld [vmem:[%s4 + $0x268] sm:$0xf]
      %v883 = vld [vmem:[%s4 + $0x26c] sm:$0xf]
      %v884 = vld [vmem:[%s4 + $0x270] sm:$0xf]
      %v885 = vld [vmem:[%s4 + $0x274] sm:$0xf]
      %v886 = vld [vmem:[%s4 + $0x278] sm:$0xf]
      %v887 = vld [vmem:[%s4 + $0x27c] sm:$0xf]
      %v888 = vld [vmem:[%s4 + $0x280] sm:$0xf]
      %v889 = vld [vmem:[%s4 + $0x284] sm:$0xf]
      %v890 = vld [vmem:[%s4 + $0x288] sm:$0xf]
      %v891 = vld [vmem:[%s4 + $0x28c] sm:$0xf]
      %v892 = vld [vmem:[%s4 + $0x290] sm:$0xf]
      %v893 = vld [vmem:[%s4 + $0x294] sm:$0xf]
      %v894 = vld [vmem:[%s4 + $0x298] sm:$0xf]
      %v895 = vld [vmem:[%s4 + $0x29c] sm:$0xf]
      %v896 = vld [vmem:[%s4 + $0x2a0] sm:$0xf]
      %v897 = vld [vmem:[%s4 + $0x2a4] sm:$0xf]
      %v898 = vld [vmem:[%s4 + $0x2a8] sm:$0xf]
      %v899 = vld [vmem:[%s4 + $0x2ac] sm:$0xf]
      %v900 = vld [vmem:[%s4 + $0x2b0] sm:$0xf]
      %v901 = vld [vmem:[%s4 + $0x2b4] sm:$0xf]
      %v902 = vld [vmem:[%s4 + $0x2b8] sm:$0xf]
      %v903 = vld [vmem:[%s4 + $0x2bc] sm:$0xf]
      %v904 = vld [vmem:[%s4 + $0x2c0] sm:$0xf]
      %v905 = vld [vmem:[%s4 + $0x2c4] sm:$0xf]
      %v906 = vld [vmem:[%s4 + $0x2c8] sm:$0xf]
      %v907 = vld [vmem:[%s4 + $0x2cc] sm:$0xf]
      %v908 = vld [vmem:[%s4 + $0x2d0] sm:$0xf]
      %v909 = vld [vmem:[%s4 + $0x2d4] sm:$0xf]
      %v910 = vld [vmem:[%s4 + $0x2d8] sm:$0xf]
      %v911 = vld [vmem:[%s4 + $0x2dc] sm:$0xf]
      %v912 = vld [vmem:[%s4 + $0x2e0] sm:$0xf]
      %v913 = vld [vmem:[%s4 + $0x2e4] sm:$0xf]
      %v914 = vld [vmem:[%s4 + $0x2e8] sm:$0xf]
      %v915 = vld [vmem:[%s4 + $0x2ec] sm:$0xf]
      %v916 = vld [vmem:[%s4 + $0x2f0] sm:$0xf]
      %v917 = vld [vmem:[%s4 + $0x2f4] sm:$0xf]
      %v918 = vld [vmem:[%s4 + $0x2f8] sm:$0xf]
      %v919 = vld [vmem:[%s4 + $0x2fc] sm:$0xf]
      %v920 = vld [vmem:[%s4 + $0x300] sm:$0xf]
      %v921 = vld [vmem:[%s4 + $0x304] sm:$0xf]
      %v922 = vld [vmem:[%s4 + $0x308] sm:$0xf]
      %v923 = vld [vmem:[%s4 + $0x30c] sm:$0xf]
      %v924 = vld [vmem:[%s4 + $0x310] sm:$0xf]
      %v925 = vld [vmem:[%s4 + $0x314] sm:$0xf]
      %v926 = vld [vmem:[%s4 + $0x318] sm:$0xf]
      %v927 = vld [vmem:[%s4 + $0x31c] sm:$0xf]
      %v928 = vld [vmem:[%s4 + $0x320] sm:$0xf]
      %v929 = vld [vmem:[%s4 + $0x324] sm:$0xf]
      %v930 = vld [vmem:[%s4 + $0x328] sm:$0xf]
      %v931 = vld [vmem:[%s4 + $0x32c] sm:$0xf]
      %v932 = vld [vmem:[%s4 + $0x330] sm:$0xf]
      %v933 = vld [vmem:[%s4 + $0x334] sm:$0xf]
      %v934 = vld [vmem:[%s4 + $0x338] sm:$0xf]
      %v935 = vld [vmem:[%s4 + $0x33c] sm:$0xf]
      %v936 = vld [vmem:[%s4 + $0x340] sm:$0xf]
      %v937 = vld [vmem:[%s4 + $0x344] sm:$0xf]
      %v938 = vld [vmem:[%s4 + $0x348] sm:$0xf]
      %v939 = vld [vmem:[%s4 + $0x34c] sm:$0xf]
      %v940 = vld [vmem:[%s4 + $0x350] sm:$0xf]
      %v941 = vld [vmem:[%s4 + $0x354] sm:$0xf]
      %v942 = vld [vmem:[%s4 + $0x358] sm:$0xf]
      %v943 = vld [vmem:[%s4 + $0x35c] sm:$0xf]
      %v944 = vld [vmem:[%s4 + $0x360] sm:$0xf]
      %v945 = vld [vmem:[%s4 + $0x364] sm:$0xf]
      %v946 = vld [vmem:[%s4 + $0x368] sm:$0xf]
      %v947 = vld [vmem:[%s4 + $0x36c] sm:$0xf]
      %v948 = vld [vmem:[%s4 + $0x370] sm:$0xf]
      %v949 = vld [vmem:[%s4 + $0x374] sm:$0xf]
      %v950 = vld [vmem:[%s4 + $0x378] sm:$0xf]
      %v951 = vld [vmem:[%s4 + $0x37c] sm:$0xf]
      %v952 = vld [vmem:[%s4 + $0x380] sm:$0xf]
      %v953 = vld [vmem:[%s4 + $0x384] sm:$0xf]
      %v954 = vld [vmem:[%s4 + $0x388] sm:$0xf]
      %v955 = vld [vmem:[%s4 + $0x38c] sm:$0xf]
      %v956 = vld [vmem:[%s4 + $0x390] sm:$0xf]
      %v957 = vld [vmem:[%s4 + $0x394] sm:$0xf]
      %v958 = vld [vmem:[%s4 + $0x398] sm:$0xf]
      %v959 = vld [vmem:[%s4 + $0x39c] sm:$0xf]
      %v960 = vld [vmem:[%s4 + $0x3a0] sm:$0xf]
      %v961 = vld [vmem:[%s4 + $0x3a4] sm:$0xf]
      %v962 = vld [vmem:[%s4 + $0x3a8] sm:$0xf]
      %v963 = vld [vmem:[%s4 + $0x3ac] sm:$0xf]
      %v964 = vld [vmem:[%s4 + $0x3b0] sm:$0xf]
      %v965 = vld [vmem:[%s4 + $0x3b4] sm:$0xf]
      %v966 = vld [vmem:[%s4 + $0x3b8] sm:$0xf]
      %v967 = vld [vmem:[%s4 + $0x3bc] sm:$0xf]
      %v968 = vld [vmem:[%s4 + $0x3c0] sm:$0xf]
      %v969 = vld [vmem:[%s4 + $0x3c4] sm:$0xf]
      %v970 = vld [vmem:[%s4 + $0x3c8] sm:$0xf]
      %v971 = vld [vmem:[%s4 + $0x3cc] sm:$0xf]
      %v972 = vld [vmem:[%s4 + $0x3d0] sm:$0xf]
      %v973 = vld [vmem:[%s4 + $0x3d4] sm:$0xf]
      %v974 = vld [vmem:[%s4 + $0x3d8] sm:$0xf]
      %v975 = vld [vmem:[%s4 + $0x3dc] sm:$0xf]
      %v976 = vld [vmem:[%s4 + $0x3e0] sm:$0xf]
      %v977 = vld [vmem:[%s4 + $0x3e4] sm:$0xf]
      %v978 = vld [vmem:[%s4 + $0x3e8] sm:$0xf]
      %v979 = vld [vmem:[%s4 + $0x3ec] sm:$0xf]
      %v980 = vld [vmem:[%s4 + $0x3f0] sm:$0xf]
      %v981 = vld [vmem:[%s4 + $0x3f4] sm:$0xf]
      %v982 = vld [vmem:[%s4 + $0x3f8] sm:$0xf]
      %v983 = vld [vmem:[%s4 + $0x3fc] sm:$0xf]
      %v984 = vld [vmem:[%s4 + $0x400] sm:$0xf]
      %v985 = vld [vmem:[%s4 + $0x404] sm:$0xf]
      %v986 = vld [vmem:[%s4 + $0x408] sm:$0xf]
      %v987 = vld [vmem:[%s4 + $0x40c] sm:$0xf]
      %v988 = vld [vmem:[%s4 + $0x410] sm:$0xf]
      %v989 = vld [vmem:[%s4 + $0x414] sm:$0xf]
      %v990 = vld [vmem:[%s4 + $0x418] sm:$0xf]
      %v991 = vld [vmem:[%s4 + $0x41c] sm:$0xf]
      %v992 = vld [vmem:[%s4 + $0x420] sm:$0xf]
      %v993 = vld [vmem:[%s4 + $0x424] sm:$0xf]
      %v994 = vld [vmem:[%s4 + $0x428] sm:$0xf]
      %v995 = vld [vmem:[%s4 + $0x42c] sm:$0xf]
      %v996 = vld [vmem:[%s4 + $0x430] sm:$0xf]
      %v997 = vld [vmem:[%s4 + $0x434] sm:$0xf]
      %v998 = vld [vmem:[%s4 + $0x438] sm:$0xf]
      %v999 = vld [vmem:[%s4 + $0x43c] sm:$0xf]
      %v1000 = vld [vmem:[%s4 + $0x440] sm:$0xf]
      %v1001 = vld [vmem:[%s4 + $0x444] sm:$0xf]
      %v1002 = vld [vmem:[%s4 + $0x448] sm:$0xf]
      %v1003 = vld [vmem:[%s4 + $0x44c] sm:$0xf]
      %v1004 = vld [vmem:[%s4 + $0x450] sm:$0xf]
      %v1005 = vld [vmem:[%s4 + $0x454] sm:$0xf]
      %v1006 = vld [vmem:[%s4 + $0x458] sm:$0xf]
      %v1007 = vld [vmem:[%s4 + $0x45c] sm:$0xf]
      %v1008 = vld [vmem:[%s4 + $0x460] sm:$0xf]
      %v1009 = vld [vmem:[%s4 + $0x464] sm:$0xf]
      %v1010 = vld [vmem:[%s4 + $0x468] sm:$0xf]
      %v1011 = vld [vmem:[%s4 + $0x46c] sm:$0xf]
      %v1012 = vld [vmem:[%s4 + $0x470] sm:$0xf]
      %v1013 = vld [vmem:[%s4 + $0x474] sm:$0xf]
      %v1014 = vld [vmem:[%s4 + $0x478] sm:$0xf]
      %v1015 = vld [vmem:[%s4 + $0x47c] sm:$0xf]
      %v1016 = vpack.c.b16 %v671, %v668
      %v1017 = vpack.c.b16 %v672, %v669
      %v1018 = vpack.c.b16 %v673, %v670
      %v1019 = vpack.c.b16 %v674, %v671
      %v1020 = vpack.c.b16 %v675, %v672
      %v1021 = vpack.c.b16 %v676, %v673
      %v1022 = vpack.c.b16 %v686, %v674
      %v1023 = vpack.c.b16 %v687, %v675
      %v1024 = vpack.c.b16 %v688, %v676
      %v1025 = vpack.c.b16 %v680, %v677
      %v1026 = vpack.c.b16 %v681, %v678
      %v1027 = vpack.c.b16 %v682, %v679
      %v1028 = vpack.c.b16 %v683, %v680
      %v1029 = vpack.c.b16 %v684, %v681
      %v1030 = vpack.c.b16 %v685, %v682
      %v1031 = vpack.c.b16 %v689, %v683
      %v1032 = vpack.c.b16 %v690, %v684
      %v1033 = vpack.c.b16 %v691, %v685
      %v1034 = vpack.c.b16 %v692, %v686
      %v1035 = vpack.c.b16 %v693, %v687
      %v1036 = vpack.c.b16 %v694, %v688
      %v1037 = vpack.c.b16 %v698, %v692
      %v1038 = vpack.c.b16 %v699, %v693
      %v1039 = vpack.c.b16 %v700, %v694
      %v1040 = vpack.c.b16 %v695, %v689
      %v1041 = vpack.c.b16 %v696, %v690
      %v1042 = vpack.c.b16 %v697, %v691
      %v1043 = vpack.c.b16 %v701, %v695
      %v1044 = vpack.c.b16 %v702, %v696
      %v1045 = vpack.c.b16 %v703, %v697
      %v1046 = vpack.c.b16 %v704, %v698
      %v1047 = vpack.c.b16 %v705, %v699
      %v1048 = vpack.c.b16 %v706, %v700
      %v1049 = vpack.c.b16 %v710, %v704
      %v1050 = vpack.c.b16 %v711, %v705
      %v1051 = vpack.c.b16 %v712, %v706
      %v1052 = vpack.c.b16 %v707, %v701
      %v1053 = vpack.c.b16 %v708, %v702
      %v1054 = vpack.c.b16 %v709, %v703
      %v1055 = vpack.c.b16 %v713, %v707
      %v1056 = vpack.c.b16 %v714, %v708
      %v1057 = vpack.c.b16 %v715, %v709
      %v1058 = vpack.c.b16 %v716, %v710
      %v1059 = vpack.c.b16 %v717, %v711
      %v1060 = vpack.c.b16 %v718, %v712
      %v1061 = vpack.c.b16 %v722, %v716
      %v1062 = vpack.c.b16 %v723, %v717
      %v1063 = vpack.c.b16 %v724, %v718
      %v1064 = vpack.c.b16 %v719, %v713
      %v1065 = vpack.c.b16 %v720, %v714
      %v1066 = vpack.c.b16 %v721, %v715
      %v1067 = vpack.c.b16 %v725, %v719
      %v1068 = vpack.c.b16 %v726, %v720
      %v1069 = vpack.c.b16 %v727, %v721
      %v1412 = vunpack.c.l.b16 %v728
      %v1413 = vunpack.c.l.b16 %v729
      %v1414 = vunpack.c.l.b16 %v730
      %v1415 = vunpack.c.l.b16 %v731
      %v1416 = vunpack.c.l.b16 %v732
      %v1417 = vunpack.c.l.b16 %v733
      %v1418 = vunpack.c.l.b16 %v734
      %v1419 = vunpack.c.l.b16 %v735
      %v1420 = vunpack.c.l.b16 %v736
      %v1421 = vunpack.c.l.b16 %v737
      %v1422 = vunpack.c.l.b16 %v738
      %v1423 = vunpack.c.l.b16 %v739
      %v1424 = vunpack.c.l.b16 %v740
      %v1425 = vunpack.c.l.b16 %v741
      %v1426 = vunpack.c.l.b16 %v742
      %v1427 = vunpack.c.l.b16 %v743
      %v1428 = vunpack.c.l.b16 %v744
      %v1429 = vunpack.c.l.b16 %v745
      %v1430 = vunpack.c.l.b16 %v746
      %v1431 = vunpack.c.l.b16 %v747
      %v1432 = vunpack.c.l.b16 %v748
      %v1433 = vunpack.c.l.b16 %v749
      %v1434 = vunpack.c.l.b16 %v750
      %v1435 = vunpack.c.l.b16 %v751
      %v1436 = vunpack.c.l.b16 %v752
      %v1437 = vunpack.c.l.b16 %v753
      %v1438 = vunpack.c.l.b16 %v754
      %v1439 = vunpack.c.l.b16 %v755
      %v1440 = vunpack.c.l.b16 %v756
      %v1441 = vunpack.c.l.b16 %v757
      %v1442 = vunpack.c.l.b16 %v758
      %v1443 = vunpack.c.l.b16 %v759
      %v1444 = vunpack.c.l.b16 %v760
      %v1445 = vunpack.c.l.b16 %v761
      %v1446 = vunpack.c.l.b16 %v762
      %v1447 = vunpack.c.l.b16 %v763
      %v1448 = vunpack.c.l.b16 %v764
      %v1449 = vunpack.c.l.b16 %v765
      %v1450 = vunpack.c.l.b16 %v766
      %v1451 = vunpack.c.l.b16 %v767
      %v1452 = vunpack.c.l.b16 %v768
      %v1453 = vunpack.c.l.b16 %v769
      %v1454 = vunpack.c.l.b16 %v770
      %v1455 = vunpack.c.l.b16 %v771
      %v1456 = vunpack.c.l.b16 %v772
      %v1457 = vunpack.c.l.b16 %v773
      %v1458 = vunpack.c.l.b16 %v774
      %v1459 = vunpack.c.l.b16 %v775
      %v1460 = vunpack.c.l.b16 %v776
      %v1461 = vunpack.c.l.b16 %v777
      %v1462 = vunpack.c.l.b16 %v778
      %v1463 = vunpack.c.l.b16 %v779
      %v1464 = vunpack.c.l.b16 %v780
      %v1465 = vunpack.c.l.b16 %v781
      %v1466 = vunpack.c.l.b16 %v782
      %v1467 = vunpack.c.l.b16 %v783
      %v1468 = vunpack.c.l.b16 %v784
      %v1469 = vunpack.c.l.b16 %v785
      %v1470 = vunpack.c.l.b16 %v786
      %v1471 = vunpack.c.l.b16 %v787
      %v1472 = vunpack.c.l.b16 %v788
      %v1473 = vunpack.c.l.b16 %v789
      %v1474 = vunpack.c.l.b16 %v790
      %v1475 = vunpack.c.l.b16 %v791
      %v1476 = vunpack.c.l.b16 %v792
      %v1477 = vunpack.c.l.b16 %v793
      %v1478 = vunpack.c.l.b16 %v794
      %v1479 = vunpack.c.l.b16 %v795
      %v1480 = vunpack.c.l.b16 %v796
      %v1481 = vunpack.c.l.b16 %v797
      %v1482 = vunpack.c.l.b16 %v798
      %v1483 = vunpack.c.l.b16 %v799
      %v1484 = vunpack.c.l.b16 %v800
      %v1485 = vunpack.c.l.b16 %v801
      %v1486 = vunpack.c.l.b16 %v802
      %v1487 = vunpack.c.l.b16 %v803
      %v1488 = vunpack.c.l.b16 %v804
      %v1489 = vunpack.c.l.b16 %v805
      %v1490 = vunpack.c.l.b16 %v806
      %v1491 = vunpack.c.l.b16 %v807
      %v1492 = vunpack.c.l.b16 %v808
      %v1493 = vunpack.c.l.b16 %v809
      %v1494 = vunpack.c.l.b16 %v810
      %v1495 = vunpack.c.l.b16 %v811
      %v1496 = vunpack.c.l.b16 %v812
      %v1497 = vunpack.c.l.b16 %v813
      %v1498 = vunpack.c.l.b16 %v814
      %v1499 = vunpack.c.l.b16 %v815
      %v1500 = vunpack.c.l.b16 %v816
      %v1501 = vunpack.c.l.b16 %v817
      %v1502 = vunpack.c.l.b16 %v818
      %v1503 = vunpack.c.l.b16 %v819
      %v1504 = vunpack.c.l.b16 %v820
      %v1505 = vunpack.c.l.b16 %v821
      %v1506 = vunpack.c.l.b16 %v822
      %v1507 = vunpack.c.l.b16 %v823
      %v1508 = vunpack.c.l.b16 %v824
      %v1509 = vunpack.c.l.b16 %v825
      %v1510 = vunpack.c.l.b16 %v826
      %v1511 = vunpack.c.l.b16 %v827
      %v1512 = vunpack.c.l.b16 %v828
      %v1513 = vunpack.c.l.b16 %v829
      %v1514 = vunpack.c.l.b16 %v830
      %v1515 = vunpack.c.l.b16 %v831
      %v1516 = vunpack.c.l.b16 %v832
      %v1517 = vunpack.c.l.b16 %v833
      %v1518 = vunpack.c.l.b16 %v834
      %v1519 = vunpack.c.l.b16 %v835
      %v1520 = vunpack.c.l.b16 %v836
      %v1521 = vunpack.c.l.b16 %v837
      %v1522 = vunpack.c.l.b16 %v838
      %v1523 = vunpack.c.l.b16 %v839
      %v1524 = vunpack.c.l.b16 %v840
      %v1525 = vunpack.c.l.b16 %v841
      %v1526 = vunpack.c.l.b16 %v842
      %v1527 = vunpack.c.l.b16 %v843
      %v1528 = vunpack.c.l.b16 %v844
      %v1529 = vunpack.c.l.b16 %v845
      %v1530 = vunpack.c.l.b16 %v846
      %v1531 = vunpack.c.l.b16 %v847
      %v1532 = vunpack.c.l.b16 %v848
      %v1533 = vunpack.c.l.b16 %v849
      %v1534 = vunpack.c.l.b16 %v850
      %v1535 = vunpack.c.l.b16 %v851
      %v1536 = vunpack.c.l.b16 %v852
      %v1537 = vunpack.c.l.b16 %v853
      %v1538 = vunpack.c.l.b16 %v854
      %v1539 = vunpack.c.l.b16 %v855
      %v1540 = vunpack.c.l.b16 %v856
      %v1541 = vunpack.c.l.b16 %v857
      %v1542 = vunpack.c.l.b16 %v858
      %v1543 = vunpack.c.l.b16 %v859
      %v1544 = vunpack.c.l.b16 %v860
      %v1545 = vunpack.c.l.b16 %v861
      %v1546 = vunpack.c.l.b16 %v862
      %v1547 = vunpack.c.l.b16 %v863
      %v1548 = vunpack.c.l.b16 %v864
      %v1549 = vunpack.c.l.b16 %v865
      %v1550 = vunpack.c.l.b16 %v866
      %v1551 = vunpack.c.l.b16 %v867
      %v1552 = vunpack.c.l.b16 %v868
      %v1553 = vunpack.c.l.b16 %v869
      %v1554 = vunpack.c.l.b16 %v870
      %v1555 = vunpack.c.l.b16 %v871
      %v1556 = vunpack.c.l.b16 %v872
      %v1557 = vunpack.c.l.b16 %v873
      %v1558 = vunpack.c.l.b16 %v874
      %v1559 = vunpack.c.l.b16 %v875
      %v1560 = vunpack.c.l.b16 %v876
      %v1561 = vunpack.c.l.b16 %v877
      %v1562 = vunpack.c.l.b16 %v878
      %v1563 = vunpack.c.l.b16 %v879
      %v1564 = vunpack.c.l.b16 %v880
      %v1565 = vunpack.c.l.b16 %v881
      %v1566 = vunpack.c.l.b16 %v882
      %v1567 = vunpack.c.l.b16 %v883
      %v1568 = vunpack.c.l.b16 %v884
      %v1569 = vunpack.c.l.b16 %v885
      %v1570 = vunpack.c.l.b16 %v886
      %v1571 = vunpack.c.l.b16 %v887
      %v1572 = vunpack.c.l.b16 %v888
      %v1573 = vunpack.c.l.b16 %v889
      %v1574 = vunpack.c.l.b16 %v890
      %v1575 = vunpack.c.l.b16 %v891
      %v1576 = vunpack.c.l.b16 %v892
      %v1577 = vunpack.c.l.b16 %v893
      %v1578 = vunpack.c.l.b16 %v894
      %v1579 = vunpack.c.l.b16 %v895
      %v1580 = vunpack.c.l.b16 %v896
      %v1581 = vunpack.c.l.b16 %v897
      %v1582 = vunpack.c.l.b16 %v898
      %v1583 = vunpack.c.l.b16 %v899
      %v1584 = vunpack.c.l.b16 %v900
      %v1585 = vunpack.c.l.b16 %v901
      %v1586 = vunpack.c.l.b16 %v902
      %v1587 = vunpack.c.l.b16 %v903
      %v1588 = vunpack.c.l.b16 %v904
      %v1589 = vunpack.c.l.b16 %v905
      %v1590 = vunpack.c.l.b16 %v906
      %v1591 = vunpack.c.l.b16 %v907
      %v1592 = vunpack.c.l.b16 %v908
      %v1593 = vunpack.c.l.b16 %v909
      %v1594 = vunpack.c.l.b16 %v910
      %v1595 = vunpack.c.l.b16 %v911
      %v1596 = vunpack.c.l.b16 %v912
      %v1597 = vunpack.c.l.b16 %v913
      %v1598 = vunpack.c.l.b16 %v914
      %v1599 = vunpack.c.l.b16 %v915
      %v1600 = vunpack.c.l.b16 %v916
      %v1601 = vunpack.c.l.b16 %v917
      %v1602 = vunpack.c.l.b16 %v918
      %v1603 = vunpack.c.l.b16 %v919
      %v1604 = vunpack.c.l.b16 %v920
      %v1605 = vunpack.c.l.b16 %v921
      %v1606 = vunpack.c.l.b16 %v922
      %v1607 = vunpack.c.l.b16 %v923
      %v1608 = vunpack.c.l.b16 %v924
      %v1609 = vunpack.c.l.b16 %v925
      %v1610 = vunpack.c.l.b16 %v926
      %v1611 = vunpack.c.l.b16 %v927
      %v1612 = vunpack.c.l.b16 %v928
      %v1613 = vunpack.c.l.b16 %v929
      %v1614 = vunpack.c.l.b16 %v930
      %v1615 = vunpack.c.l.b16 %v931
      %v1616 = vunpack.c.l.b16 %v932
      %v1617 = vunpack.c.l.b16 %v933
      %v1618 = vunpack.c.l.b16 %v934
      %v1619 = vunpack.c.l.b16 %v935
      %v1620 = vunpack.c.l.b16 %v936
      %v1621 = vunpack.c.l.b16 %v937
      %v1622 = vunpack.c.l.b16 %v938
      %v1623 = vunpack.c.l.b16 %v939
      %v1624 = vunpack.c.l.b16 %v940
      %v1625 = vunpack.c.l.b16 %v941
      %v1626 = vunpack.c.l.b16 %v942
      %v1627 = vunpack.c.l.b16 %v943
      %v1628 = vunpack.c.l.b16 %v944
      %v1629 = vunpack.c.l.b16 %v945
      %v1630 = vunpack.c.l.b16 %v946
      %v1631 = vunpack.c.l.b16 %v947
      %v1632 = vunpack.c.l.b16 %v948
      %v1633 = vunpack.c.l.b16 %v949
      %v1634 = vunpack.c.l.b16 %v950
      %v1635 = vunpack.c.l.b16 %v951
      %v1636 = vunpack.c.l.b16 %v952
      %v1637 = vunpack.c.l.b16 %v953
      %v1638 = vunpack.c.l.b16 %v954
      %v1639 = vunpack.c.l.b16 %v955
      %v1640 = vunpack.c.l.b16 %v956
      %v1641 = vunpack.c.l.b16 %v957
      %v1642 = vunpack.c.l.b16 %v958
      %v1643 = vunpack.c.l.b16 %v959
      %v1644 = vunpack.c.l.b16 %v960
      %v1645 = vunpack.c.l.b16 %v961
      %v1646 = vunpack.c.l.b16 %v962
      %v1647 = vunpack.c.l.b16 %v963
      %v1648 = vunpack.c.l.b16 %v964
      %v1649 = vunpack.c.l.b16 %v965
      %v1650 = vunpack.c.l.b16 %v966
      %v1651 = vunpack.c.l.b16 %v967
      %v1652 = vunpack.c.l.b16 %v968
      %v1653 = vunpack.c.l.b16 %v969
      %v1654 = vunpack.c.l.b16 %v970
      %v1655 = vunpack.c.l.b16 %v971
      %v1656 = vunpack.c.l.b16 %v972
      %v1657 = vunpack.c.l.b16 %v973
      %v1658 = vunpack.c.l.b16 %v974
      %v1659 = vunpack.c.l.b16 %v975
      %v1660 = vunpack.c.l.b16 %v976
      %v1661 = vunpack.c.l.b16 %v977
      %v1662 = vunpack.c.l.b16 %v978
      %v1663 = vunpack.c.l.b16 %v979
      %v1664 = vunpack.c.l.b16 %v980
      %v1665 = vunpack.c.l.b16 %v981
      %v1666 = vunpack.c.l.b16 %v982
      %v1667 = vunpack.c.l.b16 %v983
      %v1668 = vunpack.c.l.b16 %v984
      %v1669 = vunpack.c.l.b16 %v985
      %v1670 = vunpack.c.l.b16 %v986
      %v1671 = vunpack.c.l.b16 %v987
      %v1672 = vunpack.c.l.b16 %v988
      %v1673 = vunpack.c.l.b16 %v989
      %v1674 = vunpack.c.l.b16 %v990
      %v1675 = vunpack.c.l.b16 %v991
      %v1676 = vunpack.c.l.b16 %v992
      %v1677 = vunpack.c.l.b16 %v993
      %v1678 = vunpack.c.l.b16 %v994
      %v1679 = vunpack.c.l.b16 %v995
      %v1680 = vunpack.c.l.b16 %v996
      %v1681 = vunpack.c.l.b16 %v997
      %v1682 = vunpack.c.l.b16 %v998
      %v1683 = vunpack.c.l.b16 %v999
      %v1684 = vunpack.c.l.b16 %v1000
      %v1685 = vunpack.c.l.b16 %v1001
      %v1686 = vunpack.c.l.b16 %v1002
      %v1687 = vunpack.c.l.b16 %v1003
      %v1688 = vunpack.c.l.b16 %v1004
      %v1689 = vunpack.c.l.b16 %v1005
      %v1690 = vunpack.c.l.b16 %v1006
      %v1691 = vunpack.c.l.b16 %v1007
      %v1692 = vunpack.c.l.b16 %v1008
      %v1693 = vunpack.c.l.b16 %v1009
      %v1694 = vunpack.c.l.b16 %v1010
      %v1695 = vunpack.c.l.b16 %v1011
      %v1696 = vunpack.c.l.b16 %v1012
      %v1697 = vunpack.c.l.b16 %v1013
      %v1698 = vunpack.c.l.b16 %v1014
      %v1699 = vunpack.c.l.b16 %v1015
      %v1700 = vpack.c.b16 %v1413, %v1412
      %v1701 = vpack.c.b16 %v1415, %v1414
      %v1702 = vpack.c.b16 %v1417, %v1416
      %v1703 = vpack.c.b16 %v1419, %v1418
      %v1704 = vpack.c.b16 %v1421, %v1420
      %v1705 = vpack.c.b16 %v1423, %v1422
      %v1706 = vpack.c.b16 %v1425, %v1424
      %v1707 = vpack.c.b16 %v1427, %v1426
      %v1708 = vpack.c.b16 %v1429, %v1428
      %v1709 = vpack.c.b16 %v1431, %v1430
      %v1710 = vpack.c.b16 %v1433, %v1432
      %v1711 = vpack.c.b16 %v1435, %v1434
      %v1712 = vpack.c.b16 %v1437, %v1436
      %v1713 = vpack.c.b16 %v1439, %v1438
      %v1714 = vpack.c.b16 %v1441, %v1440
      %v1715 = vpack.c.b16 %v1443, %v1442
      %v1716 = vpack.c.b16 %v1445, %v1444
      %v1717 = vpack.c.b16 %v1447, %v1446
      %v1718 = vpack.c.b16 %v1449, %v1448
      %v1719 = vpack.c.b16 %v1451, %v1450
      %v1720 = vpack.c.b16 %v1453, %v1452
      %v1721 = vpack.c.b16 %v1455, %v1454
      %v1722 = vpack.c.b16 %v1457, %v1456
      %v1723 = vpack.c.b16 %v1459, %v1458
      %v1724 = vpack.c.b16 %v1461, %v1460
      %v1725 = vpack.c.b16 %v1463, %v1462
      %v1726 = vpack.c.b16 %v1465, %v1464
      %v1727 = vpack.c.b16 %v1467, %v1466
      %v1728 = vpack.c.b16 %v1469, %v1468
      %v1729 = vpack.c.b16 %v1471, %v1470
      %v1730 = vpack.c.b16 %v1473, %v1472
      %v1731 = vpack.c.b16 %v1475, %v1474
      %v1732 = vpack.c.b16 %v1477, %v1476
      %v1733 = vpack.c.b16 %v1479, %v1478
      %v1734 = vpack.c.b16 %v1481, %v1480
      %v1735 = vpack.c.b16 %v1483, %v1482
      %v1736 = vpack.c.b16 %v1485, %v1484
      %v1737 = vpack.c.b16 %v1487, %v1486
      %v1738 = vpack.c.b16 %v1489, %v1488
      %v1739 = vpack.c.b16 %v1491, %v1490
      %v1740 = vpack.c.b16 %v1493, %v1492
      %v1741 = vpack.c.b16 %v1495, %v1494
      %v1742 = vpack.c.b16 %v1497, %v1496
      %v1743 = vpack.c.b16 %v1499, %v1498
      %v1744 = vpack.c.b16 %v1501, %v1500
      %v1745 = vpack.c.b16 %v1503, %v1502
      %v1746 = vpack.c.b16 %v1505, %v1504
      %v1747 = vpack.c.b16 %v1507, %v1506
      %v1748 = vpack.c.b16 %v1509, %v1508
      %v1749 = vpack.c.b16 %v1511, %v1510
      %v1750 = vpack.c.b16 %v1513, %v1512
      %v1751 = vpack.c.b16 %v1515, %v1514
      %v1752 = vpack.c.b16 %v1517, %v1516
      %v1753 = vpack.c.b16 %v1519, %v1518
      %v1754 = vpack.c.b16 %v1521, %v1520
      %v1755 = vpack.c.b16 %v1523, %v1522
      %v1756 = vpack.c.b16 %v1525, %v1524
      %v1757 = vpack.c.b16 %v1527, %v1526
      %v1758 = vpack.c.b16 %v1529, %v1528
      %v1759 = vpack.c.b16 %v1531, %v1530
      %v1760 = vpack.c.b16 %v1533, %v1532
      %v1761 = vpack.c.b16 %v1535, %v1534
      %v1762 = vpack.c.b16 %v1537, %v1536
      %v1763 = vpack.c.b16 %v1539, %v1538
      %v1764 = vpack.c.b16 %v1541, %v1540
      %v1765 = vpack.c.b16 %v1543, %v1542
      %v1766 = vpack.c.b16 %v1545, %v1544
      %v1767 = vpack.c.b16 %v1547, %v1546
      %v1768 = vpack.c.b16 %v1549, %v1548
      %v1769 = vpack.c.b16 %v1551, %v1550
      %v1770 = vpack.c.b16 %v1553, %v1552
      %v1771 = vpack.c.b16 %v1555, %v1554
      %v1772 = vpack.c.b16 %v1557, %v1556
      %v1773 = vpack.c.b16 %v1559, %v1558
      %v1774 = vpack.c.b16 %v1561, %v1560
      %v1775 = vpack.c.b16 %v1563, %v1562
      %v1776 = vpack.c.b16 %v1565, %v1564
      %v1777 = vpack.c.b16 %v1567, %v1566
      %v1778 = vpack.c.b16 %v1569, %v1568
      %v1779 = vpack.c.b16 %v1571, %v1570
      %v1780 = vpack.c.b16 %v1573, %v1572
      %v1781 = vpack.c.b16 %v1575, %v1574
      %v1782 = vpack.c.b16 %v1577, %v1576
      %v1783 = vpack.c.b16 %v1579, %v1578
      %v1784 = vpack.c.b16 %v1581, %v1580
      %v1785 = vpack.c.b16 %v1583, %v1582
      %v1786 = vpack.c.b16 %v1585, %v1584
      %v1787 = vpack.c.b16 %v1587, %v1586
      %v1788 = vpack.c.b16 %v1589, %v1588
      %v1789 = vpack.c.b16 %v1591, %v1590
      %v1790 = vpack.c.b16 %v1593, %v1592
      %v1791 = vpack.c.b16 %v1595, %v1594
      %v1792 = vpack.c.b16 %v1597, %v1596
      %v1793 = vpack.c.b16 %v1599, %v1598
      %v1794 = vpack.c.b16 %v1601, %v1600
      %v1795 = vpack.c.b16 %v1603, %v1602
      %v1796 = vpack.c.b16 %v1605, %v1604
      %v1797 = vpack.c.b16 %v1607, %v1606
      %v1798 = vpack.c.b16 %v1609, %v1608
      %v1799 = vpack.c.b16 %v1611, %v1610
      %v1800 = vpack.c.b16 %v1613, %v1612
      %v1801 = vpack.c.b16 %v1615, %v1614
      %v1802 = vpack.c.b16 %v1617, %v1616
      %v1803 = vpack.c.b16 %v1619, %v1618
      %v1804 = vpack.c.b16 %v1621, %v1620
      %v1805 = vpack.c.b16 %v1623, %v1622
      %v1806 = vpack.c.b16 %v1625, %v1624
      %v1807 = vpack.c.b16 %v1627, %v1626
      %v1808 = vpack.c.b16 %v1629, %v1628
      %v1809 = vpack.c.b16 %v1631, %v1630
      %v1810 = vpack.c.b16 %v1633, %v1632
      %v1811 = vpack.c.b16 %v1635, %v1634
      %v1812 = vpack.c.b16 %v1637, %v1636
      %v1813 = vpack.c.b16 %v1639, %v1638
      %v1814 = vpack.c.b16 %v1641, %v1640
      %v1815 = vpack.c.b16 %v1643, %v1642
      %v1816 = vpack.c.b16 %v1645, %v1644
      %v1817 = vpack.c.b16 %v1647, %v1646
      %v1818 = vpack.c.b16 %v1649, %v1648
      %v1819 = vpack.c.b16 %v1651, %v1650
      %v1820 = vpack.c.b16 %v1653, %v1652
      %v1821 = vpack.c.b16 %v1655, %v1654
      %v1822 = vpack.c.b16 %v1657, %v1656
      %v1823 = vpack.c.b16 %v1659, %v1658
      %v1824 = vpack.c.b16 %v1661, %v1660
      %v1825 = vpack.c.b16 %v1663, %v1662
      %v1826 = vpack.c.b16 %v1665, %v1664
      %v1827 = vpack.c.b16 %v1667, %v1666
      %v1828 = vpack.c.b16 %v1669, %v1668
      %v1829 = vpack.c.b16 %v1671, %v1670
      %v1830 = vpack.c.b16 %v1673, %v1672
      %v1831 = vpack.c.b16 %v1675, %v1674
      %v1832 = vpack.c.b16 %v1677, %v1676
      %v1833 = vpack.c.b16 %v1679, %v1678
      %v1834 = vpack.c.b16 %v1681, %v1680
      %v1835 = vpack.c.b16 %v1683, %v1682
      %v1836 = vpack.c.b16 %v1685, %v1684
      %v1837 = vpack.c.b16 %v1687, %v1686
      %v1838 = vpack.c.b16 %v1689, %v1688
      %v1839 = vpack.c.b16 %v1691, %v1690
      %v1840 = vpack.c.b16 %v1693, %v1692
      %v1841 = vpack.c.b16 %v1695, %v1694
      %v1842 = vpack.c.b16 %v1697, %v1696
      %v1843 = vpack.c.b16 %v1699, %v1698
      %1988 = vmatprep.subr.bf16.mxu0 0
      %1989 = vmatpush1.bf16.msra.mxu0 %v1707
      %1990 = vmatprep.subr.bf16.mxu0 0
      %1991 = vmatpush1.bf16.msra.mxu0 %v1706
      %1992 = vmatprep.subr.bf16.mxu0 0
      %1993 = vmatpush1.bf16.msra.mxu0 %v1705
      %1994 = vmatprep.subr.bf16.mxu0 0
      %1995 = vmatpush1.bf16.msra.mxu0 %v1704
      %1996 = vmatprep.subr.bf16.mxu0 0
      %1997 = vmatpush1.bf16.msra.mxu0 %v1703
      %1998 = vmatprep.subr.bf16.mxu0 0
      %1999 = vmatpush1.bf16.msra.mxu0 %v1702
      %2000 = vmatprep.subr.bf16.mxu0 0
      %2001 = vmatpush1.bf16.msra.mxu0 %v1701
      %2002 = vmatprep.subr.bf16.mxu0 0
      %2003 = vmatpush1.bf16.msra.mxu0 %v1700
      %2004 = vmatprep.subr.bf16.mxu0 0
      %2005 = vmatpush2.bf16.msra.mxu0 %v1715
      %2006 = vmatprep.subr.bf16.mxu0 0
      %2007 = vmatpush2.bf16.msra.mxu0 %v1714
      %2008 = vmatprep.subr.bf16.mxu0 0
      %2009 = vmatpush2.bf16.msra.mxu0 %v1713
      %2010 = vmatprep.subr.bf16.mxu0 0
      %2011 = vmatpush2.bf16.msra.mxu0 %v1712
      %2012 = vmatprep.subr.bf16.mxu0 0
      %2013 = vmatpush2.bf16.msra.mxu0 %v1711
      %2014 = vmatprep.subr.bf16.mxu0 0
      %2015 = vmatpush2.bf16.msra.mxu0 %v1710
      %2016 = vmatprep.subr.bf16.mxu0 0
      %2017 = vmatpush2.bf16.msra.mxu0 %v1709
      %2018 = vmatprep.subr.bf16.mxu0 0
      %2019 = vmatpush2.bf16.msra.mxu0 %v1708
      %2020 = vmatprep.mubr.bf16.mxu0 %v1017
      %2021 = vmatmul.mubr.bf16.gmra.mxu0 %v1016
      %v2022 = vpop.f32.mrf.mxu0
      %v2023 = vadd.f32 0.0, %v2022
      %v2024 = vpop.f32.mrf.mxu0
      %v2025 = vpop.f32.mrf.mxu0
      %v2026 = vadd.f32 0.0, %v2025
      %v2027 = vpop.f32.mrf.mxu0
      %2028 = vmatprep.mubr.bf16.mxu0 %v1023
      %2029 = vmatmul.mubr.bf16.gmra.mxu0 %v1022
      %v2030 = vpop.f32.mrf.mxu0
      %v2031 = vadd.f32 0.0, %v2030
      %v2032 = vpop.f32.mrf.mxu0
      %v2033 = vpop.f32.mrf.mxu0
      %v2034 = vadd.f32 0.0, %v2033
      %v2035 = vpop.f32.mrf.mxu0
      %2036 = vmatprep.mubr.bf16.mxu0 %v1038
      %2037 = vmatmul.mubr.bf16.gmra.mxu0 %v1037
      %v2038 = vpop.f32.mrf.mxu0
      %v2039 = vadd.f32 0.0, %v2038
      %v2040 = vpop.f32.mrf.mxu0
      %v2041 = vpop.f32.mrf.mxu0
      %v2042 = vadd.f32 0.0, %v2041
      %v2043 = vpop.f32.mrf.mxu0
      %2044 = vmatprep.mubr.bf16.mxu0 %v1050
      %2045 = vmatmul.mubr.bf16.gmra.mxu0 %v1049
      %v2046 = vpop.f32.mrf.mxu0
      %v2047 = vadd.f32 0.0, %v2046
      %v2048 = vpop.f32.mrf.mxu0
      %v2049 = vpop.f32.mrf.mxu0
      %v2050 = vadd.f32 0.0, %v2049
      %v2051 = vpop.f32.mrf.mxu0
      %2052 = vdwg.mxu0
      %2053 = vmatprep.subr.bf16.mxu0 0
      %2054 = vmatpush1.bf16.msra.mxu0 %v1723
      %2055 = vmatprep.subr.bf16.mxu0 0
      %2056 = vmatpush1.bf16.msra.mxu0 %v1722
      %2057 = vmatprep.subr.bf16.mxu0 0
      %2058 = vmatpush1.bf16.msra.mxu0 %v1721
      %2059 = vmatprep.subr.bf16.mxu0 0
      %2060 = vmatpush1.bf16.msra.mxu0 %v1720
      %2061 = vmatprep.subr.bf16.mxu0 0
      %2062 = vmatpush1.bf16.msra.mxu0 %v1719
      %2063 = vmatprep.subr.bf16.mxu0 0
      %2064 = vmatpush1.bf16.msra.mxu0 %v1718
      %2065 = vmatprep.subr.bf16.mxu0 0
      %2066 = vmatpush1.bf16.msra.mxu0 %v1717
      %2067 = vmatprep.subr.bf16.mxu0 0
      %2068 = vmatpush1.bf16.msra.mxu0 %v1716
      %2069 = vmatprep.subr.bf16.mxu0 0
      %2070 = vmatpush2.bf16.msra.mxu0 %v1731
      %2071 = vmatprep.subr.bf16.mxu0 0
      %2072 = vmatpush2.bf16.msra.mxu0 %v1730
      %2073 = vmatprep.subr.bf16.mxu0 0
      %2074 = vmatpush2.bf16.msra.mxu0 %v1729
      %2075 = vmatprep.subr.bf16.mxu0 0
      %2076 = vmatpush2.bf16.msra.mxu0 %v1728
      %2077 = vmatprep.subr.bf16.mxu0 0
      %2078 = vmatpush2.bf16.msra.mxu0 %v1727
      %2079 = vmatprep.subr.bf16.mxu0 0
      %2080 = vmatpush2.bf16.msra.mxu0 %v1726
      %2081 = vmatprep.subr.bf16.mxu0 0
      %2082 = vmatpush2.bf16.msra.mxu0 %v1725
      %2083 = vmatprep.subr.bf16.mxu0 0
      %2084 = vmatpush2.bf16.msra.mxu0 %v1724
      %2085 = vmatprep.mubr.bf16.mxu0 %v1019
      %2086 = vmatmul.mubr.bf16.gmra.mxu0 %v1018
      %v2087 = vpop.f32.mrf.mxu0
      %v2088 = vadd.f32 %v2023, %v2087
      %v2089 = vpop.f32.mrf.mxu0
      %v2090 = vpop.f32.mrf.mxu0
      %v2091 = vadd.f32 %v2026, %v2090
      %v2092 = vpop.f32.mrf.mxu0
      %2093 = vmatprep.mubr.bf16.mxu0 %v1034
      %2094 = vmatmul.mubr.bf16.gmra.mxu0 %v1024
      %v2095 = vpop.f32.mrf.mxu0
      %v2096 = vadd.f32 %v2031, %v2095
      %v2097 = vpop.f32.mrf.mxu0
      %v2098 = vpop.f32.mrf.mxu0
      %v2099 = vadd.f32 %v2034, %v2098
      %v2100 = vpop.f32.mrf.mxu0
      %2101 = vmatprep.mubr.bf16.mxu0 %v1046
      %2102 = vmatmul.mubr.bf16.gmra.mxu0 %v1039
      %v2103 = vpop.f32.mrf.mxu0
      %v2104 = vadd.f32 %v2039, %v2103
      %v2105 = vpop.f32.mrf.mxu0
      %v2106 = vpop.f32.mrf.mxu0
      %v2107 = vadd.f32 %v2042, %v2106
      %v2108 = vpop.f32.mrf.mxu0
      %2109 = vmatprep.mubr.bf16.mxu0 %v1058
      %2110 = vmatmul.mubr.bf16.gmra.mxu0 %v1051
      %v2111 = vpop.f32.mrf.mxu0
      %v2112 = vadd.f32 %v2047, %v2111
      %v2113 = vpop.f32.mrf.mxu0
      %v2114 = vpop.f32.mrf.mxu0
      %v2115 = vadd.f32 %v2050, %v2114
      %v2116 = vpop.f32.mrf.mxu0
      %2117 = vdwg.mxu0
      %2118 = vmatprep.subr.bf16.mxu0 0
      %2119 = vmatpush1.bf16.msra.mxu0 %v1739
      %2120 = vmatprep.subr.bf16.mxu0 0
      %2121 = vmatpush1.bf16.msra.mxu0 %v1738
      %2122 = vmatprep.subr.bf16.mxu0 0
      %2123 = vmatpush1.bf16.msra.mxu0 %v1737
      %2124 = vmatprep.subr.bf16.mxu0 0
      %2125 = vmatpush1.bf16.msra.mxu0 %v1736
      %2126 = vmatprep.subr.bf16.mxu0 0
      %2127 = vmatpush1.bf16.msra.mxu0 %v1735
      %2128 = vmatprep.subr.bf16.mxu0 0
      %2129 = vmatpush1.bf16.msra.mxu0 %v1734
      %2130 = vmatprep.subr.bf16.mxu0 0
      %2131 = vmatpush1.bf16.msra.mxu0 %v1733
      %2132 = vmatprep.subr.bf16.mxu0 0
      %2133 = vmatpush1.bf16.msra.mxu0 %v1732
      %2134 = vmatprep.subr.bf16.mxu0 0
      %2135 = vmatpush2.bf16.msra.mxu0 %v1747
      %2136 = vmatprep.subr.bf16.mxu0 0
      %2137 = vmatpush2.bf16.msra.mxu0 %v1746
      %2138 = vmatprep.subr.bf16.mxu0 0
      %2139 = vmatpush2.bf16.msra.mxu0 %v1745
      %2140 = vmatprep.subr.bf16.mxu0 0
      %2141 = vmatpush2.bf16.msra.mxu0 %v1744
      %2142 = vmatprep.subr.bf16.mxu0 0
      %2143 = vmatpush2.bf16.msra.mxu0 %v1743
      %2144 = vmatprep.subr.bf16.mxu0 0
      %2145 = vmatpush2.bf16.msra.mxu0 %v1742
      %2146 = vmatprep.subr.bf16.mxu0 0
      %2147 = vmatpush2.bf16.msra.mxu0 %v1741
      %2148 = vmatprep.subr.bf16.mxu0 0
      %2149 = vmatpush2.bf16.msra.mxu0 %v1740
      %2150 = vmatprep.mubr.bf16.mxu0 %v1021
      %2151 = vmatmul.mubr.bf16.gmra.mxu0 %v1020
      %v2152 = vpop.f32.mrf.mxu0
      %v2153 = vadd.f32 %v2088, %v2152
      %v2154 = vpop.f32.mrf.mxu0
      %v2155 = vpop.f32.mrf.mxu0
      %v2156 = vadd.f32 %v2091, %v2155
      %v2157 = vpop.f32.mrf.mxu0
      %2158 = vmatprep.mubr.bf16.mxu0 %v1036
      %2159 = vmatmul.mubr.bf16.gmra.mxu0 %v1035
      %v2160 = vpop.f32.mrf.mxu0
      %v2161 = vadd.f32 %v2096, %v2160
      %v2162 = vpop.f32.mrf.mxu0
      %v2163 = vpop.f32.mrf.mxu0
      %v2164 = vadd.f32 %v2099, %v2163
      %v2165 = vpop.f32.mrf.mxu0
      %2166 = vmatprep.mubr.bf16.mxu0 %v1048
      %2167 = vmatmul.mubr.bf16.gmra.mxu0 %v1047
      %v2168 = vpop.f32.mrf.mxu0
      %v2169 = vadd.f32 %v2104, %v2168
      %v2170 = vpop.f32.mrf.mxu0
      %v2171 = vpop.f32.mrf.mxu0
      %v2172 = vadd.f32 %v2107, %v2171
      %v2173 = vpop.f32.mrf.mxu0
      %2174 = vmatprep.mubr.bf16.mxu0 %v1060
      %2175 = vmatmul.mubr.bf16.gmra.mxu0 %v1059
      %v2176 = vpop.f32.mrf.mxu0
      %v2177 = vadd.f32 %v2112, %v2176
      %v2178 = vpop.f32.mrf.mxu0
      %v2179 = vpop.f32.mrf.mxu0
      %v2180 = vadd.f32 %v2115, %v2179
      %v2181 = vpop.f32.mrf.mxu0
      %2182 = vdwg.mxu0
      %2183 = vmatprep.subr.bf16.mxu0 0
      %2184 = vmatpush1.bf16.msra.mxu0 %v1755
      %2185 = vmatprep.subr.bf16.mxu0 0
      %2186 = vmatpush1.bf16.msra.mxu0 %v1754
      %2187 = vmatprep.subr.bf16.mxu0 0
      %2188 = vmatpush1.bf16.msra.mxu0 %v1753
      %2189 = vmatprep.subr.bf16.mxu0 0
      %2190 = vmatpush1.bf16.msra.mxu0 %v1752
      %2191 = vmatprep.subr.bf16.mxu0 0
      %2192 = vmatpush1.bf16.msra.mxu0 %v1751
      %2193 = vmatprep.subr.bf16.mxu0 0
      %2194 = vmatpush1.bf16.msra.mxu0 %v1750
      %2195 = vmatprep.subr.bf16.mxu0 0
      %2196 = vmatpush1.bf16.msra.mxu0 %v1749
      %2197 = vmatprep.subr.bf16.mxu0 0
      %2198 = vmatpush1.bf16.msra.mxu0 %v1748
      %2199 = vmatprep.subr.bf16.mxu0 0
      %2200 = vmatpush2.bf16.msra.mxu0 %v1763
      %2201 = vmatprep.subr.bf16.mxu0 0
      %2202 = vmatpush2.bf16.msra.mxu0 %v1762
      %2203 = vmatprep.subr.bf16.mxu0 0
      %2204 = vmatpush2.bf16.msra.mxu0 %v1761
      %2205 = vmatprep.subr.bf16.mxu0 0
      %2206 = vmatpush2.bf16.msra.mxu0 %v1760
      %2207 = vmatprep.subr.bf16.mxu0 0
      %2208 = vmatpush2.bf16.msra.mxu0 %v1759
      %2209 = vmatprep.subr.bf16.mxu0 0
      %2210 = vmatpush2.bf16.msra.mxu0 %v1758
      %2211 = vmatprep.subr.bf16.mxu0 0
      %2212 = vmatpush2.bf16.msra.mxu0 %v1757
      %2213 = vmatprep.subr.bf16.mxu0 0
      %2214 = vmatpush2.bf16.msra.mxu0 %v1756
      %2215 = vmatprep.mubr.bf16.mxu0 %v1023
      %2216 = vmatmul.mubr.bf16.gmra.mxu0 %v1022
      %v2217 = vpop.f32.mrf.mxu0
      %v2218 = vadd.f32 %v2153, %v2217
      %v2219 = vpop.f32.mrf.mxu0
      %v2220 = vpop.f32.mrf.mxu0
      %v2221 = vadd.f32 %v2156, %v2220
      %v2222 = vpop.f32.mrf.mxu0
      %2223 = vmatprep.mubr.bf16.mxu0 %v1038
      %2224 = vmatmul.mubr.bf16.gmra.mxu0 %v1037
      %v2225 = vpop.f32.mrf.mxu0
      %v2226 = vadd.f32 %v2161, %v2225
      %v2227 = vpop.f32.mrf.mxu0
      %v2228 = vpop.f32.mrf.mxu0
      %v2229 = vadd.f32 %v2164, %v2228
      %v2230 = vpop.f32.mrf.mxu0
      %2231 = vmatprep.mubr.bf16.mxu0 %v1050
      %2232 = vmatmul.mubr.bf16.gmra.mxu0 %v1049
      %v2233 = vpop.f32.mrf.mxu0
      %v2234 = vadd.f32 %v2169, %v2233
      %v2235 = vpop.f32.mrf.mxu0
      %v2236 = vpop.f32.mrf.mxu0
      %v2237 = vadd.f32 %v2172, %v2236
      %v2238 = vpop.f32.mrf.mxu0
      %2239 = vmatprep.mubr.bf16.mxu0 %v1062
      %2240 = vmatmul.mubr.bf16.gmra.mxu0 %v1061
      %v2241 = vpop.f32.mrf.mxu0
      %v2242 = vadd.f32 %v2177, %v2241
      %v2243 = vpop.f32.mrf.mxu0
      %v2244 = vpop.f32.mrf.mxu0
      %v2245 = vadd.f32 %v2180, %v2244
      %v2246 = vpop.f32.mrf.mxu0
      %2247 = vdwg.mxu0
      %2248 = vmatprep.subr.bf16.mxu0 0
      %2249 = vmatpush1.bf16.msra.mxu0 %v1771
      %2250 = vmatprep.subr.bf16.mxu0 0
      %2251 = vmatpush1.bf16.msra.mxu0 %v1770
      %2252 = vmatprep.subr.bf16.mxu0 0
      %2253 = vmatpush1.bf16.msra.mxu0 %v1769
      %2254 = vmatprep.subr.bf16.mxu0 0
      %2255 = vmatpush1.bf16.msra.mxu0 %v1768
      %2256 = vmatprep.subr.bf16.mxu0 0
      %2257 = vmatpush1.bf16.msra.mxu0 %v1767
      %2258 = vmatprep.subr.bf16.mxu0 0
      %2259 = vmatpush1.bf16.msra.mxu0 %v1766
      %2260 = vmatprep.subr.bf16.mxu0 0
      %2261 = vmatpush1.bf16.msra.mxu0 %v1765
      %2262 = vmatprep.subr.bf16.mxu0 0
      %2263 = vmatpush1.bf16.msra.mxu0 %v1764
      %2264 = vmatprep.subr.bf16.mxu0 0
      %2265 = vmatpush2.bf16.msra.mxu0 %v1779
      %2266 = vmatprep.subr.bf16.mxu0 0
      %2267 = vmatpush2.bf16.msra.mxu0 %v1778
      %2268 = vmatprep.subr.bf16.mxu0 0
      %2269 = vmatpush2.bf16.msra.mxu0 %v1777
      %2270 = vmatprep.subr.bf16.mxu0 0
      %2271 = vmatpush2.bf16.msra.mxu0 %v1776
      %2272 = vmatprep.subr.bf16.mxu0 0
      %2273 = vmatpush2.bf16.msra.mxu0 %v1775
      %2274 = vmatprep.subr.bf16.mxu0 0
      %2275 = vmatpush2.bf16.msra.mxu0 %v1774
      %2276 = vmatprep.subr.bf16.mxu0 0
      %2277 = vmatpush2.bf16.msra.mxu0 %v1773
      %2278 = vmatprep.subr.bf16.mxu0 0
      %2279 = vmatpush2.bf16.msra.mxu0 %v1772
      %2280 = vmatprep.mubr.bf16.mxu0 %v1025
      %2281 = vmatmul.mubr.bf16.gmra.mxu0 %v1024
      %v2282 = vpop.f32.mrf.mxu0
      %v2283 = vadd.f32 %v2218, %v2282
      %v2284 = vpop.f32.mrf.mxu0
      %v2285 = vpop.f32.mrf.mxu0
      %v2286 = vadd.f32 %v2221, %v2285
      %v2287 = vpop.f32.mrf.mxu0
      %2288 = vmatprep.mubr.bf16.mxu0 %v1031
      %2289 = vmatmul.mubr.bf16.gmra.mxu0 %v1039
      %v2290 = vpop.f32.mrf.mxu0
      %v2291 = vadd.f32 %v2226, %v2290
      %v2292 = vpop.f32.mrf.mxu0
      %v2293 = vpop.f32.mrf.mxu0
      %v2294 = vadd.f32 %v2229, %v2293
      %v2295 = vpop.f32.mrf.mxu0
      %2296 = vmatprep.mubr.bf16.mxu0 %v1043
      %2297 = vmatmul.mubr.bf16.gmra.mxu0 %v1051
      %v2298 = vpop.f32.mrf.mxu0
      %v2299 = vadd.f32 %v2234, %v2298
      %v2300 = vpop.f32.mrf.mxu0
      %v2301 = vpop.f32.mrf.mxu0
      %v2302 = vadd.f32 %v2237, %v2301
      %v2303 = vpop.f32.mrf.mxu0
      %2304 = vmatprep.mubr.bf16.mxu0 %v1055
      %2305 = vmatmul.mubr.bf16.gmra.mxu0 %v1063
      %v2306 = vpop.f32.mrf.mxu0
      %v2307 = vadd.f32 %v2242, %v2306
      %v2308 = vpop.f32.mrf.mxu0
      %v2309 = vpop.f32.mrf.mxu0
      %v2310 = vadd.f32 %v2245, %v2309
      %v2311 = vpop.f32.mrf.mxu0
      %2312 = vdwg.mxu0
      %2313 = vmatprep.subr.bf16.mxu0 0
      %2314 = vmatpush1.bf16.msra.mxu0 %v1787
      %2315 = vmatprep.subr.bf16.mxu0 0
      %2316 = vmatpush1.bf16.msra.mxu0 %v1786
      %2317 = vmatprep.subr.bf16.mxu0 0
      %2318 = vmatpush1.bf16.msra.mxu0 %v1785
      %2319 = vmatprep.subr.bf16.mxu0 0
      %2320 = vmatpush1.bf16.msra.mxu0 %v1784
      %2321 = vmatprep.subr.bf16.mxu0 0
      %2322 = vmatpush1.bf16.msra.mxu0 %v1783
      %2323 = vmatprep.subr.bf16.mxu0 0
      %2324 = vmatpush1.bf16.msra.mxu0 %v1782
      %2325 = vmatprep.subr.bf16.mxu0 0
      %2326 = vmatpush1.bf16.msra.mxu0 %v1781
      %2327 = vmatprep.subr.bf16.mxu0 0
      %2328 = vmatpush1.bf16.msra.mxu0 %v1780
      %2329 = vmatprep.subr.bf16.mxu0 0
      %2330 = vmatpush2.bf16.msra.mxu0 %v1795
      %2331 = vmatprep.subr.bf16.mxu0 0
      %2332 = vmatpush2.bf16.msra.mxu0 %v1794
      %2333 = vmatprep.subr.bf16.mxu0 0
      %2334 = vmatpush2.bf16.msra.mxu0 %v1793
      %2335 = vmatprep.subr.bf16.mxu0 0
      %2336 = vmatpush2.bf16.msra.mxu0 %v1792
      %2337 = vmatprep.subr.bf16.mxu0 0
      %2338 = vmatpush2.bf16.msra.mxu0 %v1791
      %2339 = vmatprep.subr.bf16.mxu0 0
      %2340 = vmatpush2.bf16.msra.mxu0 %v1790
      %2341 = vmatprep.subr.bf16.mxu0 0
      %2342 = vmatpush2.bf16.msra.mxu0 %v1789
      %2343 = vmatprep.subr.bf16.mxu0 0
      %2344 = vmatpush2.bf16.msra.mxu0 %v1788
      %2345 = vmatprep.mubr.bf16.mxu0 %v1027
      %2346 = vmatmul.mubr.bf16.gmra.mxu0 %v1026
      %v2347 = vpop.f32.mrf.mxu0
      %v2348 = vadd.f32 %v2283, %v2347
      %v2349 = vpop.f32.mrf.mxu0
      %v2350 = vpop.f32.mrf.mxu0
      %v2351 = vadd.f32 %v2286, %v2350
      %v2352 = vpop.f32.mrf.mxu0
      %2353 = vmatprep.mubr.bf16.mxu0 %v1033
      %2354 = vmatmul.mubr.bf16.gmra.mxu0 %v1032
      %v2355 = vpop.f32.mrf.mxu0
      %v2356 = vadd.f32 %v2291, %v2355
      %v2357 = vpop.f32.mrf.mxu0
      %v2358 = vpop.f32.mrf.mxu0
      %v2359 = vadd.f32 %v2294, %v2358
      %v2360 = vpop.f32.mrf.mxu0
      %2361 = vmatprep.mubr.bf16.mxu0 %v1045
      %2362 = vmatmul.mubr.bf16.gmra.mxu0 %v1044
      %v2363 = vpop.f32.mrf.mxu0
      %v2364 = vadd.f32 %v2299, %v2363
      %v2365 = vpop.f32.mrf.mxu0
      %v2366 = vpop.f32.mrf.mxu0
      %v2367 = vadd.f32 %v2302, %v2366
      %v2368 = vpop.f32.mrf.mxu0
      %2369 = vmatprep.mubr.bf16.mxu0 %v1057
      %2370 = vmatmul.mubr.bf16.gmra.mxu0 %v1056
      %v2371 = vpop.f32.mrf.mxu0
      %v2372 = vadd.f32 %v2307, %v2371
      %v2373 = vpop.f32.mrf.mxu0
      %v2374 = vpop.f32.mrf.mxu0
      %v2375 = vadd.f32 %v2310, %v2374
      %v2376 = vpop.f32.mrf.mxu0
      %2377 = vdwg.mxu0
      %2378 = vmatprep.subr.bf16.mxu0 0
      %2379 = vmatpush1.bf16.msra.mxu0 %v1803
      %2380 = vmatprep.subr.bf16.mxu0 0
      %2381 = vmatpush1.bf16.msra.mxu0 %v1802
      %2382 = vmatprep.subr.bf16.mxu0 0
      %2383 = vmatpush1.bf16.msra.mxu0 %v1801
      %2384 = vmatprep.subr.bf16.mxu0 0
      %2385 = vmatpush1.bf16.msra.mxu0 %v1800
      %2386 = vmatprep.subr.bf16.mxu0 0
      %2387 = vmatpush1.bf16.msra.mxu0 %v1799
      %2388 = vmatprep.subr.bf16.mxu0 0
      %2389 = vmatpush1.bf16.msra.mxu0 %v1798
      %2390 = vmatprep.subr.bf16.mxu0 0
      %2391 = vmatpush1.bf16.msra.mxu0 %v1797
      %2392 = vmatprep.subr.bf16.mxu0 0
      %2393 = vmatpush1.bf16.msra.mxu0 %v1796
      %2394 = vmatprep.subr.bf16.mxu0 0
      %2395 = vmatpush2.bf16.msra.mxu0 %v1811
      %2396 = vmatprep.subr.bf16.mxu0 0
      %2397 = vmatpush2.bf16.msra.mxu0 %v1810
      %2398 = vmatprep.subr.bf16.mxu0 0
      %2399 = vmatpush2.bf16.msra.mxu0 %v1809
      %2400 = vmatprep.subr.bf16.mxu0 0
      %2401 = vmatpush2.bf16.msra.mxu0 %v1808
      %2402 = vmatprep.subr.bf16.mxu0 0
      %2403 = vmatpush2.bf16.msra.mxu0 %v1807
      %2404 = vmatprep.subr.bf16.mxu0 0
      %2405 = vmatpush2.bf16.msra.mxu0 %v1806
      %2406 = vmatprep.subr.bf16.mxu0 0
      %2407 = vmatpush2.bf16.msra.mxu0 %v1805
      %2408 = vmatprep.subr.bf16.mxu0 0
      %2409 = vmatpush2.bf16.msra.mxu0 %v1804
      %2410 = vmatprep.mubr.bf16.mxu0 %v1029
      %2411 = vmatmul.mubr.bf16.gmra.mxu0 %v1028
      %v2412 = vpop.f32.mrf.mxu0
      %v2413 = vadd.f32 %v2348, %v2412
      %v2414 = vpop.f32.mrf.mxu0
      %v2415 = vpop.f32.mrf.mxu0
      %v2416 = vadd.f32 %v2351, %v2415
      %v2417 = vpop.f32.mrf.mxu0
      %2418 = vmatprep.mubr.bf16.mxu0 %v1041
      %2419 = vmatmul.mubr.bf16.gmra.mxu0 %v1040
      %v2420 = vpop.f32.mrf.mxu0
      %v2421 = vadd.f32 %v2356, %v2420
      %v2422 = vpop.f32.mrf.mxu0
      %v2423 = vpop.f32.mrf.mxu0
      %v2424 = vadd.f32 %v2359, %v2423
      %v2425 = vpop.f32.mrf.mxu0
      %2426 = vmatprep.mubr.bf16.mxu0 %v1053
      %2427 = vmatmul.mubr.bf16.gmra.mxu0 %v1052
      %v2428 = vpop.f32.mrf.mxu0
      %v2429 = vadd.f32 %v2364, %v2428
      %v2430 = vpop.f32.mrf.mxu0
      %v2431 = vpop.f32.mrf.mxu0
      %v2432 = vadd.f32 %v2367, %v2431
      %v2433 = vpop.f32.mrf.mxu0
      %2434 = vmatprep.mubr.bf16.mxu0 %v1065
      %2435 = vmatmul.mubr.bf16.gmra.mxu0 %v1064
      %v2436 = vpop.f32.mrf.mxu0
      %v2437 = vadd.f32 %v2372, %v2436
      %v2438 = vpop.f32.mrf.mxu0
      %v2439 = vpop.f32.mrf.mxu0
      %v2440 = vadd.f32 %v2375, %v2439
      %v2441 = vpop.f32.mrf.mxu0
      %2442 = vdwg.mxu0
      %2443 = vmatprep.subr.bf16.mxu0 0
      %2444 = vmatpush1.bf16.msra.mxu0 %v1819
      %2445 = vmatprep.subr.bf16.mxu0 0
      %2446 = vmatpush1.bf16.msra.mxu0 %v1818
      %2447 = vmatprep.subr.bf16.mxu0 0
      %2448 = vmatpush1.bf16.msra.mxu0 %v1817
      %2449 = vmatprep.subr.bf16.mxu0 0
      %2450 = vmatpush1.bf16.msra.mxu0 %v1816
      %2451 = vmatprep.subr.bf16.mxu0 0
      %2452 = vmatpush1.bf16.msra.mxu0 %v1815
      %2453 = vmatprep.subr.bf16.mxu0 0
      %2454 = vmatpush1.bf16.msra.mxu0 %v1814
      %2455 = vmatprep.subr.bf16.mxu0 0
      %2456 = vmatpush1.bf16.msra.mxu0 %v1813
      %2457 = vmatprep.subr.bf16.mxu0 0
      %2458 = vmatpush1.bf16.msra.mxu0 %v1812
      %2459 = vmatprep.subr.bf16.mxu0 0
      %2460 = vmatpush2.bf16.msra.mxu0 %v1827
      %2461 = vmatprep.subr.bf16.mxu0 0
      %2462 = vmatpush2.bf16.msra.mxu0 %v1826
      %2463 = vmatprep.subr.bf16.mxu0 0
      %2464 = vmatpush2.bf16.msra.mxu0 %v1825
      %2465 = vmatprep.subr.bf16.mxu0 0
      %2466 = vmatpush2.bf16.msra.mxu0 %v1824
      %2467 = vmatprep.subr.bf16.mxu0 0
      %2468 = vmatpush2.bf16.msra.mxu0 %v1823
      %2469 = vmatprep.subr.bf16.mxu0 0
      %2470 = vmatpush2.bf16.msra.mxu0 %v1822
      %2471 = vmatprep.subr.bf16.mxu0 0
      %2472 = vmatpush2.bf16.msra.mxu0 %v1821
      %2473 = vmatprep.subr.bf16.mxu0 0
      %2474 = vmatpush2.bf16.msra.mxu0 %v1820
      %2475 = vmatprep.mubr.bf16.mxu0 %v1031
      %2476 = vmatmul.mubr.bf16.gmra.mxu0 %v1030
      %v2477 = vpop.f32.mrf.mxu0
      %v2478 = vadd.f32 %v2413, %v2477
      %v2479 = vpop.f32.mrf.mxu0
      %v2480 = vpop.f32.mrf.mxu0
      %v2481 = vadd.f32 %v2416, %v2480
      %v2482 = vpop.f32.mrf.mxu0
      %2483 = vmatprep.mubr.bf16.mxu0 %v1043
      %2484 = vmatmul.mubr.bf16.gmra.mxu0 %v1042
      %v2485 = vpop.f32.mrf.mxu0
      %v2486 = vadd.f32 %v2421, %v2485
      %v2487 = vpop.f32.mrf.mxu0
      %v2488 = vpop.f32.mrf.mxu0
      %v2489 = vadd.f32 %v2424, %v2488
      %v2490 = vpop.f32.mrf.mxu0
      %2491 = vmatprep.mubr.bf16.mxu0 %v1055
      %2492 = vmatmul.mubr.bf16.gmra.mxu0 %v1054
      %v2493 = vpop.f32.mrf.mxu0
      %v2494 = vadd.f32 %v2429, %v2493
      %v2495 = vpop.f32.mrf.mxu0
      %v2496 = vpop.f32.mrf.mxu0
      %v2497 = vadd.f32 %v2432, %v2496
      %v2498 = vpop.f32.mrf.mxu0
      %2499 = vmatprep.mubr.bf16.mxu0 %v1067
      %2500 = vmatmul.mubr.bf16.gmra.mxu0 %v1066
      %v2501 = vpop.f32.mrf.mxu0
      %v2502 = vadd.f32 %v2437, %v2501
      %v2503 = vpop.f32.mrf.mxu0
      %v2504 = vpop.f32.mrf.mxu0
      %v2505 = vadd.f32 %v2440, %v2504
      %v2506 = vpop.f32.mrf.mxu0
      %2507 = vdwg.mxu0
      %2508 = vmatprep.subr.bf16.mxu0 0
      %2509 = vmatpush1.bf16.msra.mxu0 %v1835
      %2510 = vmatprep.subr.bf16.mxu0 0
      %2511 = vmatpush1.bf16.msra.mxu0 %v1834
      %2512 = vmatprep.subr.bf16.mxu0 0
      %2513 = vmatpush1.bf16.msra.mxu0 %v1833
      %2514 = vmatprep.subr.bf16.mxu0 0
      %2515 = vmatpush1.bf16.msra.mxu0 %v1832
      %2516 = vmatprep.subr.bf16.mxu0 0
      %2517 = vmatpush1.bf16.msra.mxu0 %v1831
      %2518 = vmatprep.subr.bf16.mxu0 0
      %2519 = vmatpush1.bf16.msra.mxu0 %v1830
      %2520 = vmatprep.subr.bf16.mxu0 0
      %2521 = vmatpush1.bf16.msra.mxu0 %v1829
      %2522 = vmatprep.subr.bf16.mxu0 0
      %2523 = vmatpush1.bf16.msra.mxu0 %v1828
      %2524 = vmatprep.subr.bf16.mxu0 0
      %2525 = vmatpush2.bf16.msra.mxu0 %v1843
      %2526 = vmatprep.subr.bf16.mxu0 0
      %2527 = vmatpush2.bf16.msra.mxu0 %v1842
      %2528 = vmatprep.subr.bf16.mxu0 0
      %2529 = vmatpush2.bf16.msra.mxu0 %v1841
      %2530 = vmatprep.subr.bf16.mxu0 0
      %2531 = vmatpush2.bf16.msra.mxu0 %v1840
      %2532 = vmatprep.subr.bf16.mxu0 0
      %2533 = vmatpush2.bf16.msra.mxu0 %v1839
      %2534 = vmatprep.subr.bf16.mxu0 0
      %2535 = vmatpush2.bf16.msra.mxu0 %v1838
      %2536 = vmatprep.subr.bf16.mxu0 0
      %2537 = vmatpush2.bf16.msra.mxu0 %v1837
      %2538 = vmatprep.subr.bf16.mxu0 0
      %2539 = vmatpush2.bf16.msra.mxu0 %v1836
      %2540 = vmatprep.mubr.bf16.mxu0 %v1033
      %2541 = vmatmul.mubr.bf16.gmra.mxu0 %v1032
      %v2542 = vpop.f32.mrf.mxu0
      %v2543 = vadd.f32 %v2478, %v2542
      %v2544 = vpop.f32.mrf.mxu0
      %v2545 = vpop.f32.mrf.mxu0
      %v2546 = vadd.f32 %v2481, %v2545
      %v2547 = vpop.f32.mrf.mxu0
      %2548 = vmatprep.mubr.bf16.mxu0 %v1045
      %2549 = vmatmul.mubr.bf16.gmra.mxu0 %v1044
      %v2550 = vpop.f32.mrf.mxu0
      %v2551 = vadd.f32 %v2486, %v2550
      %v2552 = vpop.f32.mrf.mxu0
      %v2553 = vpop.f32.mrf.mxu0
      %v2554 = vadd.f32 %v2489, %v2553
      %v2555 = vpop.f32.mrf.mxu0
      %2556 = vmatprep.mubr.bf16.mxu0 %v1057
      %2557 = vmatmul.mubr.bf16.gmra.mxu0 %v1056
      %v2558 = vpop.f32.mrf.mxu0
      %v2559 = vadd.f32 %v2494, %v2558
      %v2560 = vpop.f32.mrf.mxu0
      %v2561 = vpop.f32.mrf.mxu0
      %v2562 = vadd.f32 %v2497, %v2561
      %v2563 = vpop.f32.mrf.mxu0
      %2564 = vmatprep.mubr.bf16.mxu0 %v1069
      %2565 = vmatmul.mubr.bf16.gmra.mxu0 %v1068
      %v2566 = vpop.f32.mrf.mxu0
      %v2567 = vadd.f32 %v2502, %v2566
      %v2568 = vpop.f32.mrf.mxu0
      %v2569 = vpop.f32.mrf.mxu0
      %v2570 = vadd.f32 %v2505, %v2569
      %v2571 = vpop.f32.mrf.mxu0
      %2572 = vdwg.mxu0
      %v2573 = vpack.c.bf16 %v2546, %v2543
      %v2574 = vpack.c.bf16 %v2554, %v2551
      %v2575 = vpack.c.bf16 %v2562, %v2559
      %v2576 = vpack.c.bf16 %v2570, %v2567
      %v2581 = vunpack.c.l.b16 %v2573
      %v2582 = vunpack.c.h.b16 %v2573
      %v2583 = vunpack.c.l.b16 %v2574
      %v2584 = vunpack.c.h.b16 %v2574
      %v2585 = vunpack.c.l.b16 %v2575
      %v2586 = vunpack.c.h.b16 %v2575
      %v2587 = vunpack.c.l.b16 %v2576
      %v2588 = vunpack.c.h.b16 %v2576
      %v2589 = vpack.c.b16 %v2581, %v2581
      %v2590 = vpack.c.b16 %v2582, %v2582
      %v2591 = vpack.c.b16 %v2583, %v2583
      %v2592 = vpack.c.b16 %v2584, %v2584
      %v2593 = vpack.c.b16 %v2585, %v2585
      %v2594 = vpack.c.b16 %v2586, %v2586
      %v2595 = vpack.c.b16 %v2587, %v2587
      %v2596 = vpack.c.b16 %v2588, %v2588
      %2605 = vst [vmem:[%s278] sm:$0xf] %v2589
      %2606 = vst [vmem:[%s278 + $0x4] sm:$0xf] %v2590
      %2607 = vst [vmem:[%s278 + $0x8] sm:$0xf] %v2591
      %2608 = vst [vmem:[%s278 + $0xc] sm:$0xf] %v2592
      %2609 = vst [vmem:[%s278 + $0x10] sm:$0xf] %v2593
      %2610 = vst [vmem:[%s278 + $0x14] sm:$0xf] %v2594
      %2611 = vst [vmem:[%s278 + $0x18] sm:$0xf] %v2595
      %2612 = vst [vmem:[%s278 + $0x1c] sm:$0xf] %v2596
      %v2613 = vadd.f32 %v2543, %v2546
      %v2614 = vadd.f32 %v2613, %v2551
      %v2615 = vadd.f32 %v2614, %v2554
      %v2616 = vadd.f32 %v2615, %v2559
      %v2617 = vadd.f32 %v2616, %v2562
      %v2618 = vadd.f32 %v2617, %v2567
      %v2619 = vadd.f32 %v2618, %v2570
      %v2620 = vrot.slane %v2619, 4
      %v2621 = vadd.f32 %v2619, %v2620
      %v2622 = vrot.slane %v2621, 2
      %v2623 = vadd.f32 %v2621, %v2622
      %v2624 = vrot.slane %v2623, 1
      %v2625 = vadd.f32 %v2623, %v2624
      %v2626 = vmul.f32 %v2543, %v2543
      %v2627 = vmul.f32 %v2546, %v2546
      %v2628 = vmul.f32 %v2551, %v2551
      %v2629 = vmul.f32 %v2554, %v2554
      %v2630 = vmul.f32 %v2559, %v2559
      %v2631 = vmul.f32 %v2562, %v2562
      %v2632 = vmul.f32 %v2567, %v2567
      %v2633 = vmul.f32 %v2570, %v2570
      %v2634 = vadd.f32 %v2626, %v2627
      %v2635 = vadd.f32 %v2634, %v2628
      %v2636 = vadd.f32 %v2635, %v2629
      %v2637 = vadd.f32 %v2636, %v2630
      %v2638 = vadd.f32 %v2637, %v2631
      %v2639 = vadd.f32 %v2638, %v2632
      %v2640 = vadd.f32 %v2639, %v2633
      %v2641 = vrot.slane %v2640, 4
      %v2642 = vadd.f32 %v2640, %v2641
      %v2643 = vrot.slane %v2642, 2
      %v2644 = vadd.f32 %v2642, %v2643
      %v2645 = vrot.slane %v2644, 1
      %v2646 = vadd.f32 %v2644, %v2645
      %vm2647 = vcmask 1040384
      %v2648 = vsel %vm2647, %v2625, %v2646
      %2649 = vst [vmem:[%s282] sm:$0x3] %v2648
      %p2650 = scmp.lt.s32.totalorder %s18, 1
      %s2651 = scalar_select %p2650, %s18, 1
      %s2652 = smul.addr %s2651, 8
      %s2653 = smul.addr %s2652, 4
      %s2654 = scalar_lea.vmem %s5, %s2653
      %p2655 = scmp.lt.s32.totalorder %s18, 1
      %s2656 = scalar_select %p2655, %s18, 1
      %s2657 = smul.addr %s2656, 2
      %s2658 = scalar_lea.vmem %s6, %s2657
      // Predicated region
      $region41: #{unet_expanding_block_forward.7} parent=39 // pred_check
        %p2659 = pneg %p151
      $region42: #{unet_expanding_block_forward.7} parent=39 // pred_check_branch
        %2661 = sbr.rel (%p2659) target = $region44
      $region43: #{unet_expanding_block_forward.7} parent=39 // pred_region
        _
      $region44: #{unet_expanding_block_forward.7} parent=39 // pred_fallthru
        _
      // Predicated region
      $region45: #{unet_expanding_block_forward.7} parent=39 // pred_check
        %p2662 = pneg %p177
      $region46: #{unet_expanding_block_forward.7} parent=39 // pred_check_branch
        %2664 = sbr.rel (%p2662) target = $region48
      $region47: #{unet_expanding_block_forward.7} parent=39 // pred_region
        _
      $region48: #{unet_expanding_block_forward.7} parent=39 // pred_fallthru
        _
    $region40: #{unet_expanding_block_forward.7} parent=5 // pred_fallthru
      _
    %p2665 = scmp.le.s32.totalorder 2, %s13
    // Predicated region
    $region49: #{unet_expanding_block_forward.7} parent=5 // pred_check
      %p2666 = pneg %p2665
    $region50: #{unet_expanding_block_forward.7} parent=5 // pred_check_branch
      %2668 = sbr.rel (%p2666) target = $region52
    $region51: #{unet_expanding_block_forward.7} parent=5 // pred_region
      %s2669 = ssub.s32 %s13, 2
      // Predicated region
      $region53: #{unet_expanding_block_forward.7} parent=51 // pred_check
        %p2670 = pneg %p157
      $region54: #{unet_expanding_block_forward.7} parent=51 // pred_check_branch
        %2672 = sbr.rel (%p2670) target = $region56
      $region55: #{unet_expanding_block_forward.7} parent=51 // pred_region
        %p2673 = scmp.lt.s32.totalorder %s19, 1
        %s2674 = scalar_select %p2673, %s19, 1
        %s2675 = smul.addr %s2674, 8
        %s2676 = smul.addr %s2675, 4
        %s2677 = scalar_lea.vmem %s5, %s2676
      $region56: #{unet_expanding_block_forward.7} parent=51 // pred_fallthru
        _
      // Predicated region
      $region57: #{unet_expanding_block_forward.7} parent=51 // pred_check
        %p2678 = pneg %p183
      $region58: #{unet_expanding_block_forward.7} parent=51 // pred_check_branch
        %2680 = sbr.rel (%p2678) target = $region60
      $region59: #{unet_expanding_block_forward.7} parent=51 // pred_region
        %p2681 = scmp.lt.s32.totalorder %s19, 1
        %s2682 = scalar_select %p2681, %s19, 1
        %s2683 = smul.addr %s2682, 2
        %s2684 = scalar_lea.vmem %s6, %s2683
      $region60: #{unet_expanding_block_forward.7} parent=51 // pred_fallthru
        _
    $region52: #{unet_expanding_block_forward.7} parent=5 // pred_fallthru
      _
  $region6: #{unet_expanding_block_forward.7} parent=0 // loop_footer
    %s17 = sadd.s32 1, %s13
  $region7: #{unet_expanding_block_forward.7} parent=0 // loop_footer_branch
    %12 = sbr.rel target = $region3
  $region8: #{unet_expanding_block_forward.7} parent=0 // loop_exit
    _

</llo_original>
